<compile_context>
chip_gen: v7x
topology: tpu7x:2x2x1
jax: 0.10.0
libtpu: 0.0.40
codegen_flags: <defaults>
</compile_context>

<pallas_src>
import functools

import jax
import jax.numpy as jnp
from jax.experimental import pallas as pl
from jax.experimental.pallas import tpu as pltpu

HIDDEN = 768      # hardcoded by the module (Linear(768, ...))
VOCAB = 1024      # synthetic tokenizer.vocab_size
N_CLASSES = 2
BATCH = 2
SEQ = 8
CLS_PAD = 128     # lane-padded width of the fused classifier head
POOL_ROWS = 8     # sublane-padded row count for the pooler/cls kernel
VMEM_LIMIT = 32 * 1024 * 1024


def _n_splits():
    # 2-way N split only on v7x (2 TensorCores per chip share the weight DMA);
    # single-step grids elsewhere (extra step is pure overhead on 1-TC chips).
    try:
        kind = jax.devices()[0].device_kind.lower()
        if "v7" in kind:
            return 2
    except Exception:
        pass
    return 1


N_SPLITS = _n_splits()


# ----------------------------- Pallas kernels --------------------------------
def _linear_kernel(x_ref, w_ref, b_ref, o_ref, *, activation):
    # Single K step: no accumulator scratch, no init/finalize phases.
    r = jnp.dot(x_ref[...], w_ref[...], preferred_element_type=jnp.float32)
    r = r + b_ref[...]
    if activation == "relu":
        r = jnp.maximum(r, 0.0)
    elif activation == "tanh":
        r = jnp.tanh(r)
    o_ref[...] = r.astype(o_ref.dtype)


def pallas_linear(x, w, b, activation="none"):
    """y = act(x @ w + b): whole-weight, single-reduction-step fused kernel.

    bf16 inputs / weights, f32 accumulation and output.
    """
    M, K = x.shape
    K2, N = w.shape
    assert K == K2 and b.shape == (N,)
    assert M % 8 == 0 and K % 128 == 0 and N % 128 == 0
    x = x.astype(jnp.bfloat16)
    w = w.astype(jnp.bfloat16)
    b2 = b.astype(jnp.float32).reshape(1, N)

    tm, tk = M, K                                       # full M and K blocks
    tn = N // N_SPLITS if (N_SPLITS > 1 and N % (N_SPLITS * 128) == 0) else N

    kernel = functools.partial(_linear_kernel, activation=activation)
    return pl.pallas_call(
        kernel,
        out_shape=jax.ShapeDtypeStruct((M, N), jnp.float32),
        grid_spec=pltpu.PrefetchScalarGridSpec(
            num_scalar_prefetch=0,
            grid=(N // tn,),
            in_specs=[
                pl.BlockSpec((tm, tk), lambda j: (0, 0)),
                pl.BlockSpec((tk, tn), lambda j: (0, j)),
                pl.BlockSpec((1, tn), lambda j: (0, j)),
            ],
            out_specs=pl.BlockSpec((tm, tn), lambda j: (0, j)),
        ),
        compiler_params=pltpu.CompilerParams(
            dimension_semantics=("parallel",),
            vmem_limit_bytes=VMEM_LIMIT),
    )(x, w, b2)


def _ssl_head_kernel(x_ref, w1_ref, b1_ref, w2_ref, b2_ref, o_ref):
    # fused: relu(x @ w1 + b1) @ w2 + b2   (both weights fully resident)
    h = jnp.dot(x_ref[...], w1_ref[...], preferred_element_type=jnp.float32)
    h = jnp.maximum(h + b1_ref[...], 0.0)
    o = jnp.dot(h.astype(w2_ref.dtype), w2_ref[...],
                preferred_element_type=jnp.float32)
    o_ref[...] = (o + b2_ref[...]).astype(o_ref.dtype)


def pallas_ssl_head(x, w1, b1, w2, b2):
    """out = relu(x @ w1 + b1) @ w2 + b2  in one kernel (no HBM round trip)."""
    M, K = x.shape
    K2, H = w1.shape
    H2, N = w2.shape
    assert K == K2 == HIDDEN and H == H2 == HIDDEN and N == VOCAB
    assert M % 8 == 0
    x = x.astype(jnp.bfloat16)
    return pl.pallas_call(
        _ssl_head_kernel,
        out_shape=jax.ShapeDtypeStruct((M, N), jnp.float32),
        grid_spec=pltpu.PrefetchScalarGridSpec(
            num_scalar_prefetch=0,
            grid=(1,),
            in_specs=[
                pl.BlockSpec((M, K), lambda i: (0, 0)),
                pl.BlockSpec((K, H), lambda i: (0, 0)),
                pl.BlockSpec((1, H), lambda i: (0, 0)),
                pl.BlockSpec((H, N), lambda i: (0, 0)),
                pl.BlockSpec((1, N), lambda i: (0, 0)),
            ],
            out_specs=pl.BlockSpec((M, N), lambda i: (0, 0)),
        ),
        compiler_params=pltpu.CompilerParams(
            dimension_semantics=("arbitrary",),
            vmem_limit_bytes=VMEM_LIMIT),
    )(x,
      w1.astype(jnp.bfloat16), b1.astype(jnp.float32).reshape(1, H),
      w2.astype(jnp.bfloat16), b2.astype(jnp.float32).reshape(1, N))


def _pooler_cls_kernel(x_ref, wp_ref, bp_ref, wc_ref, bc_ref, o_ref):
    # tanh pooler dense fused with the (lane-padded) 768->2 classifier head.
    p = jnp.dot(x_ref[...], wp_ref[...], preferred_element_type=jnp.float32)
    p = jnp.tanh(p + bp_ref[...])
    c = jnp.dot(p.astype(wc_ref.dtype), wc_ref[...],
                preferred_element_type=jnp.float32)
    o_ref[...] = (c + bc_ref[...]).astype(o_ref.dtype)


def pallas_pooler_cls(x, w_pool, b_pool, w_cls_pad, b_cls_pad):
    """out = tanh(x @ w_pool + b_pool) @ w_cls_pad + b_cls_pad  (single block)."""
    M, K = x.shape
    assert M % 8 == 0 and K == HIDDEN
    x = x.astype(jnp.bfloat16)
    return pl.pallas_call(
        _pooler_cls_kernel,
        out_shape=jax.ShapeDtypeStruct((M, CLS_PAD), jnp.float32),
        grid_spec=pltpu.PrefetchScalarGridSpec(
            num_scalar_prefetch=0,
            grid=(1,),
            in_specs=[
                pl.BlockSpec((M, K), lambda i: (0, 0)),
                pl.BlockSpec((K, K), lambda i: (0, 0)),
                pl.BlockSpec((1, K), lambda i: (0, 0)),
                pl.BlockSpec((K, CLS_PAD), lambda i: (0, 0)),
                pl.BlockSpec((1, CLS_PAD), lambda i: (0, 0)),
            ],
            out_specs=pl.BlockSpec((M, CLS_PAD), lambda i: (0, 0)),
        ),
        compiler_params=pltpu.CompilerParams(
            dimension_semantics=("arbitrary",),
            vmem_limit_bytes=VMEM_LIMIT),
    )(x,
      w_pool.astype(jnp.bfloat16),
      b_pool.astype(jnp.float32).reshape(1, K),
      w_cls_pad.astype(jnp.bfloat16),
      b_cls_pad.astype(jnp.float32).reshape(1, CLS_PAD))


# ------------------------- parameters (deterministic) -----------------------
def init_params(key):
    ks = jax.random.split(key, 10)
    s = 0.02
    f32, bf16 = jnp.float32, jnp.bfloat16

    w_cls = jax.random.normal(ks[4], (HIDDEN, N_CLASSES), f32) * s
    w_cls_pad = jnp.zeros((HIDDEN, CLS_PAD), f32).at[:, :N_CLASSES].set(w_cls)

    return {
        # synthetic backbone
        "tok_emb": jax.random.normal(ks[0], (VOCAB, HIDDEN), f32) * s,
        "pos_emb": jax.random.normal(ks[1], (SEQ, HIDDEN), f32) * s,
        "w_enc": (jax.random.normal(ks[2], (HIDDEN, HIDDEN), f32) * s).astype(bf16),
        "b_enc": jnp.zeros((HIDDEN,), f32),
        "w_pool": (jax.random.normal(ks[3], (HIDDEN, HIDDEN), f32) * s).astype(bf16),
        "b_pool": jnp.zeros((HIDDEN,), f32),
        # heads (net_cls weight lane-padded 2 -> 128 for the fused kernel)
        "w_cls_pad": w_cls_pad.astype(bf16),
        "b_cls_pad": jnp.zeros((CLS_PAD,), f32),
        "w_ssl1": (jax.random.normal(ks[5], (HIDDEN, HIDDEN), f32) * s).astype(bf16),
        "b_ssl1": jnp.zeros((HIDDEN,), f32),
        "w_ssl2": (jax.random.normal(ks[6], (HIDDEN, VOCAB), f32) * s).astype(bf16),
        "b_ssl2": jnp.zeros((VOCAB,), f32),
    }


# ------------------------------ model forward --------------------------------
def masker_net_mkr_forward(params, x_orig, x_mask):
    B, L = x_orig.shape
    attention_mask = (x_orig > 0).astype(jnp.float32)

    # --- backbone encoder: both token streams in ONE kernel (M = 2*B*L) ------
    # TODO(synk): embedding gather + position add left to XLA (small, no clean
    # Pallas win at these shapes).
    ids = jnp.concatenate([x_orig, x_mask], axis=0)                      # (2B, L)
    emb = jnp.take(params["tok_emb"], ids, axis=0) + params["pos_emb"][None, :, :]
    seq = pallas_linear(emb.reshape(2 * B * L, HIDDEN),
                        params["w_enc"], params["b_enc"],
                        activation="relu").reshape(2 * B, L, HIDDEN)
    seq_orig, seq_ssl = seq[:B], seq[B:]

    # attention-mask-weighted mean pooling of the x_orig sequence output
    m = attention_mask[:, :, None]
    denom = jnp.maximum(attention_mask.sum(axis=1, keepdims=True), 1.0)
    pooled_in = (seq_orig * m).sum(axis=1) / denom                       # (B, 768)

    # out_cls = net_cls(dropout(backbone(x_orig, mask)[1])); dropout = identity.
    # tanh pooler + classifier head fused; rows padded B->8, cols padded 2->128.
    pooled_pad = jnp.zeros((POOL_ROWS, HIDDEN), jnp.float32).at[:B].set(pooled_in)
    cls_pad = pallas_pooler_cls(pooled_pad, params["w_pool"], params["b_pool"],
                                params["w_cls_pad"], params["b_cls_pad"])
    out_cls = cls_pad[:B, :N_CLASSES]

    # out_ssl = net_ssl(dropout(backbone(x_mask, mask)[0])); dropouts = identity.
    # Both Linear layers of net_ssl fused into one kernel (weights VMEM-resident).
    out_ssl = pallas_ssl_head(seq_ssl.reshape(B * L, HIDDEN),
                              params["w_ssl1"], params["b_ssl1"],
                              params["w_ssl2"], params["b_ssl2"]).reshape(B, L, VOCAB)
    return out_cls, out_ssl


# ---------------------------------- main -------------------------------------
if __name__ == "__main__":
    key = jax.random.PRNGKey(0)
    kp, k1, k2 = jax.random.split(key, 3)
    params = init_params(kp)

    # token ids; a couple of zeros so attention_mask is non-trivial
    x_orig = jax.random.randint(k1, (BATCH, SEQ), 1, VOCAB, dtype=jnp.int32)
    x_orig = x_orig.at[:, -1].set(0)
    x_mask = jax.random.randint(k2, (BATCH, SEQ), 1, VOCAB, dtype=jnp.int32)

    fwd = jax.jit(masker_net_mkr_forward)
    out_cls, out_ssl = fwd(params, x_orig, x_mask)
    jax.block_until_ready((out_cls, out_ssl))

    assert out_cls.shape == (BATCH, N_CLASSES)
    assert out_ssl.shape == (BATCH, SEQ, VOCAB)
    assert out_cls.dtype == jnp.float32 and out_ssl.dtype == jnp.float32
    assert bool(jnp.all(jnp.isfinite(out_cls))) and bool(jnp.all(jnp.isfinite(out_ssl)))
    print("KERNEL_OK")
</pallas_src>

<mosaic_0001>
module attributes {stable_mosaic.version = 11 : i64} {
  func.func @_linear_kernel(%arg0: i32, %arg1: memref<32x768xbf16, #tpu.memory_space<vmem>>, %arg2: memref<768x768xbf16, #tpu.memory_space<vmem>>, %arg3: memref<1x768xf32, #tpu.memory_space<vmem>>, %arg4: memref<32x768xf32, #tpu.memory_space<vmem>>) attributes {dimension_semantics = [#tpu.dimension_semantics<parallel>], iteration_bounds = array<i64: 1>, scalar_prefetch = 0 : i64, scratch_operands = 0 : i64, tpu.core_type = #tpu.core_type<tc>, window_params = [{pipeline_mode = #tpu.pipeline_mode<synchronous>, transform_indices = @transform_0, window_bounds = array<i64: 32, 768>}, {transform_indices = @transform_1, window_bounds = array<i64: 768, 768>}, {transform_indices = @transform_2, window_bounds = array<i64: 1, 768>}, {transform_indices = @transform_3, window_bounds = array<i64: 32, 768>}]} {
    %c0 = arith.constant 0 : index
    %c0_0 = arith.constant 0 : index
    %0 = vector.load %arg1[%c0, %c0_0] : memref<32x768xbf16, #tpu.memory_space<vmem>>, vector<32x768xbf16>
    %c0_1 = arith.constant 0 : index
    %c0_2 = arith.constant 0 : index
    %1 = vector.load %arg2[%c0_1, %c0_2] : memref<768x768xbf16, #tpu.memory_space<vmem>>, vector<768x768xbf16>
    %cst = arith.constant dense<0.000000e+00> : vector<32x768xf32>
    %2 = tpu.matmul %0, %1, %cst {dimension_numbers = #tpu.dot_dimension_numbers<[1], [0], [0], [1], [0, 0, 1, 1], [], []>} : vector<32x768xbf16>, vector<768x768xbf16>, vector<32x768xf32> -> vector<32x768xf32>
    %c0_3 = arith.constant 0 : index
    %c0_4 = arith.constant 0 : index
    %3 = vector.load %arg3[%c0_3, %c0_4] : memref<1x768xf32, #tpu.memory_space<vmem>>, vector<1x768xf32>
    %4 = vector.broadcast %3 : vector<1x768xf32> to vector<32x768xf32>
    %5 = arith.addf %2, %4 : vector<32x768xf32>
    %cst_5 = arith.constant 0.000000e+00 : f32
    %6 = vector.broadcast %cst_5 : f32 to vector<32x768xf32>
    %7 = arith.maximumf %5, %6 : vector<32x768xf32>
    %c0_6 = arith.constant 0 : index
    %c0_7 = arith.constant 0 : index
    %8 = vector.load %arg4[%c0_6, %c0_7] : memref<32x768xf32, #tpu.memory_space<vmem>>, vector<32x768xf32>
    tpu.vector_store %arg4[%c0_6, %c0_7], %7 {strides = array<i32>} : memref<32x768xf32, #tpu.memory_space<vmem>>, vector<32x768xf32>,
    return
  }
  func.func @transform_0(%arg0: i32) -> (i32, i32) {
    %c0_i32 = arith.constant 0 : i32
    %c0_i32_0 = arith.constant 0 : i32
    %c0_i32_1 = arith.constant 0 : i32
    return %c0_i32, %c0_i32_0 : i32, i32
  }
  func.func @transform_1(%arg0: i32) -> (i32, i32) {
    %c0_i32 = arith.constant 0 : i32
    %c0_i32_0 = arith.constant 0 : i32
    return %c0_i32, %arg0 : i32, i32
  }
  func.func @transform_2(%arg0: i32) -> (i32, i32) {
    %c0_i32 = arith.constant 0 : i32
    %c0_i32_0 = arith.constant 0 : i32
    return %c0_i32, %arg0 : i32, i32
  }
  func.func @transform_3(%arg0: i32) -> (i32, i32) {
    %c0_i32 = arith.constant 0 : i32
    %c0_i32_0 = arith.constant 0 : i32
    return %c0_i32, %arg0 : i32, i32
  }
}

module attributes {stable_mosaic.version = 11 : i64} {
  func.func @_ssl_head_kernel(%arg0: i32, %arg1: memref<16x768xbf16, #tpu.memory_space<vmem>>, %arg2: memref<768x768xbf16, #tpu.memory_space<vmem>>, %arg3: memref<1x768xf32, #tpu.memory_space<vmem>>, %arg4: memref<768x1024xbf16, #tpu.memory_space<vmem>>, %arg5: memref<1x1024xf32, #tpu.memory_space<vmem>>, %arg6: memref<16x1024xf32, #tpu.memory_space<vmem>>) attributes {dimension_semantics = [#tpu.dimension_semantics<arbitrary>], iteration_bounds = array<i64: 1>, scalar_prefetch = 0 : i64, scratch_operands = 0 : i64, tpu.core_type = #tpu.core_type<tc>, window_params = [{pipeline_mode = #tpu.pipeline_mode<synchronous>, transform_indices = @transform_0, window_bounds = array<i64: 16, 768>}, {pipeline_mode = #tpu.pipeline_mode<synchronous>, transform_indices = @transform_1, window_bounds = array<i64: 768, 768>}, {pipeline_mode = #tpu.pipeline_mode<synchronous>, transform_indices = @transform_2, window_bounds = array<i64: 1, 768>}, {pipeline_mode = #tpu.pipeline_mode<synchronous>, transform_indices = @transform_3, window_bounds = array<i64: 768, 1024>}, {pipeline_mode = #tpu.pipeline_mode<synchronous>, transform_indices = @transform_4, window_bounds = array<i64: 1, 1024>}, {pipeline_mode = #tpu.pipeline_mode<synchronous>, transform_indices = @transform_5, window_bounds = array<i64: 16, 1024>}]} {
    %c0 = arith.constant 0 : index
    %c0_0 = arith.constant 0 : index
    %0 = vector.load %arg1[%c0, %c0_0] : memref<16x768xbf16, #tpu.memory_space<vmem>>, vector<16x768xbf16>
    %c0_1 = arith.constant 0 : index
    %c0_2 = arith.constant 0 : index
    %1 = vector.load %arg2[%c0_1, %c0_2] : memref<768x768xbf16, #tpu.memory_space<vmem>>, vector<768x768xbf16>
    %cst = arith.constant dense<0.000000e+00> : vector<16x768xf32>
    %2 = tpu.matmul %0, %1, %cst {dimension_numbers = #tpu.dot_dimension_numbers<[1], [0], [0], [1], [0, 0, 1, 1], [], []>} : vector<16x768xbf16>, vector<768x768xbf16>, vector<16x768xf32> -> vector<16x768xf32>
    %c0_3 = arith.constant 0 : index
    %c0_4 = arith.constant 0 : index
    %3 = vector.load %arg3[%c0_3, %c0_4] : memref<1x768xf32, #tpu.memory_space<vmem>>, vector<1x768xf32>
    %4 = vector.broadcast %3 : vector<1x768xf32> to vector<16x768xf32>
    %5 = arith.addf %2, %4 : vector<16x768xf32>
    %cst_5 = arith.constant 0.000000e+00 : f32
    %6 = vector.broadcast %cst_5 : f32 to vector<16x768xf32>
    %7 = arith.maximumf %5, %6 : vector<16x768xf32>
    %8 = arith.truncf %7 : vector<16x768xf32> to vector<16x768xbf16>
    %c0_6 = arith.constant 0 : index
    %c0_7 = arith.constant 0 : index
    %9 = vector.load %arg4[%c0_6, %c0_7] : memref<768x1024xbf16, #tpu.memory_space<vmem>>, vector<768x1024xbf16>
    %cst_8 = arith.constant dense<0.000000e+00> : vector<16x1024xf32>
    %10 = tpu.matmul %8, %9, %cst_8 {dimension_numbers = #tpu.dot_dimension_numbers<[1], [0], [0], [1], [0, 0, 1, 1], [], []>} : vector<16x768xbf16>, vector<768x1024xbf16>, vector<16x1024xf32> -> vector<16x1024xf32>
    %c0_9 = arith.constant 0 : index
    %c0_10 = arith.constant 0 : index
    %11 = vector.load %arg5[%c0_9, %c0_10] : memref<1x1024xf32, #tpu.memory_space<vmem>>, vector<1x1024xf32>
    %12 = vector.broadcast %11 : vector<1x1024xf32> to vector<16x1024xf32>
    %13 = arith.addf %10, %12 : vector<16x1024xf32>
    %c0_11 = arith.constant 0 : index
    %c0_12 = arith.constant 0 : index
    %14 = vector.load %arg6[%c0_11, %c0_12] : memref<16x1024xf32, #tpu.memory_space<vmem>>, vector<16x1024xf32>
    tpu.vector_store %arg6[%c0_11, %c0_12], %13 {strides = array<i32>} : memref<16x1024xf32, #tpu.memory_space<vmem>>, vector<16x1024xf32>,
    return
  }
  func.func @transform_0(%arg0: i32) -> (i32, i32) {
    %c0_i32 = arith.constant 0 : i32
    %c0_i32_0 = arith.constant 0 : i32
    %c0_i32_1 = arith.constant 0 : i32
    return %c0_i32, %c0_i32_0 : i32, i32
  }
  func.func @transform_1(%arg0: i32) -> (i32, i32) {
    %c0_i32 = arith.constant 0 : i32
    %c0_i32_0 = arith.constant 0 : i32
    %c0_i32_1 = arith.constant 0 : i32
    return %c0_i32, %c0_i32_0 : i32, i32
  }
  func.func @transform_2(%arg0: i32) -> (i32, i32) {
    %c0_i32 = arith.constant 0 : i32
    %c0_i32_0 = arith.constant 0 : i32
    %c0_i32_1 = arith.constant 0 : i32
    return %c0_i32, %c0_i32_0 : i32, i32
  }
  func.func @transform_3(%arg0: i32) -> (i32, i32) {
    %c0_i32 = arith.constant 0 : i32
    %c0_i32_0 = arith.constant 0 : i32
    %c0_i32_1 = arith.constant 0 : i32
    return %c0_i32, %c0_i32_0 : i32, i32
  }
  func.func @transform_4(%arg0: i32) -> (i32, i32) {
    %c0_i32 = arith.constant 0 : i32
    %c0_i32_0 = arith.constant 0 : i32
    %c0_i32_1 = arith.constant 0 : i32
    return %c0_i32, %c0_i32_0 : i32, i32
  }
  func.func @transform_5(%arg0: i32) -> (i32, i32) {
    %c0_i32 = arith.constant 0 : i32
    %c0_i32_0 = arith.constant 0 : i32
    %c0_i32_1 = arith.constant 0 : i32
    return %c0_i32, %c0_i32_0 : i32, i32
  }
}

module attributes {stable_mosaic.version = 11 : i64} {
  func.func @_pooler_cls_kernel(%arg0: i32, %arg1: memref<8x768xbf16, #tpu.memory_space<vmem>>, %arg2: memref<768x768xbf16, #tpu.memory_space<vmem>>, %arg3: memref<1x768xf32, #tpu.memory_space<vmem>>, %arg4: memref<768x128xbf16, #tpu.memory_space<vmem>>, %arg5: memref<1x128xf32, #tpu.memory_space<vmem>>, %arg6: memref<8x128xf32, #tpu.memory_space<vmem>>) attributes {dimension_semantics = [#tpu.dimension_semantics<arbitrary>], iteration_bounds = array<i64: 1>, scalar_prefetch = 0 : i64, scratch_operands = 0 : i64, tpu.core_type = #tpu.core_type<tc>, window_params = [{pipeline_mode = #tpu.pipeline_mode<synchronous>, transform_indices = @transform_0, window_bounds = array<i64: 8, 768>}, {pipeline_mode = #tpu.pipeline_mode<synchronous>, transform_indices = @transform_1, window_bounds = array<i64: 768, 768>}, {pipeline_mode = #tpu.pipeline_mode<synchronous>, transform_indices = @transform_2, window_bounds = array<i64: 1, 768>}, {pipeline_mode = #tpu.pipeline_mode<synchronous>, transform_indices = @transform_3, window_bounds = array<i64: 768, 128>}, {pipeline_mode = #tpu.pipeline_mode<synchronous>, transform_indices = @transform_4, window_bounds = array<i64: 1, 128>}, {pipeline_mode = #tpu.pipeline_mode<synchronous>, transform_indices = @transform_5, window_bounds = array<i64: 8, 128>}]} {
    %c0 = arith.constant 0 : index
    %c0_0 = arith.constant 0 : index
    %0 = vector.load %arg1[%c0, %c0_0] : memref<8x768xbf16, #tpu.memory_space<vmem>>, vector<8x768xbf16>
    %c0_1 = arith.constant 0 : index
    %c0_2 = arith.constant 0 : index
    %1 = vector.load %arg2[%c0_1, %c0_2] : memref<768x768xbf16, #tpu.memory_space<vmem>>, vector<768x768xbf16>
    %cst = arith.constant dense<0.000000e+00> : vector<8x768xf32>
    %2 = tpu.matmul %0, %1, %cst {dimension_numbers = #tpu.dot_dimension_numbers<[1], [0], [0], [1], [0, 0, 1, 1], [], []>} : vector<8x768xbf16>, vector<768x768xbf16>, vector<8x768xf32> -> vector<8x768xf32>
    %c0_3 = arith.constant 0 : index
    %c0_4 = arith.constant 0 : index
    %3 = vector.load %arg3[%c0_3, %c0_4] : memref<1x768xf32, #tpu.memory_space<vmem>>, vector<1x768xf32>
    %4 = vector.broadcast %3 : vector<1x768xf32> to vector<8x768xf32>
    %5 = arith.addf %2, %4 : vector<8x768xf32>
    %6 = math.tanh %5 : vector<8x768xf32>
    %7 = arith.truncf %6 : vector<8x768xf32> to vector<8x768xbf16>
    %c0_5 = arith.constant 0 : index
    %c0_6 = arith.constant 0 : index
    %8 = vector.load %arg4[%c0_5, %c0_6] : memref<768x128xbf16, #tpu.memory_space<vmem>>, vector<768x128xbf16>
    %cst_7 = arith.constant dense<0.000000e+00> : vector<8x128xf32>
    %9 = tpu.matmul %7, %8, %cst_7 {dimension_numbers = #tpu.dot_dimension_numbers<[1], [0], [0], [1], [0, 0, 1, 1], [], []>} : vector<8x768xbf16>, vector<768x128xbf16>, vector<8x128xf32> -> vector<8x128xf32>
    %c0_8 = arith.constant 0 : index
    %c0_9 = arith.constant 0 : index
    %10 = vector.load %arg5[%c0_8, %c0_9] : memref<1x128xf32, #tpu.memory_space<vmem>>, vector<1x128xf32>
    %11 = vector.broadcast %10 : vector<1x128xf32> to vector<8x128xf32>
    %12 = arith.addf %9, %11 : vector<8x128xf32>
    %c0_10 = arith.constant 0 : index
    %c0_11 = arith.constant 0 : index
    %13 = vector.load %arg6[%c0_10, %c0_11] : memref<8x128xf32, #tpu.memory_space<vmem>>, vector<8x128xf32>
    tpu.vector_store %arg6[%c0_10, %c0_11], %12 {strides = array<i32>} : memref<8x128xf32, #tpu.memory_space<vmem>>, vector<8x128xf32>,
    return
  }
  func.func @transform_0(%arg0: i32) -> (i32, i32) {
    %c0_i32 = arith.constant 0 : i32
    %c0_i32_0 = arith.constant 0 : i32
    %c0_i32_1 = arith.constant 0 : i32
    return %c0_i32, %c0_i32_0 : i32, i32
  }
  func.func @transform_1(%arg0: i32) -> (i32, i32) {
    %c0_i32 = arith.constant 0 : i32
    %c0_i32_0 = arith.constant 0 : i32
    %c0_i32_1 = arith.constant 0 : i32
    return %c0_i32, %c0_i32_0 : i32, i32
  }
  func.func @transform_2(%arg0: i32) -> (i32, i32) {
    %c0_i32 = arith.constant 0 : i32
    %c0_i32_0 = arith.constant 0 : i32
    %c0_i32_1 = arith.constant 0 : i32
    return %c0_i32, %c0_i32_0 : i32, i32
  }
  func.func @transform_3(%arg0: i32) -> (i32, i32) {
    %c0_i32 = arith.constant 0 : i32
    %c0_i32_0 = arith.constant 0 : i32
    %c0_i32_1 = arith.constant 0 : i32
    return %c0_i32, %c0_i32_0 : i32, i32
  }
  func.func @transform_4(%arg0: i32) -> (i32, i32) {
    %c0_i32 = arith.constant 0 : i32
    %c0_i32_0 = arith.constant 0 : i32
    %c0_i32_1 = arith.constant 0 : i32
    return %c0_i32, %c0_i32_0 : i32, i32
  }
  func.func @transform_5(%arg0: i32) -> (i32, i32) {
    %c0_i32 = arith.constant 0 : i32
    %c0_i32_0 = arith.constant 0 : i32
    %c0_i32_1 = arith.constant 0 : i32
    return %c0_i32, %c0_i32_0 : i32, i32
  }
}

</mosaic_0001>

<llo_original>
// kernel: masker_net_mkr_forward.3
$region0: #{masker_net_mkr_forward.3}
  #allocation0 [shape = 'u32[]', space=smem, size = 0x4, offset = 0x4, fixed_abs, tag = 'smem constant byte address 0x4 - core index']
  #allocation1 [shape = 'u32[144,128]{1,0:T(1,128)}', space=vmem, size = 0x12000, scoped, tag = 'internal scratch']
  %s0 = inlined_call_operand.vmem [shape: bf16[32,768], index: 0, kind: input, shape index: {}]
  %s1 = inlined_call_operand.hbm [shape: bf16[768,768], index: 1, kind: input, shape index: {}]
  %s2 = inlined_call_operand.vmem [shape: f32[1,768], index: 2, kind: input, shape index: {}]
  %s3 = inlined_call_operand.vmem [shape: f32[32,768], index: 3, kind: output, shape index: {}]
  %s4 = sld [smem:[#allocation0]]
  $region26: #{masker_net_mkr_forward.3} parent=0
    _
  %s6 = ssub.s32 1, %s4
  %s7 = scalar_select 0, %s6, %s4
  $region1: #{masker_net_mkr_forward.3} parent=0
    #allocation2 [shape = 'u8[1179648]{0}', space=vmem, size = 0x120000, scoped, tag = 'input window, operand 1, single buffered']
    #allocation3 [shape = 's32[1]{0}', space=sflag, size = 0x4, scoped, tag = 'scoped memory for masker_net_mkr_forward.3']
    %8 = vsyncpa [#allocation3], 0
    // Predicated region
    $region2: #{masker_net_mkr_forward.3} parent=1 // pred_check
      _
    $region3: #{masker_net_mkr_forward.3} parent=1 // pred_check_branch
      %10 = sbr.rel (0) target = $region5
    $region4: #{masker_net_mkr_forward.3} parent=1 // pred_region
      _
    $region5: #{masker_net_mkr_forward.3} parent=1 // pred_fallthru
      _
    // Predicated region
    $region6: #{masker_net_mkr_forward.3} parent=1 // pred_check
      _
    $region7: #{masker_net_mkr_forward.3} parent=1 // pred_check_branch
      %12 = sbr.rel (0) target = $region9
    $region8: #{masker_net_mkr_forward.3} parent=1 // pred_region
      %s14 = ssub.s32 36864, 36864
      %15 = vsyncadd [#allocation3], %s14
      %s16 = sshll.u32 [#allocation2], 4
      %s17 = int_to_ptr.vmem [resolvable:$true] %s16
      %22 = dma.hbm_to_vmem [thread:$0]  %s1, 36864, %s17, [#allocation3], 384, 384, 24
    $region9: #{masker_net_mkr_forward.3} parent=1 // pred_fallthru
      _
    // Predicated region
    $region10: #{masker_net_mkr_forward.3} parent=1 // pred_check
      _
    $region11: #{masker_net_mkr_forward.3} parent=1 // pred_check_branch
      %24 = sbr.rel (0) target = $region13
    $region12: #{masker_net_mkr_forward.3} parent=1 // pred_region
      _
    $region13: #{masker_net_mkr_forward.3} parent=1 // pred_fallthru
      _
    // Predicated region
    $region14: #{masker_net_mkr_forward.3} parent=1 // pred_check
      _
    $region15: #{masker_net_mkr_forward.3} parent=1 // pred_check_branch
      %26 = sbr.rel (0) target = $region17
    $region16: #{masker_net_mkr_forward.3} parent=1 // pred_region
      %27 = dma.done [#allocation3], 36864
    $region17: #{masker_net_mkr_forward.3} parent=1 // pred_fallthru
      _
    %v28 = vld [vmem:[%s0] sm:$0xff]
    %v29 = vld [vmem:[%s0 + $0x8] sm:$0xff]
    %v30 = vld [vmem:[%s0 + $0x10] sm:$0xff]
    %v31 = vld [vmem:[%s0 + $0x18] sm:$0xff]
    %v32 = vld [vmem:[%s0 + $0x20] sm:$0xff]
    %v33 = vld [vmem:[%s0 + $0x28] sm:$0xff]
    %v34 = vld [vmem:[%s0 + $0x30] sm:$0xff]
    %v35 = vld [vmem:[%s0 + $0x38] sm:$0xff]
    %v36 = vld [vmem:[%s0 + $0x40] sm:$0xff]
    %v37 = vld [vmem:[%s0 + $0x48] sm:$0xff]
    %v38 = vld [vmem:[%s0 + $0x50] sm:$0xff]
    %v39 = vld [vmem:[%s0 + $0x58] sm:$0xff]
    %v40 = vld [vmem:[#allocation2] sm:$0xff]
    %v41 = vld [vmem:[#allocation2 + $0x8] sm:$0xff]
    %v42 = vld [vmem:[#allocation2 + $0x10] sm:$0xff]
    %v43 = vld [vmem:[#allocation2 + $0x18] sm:$0xff]
    %v44 = vld [vmem:[#allocation2 + $0x20] sm:$0xff]
    %v45 = vld [vmem:[#allocation2 + $0x28] sm:$0xff]
    %v46 = vld [vmem:[#allocation2 + $0x30] sm:$0xff]
    %v47 = vld [vmem:[#allocation2 + $0x38] sm:$0xff]
    %v48 = vld [vmem:[#allocation2 + $0x40] sm:$0xff]
    %v49 = vld [vmem:[#allocation2 + $0x48] sm:$0xff]
    %v50 = vld [vmem:[#allocation2 + $0x50] sm:$0xff]
    %v51 = vld [vmem:[#allocation2 + $0x58] sm:$0xff]
    %v52 = vld [vmem:[#allocation2 + $0x60] sm:$0xff]
    %v53 = vld [vmem:[#allocation2 + $0x68] sm:$0xff]
    %v54 = vld [vmem:[#allocation2 + $0x70] sm:$0xff]
    %v55 = vld [vmem:[#allocation2 + $0x78] sm:$0xff]
    %v56 = vld [vmem:[#allocation2 + $0x80] sm:$0xff]
    %v57 = vld [vmem:[#allocation2 + $0x88] sm:$0xff]
    %v58 = vld [vmem:[#allocation2 + $0x90] sm:$0xff]
    %v59 = vld [vmem:[#allocation2 + $0x98] sm:$0xff]
    %v60 = vld [vmem:[#allocation2 + $0xa0] sm:$0xff]
    %v61 = vld [vmem:[#allocation2 + $0xa8] sm:$0xff]
    %v62 = vld [vmem:[#allocation2 + $0xb0] sm:$0xff]
    %v63 = vld [vmem:[#allocation2 + $0xb8] sm:$0xff]
    %v64 = vld [vmem:[#allocation2 + $0xc0] sm:$0xff]
    %v65 = vld [vmem:[#allocation2 + $0xc8] sm:$0xff]
    %v66 = vld [vmem:[#allocation2 + $0xd0] sm:$0xff]
    %v67 = vld [vmem:[#allocation2 + $0xd8] sm:$0xff]
    %v68 = vld [vmem:[#allocation2 + $0xe0] sm:$0xff]
    %v69 = vld [vmem:[#allocation2 + $0xe8] sm:$0xff]
    %v70 = vld [vmem:[#allocation2 + $0xf0] sm:$0xff]
    %v71 = vld [vmem:[#allocation2 + $0xf8] sm:$0xff]
    %v72 = vld [vmem:[#allocation2 + $0x100] sm:$0xff]
    %v73 = vld [vmem:[#allocation2 + $0x108] sm:$0xff]
    %v74 = vld [vmem:[#allocation2 + $0x110] sm:$0xff]
    %v75 = vld [vmem:[#allocation2 + $0x118] sm:$0xff]
    %v76 = vld [vmem:[#allocation2 + $0x120] sm:$0xff]
    %v77 = vld [vmem:[#allocation2 + $0x128] sm:$0xff]
    %v78 = vld [vmem:[#allocation2 + $0x130] sm:$0xff]
    %v79 = vld [vmem:[#allocation2 + $0x138] sm:$0xff]
    %v80 = vld [vmem:[#allocation2 + $0x140] sm:$0xff]
    %v81 = vld [vmem:[#allocation2 + $0x148] sm:$0xff]
    %v82 = vld [vmem:[#allocation2 + $0x150] sm:$0xff]
    %v83 = vld [vmem:[#allocation2 + $0x158] sm:$0xff]
    %v84 = vld [vmem:[#allocation2 + $0x160] sm:$0xff]
    %v85 = vld [vmem:[#allocation2 + $0x168] sm:$0xff]
    %v86 = vld [vmem:[#allocation2 + $0x170] sm:$0xff]
    %v87 = vld [vmem:[#allocation2 + $0x178] sm:$0xff]
    %v88 = vld [vmem:[#allocation2 + $0x180] sm:$0xff]
    %v89 = vld [vmem:[#allocation2 + $0x188] sm:$0xff]
    %v90 = vld [vmem:[#allocation2 + $0x190] sm:$0xff]
    %v91 = vld [vmem:[#allocation2 + $0x198] sm:$0xff]
    %v92 = vld [vmem:[#allocation2 + $0x1a0] sm:$0xff]
    %v93 = vld [vmem:[#allocation2 + $0x1a8] sm:$0xff]
    %v94 = vld [vmem:[#allocation2 + $0x1b0] sm:$0xff]
    %v95 = vld [vmem:[#allocation2 + $0x1b8] sm:$0xff]
    %v96 = vld [vmem:[#allocation2 + $0x1c0] sm:$0xff]
    %v97 = vld [vmem:[#allocation2 + $0x1c8] sm:$0xff]
    %v98 = vld [vmem:[#allocation2 + $0x1d0] sm:$0xff]
    %v99 = vld [vmem:[#allocation2 + $0x1d8] sm:$0xff]
    %v100 = vld [vmem:[#allocation2 + $0x1e0] sm:$0xff]
    %v101 = vld [vmem:[#allocation2 + $0x1e8] sm:$0xff]
    %v102 = vld [vmem:[#allocation2 + $0x1f0] sm:$0xff]
    %v103 = vld [vmem:[#allocation2 + $0x1f8] sm:$0xff]
    %v104 = vld [vmem:[#allocation2 + $0x200] sm:$0xff]
    %v105 = vld [vmem:[#allocation2 + $0x208] sm:$0xff]
    %v106 = vld [vmem:[#allocation2 + $0x210] sm:$0xff]
    %v107 = vld [vmem:[#allocation2 + $0x218] sm:$0xff]
    %v108 = vld [vmem:[#allocation2 + $0x220] sm:$0xff]
    %v109 = vld [vmem:[#allocation2 + $0x228] sm:$0xff]
    %v110 = vld [vmem:[#allocation2 + $0x230] sm:$0xff]
    %v111 = vld [vmem:[#allocation2 + $0x238] sm:$0xff]
    %v112 = vld [vmem:[#allocation2 + $0x240] sm:$0xff]
    %v113 = vld [vmem:[#allocation2 + $0x248] sm:$0xff]
    %v114 = vld [vmem:[#allocation2 + $0x250] sm:$0xff]
    %v115 = vld [vmem:[#allocation2 + $0x258] sm:$0xff]
    %v116 = vld [vmem:[#allocation2 + $0x260] sm:$0xff]
    %v117 = vld [vmem:[#allocation2 + $0x268] sm:$0xff]
    %v118 = vld [vmem:[#allocation2 + $0x270] sm:$0xff]
    %v119 = vld [vmem:[#allocation2 + $0x278] sm:$0xff]
    %v120 = vld [vmem:[#allocation2 + $0x280] sm:$0xff]
    %v121 = vld [vmem:[#allocation2 + $0x288] sm:$0xff]
    %v122 = vld [vmem:[#allocation2 + $0x290] sm:$0xff]
    %v123 = vld [vmem:[#allocation2 + $0x298] sm:$0xff]
    %v124 = vld [vmem:[#allocation2 + $0x2a0] sm:$0xff]
    %v125 = vld [vmem:[#allocation2 + $0x2a8] sm:$0xff]
    %v126 = vld [vmem:[#allocation2 + $0x2b0] sm:$0xff]
    %v127 = vld [vmem:[#allocation2 + $0x2b8] sm:$0xff]
    %v128 = vld [vmem:[#allocation2 + $0x2c0] sm:$0xff]
    %v129 = vld [vmem:[#allocation2 + $0x2c8] sm:$0xff]
    %v130 = vld [vmem:[#allocation2 + $0x2d0] sm:$0xff]
    %v131 = vld [vmem:[#allocation2 + $0x2d8] sm:$0xff]
    %v132 = vld [vmem:[#allocation2 + $0x2e0] sm:$0xff]
    %v133 = vld [vmem:[#allocation2 + $0x2e8] sm:$0xff]
    %v134 = vld [vmem:[#allocation2 + $0x2f0] sm:$0xff]
    %v135 = vld [vmem:[#allocation2 + $0x2f8] sm:$0xff]
    %v136 = vld [vmem:[#allocation2 + $0x300] sm:$0xff]
    %v137 = vld [vmem:[#allocation2 + $0x308] sm:$0xff]
    %v138 = vld [vmem:[#allocation2 + $0x310] sm:$0xff]
    %v139 = vld [vmem:[#allocation2 + $0x318] sm:$0xff]
    %v140 = vld [vmem:[#allocation2 + $0x320] sm:$0xff]
    %v141 = vld [vmem:[#allocation2 + $0x328] sm:$0xff]
    %v142 = vld [vmem:[#allocation2 + $0x330] sm:$0xff]
    %v143 = vld [vmem:[#allocation2 + $0x338] sm:$0xff]
    %v144 = vld [vmem:[#allocation2 + $0x340] sm:$0xff]
    %v145 = vld [vmem:[#allocation2 + $0x348] sm:$0xff]
    %v146 = vld [vmem:[#allocation2 + $0x350] sm:$0xff]
    %v147 = vld [vmem:[#allocation2 + $0x358] sm:$0xff]
    %v148 = vld [vmem:[#allocation2 + $0x360] sm:$0xff]
    %v149 = vld [vmem:[#allocation2 + $0x368] sm:$0xff]
    %v150 = vld [vmem:[#allocation2 + $0x370] sm:$0xff]
    %v151 = vld [vmem:[#allocation2 + $0x378] sm:$0xff]
    %v152 = vld [vmem:[#allocation2 + $0x380] sm:$0xff]
    %v153 = vld [vmem:[#allocation2 + $0x388] sm:$0xff]
    %v154 = vld [vmem:[#allocation2 + $0x390] sm:$0xff]
    %v155 = vld [vmem:[#allocation2 + $0x398] sm:$0xff]
    %v156 = vld [vmem:[#allocation2 + $0x3a0] sm:$0xff]
    %v157 = vld [vmem:[#allocation2 + $0x3a8] sm:$0xff]
    %v158 = vld [vmem:[#allocation2 + $0x3b0] sm:$0xff]
    %v159 = vld [vmem:[#allocation2 + $0x3b8] sm:$0xff]
    %v160 = vld [vmem:[#allocation2 + $0x3c0] sm:$0xff]
    %v161 = vld [vmem:[#allocation2 + $0x3c8] sm:$0xff]
    %v162 = vld [vmem:[#allocation2 + $0x3d0] sm:$0xff]
    %v163 = vld [vmem:[#allocation2 + $0x3d8] sm:$0xff]
    %v164 = vld [vmem:[#allocation2 + $0x3e0] sm:$0xff]
    %v165 = vld [vmem:[#allocation2 + $0x3e8] sm:$0xff]
    %v166 = vld [vmem:[#allocation2 + $0x3f0] sm:$0xff]
    %v167 = vld [vmem:[#allocation2 + $0x3f8] sm:$0xff]
    %v168 = vld [vmem:[#allocation2 + $0x400] sm:$0xff]
    %v169 = vld [vmem:[#allocation2 + $0x408] sm:$0xff]
    %v170 = vld [vmem:[#allocation2 + $0x410] sm:$0xff]
    %v171 = vld [vmem:[#allocation2 + $0x418] sm:$0xff]
    %v172 = vld [vmem:[#allocation2 + $0x420] sm:$0xff]
    %v173 = vld [vmem:[#allocation2 + $0x428] sm:$0xff]
    %v174 = vld [vmem:[#allocation2 + $0x430] sm:$0xff]
    %v175 = vld [vmem:[#allocation2 + $0x438] sm:$0xff]
    %v176 = vld [vmem:[#allocation2 + $0x440] sm:$0xff]
    %v177 = vld [vmem:[#allocation2 + $0x448] sm:$0xff]
    %v178 = vld [vmem:[#allocation2 + $0x450] sm:$0xff]
    %v179 = vld [vmem:[#allocation2 + $0x458] sm:$0xff]
    %v180 = vld [vmem:[#allocation2 + $0x460] sm:$0xff]
    %v181 = vld [vmem:[#allocation2 + $0x468] sm:$0xff]
    %v182 = vld [vmem:[#allocation2 + $0x470] sm:$0xff]
    %v183 = vld [vmem:[#allocation2 + $0x478] sm:$0xff]
    %v184 = vld [vmem:[#allocation2 + $0x480] sm:$0xff]
    %v185 = vld [vmem:[#allocation2 + $0x488] sm:$0xff]
    %v186 = vld [vmem:[#allocation2 + $0x490] sm:$0xff]
    %v187 = vld [vmem:[#allocation2 + $0x498] sm:$0xff]
    %v188 = vld [vmem:[#allocation2 + $0x4a0] sm:$0xff]
    %v189 = vld [vmem:[#allocation2 + $0x4a8] sm:$0xff]
    %v190 = vld [vmem:[#allocation2 + $0x4b0] sm:$0xff]
    %v191 = vld [vmem:[#allocation2 + $0x4b8] sm:$0xff]
    %v192 = vld [vmem:[#allocation2 + $0x4c0] sm:$0xff]
    %v193 = vld [vmem:[#allocation2 + $0x4c8] sm:$0xff]
    %v194 = vld [vmem:[#allocation2 + $0x4d0] sm:$0xff]
    %v195 = vld [vmem:[#allocation2 + $0x4d8] sm:$0xff]
    %v196 = vld [vmem:[#allocation2 + $0x4e0] sm:$0xff]
    %v197 = vld [vmem:[#allocation2 + $0x4e8] sm:$0xff]
    %v198 = vld [vmem:[#allocation2 + $0x4f0] sm:$0xff]
    %v199 = vld [vmem:[#allocation2 + $0x4f8] sm:$0xff]
    %v200 = vld [vmem:[#allocation2 + $0x500] sm:$0xff]
    %v201 = vld [vmem:[#allocation2 + $0x508] sm:$0xff]
    %v202 = vld [vmem:[#allocation2 + $0x510] sm:$0xff]
    %v203 = vld [vmem:[#allocation2 + $0x518] sm:$0xff]
    %v204 = vld [vmem:[#allocation2 + $0x520] sm:$0xff]
    %v205 = vld [vmem:[#allocation2 + $0x528] sm:$0xff]
    %v206 = vld [vmem:[#allocation2 + $0x530] sm:$0xff]
    %v207 = vld [vmem:[#allocation2 + $0x538] sm:$0xff]
    %v208 = vld [vmem:[#allocation2 + $0x540] sm:$0xff]
    %v209 = vld [vmem:[#allocation2 + $0x548] sm:$0xff]
    %v210 = vld [vmem:[#allocation2 + $0x550] sm:$0xff]
    %v211 = vld [vmem:[#allocation2 + $0x558] sm:$0xff]
    %v212 = vld [vmem:[#allocation2 + $0x560] sm:$0xff]
    %v213 = vld [vmem:[#allocation2 + $0x568] sm:$0xff]
    %v214 = vld [vmem:[#allocation2 + $0x570] sm:$0xff]
    %v215 = vld [vmem:[#allocation2 + $0x578] sm:$0xff]
    %v216 = vld [vmem:[#allocation2 + $0x580] sm:$0xff]
    %v217 = vld [vmem:[#allocation2 + $0x588] sm:$0xff]
    %v218 = vld [vmem:[#allocation2 + $0x590] sm:$0xff]
    %v219 = vld [vmem:[#allocation2 + $0x598] sm:$0xff]
    %v220 = vld [vmem:[#allocation2 + $0x5a0] sm:$0xff]
    %v221 = vld [vmem:[#allocation2 + $0x5a8] sm:$0xff]
    %v222 = vld [vmem:[#allocation2 + $0x5b0] sm:$0xff]
    %v223 = vld [vmem:[#allocation2 + $0x5b8] sm:$0xff]
    %v224 = vld [vmem:[#allocation2 + $0x5c0] sm:$0xff]
    %v225 = vld [vmem:[#allocation2 + $0x5c8] sm:$0xff]
    %v226 = vld [vmem:[#allocation2 + $0x5d0] sm:$0xff]
    %v227 = vld [vmem:[#allocation2 + $0x5d8] sm:$0xff]
    %v228 = vld [vmem:[#allocation2 + $0x5e0] sm:$0xff]
    %v229 = vld [vmem:[#allocation2 + $0x5e8] sm:$0xff]
    %v230 = vld [vmem:[#allocation2 + $0x5f0] sm:$0xff]
    %v231 = vld [vmem:[#allocation2 + $0x5f8] sm:$0xff]
    %v232 = vld [vmem:[#allocation2 + $0x600] sm:$0xff]
    %v233 = vld [vmem:[#allocation2 + $0x608] sm:$0xff]
    %v234 = vld [vmem:[#allocation2 + $0x610] sm:$0xff]
    %v235 = vld [vmem:[#allocation2 + $0x618] sm:$0xff]
    %v236 = vld [vmem:[#allocation2 + $0x620] sm:$0xff]
    %v237 = vld [vmem:[#allocation2 + $0x628] sm:$0xff]
    %v238 = vld [vmem:[#allocation2 + $0x630] sm:$0xff]
    %v239 = vld [vmem:[#allocation2 + $0x638] sm:$0xff]
    %v240 = vld [vmem:[#allocation2 + $0x640] sm:$0xff]
    %v241 = vld [vmem:[#allocation2 + $0x648] sm:$0xff]
    %v242 = vld [vmem:[#allocation2 + $0x650] sm:$0xff]
    %v243 = vld [vmem:[#allocation2 + $0x658] sm:$0xff]
    %v244 = vld [vmem:[#allocation2 + $0x660] sm:$0xff]
    %v245 = vld [vmem:[#allocation2 + $0x668] sm:$0xff]
    %v246 = vld [vmem:[#allocation2 + $0x670] sm:$0xff]
    %v247 = vld [vmem:[#allocation2 + $0x678] sm:$0xff]
    %v248 = vld [vmem:[#allocation2 + $0x680] sm:$0xff]
    %v249 = vld [vmem:[#allocation2 + $0x688] sm:$0xff]
    %v250 = vld [vmem:[#allocation2 + $0x690] sm:$0xff]
    %v251 = vld [vmem:[#allocation2 + $0x698] sm:$0xff]
    %v252 = vld [vmem:[#allocation2 + $0x6a0] sm:$0xff]
    %v253 = vld [vmem:[#allocation2 + $0x6a8] sm:$0xff]
    %v254 = vld [vmem:[#allocation2 + $0x6b0] sm:$0xff]
    %v255 = vld [vmem:[#allocation2 + $0x6b8] sm:$0xff]
    %v256 = vld [vmem:[#allocation2 + $0x6c0] sm:$0xff]
    %v257 = vld [vmem:[#allocation2 + $0x6c8] sm:$0xff]
    %v258 = vld [vmem:[#allocation2 + $0x6d0] sm:$0xff]
    %v259 = vld [vmem:[#allocation2 + $0x6d8] sm:$0xff]
    %v260 = vld [vmem:[#allocation2 + $0x6e0] sm:$0xff]
    %v261 = vld [vmem:[#allocation2 + $0x6e8] sm:$0xff]
    %v262 = vld [vmem:[#allocation2 + $0x6f0] sm:$0xff]
    %v263 = vld [vmem:[#allocation2 + $0x6f8] sm:$0xff]
    %v264 = vld [vmem:[#allocation2 + $0x700] sm:$0xff]
    %v265 = vld [vmem:[#allocation2 + $0x708] sm:$0xff]
    %v266 = vld [vmem:[#allocation2 + $0x710] sm:$0xff]
    %v267 = vld [vmem:[#allocation2 + $0x718] sm:$0xff]
    %v268 = vld [vmem:[#allocation2 + $0x720] sm:$0xff]
    %v269 = vld [vmem:[#allocation2 + $0x728] sm:$0xff]
    %v270 = vld [vmem:[#allocation2 + $0x730] sm:$0xff]
    %v271 = vld [vmem:[#allocation2 + $0x738] sm:$0xff]
    %v272 = vld [vmem:[#allocation2 + $0x740] sm:$0xff]
    %v273 = vld [vmem:[#allocation2 + $0x748] sm:$0xff]
    %v274 = vld [vmem:[#allocation2 + $0x750] sm:$0xff]
    %v275 = vld [vmem:[#allocation2 + $0x758] sm:$0xff]
    %v276 = vld [vmem:[#allocation2 + $0x760] sm:$0xff]
    %v277 = vld [vmem:[#allocation2 + $0x768] sm:$0xff]
    %v278 = vld [vmem:[#allocation2 + $0x770] sm:$0xff]
    %v279 = vld [vmem:[#allocation2 + $0x778] sm:$0xff]
    %v280 = vld [vmem:[#allocation2 + $0x780] sm:$0xff]
    %v281 = vld [vmem:[#allocation2 + $0x788] sm:$0xff]
    %v282 = vld [vmem:[#allocation2 + $0x790] sm:$0xff]
    %v283 = vld [vmem:[#allocation2 + $0x798] sm:$0xff]
    %v284 = vld [vmem:[#allocation2 + $0x7a0] sm:$0xff]
    %v285 = vld [vmem:[#allocation2 + $0x7a8] sm:$0xff]
    %v286 = vld [vmem:[#allocation2 + $0x7b0] sm:$0xff]
    %v287 = vld [vmem:[#allocation2 + $0x7b8] sm:$0xff]
    %v288 = vld [vmem:[#allocation2 + $0x7c0] sm:$0xff]
    %v289 = vld [vmem:[#allocation2 + $0x7c8] sm:$0xff]
    %v290 = vld [vmem:[#allocation2 + $0x7d0] sm:$0xff]
    %v291 = vld [vmem:[#allocation2 + $0x7d8] sm:$0xff]
    %v292 = vld [vmem:[#allocation2 + $0x7e0] sm:$0xff]
    %v293 = vld [vmem:[#allocation2 + $0x7e8] sm:$0xff]
    %v294 = vld [vmem:[#allocation2 + $0x7f0] sm:$0xff]
    %v295 = vld [vmem:[#allocation2 + $0x7f8] sm:$0xff]
    %v296 = vld [vmem:[#allocation2 + $0x800] sm:$0xff]
    %v297 = vld [vmem:[#allocation2 + $0x808] sm:$0xff]
    %v298 = vld [vmem:[#allocation2 + $0x810] sm:$0xff]
    %v299 = vld [vmem:[#allocation2 + $0x818] sm:$0xff]
    %v300 = vld [vmem:[#allocation2 + $0x820] sm:$0xff]
    %v301 = vld [vmem:[#allocation2 + $0x828] sm:$0xff]
    %v302 = vld [vmem:[#allocation2 + $0x830] sm:$0xff]
    %v303 = vld [vmem:[#allocation2 + $0x838] sm:$0xff]
    %v304 = vld [vmem:[#allocation2 + $0x840] sm:$0xff]
    %v305 = vld [vmem:[#allocation2 + $0x848] sm:$0xff]
    %v306 = vld [vmem:[#allocation2 + $0x850] sm:$0xff]
    %v307 = vld [vmem:[#allocation2 + $0x858] sm:$0xff]
    %v308 = vld [vmem:[#allocation2 + $0x860] sm:$0xff]
    %v309 = vld [vmem:[#allocation2 + $0x868] sm:$0xff]
    %v310 = vld [vmem:[#allocation2 + $0x870] sm:$0xff]
    %v311 = vld [vmem:[#allocation2 + $0x878] sm:$0xff]
    %v312 = vld [vmem:[#allocation2 + $0x880] sm:$0xff]
    %v313 = vld [vmem:[#allocation2 + $0x888] sm:$0xff]
    %v314 = vld [vmem:[#allocation2 + $0x890] sm:$0xff]
    %v315 = vld [vmem:[#allocation2 + $0x898] sm:$0xff]
    %v316 = vld [vmem:[#allocation2 + $0x8a0] sm:$0xff]
    %v317 = vld [vmem:[#allocation2 + $0x8a8] sm:$0xff]
    %v318 = vld [vmem:[#allocation2 + $0x8b0] sm:$0xff]
    %v319 = vld [vmem:[#allocation2 + $0x8b8] sm:$0xff]
    %v320 = vld [vmem:[#allocation2 + $0x8c0] sm:$0xff]
    %v321 = vld [vmem:[#allocation2 + $0x8c8] sm:$0xff]
    %v322 = vld [vmem:[#allocation2 + $0x8d0] sm:$0xff]
    %v323 = vld [vmem:[#allocation2 + $0x8d8] sm:$0xff]
    %v324 = vld [vmem:[#allocation2 + $0x8e0] sm:$0xff]
    %v325 = vld [vmem:[#allocation2 + $0x8e8] sm:$0xff]
    %v326 = vld [vmem:[#allocation2 + $0x8f0] sm:$0xff]
    %v327 = vld [vmem:[#allocation2 + $0x8f8] sm:$0xff]
    %v328 = vld [vmem:[%s2] sm:$0x3f]
    %v330 = vlaneseq
    %v331 = vshrl.u32 %v330, 7
    %v332 = vsub.s32 0, %v331
    %v333 = vrot.slane %v328, %v332
    %v334 = vlaneseq
    %v335 = vshrl.u32 %v334, 7
    %v336 = vsub.s32 1, %v335
    %v337 = vrot.slane %v328, %v336
    %v338 = vlaneseq
    %v339 = vshrl.u32 %v338, 7
    %v340 = vsub.s32 2, %v339
    %v341 = vrot.slane %v328, %v340
    %v342 = vlaneseq
    %v343 = vshrl.u32 %v342, 7
    %v344 = vsub.s32 3, %v343
    %v345 = vrot.slane %v328, %v344
    %v346 = vlaneseq
    %v347 = vshrl.u32 %v346, 7
    %v348 = vsub.s32 4, %v347
    %v349 = vrot.slane %v328, %v348
    %v350 = vlaneseq
    %v351 = vshrl.u32 %v350, 7
    %v352 = vsub.s32 5, %v351
    %v353 = vrot.slane %v328, %v352
    %v372 = vunpack.c.l.b16 %v28
    %v373 = vunpack.c.h.b16 %v28
    %v374 = vunpack.c.l.b16 %v29
    %v375 = vunpack.c.h.b16 %v29
    %v376 = vunpack.c.l.b16 %v30
    %v377 = vunpack.c.h.b16 %v30
    %v378 = vunpack.c.l.b16 %v31
    %v379 = vunpack.c.h.b16 %v31
    %v380 = vunpack.c.l.b16 %v32
    %v381 = vunpack.c.h.b16 %v32
    %v382 = vunpack.c.l.b16 %v33
    %v383 = vunpack.c.h.b16 %v33
    %v384 = vunpack.c.l.b16 %v34
    %v385 = vunpack.c.h.b16 %v34
    %v386 = vunpack.c.l.b16 %v35
    %v387 = vunpack.c.h.b16 %v35
    %v388 = vunpack.c.l.b16 %v36
    %v389 = vunpack.c.h.b16 %v36
    %v390 = vunpack.c.l.b16 %v37
    %v391 = vunpack.c.h.b16 %v37
    %v392 = vunpack.c.l.b16 %v38
    %v393 = vunpack.c.h.b16 %v38
    %v394 = vunpack.c.l.b16 %v39
    %v395 = vunpack.c.h.b16 %v39
    %v396 = vpack.c.b16 %v378, %v372
    %v397 = vpack.c.b16 %v379, %v373
    %v398 = vpack.c.b16 %v380, %v374
    %v399 = vpack.c.b16 %v381, %v375
    %v400 = vpack.c.b16 %v382, %v376
    %v401 = vpack.c.b16 %v383, %v377
    %v402 = vpack.c.b16 %v390, %v384
    %v403 = vpack.c.b16 %v391, %v385
    %v404 = vpack.c.b16 %v392, %v386
    %v405 = vpack.c.b16 %v393, %v387
    %v406 = vpack.c.b16 %v394, %v388
    %v407 = vpack.c.b16 %v395, %v389
    %v708 = vunpack.c.l.b16 %v40
    %v709 = vunpack.c.h.b16 %v40
    %v710 = vunpack.c.l.b16 %v41
    %v711 = vunpack.c.h.b16 %v41
    %v712 = vunpack.c.l.b16 %v42
    %v713 = vunpack.c.h.b16 %v42
    %v714 = vunpack.c.l.b16 %v43
    %v715 = vunpack.c.h.b16 %v43
    %v716 = vunpack.c.l.b16 %v44
    %v717 = vunpack.c.h.b16 %v44
    %v718 = vunpack.c.l.b16 %v45
    %v719 = vunpack.c.h.b16 %v45
    %v720 = vunpack.c.l.b16 %v46
    %v721 = vunpack.c.h.b16 %v46
    %v722 = vunpack.c.l.b16 %v47
    %v723 = vunpack.c.h.b16 %v47
    %v724 = vunpack.c.l.b16 %v48
    %v725 = vunpack.c.h.b16 %v48
    %v726 = vunpack.c.l.b16 %v49
    %v727 = vunpack.c.h.b16 %v49
    %v728 = vunpack.c.l.b16 %v50
    %v729 = vunpack.c.h.b16 %v50
    %v730 = vunpack.c.l.b16 %v51
    %v731 = vunpack.c.h.b16 %v51
    %v732 = vunpack.c.l.b16 %v52
    %v733 = vunpack.c.h.b16 %v52
    %v734 = vunpack.c.l.b16 %v53
    %v735 = vunpack.c.h.b16 %v53
    %v736 = vunpack.c.l.b16 %v54
    %v737 = vunpack.c.h.b16 %v54
    %v738 = vunpack.c.l.b16 %v55
    %v739 = vunpack.c.h.b16 %v55
    %v740 = vunpack.c.l.b16 %v56
    %v741 = vunpack.c.h.b16 %v56
    %v742 = vunpack.c.l.b16 %v57
    %v743 = vunpack.c.h.b16 %v57
    %v744 = vunpack.c.l.b16 %v58
    %v745 = vunpack.c.h.b16 %v58
    %v746 = vunpack.c.l.b16 %v59
    %v747 = vunpack.c.h.b16 %v59
    %v748 = vunpack.c.l.b16 %v60
    %v749 = vunpack.c.h.b16 %v60
    %v750 = vunpack.c.l.b16 %v61
    %v751 = vunpack.c.h.b16 %v61
    %v752 = vunpack.c.l.b16 %v62
    %v753 = vunpack.c.h.b16 %v62
    %v754 = vunpack.c.l.b16 %v63
    %v755 = vunpack.c.h.b16 %v63
    %v756 = vunpack.c.l.b16 %v64
    %v757 = vunpack.c.h.b16 %v64
    %v758 = vunpack.c.l.b16 %v65
    %v759 = vunpack.c.h.b16 %v65
    %v760 = vunpack.c.l.b16 %v66
    %v761 = vunpack.c.h.b16 %v66
    %v762 = vunpack.c.l.b16 %v67
    %v763 = vunpack.c.h.b16 %v67
    %v764 = vunpack.c.l.b16 %v68
    %v765 = vunpack.c.h.b16 %v68
    %v766 = vunpack.c.l.b16 %v69
    %v767 = vunpack.c.h.b16 %v69
    %v768 = vunpack.c.l.b16 %v70
    %v769 = vunpack.c.h.b16 %v70
    %v770 = vunpack.c.l.b16 %v71
    %v771 = vunpack.c.h.b16 %v71
    %v772 = vunpack.c.l.b16 %v72
    %v773 = vunpack.c.h.b16 %v72
    %v774 = vunpack.c.l.b16 %v73
    %v775 = vunpack.c.h.b16 %v73
    %v776 = vunpack.c.l.b16 %v74
    %v777 = vunpack.c.h.b16 %v74
    %v778 = vunpack.c.l.b16 %v75
    %v779 = vunpack.c.h.b16 %v75
    %v780 = vunpack.c.l.b16 %v76
    %v781 = vunpack.c.h.b16 %v76
    %v782 = vunpack.c.l.b16 %v77
    %v783 = vunpack.c.h.b16 %v77
    %v784 = vunpack.c.l.b16 %v78
    %v785 = vunpack.c.h.b16 %v78
    %v786 = vunpack.c.l.b16 %v79
    %v787 = vunpack.c.h.b16 %v79
    %v788 = vunpack.c.l.b16 %v80
    %v789 = vunpack.c.h.b16 %v80
    %v790 = vunpack.c.l.b16 %v81
    %v791 = vunpack.c.h.b16 %v81
    %v792 = vunpack.c.l.b16 %v82
    %v793 = vunpack.c.h.b16 %v82
    %v794 = vunpack.c.l.b16 %v83
    %v795 = vunpack.c.h.b16 %v83
    %v796 = vunpack.c.l.b16 %v84
    %v797 = vunpack.c.h.b16 %v84
    %v798 = vunpack.c.l.b16 %v85
    %v799 = vunpack.c.h.b16 %v85
    %v800 = vunpack.c.l.b16 %v86
    %v801 = vunpack.c.h.b16 %v86
    %v802 = vunpack.c.l.b16 %v87
    %v803 = vunpack.c.h.b16 %v87
    %v804 = vunpack.c.l.b16 %v88
    %v805 = vunpack.c.h.b16 %v88
    %v806 = vunpack.c.l.b16 %v89
    %v807 = vunpack.c.h.b16 %v89
    %v808 = vunpack.c.l.b16 %v90
    %v809 = vunpack.c.h.b16 %v90
    %v810 = vunpack.c.l.b16 %v91
    %v811 = vunpack.c.h.b16 %v91
    %v812 = vunpack.c.l.b16 %v92
    %v813 = vunpack.c.h.b16 %v92
    %v814 = vunpack.c.l.b16 %v93
    %v815 = vunpack.c.h.b16 %v93
    %v816 = vunpack.c.l.b16 %v94
    %v817 = vunpack.c.h.b16 %v94
    %v818 = vunpack.c.l.b16 %v95
    %v819 = vunpack.c.h.b16 %v95
    %v820 = vunpack.c.l.b16 %v96
    %v821 = vunpack.c.h.b16 %v96
    %v822 = vunpack.c.l.b16 %v97
    %v823 = vunpack.c.h.b16 %v97
    %v824 = vunpack.c.l.b16 %v98
    %v825 = vunpack.c.h.b16 %v98
    %v826 = vunpack.c.l.b16 %v99
    %v827 = vunpack.c.h.b16 %v99
    %v828 = vunpack.c.l.b16 %v100
    %v829 = vunpack.c.h.b16 %v100
    %v830 = vunpack.c.l.b16 %v101
    %v831 = vunpack.c.h.b16 %v101
    %v832 = vunpack.c.l.b16 %v102
    %v833 = vunpack.c.h.b16 %v102
    %v834 = vunpack.c.l.b16 %v103
    %v835 = vunpack.c.h.b16 %v103
    %v836 = vunpack.c.l.b16 %v104
    %v837 = vunpack.c.h.b16 %v104
    %v838 = vunpack.c.l.b16 %v105
    %v839 = vunpack.c.h.b16 %v105
    %v840 = vunpack.c.l.b16 %v106
    %v841 = vunpack.c.h.b16 %v106
    %v842 = vunpack.c.l.b16 %v107
    %v843 = vunpack.c.h.b16 %v107
    %v844 = vunpack.c.l.b16 %v108
    %v845 = vunpack.c.h.b16 %v108
    %v846 = vunpack.c.l.b16 %v109
    %v847 = vunpack.c.h.b16 %v109
    %v848 = vunpack.c.l.b16 %v110
    %v849 = vunpack.c.h.b16 %v110
    %v850 = vunpack.c.l.b16 %v111
    %v851 = vunpack.c.h.b16 %v111
    %v852 = vunpack.c.l.b16 %v112
    %v853 = vunpack.c.h.b16 %v112
    %v854 = vunpack.c.l.b16 %v113
    %v855 = vunpack.c.h.b16 %v113
    %v856 = vunpack.c.l.b16 %v114
    %v857 = vunpack.c.h.b16 %v114
    %v858 = vunpack.c.l.b16 %v115
    %v859 = vunpack.c.h.b16 %v115
    %v860 = vunpack.c.l.b16 %v116
    %v861 = vunpack.c.h.b16 %v116
    %v862 = vunpack.c.l.b16 %v117
    %v863 = vunpack.c.h.b16 %v117
    %v864 = vunpack.c.l.b16 %v118
    %v865 = vunpack.c.h.b16 %v118
    %v866 = vunpack.c.l.b16 %v119
    %v867 = vunpack.c.h.b16 %v119
    %v868 = vunpack.c.l.b16 %v120
    %v869 = vunpack.c.h.b16 %v120
    %v870 = vunpack.c.l.b16 %v121
    %v871 = vunpack.c.h.b16 %v121
    %v872 = vunpack.c.l.b16 %v122
    %v873 = vunpack.c.h.b16 %v122
    %v874 = vunpack.c.l.b16 %v123
    %v875 = vunpack.c.h.b16 %v123
    %v876 = vunpack.c.l.b16 %v124
    %v877 = vunpack.c.h.b16 %v124
    %v878 = vunpack.c.l.b16 %v125
    %v879 = vunpack.c.h.b16 %v125
    %v880 = vunpack.c.l.b16 %v126
    %v881 = vunpack.c.h.b16 %v126
    %v882 = vunpack.c.l.b16 %v127
    %v883 = vunpack.c.h.b16 %v127
    %v884 = vunpack.c.l.b16 %v128
    %v885 = vunpack.c.h.b16 %v128
    %v886 = vunpack.c.l.b16 %v129
    %v887 = vunpack.c.h.b16 %v129
    %v888 = vunpack.c.l.b16 %v130
    %v889 = vunpack.c.h.b16 %v130
    %v890 = vunpack.c.l.b16 %v131
    %v891 = vunpack.c.h.b16 %v131
    %v892 = vunpack.c.l.b16 %v132
    %v893 = vunpack.c.h.b16 %v132
    %v894 = vunpack.c.l.b16 %v133
    %v895 = vunpack.c.h.b16 %v133
    %v896 = vunpack.c.l.b16 %v134
    %v897 = vunpack.c.h.b16 %v134
    %v898 = vunpack.c.l.b16 %v135
    %v899 = vunpack.c.h.b16 %v135
    %v900 = vunpack.c.l.b16 %v136
    %v901 = vunpack.c.h.b16 %v136
    %v902 = vunpack.c.l.b16 %v137
    %v903 = vunpack.c.h.b16 %v137
    %v904 = vunpack.c.l.b16 %v138
    %v905 = vunpack.c.h.b16 %v138
    %v906 = vunpack.c.l.b16 %v139
    %v907 = vunpack.c.h.b16 %v139
    %v908 = vunpack.c.l.b16 %v140
    %v909 = vunpack.c.h.b16 %v140
    %v910 = vunpack.c.l.b16 %v141
    %v911 = vunpack.c.h.b16 %v141
    %v912 = vunpack.c.l.b16 %v142
    %v913 = vunpack.c.h.b16 %v142
    %v914 = vunpack.c.l.b16 %v143
    %v915 = vunpack.c.h.b16 %v143
    %v916 = vunpack.c.l.b16 %v144
    %v917 = vunpack.c.h.b16 %v144
    %v918 = vunpack.c.l.b16 %v145
    %v919 = vunpack.c.h.b16 %v145
    %v920 = vunpack.c.l.b16 %v146
    %v921 = vunpack.c.h.b16 %v146
    %v922 = vunpack.c.l.b16 %v147
    %v923 = vunpack.c.h.b16 %v147
    %v924 = vunpack.c.l.b16 %v148
    %v925 = vunpack.c.h.b16 %v148
    %v926 = vunpack.c.l.b16 %v149
    %v927 = vunpack.c.h.b16 %v149
    %v928 = vunpack.c.l.b16 %v150
    %v929 = vunpack.c.h.b16 %v150
    %v930 = vunpack.c.l.b16 %v151
    %v931 = vunpack.c.h.b16 %v151
    %v932 = vunpack.c.l.b16 %v152
    %v933 = vunpack.c.h.b16 %v152
    %v934 = vunpack.c.l.b16 %v153
    %v935 = vunpack.c.h.b16 %v153
    %v936 = vunpack.c.l.b16 %v154
    %v937 = vunpack.c.h.b16 %v154
    %v938 = vunpack.c.l.b16 %v155
    %v939 = vunpack.c.h.b16 %v155
    %v940 = vunpack.c.l.b16 %v156
    %v941 = vunpack.c.h.b16 %v156
    %v942 = vunpack.c.l.b16 %v157
    %v943 = vunpack.c.h.b16 %v157
    %v944 = vunpack.c.l.b16 %v158
    %v945 = vunpack.c.h.b16 %v158
    %v946 = vunpack.c.l.b16 %v159
    %v947 = vunpack.c.h.b16 %v159
    %v948 = vunpack.c.l.b16 %v160
    %v949 = vunpack.c.h.b16 %v160
    %v950 = vunpack.c.l.b16 %v161
    %v951 = vunpack.c.h.b16 %v161
    %v952 = vunpack.c.l.b16 %v162
    %v953 = vunpack.c.h.b16 %v162
    %v954 = vunpack.c.l.b16 %v163
    %v955 = vunpack.c.h.b16 %v163
    %v956 = vunpack.c.l.b16 %v164
    %v957 = vunpack.c.h.b16 %v164
    %v958 = vunpack.c.l.b16 %v165
    %v959 = vunpack.c.h.b16 %v165
    %v960 = vunpack.c.l.b16 %v166
    %v961 = vunpack.c.h.b16 %v166
    %v962 = vunpack.c.l.b16 %v167
    %v963 = vunpack.c.h.b16 %v167
    %v964 = vunpack.c.l.b16 %v168
    %v965 = vunpack.c.h.b16 %v168
    %v966 = vunpack.c.l.b16 %v169
    %v967 = vunpack.c.h.b16 %v169
    %v968 = vunpack.c.l.b16 %v170
    %v969 = vunpack.c.h.b16 %v170
    %v970 = vunpack.c.l.b16 %v171
    %v971 = vunpack.c.h.b16 %v171
    %v972 = vunpack.c.l.b16 %v172
    %v973 = vunpack.c.h.b16 %v172
    %v974 = vunpack.c.l.b16 %v173
    %v975 = vunpack.c.h.b16 %v173
    %v976 = vunpack.c.l.b16 %v174
    %v977 = vunpack.c.h.b16 %v174
    %v978 = vunpack.c.l.b16 %v175
    %v979 = vunpack.c.h.b16 %v175
    %v980 = vunpack.c.l.b16 %v176
    %v981 = vunpack.c.h.b16 %v176
    %v982 = vunpack.c.l.b16 %v177
    %v983 = vunpack.c.h.b16 %v177
    %v984 = vunpack.c.l.b16 %v178
    %v985 = vunpack.c.h.b16 %v178
    %v986 = vunpack.c.l.b16 %v179
    %v987 = vunpack.c.h.b16 %v179
    %v988 = vunpack.c.l.b16 %v180
    %v989 = vunpack.c.h.b16 %v180
    %v990 = vunpack.c.l.b16 %v181
    %v991 = vunpack.c.h.b16 %v181
    %v992 = vunpack.c.l.b16 %v182
    %v993 = vunpack.c.h.b16 %v182
    %v994 = vunpack.c.l.b16 %v183
    %v995 = vunpack.c.h.b16 %v183
    %v996 = vunpack.c.l.b16 %v184
    %v997 = vunpack.c.h.b16 %v184
    %v998 = vunpack.c.l.b16 %v185
    %v999 = vunpack.c.h.b16 %v185
    %v1000 = vunpack.c.l.b16 %v186
    %v1001 = vunpack.c.h.b16 %v186
    %v1002 = vunpack.c.l.b16 %v187
    %v1003 = vunpack.c.h.b16 %v187
    %v1004 = vunpack.c.l.b16 %v188
    %v1005 = vunpack.c.h.b16 %v188
    %v1006 = vunpack.c.l.b16 %v189
    %v1007 = vunpack.c.h.b16 %v189
    %v1008 = vunpack.c.l.b16 %v190
    %v1009 = vunpack.c.h.b16 %v190
    %v1010 = vunpack.c.l.b16 %v191
    %v1011 = vunpack.c.h.b16 %v191
    %v1012 = vunpack.c.l.b16 %v192
    %v1013 = vunpack.c.h.b16 %v192
    %v1014 = vunpack.c.l.b16 %v193
    %v1015 = vunpack.c.h.b16 %v193
    %v1016 = vunpack.c.l.b16 %v194
    %v1017 = vunpack.c.h.b16 %v194
    %v1018 = vunpack.c.l.b16 %v195
    %v1019 = vunpack.c.h.b16 %v195
    %v1020 = vunpack.c.l.b16 %v196
    %v1021 = vunpack.c.h.b16 %v196
    %v1022 = vunpack.c.l.b16 %v197
    %v1023 = vunpack.c.h.b16 %v197
    %v1024 = vunpack.c.l.b16 %v198
    %v1025 = vunpack.c.h.b16 %v198
    %v1026 = vunpack.c.l.b16 %v199
    %v1027 = vunpack.c.h.b16 %v199
    %v1028 = vunpack.c.l.b16 %v200
    %v1029 = vunpack.c.h.b16 %v200
    %v1030 = vunpack.c.l.b16 %v201
    %v1031 = vunpack.c.h.b16 %v201
    %v1032 = vunpack.c.l.b16 %v202
    %v1033 = vunpack.c.h.b16 %v202
    %v1034 = vunpack.c.l.b16 %v203
    %v1035 = vunpack.c.h.b16 %v203
    %v1036 = vunpack.c.l.b16 %v204
    %v1037 = vunpack.c.h.b16 %v204
    %v1038 = vunpack.c.l.b16 %v205
    %v1039 = vunpack.c.h.b16 %v205
    %v1040 = vunpack.c.l.b16 %v206
    %v1041 = vunpack.c.h.b16 %v206
    %v1042 = vunpack.c.l.b16 %v207
    %v1043 = vunpack.c.h.b16 %v207
    %v1044 = vunpack.c.l.b16 %v208
    %v1045 = vunpack.c.h.b16 %v208
    %v1046 = vunpack.c.l.b16 %v209
    %v1047 = vunpack.c.h.b16 %v209
    %v1048 = vunpack.c.l.b16 %v210
    %v1049 = vunpack.c.h.b16 %v210
    %v1050 = vunpack.c.l.b16 %v211
    %v1051 = vunpack.c.h.b16 %v211
    %v1052 = vunpack.c.l.b16 %v212
    %v1053 = vunpack.c.h.b16 %v212
    %v1054 = vunpack.c.l.b16 %v213
    %v1055 = vunpack.c.h.b16 %v213
    %v1056 = vunpack.c.l.b16 %v214
    %v1057 = vunpack.c.h.b16 %v214
    %v1058 = vunpack.c.l.b16 %v215
    %v1059 = vunpack.c.h.b16 %v215
    %v1060 = vunpack.c.l.b16 %v216
    %v1061 = vunpack.c.h.b16 %v216
    %v1062 = vunpack.c.l.b16 %v217
    %v1063 = vunpack.c.h.b16 %v217
    %v1064 = vunpack.c.l.b16 %v218
    %v1065 = vunpack.c.h.b16 %v218
    %v1066 = vunpack.c.l.b16 %v219
    %v1067 = vunpack.c.h.b16 %v219
    %v1068 = vunpack.c.l.b16 %v220
    %v1069 = vunpack.c.h.b16 %v220
    %v1070 = vunpack.c.l.b16 %v221
    %v1071 = vunpack.c.h.b16 %v221
    %v1072 = vunpack.c.l.b16 %v222
    %v1073 = vunpack.c.h.b16 %v222
    %v1074 = vunpack.c.l.b16 %v223
    %v1075 = vunpack.c.h.b16 %v223
    %v1076 = vunpack.c.l.b16 %v224
    %v1077 = vunpack.c.h.b16 %v224
    %v1078 = vunpack.c.l.b16 %v225
    %v1079 = vunpack.c.h.b16 %v225
    %v1080 = vunpack.c.l.b16 %v226
    %v1081 = vunpack.c.h.b16 %v226
    %v1082 = vunpack.c.l.b16 %v227
    %v1083 = vunpack.c.h.b16 %v227
    %v1084 = vunpack.c.l.b16 %v228
    %v1085 = vunpack.c.h.b16 %v228
    %v1086 = vunpack.c.l.b16 %v229
    %v1087 = vunpack.c.h.b16 %v229
    %v1088 = vunpack.c.l.b16 %v230
    %v1089 = vunpack.c.h.b16 %v230
    %v1090 = vunpack.c.l.b16 %v231
    %v1091 = vunpack.c.h.b16 %v231
    %v1092 = vunpack.c.l.b16 %v232
    %v1093 = vunpack.c.h.b16 %v232
    %v1094 = vunpack.c.l.b16 %v233
    %v1095 = vunpack.c.h.b16 %v233
    %v1096 = vunpack.c.l.b16 %v234
    %v1097 = vunpack.c.h.b16 %v234
    %v1098 = vunpack.c.l.b16 %v235
    %v1099 = vunpack.c.h.b16 %v235
    %v1100 = vunpack.c.l.b16 %v236
    %v1101 = vunpack.c.h.b16 %v236
    %v1102 = vunpack.c.l.b16 %v237
    %v1103 = vunpack.c.h.b16 %v237
    %v1104 = vunpack.c.l.b16 %v238
    %v1105 = vunpack.c.h.b16 %v238
    %v1106 = vunpack.c.l.b16 %v239
    %v1107 = vunpack.c.h.b16 %v239
    %v1108 = vunpack.c.l.b16 %v240
    %v1109 = vunpack.c.h.b16 %v240
    %v1110 = vunpack.c.l.b16 %v241
    %v1111 = vunpack.c.h.b16 %v241
    %v1112 = vunpack.c.l.b16 %v242
    %v1113 = vunpack.c.h.b16 %v242
    %v1114 = vunpack.c.l.b16 %v243
    %v1115 = vunpack.c.h.b16 %v243
    %v1116 = vunpack.c.l.b16 %v244
    %v1117 = vunpack.c.h.b16 %v244
    %v1118 = vunpack.c.l.b16 %v245
    %v1119 = vunpack.c.h.b16 %v245
    %v1120 = vunpack.c.l.b16 %v246
    %v1121 = vunpack.c.h.b16 %v246
    %v1122 = vunpack.c.l.b16 %v247
    %v1123 = vunpack.c.h.b16 %v247
    %v1124 = vunpack.c.l.b16 %v248
    %v1125 = vunpack.c.h.b16 %v248
    %v1126 = vunpack.c.l.b16 %v249
    %v1127 = vunpack.c.h.b16 %v249
    %v1128 = vunpack.c.l.b16 %v250
    %v1129 = vunpack.c.h.b16 %v250
    %v1130 = vunpack.c.l.b16 %v251
    %v1131 = vunpack.c.h.b16 %v251
    %v1132 = vunpack.c.l.b16 %v252
    %v1133 = vunpack.c.h.b16 %v252
    %v1134 = vunpack.c.l.b16 %v253
    %v1135 = vunpack.c.h.b16 %v253
    %v1136 = vunpack.c.l.b16 %v254
    %v1137 = vunpack.c.h.b16 %v254
    %v1138 = vunpack.c.l.b16 %v255
    %v1139 = vunpack.c.h.b16 %v255
    %v1140 = vunpack.c.l.b16 %v256
    %v1141 = vunpack.c.h.b16 %v256
    %v1142 = vunpack.c.l.b16 %v257
    %v1143 = vunpack.c.h.b16 %v257
    %v1144 = vunpack.c.l.b16 %v258
    %v1145 = vunpack.c.h.b16 %v258
    %v1146 = vunpack.c.l.b16 %v259
    %v1147 = vunpack.c.h.b16 %v259
    %v1148 = vunpack.c.l.b16 %v260
    %v1149 = vunpack.c.h.b16 %v260
    %v1150 = vunpack.c.l.b16 %v261
    %v1151 = vunpack.c.h.b16 %v261
    %v1152 = vunpack.c.l.b16 %v262
    %v1153 = vunpack.c.h.b16 %v262
    %v1154 = vunpack.c.l.b16 %v263
    %v1155 = vunpack.c.h.b16 %v263
    %v1156 = vunpack.c.l.b16 %v264
    %v1157 = vunpack.c.h.b16 %v264
    %v1158 = vunpack.c.l.b16 %v265
    %v1159 = vunpack.c.h.b16 %v265
    %v1160 = vunpack.c.l.b16 %v266
    %v1161 = vunpack.c.h.b16 %v266
    %v1162 = vunpack.c.l.b16 %v267
    %v1163 = vunpack.c.h.b16 %v267
    %v1164 = vunpack.c.l.b16 %v268
    %v1165 = vunpack.c.h.b16 %v268
    %v1166 = vunpack.c.l.b16 %v269
    %v1167 = vunpack.c.h.b16 %v269
    %v1168 = vunpack.c.l.b16 %v270
    %v1169 = vunpack.c.h.b16 %v270
    %v1170 = vunpack.c.l.b16 %v271
    %v1171 = vunpack.c.h.b16 %v271
    %v1172 = vunpack.c.l.b16 %v272
    %v1173 = vunpack.c.h.b16 %v272
    %v1174 = vunpack.c.l.b16 %v273
    %v1175 = vunpack.c.h.b16 %v273
    %v1176 = vunpack.c.l.b16 %v274
    %v1177 = vunpack.c.h.b16 %v274
    %v1178 = vunpack.c.l.b16 %v275
    %v1179 = vunpack.c.h.b16 %v275
    %v1180 = vunpack.c.l.b16 %v276
    %v1181 = vunpack.c.h.b16 %v276
    %v1182 = vunpack.c.l.b16 %v277
    %v1183 = vunpack.c.h.b16 %v277
    %v1184 = vunpack.c.l.b16 %v278
    %v1185 = vunpack.c.h.b16 %v278
    %v1186 = vunpack.c.l.b16 %v279
    %v1187 = vunpack.c.h.b16 %v279
    %v1188 = vunpack.c.l.b16 %v280
    %v1189 = vunpack.c.h.b16 %v280
    %v1190 = vunpack.c.l.b16 %v281
    %v1191 = vunpack.c.h.b16 %v281
    %v1192 = vunpack.c.l.b16 %v282
    %v1193 = vunpack.c.h.b16 %v282
    %v1194 = vunpack.c.l.b16 %v283
    %v1195 = vunpack.c.h.b16 %v283
    %v1196 = vunpack.c.l.b16 %v284
    %v1197 = vunpack.c.h.b16 %v284
    %v1198 = vunpack.c.l.b16 %v285
    %v1199 = vunpack.c.h.b16 %v285
    %v1200 = vunpack.c.l.b16 %v286
    %v1201 = vunpack.c.h.b16 %v286
    %v1202 = vunpack.c.l.b16 %v287
    %v1203 = vunpack.c.h.b16 %v287
    %v1204 = vunpack.c.l.b16 %v288
    %v1205 = vunpack.c.h.b16 %v288
    %v1206 = vunpack.c.l.b16 %v289
    %v1207 = vunpack.c.h.b16 %v289
    %v1208 = vunpack.c.l.b16 %v290
    %v1209 = vunpack.c.h.b16 %v290
    %v1210 = vunpack.c.l.b16 %v291
    %v1211 = vunpack.c.h.b16 %v291
    %v1212 = vunpack.c.l.b16 %v292
    %v1213 = vunpack.c.h.b16 %v292
    %v1214 = vunpack.c.l.b16 %v293
    %v1215 = vunpack.c.h.b16 %v293
    %v1216 = vunpack.c.l.b16 %v294
    %v1217 = vunpack.c.h.b16 %v294
    %v1218 = vunpack.c.l.b16 %v295
    %v1219 = vunpack.c.h.b16 %v295
    %v1220 = vunpack.c.l.b16 %v296
    %v1221 = vunpack.c.h.b16 %v296
    %v1222 = vunpack.c.l.b16 %v297
    %v1223 = vunpack.c.h.b16 %v297
    %v1224 = vunpack.c.l.b16 %v298
    %v1225 = vunpack.c.h.b16 %v298
    %v1226 = vunpack.c.l.b16 %v299
    %v1227 = vunpack.c.h.b16 %v299
    %v1228 = vunpack.c.l.b16 %v300
    %v1229 = vunpack.c.h.b16 %v300
    %v1230 = vunpack.c.l.b16 %v301
    %v1231 = vunpack.c.h.b16 %v301
    %v1232 = vunpack.c.l.b16 %v302
    %v1233 = vunpack.c.h.b16 %v302
    %v1234 = vunpack.c.l.b16 %v303
    %v1235 = vunpack.c.h.b16 %v303
    %v1236 = vunpack.c.l.b16 %v304
    %v1237 = vunpack.c.h.b16 %v304
    %v1238 = vunpack.c.l.b16 %v305
    %v1239 = vunpack.c.h.b16 %v305
    %v1240 = vunpack.c.l.b16 %v306
    %v1241 = vunpack.c.h.b16 %v306
    %v1242 = vunpack.c.l.b16 %v307
    %v1243 = vunpack.c.h.b16 %v307
    %v1244 = vunpack.c.l.b16 %v308
    %v1245 = vunpack.c.h.b16 %v308
    %v1246 = vunpack.c.l.b16 %v309
    %v1247 = vunpack.c.h.b16 %v309
    %v1248 = vunpack.c.l.b16 %v310
    %v1249 = vunpack.c.h.b16 %v310
    %v1250 = vunpack.c.l.b16 %v311
    %v1251 = vunpack.c.h.b16 %v311
    %v1252 = vunpack.c.l.b16 %v312
    %v1253 = vunpack.c.h.b16 %v312
    %v1254 = vunpack.c.l.b16 %v313
    %v1255 = vunpack.c.h.b16 %v313
    %v1256 = vunpack.c.l.b16 %v314
    %v1257 = vunpack.c.h.b16 %v314
    %v1258 = vunpack.c.l.b16 %v315
    %v1259 = vunpack.c.h.b16 %v315
    %v1260 = vunpack.c.l.b16 %v316
    %v1261 = vunpack.c.h.b16 %v316
    %v1262 = vunpack.c.l.b16 %v317
    %v1263 = vunpack.c.h.b16 %v317
    %v1264 = vunpack.c.l.b16 %v318
    %v1265 = vunpack.c.h.b16 %v318
    %v1266 = vunpack.c.l.b16 %v319
    %v1267 = vunpack.c.h.b16 %v319
    %v1268 = vunpack.c.l.b16 %v320
    %v1269 = vunpack.c.h.b16 %v320
    %v1270 = vunpack.c.l.b16 %v321
    %v1271 = vunpack.c.h.b16 %v321
    %v1272 = vunpack.c.l.b16 %v322
    %v1273 = vunpack.c.h.b16 %v322
    %v1274 = vunpack.c.l.b16 %v323
    %v1275 = vunpack.c.h.b16 %v323
    %v1276 = vunpack.c.l.b16 %v324
    %v1277 = vunpack.c.h.b16 %v324
    %v1278 = vunpack.c.l.b16 %v325
    %v1279 = vunpack.c.h.b16 %v325
    %v1280 = vunpack.c.l.b16 %v326
    %v1281 = vunpack.c.h.b16 %v326
    %v1282 = vunpack.c.l.b16 %v327
    %v1283 = vunpack.c.h.b16 %v327
    %v1284 = vpack.c.b16 %v714, %v708
    %v1285 = vpack.c.b16 %v715, %v709
    %v1286 = vpack.c.b16 %v716, %v710
    %v1287 = vpack.c.b16 %v717, %v711
    %v1288 = vpack.c.b16 %v718, %v712
    %v1289 = vpack.c.b16 %v719, %v713
    %v1290 = vpack.c.b16 %v726, %v720
    %v1291 = vpack.c.b16 %v727, %v721
    %v1292 = vpack.c.b16 %v728, %v722
    %v1293 = vpack.c.b16 %v729, %v723
    %v1294 = vpack.c.b16 %v730, %v724
    %v1295 = vpack.c.b16 %v731, %v725
    %v1296 = vpack.c.b16 %v738, %v732
    %v1297 = vpack.c.b16 %v739, %v733
    %v1298 = vpack.c.b16 %v740, %v734
    %v1299 = vpack.c.b16 %v741, %v735
    %v1300 = vpack.c.b16 %v742, %v736
    %v1301 = vpack.c.b16 %v743, %v737
    %v1302 = vpack.c.b16 %v750, %v744
    %v1303 = vpack.c.b16 %v751, %v745
    %v1304 = vpack.c.b16 %v752, %v746
    %v1305 = vpack.c.b16 %v753, %v747
    %v1306 = vpack.c.b16 %v754, %v748
    %v1307 = vpack.c.b16 %v755, %v749
    %v1308 = vpack.c.b16 %v762, %v756
    %v1309 = vpack.c.b16 %v763, %v757
    %v1310 = vpack.c.b16 %v764, %v758
    %v1311 = vpack.c.b16 %v765, %v759
    %v1312 = vpack.c.b16 %v766, %v760
    %v1313 = vpack.c.b16 %v767, %v761
    %v1314 = vpack.c.b16 %v774, %v768
    %v1315 = vpack.c.b16 %v775, %v769
    %v1316 = vpack.c.b16 %v776, %v770
    %v1317 = vpack.c.b16 %v777, %v771
    %v1318 = vpack.c.b16 %v778, %v772
    %v1319 = vpack.c.b16 %v779, %v773
    %v1320 = vpack.c.b16 %v786, %v780
    %v1321 = vpack.c.b16 %v787, %v781
    %v1322 = vpack.c.b16 %v788, %v782
    %v1323 = vpack.c.b16 %v789, %v783
    %v1324 = vpack.c.b16 %v790, %v784
    %v1325 = vpack.c.b16 %v791, %v785
    %v1326 = vpack.c.b16 %v798, %v792
    %v1327 = vpack.c.b16 %v799, %v793
    %v1328 = vpack.c.b16 %v800, %v794
    %v1329 = vpack.c.b16 %v801, %v795
    %v1330 = vpack.c.b16 %v802, %v796
    %v1331 = vpack.c.b16 %v803, %v797
    %v1332 = vpack.c.b16 %v810, %v804
    %v1333 = vpack.c.b16 %v811, %v805
    %v1334 = vpack.c.b16 %v812, %v806
    %v1335 = vpack.c.b16 %v813, %v807
    %v1336 = vpack.c.b16 %v814, %v808
    %v1337 = vpack.c.b16 %v815, %v809
    %v1338 = vpack.c.b16 %v822, %v816
    %v1339 = vpack.c.b16 %v823, %v817
    %v1340 = vpack.c.b16 %v824, %v818
    %v1341 = vpack.c.b16 %v825, %v819
    %v1342 = vpack.c.b16 %v826, %v820
    %v1343 = vpack.c.b16 %v827, %v821
    %v1344 = vpack.c.b16 %v834, %v828
    %v1345 = vpack.c.b16 %v835, %v829
    %v1346 = vpack.c.b16 %v836, %v830
    %v1347 = vpack.c.b16 %v837, %v831
    %v1348 = vpack.c.b16 %v838, %v832
    %v1349 = vpack.c.b16 %v839, %v833
    %v1350 = vpack.c.b16 %v846, %v840
    %v1351 = vpack.c.b16 %v847, %v841
    %v1352 = vpack.c.b16 %v848, %v842
    %v1353 = vpack.c.b16 %v849, %v843
    %v1354 = vpack.c.b16 %v850, %v844
    %v1355 = vpack.c.b16 %v851, %v845
    %v1356 = vpack.c.b16 %v858, %v852
    %v1357 = vpack.c.b16 %v859, %v853
    %v1358 = vpack.c.b16 %v860, %v854
    %v1359 = vpack.c.b16 %v861, %v855
    %v1360 = vpack.c.b16 %v862, %v856
    %v1361 = vpack.c.b16 %v863, %v857
    %v1362 = vpack.c.b16 %v870, %v864
    %v1363 = vpack.c.b16 %v871, %v865
    %v1364 = vpack.c.b16 %v872, %v866
    %v1365 = vpack.c.b16 %v873, %v867
    %v1366 = vpack.c.b16 %v874, %v868
    %v1367 = vpack.c.b16 %v875, %v869
    %v1368 = vpack.c.b16 %v882, %v876
    %v1369 = vpack.c.b16 %v883, %v877
    %v1370 = vpack.c.b16 %v884, %v878
    %v1371 = vpack.c.b16 %v885, %v879
    %v1372 = vpack.c.b16 %v886, %v880
    %v1373 = vpack.c.b16 %v887, %v881
    %v1374 = vpack.c.b16 %v894, %v888
    %v1375 = vpack.c.b16 %v895, %v889
    %v1376 = vpack.c.b16 %v896, %v890
    %v1377 = vpack.c.b16 %v897, %v891
    %v1378 = vpack.c.b16 %v898, %v892
    %v1379 = vpack.c.b16 %v899, %v893
    %v1380 = vpack.c.b16 %v906, %v900
    %v1381 = vpack.c.b16 %v907, %v901
    %v1382 = vpack.c.b16 %v908, %v902
    %v1383 = vpack.c.b16 %v909, %v903
    %v1384 = vpack.c.b16 %v910, %v904
    %v1385 = vpack.c.b16 %v911, %v905
    %v1386 = vpack.c.b16 %v918, %v912
    %v1387 = vpack.c.b16 %v919, %v913
    %v1388 = vpack.c.b16 %v920, %v914
    %v1389 = vpack.c.b16 %v921, %v915
    %v1390 = vpack.c.b16 %v922, %v916
    %v1391 = vpack.c.b16 %v923, %v917
    %v1392 = vpack.c.b16 %v930, %v924
    %v1393 = vpack.c.b16 %v931, %v925
    %v1394 = vpack.c.b16 %v932, %v926
    %v1395 = vpack.c.b16 %v933, %v927
    %v1396 = vpack.c.b16 %v934, %v928
    %v1397 = vpack.c.b16 %v935, %v929
    %v1398 = vpack.c.b16 %v942, %v936
    %v1399 = vpack.c.b16 %v943, %v937
    %v1400 = vpack.c.b16 %v944, %v938
    %v1401 = vpack.c.b16 %v945, %v939
    %v1402 = vpack.c.b16 %v946, %v940
    %v1403 = vpack.c.b16 %v947, %v941
    %v1404 = vpack.c.b16 %v954, %v948
    %v1405 = vpack.c.b16 %v955, %v949
    %v1406 = vpack.c.b16 %v956, %v950
    %v1407 = vpack.c.b16 %v957, %v951
    %v1408 = vpack.c.b16 %v958, %v952
    %v1409 = vpack.c.b16 %v959, %v953
    %v1410 = vpack.c.b16 %v966, %v960
    %v1411 = vpack.c.b16 %v967, %v961
    %v1412 = vpack.c.b16 %v968, %v962
    %v1413 = vpack.c.b16 %v969, %v963
    %v1414 = vpack.c.b16 %v970, %v964
    %v1415 = vpack.c.b16 %v971, %v965
    %v1416 = vpack.c.b16 %v978, %v972
    %v1417 = vpack.c.b16 %v979, %v973
    %v1418 = vpack.c.b16 %v980, %v974
    %v1419 = vpack.c.b16 %v981, %v975
    %v1420 = vpack.c.b16 %v982, %v976
    %v1421 = vpack.c.b16 %v983, %v977
    %v1422 = vpack.c.b16 %v990, %v984
    %v1423 = vpack.c.b16 %v991, %v985
    %v1424 = vpack.c.b16 %v992, %v986
    %v1425 = vpack.c.b16 %v993, %v987
    %v1426 = vpack.c.b16 %v994, %v988
    %v1427 = vpack.c.b16 %v995, %v989
    %v1428 = vpack.c.b16 %v1002, %v996
    %v1429 = vpack.c.b16 %v1003, %v997
    %v1430 = vpack.c.b16 %v1004, %v998
    %v1431 = vpack.c.b16 %v1005, %v999
    %v1432 = vpack.c.b16 %v1006, %v1000
    %v1433 = vpack.c.b16 %v1007, %v1001
    %v1434 = vpack.c.b16 %v1014, %v1008
    %v1435 = vpack.c.b16 %v1015, %v1009
    %v1436 = vpack.c.b16 %v1016, %v1010
    %v1437 = vpack.c.b16 %v1017, %v1011
    %v1438 = vpack.c.b16 %v1018, %v1012
    %v1439 = vpack.c.b16 %v1019, %v1013
    %v1440 = vpack.c.b16 %v1026, %v1020
    %v1441 = vpack.c.b16 %v1027, %v1021
    %v1442 = vpack.c.b16 %v1028, %v1022
    %v1443 = vpack.c.b16 %v1029, %v1023
    %v1444 = vpack.c.b16 %v1030, %v1024
    %v1445 = vpack.c.b16 %v1031, %v1025
    %v1446 = vpack.c.b16 %v1038, %v1032
    %v1447 = vpack.c.b16 %v1039, %v1033
    %v1448 = vpack.c.b16 %v1040, %v1034
    %v1449 = vpack.c.b16 %v1041, %v1035
    %v1450 = vpack.c.b16 %v1042, %v1036
    %v1451 = vpack.c.b16 %v1043, %v1037
    %v1452 = vpack.c.b16 %v1050, %v1044
    %v1453 = vpack.c.b16 %v1051, %v1045
    %v1454 = vpack.c.b16 %v1052, %v1046
    %v1455 = vpack.c.b16 %v1053, %v1047
    %v1456 = vpack.c.b16 %v1054, %v1048
    %v1457 = vpack.c.b16 %v1055, %v1049
    %v1458 = vpack.c.b16 %v1062, %v1056
    %v1459 = vpack.c.b16 %v1063, %v1057
    %v1460 = vpack.c.b16 %v1064, %v1058
    %v1461 = vpack.c.b16 %v1065, %v1059
    %v1462 = vpack.c.b16 %v1066, %v1060
    %v1463 = vpack.c.b16 %v1067, %v1061
    %v1464 = vpack.c.b16 %v1074, %v1068
    %v1465 = vpack.c.b16 %v1075, %v1069
    %v1466 = vpack.c.b16 %v1076, %v1070
    %v1467 = vpack.c.b16 %v1077, %v1071
    %v1468 = vpack.c.b16 %v1078, %v1072
    %v1469 = vpack.c.b16 %v1079, %v1073
    %v1470 = vpack.c.b16 %v1086, %v1080
    %v1471 = vpack.c.b16 %v1087, %v1081
    %v1472 = vpack.c.b16 %v1088, %v1082
    %v1473 = vpack.c.b16 %v1089, %v1083
    %v1474 = vpack.c.b16 %v1090, %v1084
    %v1475 = vpack.c.b16 %v1091, %v1085
    %v1476 = vpack.c.b16 %v1098, %v1092
    %v1477 = vpack.c.b16 %v1099, %v1093
    %v1478 = vpack.c.b16 %v1100, %v1094
    %v1479 = vpack.c.b16 %v1101, %v1095
    %v1480 = vpack.c.b16 %v1102, %v1096
    %v1481 = vpack.c.b16 %v1103, %v1097
    %v1482 = vpack.c.b16 %v1110, %v1104
    %v1483 = vpack.c.b16 %v1111, %v1105
    %v1484 = vpack.c.b16 %v1112, %v1106
    %v1485 = vpack.c.b16 %v1113, %v1107
    %v1486 = vpack.c.b16 %v1114, %v1108
    %v1487 = vpack.c.b16 %v1115, %v1109
    %v1488 = vpack.c.b16 %v1122, %v1116
    %v1489 = vpack.c.b16 %v1123, %v1117
    %v1490 = vpack.c.b16 %v1124, %v1118
    %v1491 = vpack.c.b16 %v1125, %v1119
    %v1492 = vpack.c.b16 %v1126, %v1120
    %v1493 = vpack.c.b16 %v1127, %v1121
    %v1494 = vpack.c.b16 %v1134, %v1128
    %v1495 = vpack.c.b16 %v1135, %v1129
    %v1496 = vpack.c.b16 %v1136, %v1130
    %v1497 = vpack.c.b16 %v1137, %v1131
    %v1498 = vpack.c.b16 %v1138, %v1132
    %v1499 = vpack.c.b16 %v1139, %v1133
    %v1500 = vpack.c.b16 %v1146, %v1140
    %v1501 = vpack.c.b16 %v1147, %v1141
    %v1502 = vpack.c.b16 %v1148, %v1142
    %v1503 = vpack.c.b16 %v1149, %v1143
    %v1504 = vpack.c.b16 %v1150, %v1144
    %v1505 = vpack.c.b16 %v1151, %v1145
    %v1506 = vpack.c.b16 %v1158, %v1152
    %v1507 = vpack.c.b16 %v1159, %v1153
    %v1508 = vpack.c.b16 %v1160, %v1154
    %v1509 = vpack.c.b16 %v1161, %v1155
    %v1510 = vpack.c.b16 %v1162, %v1156
    %v1511 = vpack.c.b16 %v1163, %v1157
    %v1512 = vpack.c.b16 %v1170, %v1164
    %v1513 = vpack.c.b16 %v1171, %v1165
    %v1514 = vpack.c.b16 %v1172, %v1166
    %v1515 = vpack.c.b16 %v1173, %v1167
    %v1516 = vpack.c.b16 %v1174, %v1168
    %v1517 = vpack.c.b16 %v1175, %v1169
    %v1518 = vpack.c.b16 %v1182, %v1176
    %v1519 = vpack.c.b16 %v1183, %v1177
    %v1520 = vpack.c.b16 %v1184, %v1178
    %v1521 = vpack.c.b16 %v1185, %v1179
    %v1522 = vpack.c.b16 %v1186, %v1180
    %v1523 = vpack.c.b16 %v1187, %v1181
    %v1524 = vpack.c.b16 %v1194, %v1188
    %v1525 = vpack.c.b16 %v1195, %v1189
    %v1526 = vpack.c.b16 %v1196, %v1190
    %v1527 = vpack.c.b16 %v1197, %v1191
    %v1528 = vpack.c.b16 %v1198, %v1192
    %v1529 = vpack.c.b16 %v1199, %v1193
    %v1530 = vpack.c.b16 %v1206, %v1200
    %v1531 = vpack.c.b16 %v1207, %v1201
    %v1532 = vpack.c.b16 %v1208, %v1202
    %v1533 = vpack.c.b16 %v1209, %v1203
    %v1534 = vpack.c.b16 %v1210, %v1204
    %v1535 = vpack.c.b16 %v1211, %v1205
    %v1536 = vpack.c.b16 %v1218, %v1212
    %v1537 = vpack.c.b16 %v1219, %v1213
    %v1538 = vpack.c.b16 %v1220, %v1214
    %v1539 = vpack.c.b16 %v1221, %v1215
    %v1540 = vpack.c.b16 %v1222, %v1216
    %v1541 = vpack.c.b16 %v1223, %v1217
    %v1542 = vpack.c.b16 %v1230, %v1224
    %v1543 = vpack.c.b16 %v1231, %v1225
    %v1544 = vpack.c.b16 %v1232, %v1226
    %v1545 = vpack.c.b16 %v1233, %v1227
    %v1546 = vpack.c.b16 %v1234, %v1228
    %v1547 = vpack.c.b16 %v1235, %v1229
    %v1548 = vpack.c.b16 %v1242, %v1236
    %v1549 = vpack.c.b16 %v1243, %v1237
    %v1550 = vpack.c.b16 %v1244, %v1238
    %v1551 = vpack.c.b16 %v1245, %v1239
    %v1552 = vpack.c.b16 %v1246, %v1240
    %v1553 = vpack.c.b16 %v1247, %v1241
    %v1554 = vpack.c.b16 %v1254, %v1248
    %v1555 = vpack.c.b16 %v1255, %v1249
    %v1556 = vpack.c.b16 %v1256, %v1250
    %v1557 = vpack.c.b16 %v1257, %v1251
    %v1558 = vpack.c.b16 %v1258, %v1252
    %v1559 = vpack.c.b16 %v1259, %v1253
    %v1560 = vpack.c.b16 %v1266, %v1260
    %v1561 = vpack.c.b16 %v1267, %v1261
    %v1562 = vpack.c.b16 %v1268, %v1262
    %v1563 = vpack.c.b16 %v1269, %v1263
    %v1564 = vpack.c.b16 %v1270, %v1264
    %v1565 = vpack.c.b16 %v1271, %v1265
    %v1566 = vpack.c.b16 %v1278, %v1272
    %v1567 = vpack.c.b16 %v1279, %v1273
    %v1568 = vpack.c.b16 %v1280, %v1274
    %v1569 = vpack.c.b16 %v1281, %v1275
    %v1570 = vpack.c.b16 %v1282, %v1276
    %v1571 = vpack.c.b16 %v1283, %v1277
    %1860 = vmatprep.subr.bf16.mxu0 %v1285
    %1861 = vmatpush1.bf16.msra.mxu0 %v1284
    %1862 = vmatprep.subr.bf16.mxu0 %v1291
    %1863 = vmatpush1.bf16.msra.mxu0 %v1290
    %1864 = vmatprep.subr.bf16.mxu0 %v1297
    %1865 = vmatpush1.bf16.msra.mxu0 %v1296
    %1866 = vmatprep.subr.bf16.mxu0 %v1303
    %1867 = vmatpush1.bf16.msra.mxu0 %v1302
    %1868 = vmatprep.subr.bf16.mxu0 %v1309
    %1869 = vmatpush1.bf16.msra.mxu0 %v1308
    %1870 = vmatprep.subr.bf16.mxu0 %v1315
    %1871 = vmatpush1.bf16.msra.mxu0 %v1314
    %1872 = vmatprep.subr.bf16.mxu0 %v1321
    %1873 = vmatpush1.bf16.msra.mxu0 %v1320
    %1874 = vmatprep.subr.bf16.mxu0 %v1327
    %1875 = vmatpush1.bf16.msra.mxu0 %v1326
    %1876 = vmatprep.subr.bf16.mxu0 %v1333
    %1877 = vmatpush1.bf16.msra.mxu0 %v1332
    %1878 = vmatprep.subr.bf16.mxu0 %v1339
    %1879 = vmatpush1.bf16.msra.mxu0 %v1338
    %1880 = vmatprep.subr.bf16.mxu0 %v1345
    %1881 = vmatpush1.bf16.msra.mxu0 %v1344
    %1882 = vmatprep.subr.bf16.mxu0 %v1351
    %1883 = vmatpush1.bf16.msra.mxu0 %v1350
    %1884 = vmatprep.subr.bf16.mxu0 %v1357
    %1885 = vmatpush1.bf16.msra.mxu0 %v1356
    %1886 = vmatprep.subr.bf16.mxu0 %v1363
    %1887 = vmatpush1.bf16.msra.mxu0 %v1362
    %1888 = vmatprep.subr.bf16.mxu0 %v1369
    %1889 = vmatpush1.bf16.msra.mxu0 %v1368
    %1890 = vmatprep.subr.bf16.mxu0 %v1375
    %1891 = vmatpush1.bf16.msra.mxu0 %v1374
    %1892 = vmatprep.mubr.bf16.mxu0 %v397
    %1893 = vmatmul.mubr.bf16.gmra.mrb[0].mxu0 %v396
    %v1894 = vpop.f32.mrb[0].mxu0
    %v1895 = vadd.f32 %v333, %v1894
    %v1896 = vpop.f32.mrb[0].mxu0
    %v1897 = vadd.f32 %v337, %v1896
    %v1898 = vpop.f32.mrb[0].mxu0
    %v1899 = vadd.f32 %v333, %v1898
    %v1900 = vpop.f32.mrb[0].mxu0
    %v1901 = vadd.f32 %v337, %v1900
    %1902 = vmatprep.mubr.bf16.mxu0 %v403
    %1903 = vmatmul.mubr.bf16.gmra.mrb[0].mxu0 %v402
    %v1904 = vpop.f32.mrb[0].mxu0
    %v1905 = vadd.f32 %v333, %v1904
    %v1906 = vpop.f32.mrb[0].mxu0
    %v1907 = vadd.f32 %v337, %v1906
    %v1908 = vpop.f32.mrb[0].mxu0
    %v1909 = vadd.f32 %v333, %v1908
    %v1910 = vpop.f32.mrb[0].mxu0
    %v1911 = vadd.f32 %v337, %v1910
    %1912 = vdwg.mxu0
    %1913 = vmatprep.subr.bf16.mxu0 %v1381
    %1914 = vmatpush1.bf16.msra.mxu0 %v1380
    %1915 = vmatprep.subr.bf16.mxu0 %v1387
    %1916 = vmatpush1.bf16.msra.mxu0 %v1386
    %1917 = vmatprep.subr.bf16.mxu0 %v1393
    %1918 = vmatpush1.bf16.msra.mxu0 %v1392
    %1919 = vmatprep.subr.bf16.mxu0 %v1399
    %1920 = vmatpush1.bf16.msra.mxu0 %v1398
    %1921 = vmatprep.subr.bf16.mxu0 %v1405
    %1922 = vmatpush1.bf16.msra.mxu0 %v1404
    %1923 = vmatprep.subr.bf16.mxu0 %v1411
    %1924 = vmatpush1.bf16.msra.mxu0 %v1410
    %1925 = vmatprep.subr.bf16.mxu0 %v1417
    %1926 = vmatpush1.bf16.msra.mxu0 %v1416
    %1927 = vmatprep.subr.bf16.mxu0 %v1423
    %1928 = vmatpush1.bf16.msra.mxu0 %v1422
    %1929 = vmatprep.subr.bf16.mxu0 %v1429
    %1930 = vmatpush1.bf16.msra.mxu0 %v1428
    %1931 = vmatprep.subr.bf16.mxu0 %v1435
    %1932 = vmatpush1.bf16.msra.mxu0 %v1434
    %1933 = vmatprep.subr.bf16.mxu0 %v1441
    %1934 = vmatpush1.bf16.msra.mxu0 %v1440
    %1935 = vmatprep.subr.bf16.mxu0 %v1447
    %1936 = vmatpush1.bf16.msra.mxu0 %v1446
    %1937 = vmatprep.subr.bf16.mxu0 %v1453
    %1938 = vmatpush1.bf16.msra.mxu0 %v1452
    %1939 = vmatprep.subr.bf16.mxu0 %v1459
    %1940 = vmatpush1.bf16.msra.mxu0 %v1458
    %1941 = vmatprep.subr.bf16.mxu0 %v1465
    %1942 = vmatpush1.bf16.msra.mxu0 %v1464
    %1943 = vmatprep.subr.bf16.mxu0 %v1471
    %1944 = vmatpush1.bf16.msra.mxu0 %v1470
    %1945 = vmatprep.mubr.bf16.mxu0 %v399
    %1946 = vmatmul.mubr.bf16.gmra.mrb[0].mxu0 %v398
    %v1947 = vpop.f32.mrb[0].mxu0
    %v1948 = vadd.f32 %v1895, %v1947
    %v1949 = vpop.f32.mrb[0].mxu0
    %v1950 = vadd.f32 %v1897, %v1949
    %v1951 = vpop.f32.mrb[0].mxu0
    %v1952 = vadd.f32 %v1899, %v1951
    %v1953 = vpop.f32.mrb[0].mxu0
    %v1954 = vadd.f32 %v1901, %v1953
    %1955 = vmatprep.mubr.bf16.mxu0 %v405
    %1956 = vmatmul.mubr.bf16.gmra.mrb[0].mxu0 %v404
    %v1957 = vpop.f32.mrb[0].mxu0
    %v1958 = vadd.f32 %v1905, %v1957
    %v1959 = vpop.f32.mrb[0].mxu0
    %v1960 = vadd.f32 %v1907, %v1959
    %v1961 = vpop.f32.mrb[0].mxu0
    %v1962 = vadd.f32 %v1909, %v1961
    %v1963 = vpop.f32.mrb[0].mxu0
    %v1964 = vadd.f32 %v1911, %v1963
    %1965 = vdwg.mxu0
    %1966 = vmatprep.subr.bf16.mxu0 %v1477
    %1967 = vmatpush1.bf16.msra.mxu0 %v1476
    %1968 = vmatprep.subr.bf16.mxu0 %v1483
    %1969 = vmatpush1.bf16.msra.mxu0 %v1482
    %1970 = vmatprep.subr.bf16.mxu0 %v1489
    %1971 = vmatpush1.bf16.msra.mxu0 %v1488
    %1972 = vmatprep.subr.bf16.mxu0 %v1495
    %1973 = vmatpush1.bf16.msra.mxu0 %v1494
    %1974 = vmatprep.subr.bf16.mxu0 %v1501
    %1975 = vmatpush1.bf16.msra.mxu0 %v1500
    %1976 = vmatprep.subr.bf16.mxu0 %v1507
    %1977 = vmatpush1.bf16.msra.mxu0 %v1506
    %1978 = vmatprep.subr.bf16.mxu0 %v1513
    %1979 = vmatpush1.bf16.msra.mxu0 %v1512
    %1980 = vmatprep.subr.bf16.mxu0 %v1519
    %1981 = vmatpush1.bf16.msra.mxu0 %v1518
    %1982 = vmatprep.subr.bf16.mxu0 %v1525
    %1983 = vmatpush1.bf16.msra.mxu0 %v1524
    %1984 = vmatprep.subr.bf16.mxu0 %v1531
    %1985 = vmatpush1.bf16.msra.mxu0 %v1530
    %1986 = vmatprep.subr.bf16.mxu0 %v1537
    %1987 = vmatpush1.bf16.msra.mxu0 %v1536
    %1988 = vmatprep.subr.bf16.mxu0 %v1543
    %1989 = vmatpush1.bf16.msra.mxu0 %v1542
    %1990 = vmatprep.subr.bf16.mxu0 %v1549
    %1991 = vmatpush1.bf16.msra.mxu0 %v1548
    %1992 = vmatprep.subr.bf16.mxu0 %v1555
    %1993 = vmatpush1.bf16.msra.mxu0 %v1554
    %1994 = vmatprep.subr.bf16.mxu0 %v1561
    %1995 = vmatpush1.bf16.msra.mxu0 %v1560
    %1996 = vmatprep.subr.bf16.mxu0 %v1567
    %1997 = vmatpush1.bf16.msra.mxu0 %v1566
    %1998 = vmatprep.mubr.bf16.mxu0 %v401
    %1999 = vmatmul.mubr.bf16.gmra.mrb[0].mxu0 %v400
    %v2000 = vpop.f32.mrb[0].mxu0
    %v2001 = vadd.f32 %v1948, %v2000
    %v2002 = vpop.f32.mrb[0].mxu0
    %v2003 = vadd.f32 %v1950, %v2002
    %v2004 = vpop.f32.mrb[0].mxu0
    %v2005 = vadd.f32 %v1952, %v2004
    %v2006 = vpop.f32.mrb[0].mxu0
    %v2007 = vadd.f32 %v1954, %v2006
    %2008 = vmatprep.mubr.bf16.mxu0 %v407
    %2009 = vmatmul.mubr.bf16.gmra.mrb[0].mxu0 %v406
    %v2010 = vpop.f32.mrb[0].mxu0
    %v2011 = vadd.f32 %v1958, %v2010
    %v2012 = vpop.f32.mrb[0].mxu0
    %v2013 = vadd.f32 %v1960, %v2012
    %v2014 = vpop.f32.mrb[0].mxu0
    %v2015 = vadd.f32 %v1962, %v2014
    %v2016 = vpop.f32.mrb[0].mxu0
    %v2017 = vadd.f32 %v1964, %v2016
    %2018 = vdwg.mxu0
    %2019 = vmatprep.subr.bf16.mxu0 %v1287
    %2020 = vmatpush1.bf16.msra.mxu0 %v1286
    %2021 = vmatprep.subr.bf16.mxu0 %v1293
    %2022 = vmatpush1.bf16.msra.mxu0 %v1292
    %2023 = vmatprep.subr.bf16.mxu0 %v1299
    %2024 = vmatpush1.bf16.msra.mxu0 %v1298
    %2025 = vmatprep.subr.bf16.mxu0 %v1305
    %2026 = vmatpush1.bf16.msra.mxu0 %v1304
    %2027 = vmatprep.subr.bf16.mxu0 %v1311
    %2028 = vmatpush1.bf16.msra.mxu0 %v1310
    %2029 = vmatprep.subr.bf16.mxu0 %v1317
    %2030 = vmatpush1.bf16.msra.mxu0 %v1316
    %2031 = vmatprep.subr.bf16.mxu0 %v1323
    %2032 = vmatpush1.bf16.msra.mxu0 %v1322
    %2033 = vmatprep.subr.bf16.mxu0 %v1329
    %2034 = vmatpush1.bf16.msra.mxu0 %v1328
    %2035 = vmatprep.subr.bf16.mxu0 %v1335
    %2036 = vmatpush1.bf16.msra.mxu0 %v1334
    %2037 = vmatprep.subr.bf16.mxu0 %v1341
    %2038 = vmatpush1.bf16.msra.mxu0 %v1340
    %2039 = vmatprep.subr.bf16.mxu0 %v1347
    %2040 = vmatpush1.bf16.msra.mxu0 %v1346
    %2041 = vmatprep.subr.bf16.mxu0 %v1353
    %2042 = vmatpush1.bf16.msra.mxu0 %v1352
    %2043 = vmatprep.subr.bf16.mxu0 %v1359
    %2044 = vmatpush1.bf16.msra.mxu0 %v1358
    %2045 = vmatprep.subr.bf16.mxu0 %v1365
    %2046 = vmatpush1.bf16.msra.mxu0 %v1364
    %2047 = vmatprep.subr.bf16.mxu0 %v1371
    %2048 = vmatpush1.bf16.msra.mxu0 %v1370
    %2049 = vmatprep.subr.bf16.mxu0 %v1377
    %2050 = vmatpush1.bf16.msra.mxu0 %v1376
    %2051 = vmatprep.mubr.bf16.mxu0 %v397
    %2052 = vmatmul.mubr.bf16.gmra.mrb[0].mxu0 %v396
    %v2053 = vpop.f32.mrb[0].mxu0
    %v2054 = vadd.f32 %v341, %v2053
    %v2055 = vpop.f32.mrb[0].mxu0
    %v2056 = vadd.f32 %v345, %v2055
    %v2057 = vpop.f32.mrb[0].mxu0
    %v2058 = vadd.f32 %v341, %v2057
    %v2059 = vpop.f32.mrb[0].mxu0
    %v2060 = vadd.f32 %v345, %v2059
    %2061 = vmatprep.mubr.bf16.mxu0 %v403
    %2062 = vmatmul.mubr.bf16.gmra.mrb[0].mxu0 %v402
    %v2063 = vpop.f32.mrb[0].mxu0
    %v2064 = vadd.f32 %v341, %v2063
    %v2065 = vpop.f32.mrb[0].mxu0
    %v2066 = vadd.f32 %v345, %v2065
    %v2067 = vpop.f32.mrb[0].mxu0
    %v2068 = vadd.f32 %v341, %v2067
    %v2069 = vpop.f32.mrb[0].mxu0
    %v2070 = vadd.f32 %v345, %v2069
    %2071 = vdwg.mxu0
    %2072 = vmatprep.subr.bf16.mxu0 %v1383
    %2073 = vmatpush1.bf16.msra.mxu0 %v1382
    %2074 = vmatprep.subr.bf16.mxu0 %v1389
    %2075 = vmatpush1.bf16.msra.mxu0 %v1388
    %2076 = vmatprep.subr.bf16.mxu0 %v1395
    %2077 = vmatpush1.bf16.msra.mxu0 %v1394
    %2078 = vmatprep.subr.bf16.mxu0 %v1401
    %2079 = vmatpush1.bf16.msra.mxu0 %v1400
    %2080 = vmatprep.subr.bf16.mxu0 %v1407
    %2081 = vmatpush1.bf16.msra.mxu0 %v1406
    %2082 = vmatprep.subr.bf16.mxu0 %v1413
    %2083 = vmatpush1.bf16.msra.mxu0 %v1412
    %2084 = vmatprep.subr.bf16.mxu0 %v1419
    %2085 = vmatpush1.bf16.msra.mxu0 %v1418
    %2086 = vmatprep.subr.bf16.mxu0 %v1425
    %2087 = vmatpush1.bf16.msra.mxu0 %v1424
    %2088 = vmatprep.subr.bf16.mxu0 %v1431
    %2089 = vmatpush1.bf16.msra.mxu0 %v1430
    %2090 = vmatprep.subr.bf16.mxu0 %v1437
    %2091 = vmatpush1.bf16.msra.mxu0 %v1436
    %2092 = vmatprep.subr.bf16.mxu0 %v1443
    %2093 = vmatpush1.bf16.msra.mxu0 %v1442
    %2094 = vmatprep.subr.bf16.mxu0 %v1449
    %2095 = vmatpush1.bf16.msra.mxu0 %v1448
    %2096 = vmatprep.subr.bf16.mxu0 %v1455
    %2097 = vmatpush1.bf16.msra.mxu0 %v1454
    %2098 = vmatprep.subr.bf16.mxu0 %v1461
    %2099 = vmatpush1.bf16.msra.mxu0 %v1460
    %2100 = vmatprep.subr.bf16.mxu0 %v1467
    %2101 = vmatpush1.bf16.msra.mxu0 %v1466
    %2102 = vmatprep.subr.bf16.mxu0 %v1473
    %2103 = vmatpush1.bf16.msra.mxu0 %v1472
    %2104 = vmatprep.mubr.bf16.mxu0 %v399
    %2105 = vmatmul.mubr.bf16.gmra.mrb[0].mxu0 %v398
    %v2106 = vpop.f32.mrb[0].mxu0
    %v2107 = vadd.f32 %v2054, %v2106
    %v2108 = vpop.f32.mrb[0].mxu0
    %v2109 = vadd.f32 %v2056, %v2108
    %v2110 = vpop.f32.mrb[0].mxu0
    %v2111 = vadd.f32 %v2058, %v2110
    %v2112 = vpop.f32.mrb[0].mxu0
    %v2113 = vadd.f32 %v2060, %v2112
    %2114 = vmatprep.mubr.bf16.mxu0 %v405
    %2115 = vmatmul.mubr.bf16.gmra.mrb[0].mxu0 %v404
    %v2116 = vpop.f32.mrb[0].mxu0
    %v2117 = vadd.f32 %v2064, %v2116
    %v2118 = vpop.f32.mrb[0].mxu0
    %v2119 = vadd.f32 %v2066, %v2118
    %v2120 = vpop.f32.mrb[0].mxu0
    %v2121 = vadd.f32 %v2068, %v2120
    %v2122 = vpop.f32.mrb[0].mxu0
    %v2123 = vadd.f32 %v2070, %v2122
    %2124 = vdwg.mxu0
    %2125 = vmatprep.subr.bf16.mxu0 %v1479
    %2126 = vmatpush1.bf16.msra.mxu0 %v1478
    %2127 = vmatprep.subr.bf16.mxu0 %v1485
    %2128 = vmatpush1.bf16.msra.mxu0 %v1484
    %2129 = vmatprep.subr.bf16.mxu0 %v1491
    %2130 = vmatpush1.bf16.msra.mxu0 %v1490
    %2131 = vmatprep.subr.bf16.mxu0 %v1497
    %2132 = vmatpush1.bf16.msra.mxu0 %v1496
    %2133 = vmatprep.subr.bf16.mxu0 %v1503
    %2134 = vmatpush1.bf16.msra.mxu0 %v1502
    %2135 = vmatprep.subr.bf16.mxu0 %v1509
    %2136 = vmatpush1.bf16.msra.mxu0 %v1508
    %2137 = vmatprep.subr.bf16.mxu0 %v1515
    %2138 = vmatpush1.bf16.msra.mxu0 %v1514
    %2139 = vmatprep.subr.bf16.mxu0 %v1521
    %2140 = vmatpush1.bf16.msra.mxu0 %v1520
    %2141 = vmatprep.subr.bf16.mxu0 %v1527
    %2142 = vmatpush1.bf16.msra.mxu0 %v1526
    %2143 = vmatprep.subr.bf16.mxu0 %v1533
    %2144 = vmatpush1.bf16.msra.mxu0 %v1532
    %2145 = vmatprep.subr.bf16.mxu0 %v1539
    %2146 = vmatpush1.bf16.msra.mxu0 %v1538
    %2147 = vmatprep.subr.bf16.mxu0 %v1545
    %2148 = vmatpush1.bf16.msra.mxu0 %v1544
    %2149 = vmatprep.subr.bf16.mxu0 %v1551
    %2150 = vmatpush1.bf16.msra.mxu0 %v1550
    %2151 = vmatprep.subr.bf16.mxu0 %v1557
    %2152 = vmatpush1.bf16.msra.mxu0 %v1556
    %2153 = vmatprep.subr.bf16.mxu0 %v1563
    %2154 = vmatpush1.bf16.msra.mxu0 %v1562
    %2155 = vmatprep.subr.bf16.mxu0 %v1569
    %2156 = vmatpush1.bf16.msra.mxu0 %v1568
    %2157 = vmatprep.mubr.bf16.mxu0 %v401
    %2158 = vmatmul.mubr.bf16.gmra.mrb[0].mxu0 %v400
    %v2159 = vpop.f32.mrb[0].mxu0
    %v2160 = vadd.f32 %v2107, %v2159
    %v2161 = vpop.f32.mrb[0].mxu0
    %v2162 = vadd.f32 %v2109, %v2161
    %v2163 = vpop.f32.mrb[0].mxu0
    %v2164 = vadd.f32 %v2111, %v2163
    %v2165 = vpop.f32.mrb[0].mxu0
    %v2166 = vadd.f32 %v2113, %v2165
    %2167 = vmatprep.mubr.bf16.mxu0 %v407
    %2168 = vmatmul.mubr.bf16.gmra.mrb[0].mxu0 %v406
    %v2169 = vpop.f32.mrb[0].mxu0
    %v2170 = vadd.f32 %v2117, %v2169
    %v2171 = vpop.f32.mrb[0].mxu0
    %v2172 = vadd.f32 %v2119, %v2171
    %v2173 = vpop.f32.mrb[0].mxu0
    %v2174 = vadd.f32 %v2121, %v2173
    %v2175 = vpop.f32.mrb[0].mxu0
    %v2176 = vadd.f32 %v2123, %v2175
    %2177 = vdwg.mxu0
    %2178 = vmatprep.subr.bf16.mxu0 %v1289
    %2179 = vmatpush1.bf16.msra.mxu0 %v1288
    %2180 = vmatprep.subr.bf16.mxu0 %v1295
    %2181 = vmatpush1.bf16.msra.mxu0 %v1294
    %2182 = vmatprep.subr.bf16.mxu0 %v1301
    %2183 = vmatpush1.bf16.msra.mxu0 %v1300
    %2184 = vmatprep.subr.bf16.mxu0 %v1307
    %2185 = vmatpush1.bf16.msra.mxu0 %v1306
    %2186 = vmatprep.subr.bf16.mxu0 %v1313
    %2187 = vmatpush1.bf16.msra.mxu0 %v1312
    %2188 = vmatprep.subr.bf16.mxu0 %v1319
    %2189 = vmatpush1.bf16.msra.mxu0 %v1318
    %2190 = vmatprep.subr.bf16.mxu0 %v1325
    %2191 = vmatpush1.bf16.msra.mxu0 %v1324
    %2192 = vmatprep.subr.bf16.mxu0 %v1331
    %2193 = vmatpush1.bf16.msra.mxu0 %v1330
    %2194 = vmatprep.subr.bf16.mxu0 %v1337
    %2195 = vmatpush1.bf16.msra.mxu0 %v1336
    %2196 = vmatprep.subr.bf16.mxu0 %v1343
    %2197 = vmatpush1.bf16.msra.mxu0 %v1342
    %2198 = vmatprep.subr.bf16.mxu0 %v1349
    %2199 = vmatpush1.bf16.msra.mxu0 %v1348
    %2200 = vmatprep.subr.bf16.mxu0 %v1355
    %2201 = vmatpush1.bf16.msra.mxu0 %v1354
    %2202 = vmatprep.subr.bf16.mxu0 %v1361
    %2203 = vmatpush1.bf16.msra.mxu0 %v1360
    %2204 = vmatprep.subr.bf16.mxu0 %v1367
    %2205 = vmatpush1.bf16.msra.mxu0 %v1366
    %2206 = vmatprep.subr.bf16.mxu0 %v1373
    %2207 = vmatpush1.bf16.msra.mxu0 %v1372
    %2208 = vmatprep.subr.bf16.mxu0 %v1379
    %2209 = vmatpush1.bf16.msra.mxu0 %v1378
    %2210 = vmatprep.mubr.bf16.mxu0 %v397
    %2211 = vmatmul.mubr.bf16.gmra.mrb[0].mxu0 %v396
    %v2212 = vpop.f32.mrb[0].mxu0
    %v2213 = vadd.f32 %v349, %v2212
    %v2214 = vpop.f32.mrb[0].mxu0
    %v2215 = vadd.f32 %v353, %v2214
    %v2216 = vpop.f32.mrb[0].mxu0
    %v2217 = vadd.f32 %v349, %v2216
    %v2218 = vpop.f32.mrb[0].mxu0
    %v2219 = vadd.f32 %v353, %v2218
    %2220 = vmatprep.mubr.bf16.mxu0 %v403
    %2221 = vmatmul.mubr.bf16.gmra.mrb[0].mxu0 %v402
    %v2222 = vpop.f32.mrb[0].mxu0
    %v2223 = vadd.f32 %v349, %v2222
    %v2224 = vpop.f32.mrb[0].mxu0
    %v2225 = vadd.f32 %v353, %v2224
    %v2226 = vpop.f32.mrb[0].mxu0
    %v2227 = vadd.f32 %v349, %v2226
    %v2228 = vpop.f32.mrb[0].mxu0
    %v2229 = vadd.f32 %v353, %v2228
    %2230 = vdwg.mxu0
    %2231 = vmatprep.subr.bf16.mxu0 %v1385
    %2232 = vmatpush1.bf16.msra.mxu0 %v1384
    %2233 = vmatprep.subr.bf16.mxu0 %v1391
    %2234 = vmatpush1.bf16.msra.mxu0 %v1390
    %2235 = vmatprep.subr.bf16.mxu0 %v1397
    %2236 = vmatpush1.bf16.msra.mxu0 %v1396
    %2237 = vmatprep.subr.bf16.mxu0 %v1403
    %2238 = vmatpush1.bf16.msra.mxu0 %v1402
    %2239 = vmatprep.subr.bf16.mxu0 %v1409
    %2240 = vmatpush1.bf16.msra.mxu0 %v1408
    %2241 = vmatprep.subr.bf16.mxu0 %v1415
    %2242 = vmatpush1.bf16.msra.mxu0 %v1414
    %2243 = vmatprep.subr.bf16.mxu0 %v1421
    %2244 = vmatpush1.bf16.msra.mxu0 %v1420
    %2245 = vmatprep.subr.bf16.mxu0 %v1427
    %2246 = vmatpush1.bf16.msra.mxu0 %v1426
    %2247 = vmatprep.subr.bf16.mxu0 %v1433
    %2248 = vmatpush1.bf16.msra.mxu0 %v1432
    %2249 = vmatprep.subr.bf16.mxu0 %v1439
    %2250 = vmatpush1.bf16.msra.mxu0 %v1438
    %2251 = vmatprep.subr.bf16.mxu0 %v1445
    %2252 = vmatpush1.bf16.msra.mxu0 %v1444
    %2253 = vmatprep.subr.bf16.mxu0 %v1451
    %2254 = vmatpush1.bf16.msra.mxu0 %v1450
    %2255 = vmatprep.subr.bf16.mxu0 %v1457
    %2256 = vmatpush1.bf16.msra.mxu0 %v1456
    %2257 = vmatprep.subr.bf16.mxu0 %v1463
    %2258 = vmatpush1.bf16.msra.mxu0 %v1462
    %2259 = vmatprep.subr.bf16.mxu0 %v1469
    %2260 = vmatpush1.bf16.msra.mxu0 %v1468
    %2261 = vmatprep.subr.bf16.mxu0 %v1475
    %2262 = vmatpush1.bf16.msra.mxu0 %v1474
    %2263 = vmatprep.mubr.bf16.mxu0 %v399
    %2264 = vmatmul.mubr.bf16.gmra.mrb[0].mxu0 %v398
    %v2265 = vpop.f32.mrb[0].mxu0
    %v2266 = vadd.f32 %v2213, %v2265
    %v2267 = vpop.f32.mrb[0].mxu0
    %v2268 = vadd.f32 %v2215, %v2267
    %v2269 = vpop.f32.mrb[0].mxu0
    %v2270 = vadd.f32 %v2217, %v2269
    %v2271 = vpop.f32.mrb[0].mxu0
    %v2272 = vadd.f32 %v2219, %v2271
    %2273 = vmatprep.mubr.bf16.mxu0 %v405
    %2274 = vmatmul.mubr.bf16.gmra.mrb[0].mxu0 %v404
    %v2275 = vpop.f32.mrb[0].mxu0
    %v2276 = vadd.f32 %v2223, %v2275
    %v2277 = vpop.f32.mrb[0].mxu0
    %v2278 = vadd.f32 %v2225, %v2277
    %v2279 = vpop.f32.mrb[0].mxu0
    %v2280 = vadd.f32 %v2227, %v2279
    %v2281 = vpop.f32.mrb[0].mxu0
    %v2282 = vadd.f32 %v2229, %v2281
    %2283 = vdwg.mxu0
    %2284 = vmatprep.subr.bf16.mxu0 %v1481
    %2285 = vmatpush1.bf16.msra.mxu0 %v1480
    %2286 = vmatprep.subr.bf16.mxu0 %v1487
    %2287 = vmatpush1.bf16.msra.mxu0 %v1486
    %2288 = vmatprep.subr.bf16.mxu0 %v1493
    %2289 = vmatpush1.bf16.msra.mxu0 %v1492
    %2290 = vmatprep.subr.bf16.mxu0 %v1499
    %2291 = vmatpush1.bf16.msra.mxu0 %v1498
    %2292 = vmatprep.subr.bf16.mxu0 %v1505
    %2293 = vmatpush1.bf16.msra.mxu0 %v1504
    %2294 = vmatprep.subr.bf16.mxu0 %v1511
    %2295 = vmatpush1.bf16.msra.mxu0 %v1510
    %2296 = vmatprep.subr.bf16.mxu0 %v1517
    %2297 = vmatpush1.bf16.msra.mxu0 %v1516
    %2298 = vmatprep.subr.bf16.mxu0 %v1523
    %2299 = vmatpush1.bf16.msra.mxu0 %v1522
    %2300 = vmatprep.subr.bf16.mxu0 %v1529
    %2301 = vmatpush1.bf16.msra.mxu0 %v1528
    %2302 = vmatprep.subr.bf16.mxu0 %v1535
    %2303 = vmatpush1.bf16.msra.mxu0 %v1534
    %2304 = vmatprep.subr.bf16.mxu0 %v1541
    %2305 = vmatpush1.bf16.msra.mxu0 %v1540
    %2306 = vmatprep.subr.bf16.mxu0 %v1547
    %2307 = vmatpush1.bf16.msra.mxu0 %v1546
    %2308 = vmatprep.subr.bf16.mxu0 %v1553
    %2309 = vmatpush1.bf16.msra.mxu0 %v1552
    %2310 = vmatprep.subr.bf16.mxu0 %v1559
    %2311 = vmatpush1.bf16.msra.mxu0 %v1558
    %2312 = vmatprep.subr.bf16.mxu0 %v1565
    %2313 = vmatpush1.bf16.msra.mxu0 %v1564
    %2314 = vmatprep.subr.bf16.mxu0 %v1571
    %2315 = vmatpush1.bf16.msra.mxu0 %v1570
    %2316 = vmatprep.mubr.bf16.mxu0 %v401
    %2317 = vmatmul.mubr.bf16.gmra.mrb[0].mxu0 %v400
    %v2318 = vpop.f32.mrb[0].mxu0
    %v2319 = vadd.f32 %v2266, %v2318
    %v2320 = vpop.f32.mrb[0].mxu0
    %v2321 = vadd.f32 %v2268, %v2320
    %v2322 = vpop.f32.mrb[0].mxu0
    %v2323 = vadd.f32 %v2270, %v2322
    %v2324 = vpop.f32.mrb[0].mxu0
    %v2325 = vadd.f32 %v2272, %v2324
    %2326 = vmatprep.mubr.bf16.mxu0 %v407
    %2327 = vmatmul.mubr.bf16.gmra.mrb[0].mxu0 %v406
    %v2328 = vpop.f32.mrb[0].mxu0
    %v2329 = vadd.f32 %v2276, %v2328
    %v2330 = vpop.f32.mrb[0].mxu0
    %v2331 = vadd.f32 %v2278, %v2330
    %v2332 = vpop.f32.mrb[0].mxu0
    %v2333 = vadd.f32 %v2280, %v2332
    %v2334 = vpop.f32.mrb[0].mxu0
    %v2335 = vadd.f32 %v2282, %v2334
    %2336 = vdwg.mxu0
    %v2337 = vmax.f32 %v2001, 0.0
    %v2338 = vmax.f32 %v2003, 0.0
    %v2339 = vmax.f32 %v2160, 0.0
    %v2340 = vmax.f32 %v2162, 0.0
    %v2341 = vmax.f32 %v2319, 0.0
    %v2342 = vmax.f32 %v2321, 0.0
    %v2343 = vmax.f32 %v2005, 0.0
    %v2344 = vmax.f32 %v2007, 0.0
    %v2345 = vmax.f32 %v2164, 0.0
    %v2346 = vmax.f32 %v2166, 0.0
    %v2347 = vmax.f32 %v2323, 0.0
    %v2348 = vmax.f32 %v2325, 0.0
    %v2349 = vmax.f32 %v2011, 0.0
    %v2350 = vmax.f32 %v2013, 0.0
    %v2351 = vmax.f32 %v2170, 0.0
    %v2352 = vmax.f32 %v2172, 0.0
    %v2353 = vmax.f32 %v2329, 0.0
    %v2354 = vmax.f32 %v2331, 0.0
    %v2355 = vmax.f32 %v2015, 0.0
    %v2356 = vmax.f32 %v2017, 0.0
    %v2357 = vmax.f32 %v2174, 0.0
    %v2358 = vmax.f32 %v2176, 0.0
    %v2359 = vmax.f32 %v2333, 0.0
    %v2360 = vmax.f32 %v2335, 0.0
    %2361 = vst [vmem:[%s3] sm:$0xff] %v2337
    %2362 = vst [vmem:[%s3 + $0x8] sm:$0xff] %v2338
    %2363 = vst [vmem:[%s3 + $0x10] sm:$0xff] %v2339
    %2364 = vst [vmem:[%s3 + $0x18] sm:$0xff] %v2340
    %2365 = vst [vmem:[%s3 + $0x20] sm:$0xff] %v2341
    %2366 = vst [vmem:[%s3 + $0x28] sm:$0xff] %v2342
    %2367 = vst [vmem:[%s3 + $0x30] sm:$0xff] %v2343
    %2368 = vst [vmem:[%s3 + $0x38] sm:$0xff] %v2344
    %2369 = vst [vmem:[%s3 + $0x40] sm:$0xff] %v2345
    %2370 = vst [vmem:[%s3 + $0x48] sm:$0xff] %v2346
    %2371 = vst [vmem:[%s3 + $0x50] sm:$0xff] %v2347
    %2372 = vst [vmem:[%s3 + $0x58] sm:$0xff] %v2348
    %2373 = vst [vmem:[%s3 + $0x60] sm:$0xff] %v2349
    %2374 = vst [vmem:[%s3 + $0x68] sm:$0xff] %v2350
    %2375 = vst [vmem:[%s3 + $0x70] sm:$0xff] %v2351
    %2376 = vst [vmem:[%s3 + $0x78] sm:$0xff] %v2352
    %2377 = vst [vmem:[%s3 + $0x80] sm:$0xff] %v2353
    %2378 = vst [vmem:[%s3 + $0x88] sm:$0xff] %v2354
    %2379 = vst [vmem:[%s3 + $0x90] sm:$0xff] %v2355
    %2380 = vst [vmem:[%s3 + $0x98] sm:$0xff] %v2356
    %2381 = vst [vmem:[%s3 + $0xa0] sm:$0xff] %v2357
    %2382 = vst [vmem:[%s3 + $0xa8] sm:$0xff] %v2358
    %2383 = vst [vmem:[%s3 + $0xb0] sm:$0xff] %v2359
    %2384 = vst [vmem:[%s3 + $0xb8] sm:$0xff] %v2360
    // Predicated region
    $region18: #{masker_net_mkr_forward.3} parent=1 // pred_check
      _
    $region19: #{masker_net_mkr_forward.3} parent=1 // pred_check_branch
      %2386 = sbr.rel (0) target = $region21
    $region20: #{masker_net_mkr_forward.3} parent=1 // pred_region
      _
    $region21: #{masker_net_mkr_forward.3} parent=1 // pred_fallthru
      _
    // Predicated region
    $region22: #{masker_net_mkr_forward.3} parent=1 // pred_check
      _
    $region23: #{masker_net_mkr_forward.3} parent=1 // pred_check_branch
      %2388 = sbr.rel (0) target = $region25
    $region24: #{masker_net_mkr_forward.3} parent=1 // pred_region
      _
    $region25: #{masker_net_mkr_forward.3} parent=1 // pred_fallthru
      _
    %2389 = vsyncpa [#allocation3], 1

// kernel: masker_net_mkr_forward.4
$region0: #{masker_net_mkr_forward.4}
  #allocation0 [shape = 'u32[]', space=smem, size = 0x4, offset = 0x4, fixed_abs, tag = 'smem constant byte address 0x4 - core index']
  #allocation1 [shape = 'u32[144,128]{1,0:T(1,128)}', space=vmem, size = 0x12000, scoped, tag = 'internal scratch']
  %s0 = inlined_call_operand.vmem [shape: bf16[8,768], index: 0, kind: input, shape index: {}]
  %s1 = inlined_call_operand.vmem [shape: bf16[768,768], index: 1, kind: input, shape index: {}]
  %s2 = inlined_call_operand.vmem [shape: f32[1,768], index: 2, kind: input, shape index: {}]
  %s3 = inlined_call_operand.vmem [shape: bf16[768,128], index: 3, kind: input, shape index: {}]
  %s4 = inlined_call_operand.vmem [shape: f32[1,128], index: 4, kind: input, shape index: {}]
  %s5 = inlined_call_operand.vmem [shape: f32[8,128], index: 5, kind: output, shape index: {}]
  %s6 = sld [smem:[#allocation0]]
  $region30: #{masker_net_mkr_forward.4} parent=0
    _
  %s8 = ssub.s32 1, %s6
  %s9 = scalar_select 0, %s8, %s6
  // Predicated region
  $region2: #{masker_net_mkr_forward.4} parent=0 // pred_check
    _
  $region3: #{masker_net_mkr_forward.4} parent=0 // pred_check_branch
    %11 = sbr.rel (0) target = $region5
  $region4: #{masker_net_mkr_forward.4} parent=0 // pred_region
    _
  $region5: #{masker_net_mkr_forward.4} parent=0 // pred_fallthru
    _
  // Predicated region
  $region6: #{masker_net_mkr_forward.4} parent=0 // pred_check
    _
  $region7: #{masker_net_mkr_forward.4} parent=0 // pred_check_branch
    %13 = sbr.rel (0) target = $region9
  $region8: #{masker_net_mkr_forward.4} parent=0 // pred_region
    _
  $region9: #{masker_net_mkr_forward.4} parent=0 // pred_fallthru
    _
  // Predicated region
  $region10: #{masker_net_mkr_forward.4} parent=0 // pred_check
    _
  $region11: #{masker_net_mkr_forward.4} parent=0 // pred_check_branch
    %15 = sbr.rel (0) target = $region13
  $region12: #{masker_net_mkr_forward.4} parent=0 // pred_region
    _
  $region13: #{masker_net_mkr_forward.4} parent=0 // pred_fallthru
    _
  // Predicated region
  $region14: #{masker_net_mkr_forward.4} parent=0 // pred_check
    _
  $region15: #{masker_net_mkr_forward.4} parent=0 // pred_check_branch
    %17 = sbr.rel (0) target = $region17
  $region16: #{masker_net_mkr_forward.4} parent=0 // pred_region
    _
  $region17: #{masker_net_mkr_forward.4} parent=0 // pred_fallthru
    _
  // Predicated region
  $region18: #{masker_net_mkr_forward.4} parent=0 // pred_check
    _
  $region19: #{masker_net_mkr_forward.4} parent=0 // pred_check_branch
    %19 = sbr.rel (0) target = $region21
  $region20: #{masker_net_mkr_forward.4} parent=0 // pred_region
    _
  $region21: #{masker_net_mkr_forward.4} parent=0 // pred_fallthru
    _
  %v21 = vld [vmem:[%s0] sm:$0xff]
  %v22 = vld [vmem:[%s0 + $0x8] sm:$0xff]
  %v23 = vld [vmem:[%s0 + $0x10] sm:$0xff]
  %v24 = vld [vmem:[%s1] sm:$0xff]
  %v25 = vld [vmem:[%s1 + $0x8] sm:$0xff]
  %v26 = vld [vmem:[%s1 + $0x10] sm:$0xff]
  %v27 = vld [vmem:[%s1 + $0x18] sm:$0xff]
  %v28 = vld [vmem:[%s1 + $0x20] sm:$0xff]
  %v29 = vld [vmem:[%s1 + $0x28] sm:$0xff]
  %v30 = vld [vmem:[%s1 + $0x30] sm:$0xff]
  %v31 = vld [vmem:[%s1 + $0x38] sm:$0xff]
  %v32 = vld [vmem:[%s1 + $0x40] sm:$0xff]
  %v33 = vld [vmem:[%s1 + $0x48] sm:$0xff]
  %v34 = vld [vmem:[%s1 + $0x50] sm:$0xff]
  %v35 = vld [vmem:[%s1 + $0x58] sm:$0xff]
  %v36 = vld [vmem:[%s1 + $0x60] sm:$0xff]
  %v37 = vld [vmem:[%s1 + $0x68] sm:$0xff]
  %v38 = vld [vmem:[%s1 + $0x70] sm:$0xff]
  %v39 = vld [vmem:[%s1 + $0x78] sm:$0xff]
  %v40 = vld [vmem:[%s1 + $0x80] sm:$0xff]
  %v41 = vld [vmem:[%s1 + $0x88] sm:$0xff]
  %v42 = vld [vmem:[%s1 + $0x90] sm:$0xff]
  %v43 = vld [vmem:[%s1 + $0x98] sm:$0xff]
  %v44 = vld [vmem:[%s1 + $0xa0] sm:$0xff]
  %v45 = vld [vmem:[%s1 + $0xa8] sm:$0xff]
  %v46 = vld [vmem:[%s1 + $0xb0] sm:$0xff]
  %v47 = vld [vmem:[%s1 + $0xb8] sm:$0xff]
  %v48 = vld [vmem:[%s1 + $0xc0] sm:$0xff]
  %v49 = vld [vmem:[%s1 + $0xc8] sm:$0xff]
  %v50 = vld [vmem:[%s1 + $0xd0] sm:$0xff]
  %v51 = vld [vmem:[%s1 + $0xd8] sm:$0xff]
  %v52 = vld [vmem:[%s1 + $0xe0] sm:$0xff]
  %v53 = vld [vmem:[%s1 + $0xe8] sm:$0xff]
  %v54 = vld [vmem:[%s1 + $0xf0] sm:$0xff]
  %v55 = vld [vmem:[%s1 + $0xf8] sm:$0xff]
  %v56 = vld [vmem:[%s1 + $0x100] sm:$0xff]
  %v57 = vld [vmem:[%s1 + $0x108] sm:$0xff]
  %v58 = vld [vmem:[%s1 + $0x110] sm:$0xff]
  %v59 = vld [vmem:[%s1 + $0x118] sm:$0xff]
  %v60 = vld [vmem:[%s1 + $0x120] sm:$0xff]
  %v61 = vld [vmem:[%s1 + $0x128] sm:$0xff]
  %v62 = vld [vmem:[%s1 + $0x130] sm:$0xff]
  %v63 = vld [vmem:[%s1 + $0x138] sm:$0xff]
  %v64 = vld [vmem:[%s1 + $0x140] sm:$0xff]
  %v65 = vld [vmem:[%s1 + $0x148] sm:$0xff]
  %v66 = vld [vmem:[%s1 + $0x150] sm:$0xff]
  %v67 = vld [vmem:[%s1 + $0x158] sm:$0xff]
  %v68 = vld [vmem:[%s1 + $0x160] sm:$0xff]
  %v69 = vld [vmem:[%s1 + $0x168] sm:$0xff]
  %v70 = vld [vmem:[%s1 + $0x170] sm:$0xff]
  %v71 = vld [vmem:[%s1 + $0x178] sm:$0xff]
  %v72 = vld [vmem:[%s1 + $0x180] sm:$0xff]
  %v73 = vld [vmem:[%s1 + $0x188] sm:$0xff]
  %v74 = vld [vmem:[%s1 + $0x190] sm:$0xff]
  %v75 = vld [vmem:[%s1 + $0x198] sm:$0xff]
  %v76 = vld [vmem:[%s1 + $0x1a0] sm:$0xff]
  %v77 = vld [vmem:[%s1 + $0x1a8] sm:$0xff]
  %v78 = vld [vmem:[%s1 + $0x1b0] sm:$0xff]
  %v79 = vld [vmem:[%s1 + $0x1b8] sm:$0xff]
  %v80 = vld [vmem:[%s1 + $0x1c0] sm:$0xff]
  %v81 = vld [vmem:[%s1 + $0x1c8] sm:$0xff]
  %v82 = vld [vmem:[%s1 + $0x1d0] sm:$0xff]
  %v83 = vld [vmem:[%s1 + $0x1d8] sm:$0xff]
  %v84 = vld [vmem:[%s1 + $0x1e0] sm:$0xff]
  %v85 = vld [vmem:[%s1 + $0x1e8] sm:$0xff]
  %v86 = vld [vmem:[%s1 + $0x1f0] sm:$0xff]
  %v87 = vld [vmem:[%s1 + $0x1f8] sm:$0xff]
  %v88 = vld [vmem:[%s1 + $0x200] sm:$0xff]
  %v89 = vld [vmem:[%s1 + $0x208] sm:$0xff]
  %v90 = vld [vmem:[%s1 + $0x210] sm:$0xff]
  %v91 = vld [vmem:[%s1 + $0x218] sm:$0xff]
  %v92 = vld [vmem:[%s1 + $0x220] sm:$0xff]
  %v93 = vld [vmem:[%s1 + $0x228] sm:$0xff]
  %v94 = vld [vmem:[%s1 + $0x230] sm:$0xff]
  %v95 = vld [vmem:[%s1 + $0x238] sm:$0xff]
  %v96 = vld [vmem:[%s1 + $0x240] sm:$0xff]
  %v97 = vld [vmem:[%s1 + $0x248] sm:$0xff]
  %v98 = vld [vmem:[%s1 + $0x250] sm:$0xff]
  %v99 = vld [vmem:[%s1 + $0x258] sm:$0xff]
  %v100 = vld [vmem:[%s1 + $0x260] sm:$0xff]
  %v101 = vld [vmem:[%s1 + $0x268] sm:$0xff]
  %v102 = vld [vmem:[%s1 + $0x270] sm:$0xff]
  %v103 = vld [vmem:[%s1 + $0x278] sm:$0xff]
  %v104 = vld [vmem:[%s1 + $0x280] sm:$0xff]
  %v105 = vld [vmem:[%s1 + $0x288] sm:$0xff]
  %v106 = vld [vmem:[%s1 + $0x290] sm:$0xff]
  %v107 = vld [vmem:[%s1 + $0x298] sm:$0xff]
  %v108 = vld [vmem:[%s1 + $0x2a0] sm:$0xff]
  %v109 = vld [vmem:[%s1 + $0x2a8] sm:$0xff]
  %v110 = vld [vmem:[%s1 + $0x2b0] sm:$0xff]
  %v111 = vld [vmem:[%s1 + $0x2b8] sm:$0xff]
  %v112 = vld [vmem:[%s1 + $0x2c0] sm:$0xff]
  %v113 = vld [vmem:[%s1 + $0x2c8] sm:$0xff]
  %v114 = vld [vmem:[%s1 + $0x2d0] sm:$0xff]
  %v115 = vld [vmem:[%s1 + $0x2d8] sm:$0xff]
  %v116 = vld [vmem:[%s1 + $0x2e0] sm:$0xff]
  %v117 = vld [vmem:[%s1 + $0x2e8] sm:$0xff]
  %v118 = vld [vmem:[%s1 + $0x2f0] sm:$0xff]
  %v119 = vld [vmem:[%s1 + $0x2f8] sm:$0xff]
  %v120 = vld [vmem:[%s1 + $0x300] sm:$0xff]
  %v121 = vld [vmem:[%s1 + $0x308] sm:$0xff]
  %v122 = vld [vmem:[%s1 + $0x310] sm:$0xff]
  %v123 = vld [vmem:[%s1 + $0x318] sm:$0xff]
  %v124 = vld [vmem:[%s1 + $0x320] sm:$0xff]
  %v125 = vld [vmem:[%s1 + $0x328] sm:$0xff]
  %v126 = vld [vmem:[%s1 + $0x330] sm:$0xff]
  %v127 = vld [vmem:[%s1 + $0x338] sm:$0xff]
  %v128 = vld [vmem:[%s1 + $0x340] sm:$0xff]
  %v129 = vld [vmem:[%s1 + $0x348] sm:$0xff]
  %v130 = vld [vmem:[%s1 + $0x350] sm:$0xff]
  %v131 = vld [vmem:[%s1 + $0x358] sm:$0xff]
  %v132 = vld [vmem:[%s1 + $0x360] sm:$0xff]
  %v133 = vld [vmem:[%s1 + $0x368] sm:$0xff]
  %v134 = vld [vmem:[%s1 + $0x370] sm:$0xff]
  %v135 = vld [vmem:[%s1 + $0x378] sm:$0xff]
  %v136 = vld [vmem:[%s1 + $0x380] sm:$0xff]
  %v137 = vld [vmem:[%s1 + $0x388] sm:$0xff]
  %v138 = vld [vmem:[%s1 + $0x390] sm:$0xff]
  %v139 = vld [vmem:[%s1 + $0x398] sm:$0xff]
  %v140 = vld [vmem:[%s1 + $0x3a0] sm:$0xff]
  %v141 = vld [vmem:[%s1 + $0x3a8] sm:$0xff]
  %v142 = vld [vmem:[%s1 + $0x3b0] sm:$0xff]
  %v143 = vld [vmem:[%s1 + $0x3b8] sm:$0xff]
  %v144 = vld [vmem:[%s1 + $0x3c0] sm:$0xff]
  %v145 = vld [vmem:[%s1 + $0x3c8] sm:$0xff]
  %v146 = vld [vmem:[%s1 + $0x3d0] sm:$0xff]
  %v147 = vld [vmem:[%s1 + $0x3d8] sm:$0xff]
  %v148 = vld [vmem:[%s1 + $0x3e0] sm:$0xff]
  %v149 = vld [vmem:[%s1 + $0x3e8] sm:$0xff]
  %v150 = vld [vmem:[%s1 + $0x3f0] sm:$0xff]
  %v151 = vld [vmem:[%s1 + $0x3f8] sm:$0xff]
  %v152 = vld [vmem:[%s1 + $0x400] sm:$0xff]
  %v153 = vld [vmem:[%s1 + $0x408] sm:$0xff]
  %v154 = vld [vmem:[%s1 + $0x410] sm:$0xff]
  %v155 = vld [vmem:[%s1 + $0x418] sm:$0xff]
  %v156 = vld [vmem:[%s1 + $0x420] sm:$0xff]
  %v157 = vld [vmem:[%s1 + $0x428] sm:$0xff]
  %v158 = vld [vmem:[%s1 + $0x430] sm:$0xff]
  %v159 = vld [vmem:[%s1 + $0x438] sm:$0xff]
  %v160 = vld [vmem:[%s1 + $0x440] sm:$0xff]
  %v161 = vld [vmem:[%s1 + $0x448] sm:$0xff]
  %v162 = vld [vmem:[%s1 + $0x450] sm:$0xff]
  %v163 = vld [vmem:[%s1 + $0x458] sm:$0xff]
  %v164 = vld [vmem:[%s1 + $0x460] sm:$0xff]
  %v165 = vld [vmem:[%s1 + $0x468] sm:$0xff]
  %v166 = vld [vmem:[%s1 + $0x470] sm:$0xff]
  %v167 = vld [vmem:[%s1 + $0x478] sm:$0xff]
  %v168 = vld [vmem:[%s1 + $0x480] sm:$0xff]
  %v169 = vld [vmem:[%s1 + $0x488] sm:$0xff]
  %v170 = vld [vmem:[%s1 + $0x490] sm:$0xff]
  %v171 = vld [vmem:[%s1 + $0x498] sm:$0xff]
  %v172 = vld [vmem:[%s1 + $0x4a0] sm:$0xff]
  %v173 = vld [vmem:[%s1 + $0x4a8] sm:$0xff]
  %v174 = vld [vmem:[%s1 + $0x4b0] sm:$0xff]
  %v175 = vld [vmem:[%s1 + $0x4b8] sm:$0xff]
  %v176 = vld [vmem:[%s1 + $0x4c0] sm:$0xff]
  %v177 = vld [vmem:[%s1 + $0x4c8] sm:$0xff]
  %v178 = vld [vmem:[%s1 + $0x4d0] sm:$0xff]
  %v179 = vld [vmem:[%s1 + $0x4d8] sm:$0xff]
  %v180 = vld [vmem:[%s1 + $0x4e0] sm:$0xff]
  %v181 = vld [vmem:[%s1 + $0x4e8] sm:$0xff]
  %v182 = vld [vmem:[%s1 + $0x4f0] sm:$0xff]
  %v183 = vld [vmem:[%s1 + $0x4f8] sm:$0xff]
  %v184 = vld [vmem:[%s1 + $0x500] sm:$0xff]
  %v185 = vld [vmem:[%s1 + $0x508] sm:$0xff]
  %v186 = vld [vmem:[%s1 + $0x510] sm:$0xff]
  %v187 = vld [vmem:[%s1 + $0x518] sm:$0xff]
  %v188 = vld [vmem:[%s1 + $0x520] sm:$0xff]
  %v189 = vld [vmem:[%s1 + $0x528] sm:$0xff]
  %v190 = vld [vmem:[%s1 + $0x530] sm:$0xff]
  %v191 = vld [vmem:[%s1 + $0x538] sm:$0xff]
  %v192 = vld [vmem:[%s1 + $0x540] sm:$0xff]
  %v193 = vld [vmem:[%s1 + $0x548] sm:$0xff]
  %v194 = vld [vmem:[%s1 + $0x550] sm:$0xff]
  %v195 = vld [vmem:[%s1 + $0x558] sm:$0xff]
  %v196 = vld [vmem:[%s1 + $0x560] sm:$0xff]
  %v197 = vld [vmem:[%s1 + $0x568] sm:$0xff]
  %v198 = vld [vmem:[%s1 + $0x570] sm:$0xff]
  %v199 = vld [vmem:[%s1 + $0x578] sm:$0xff]
  %v200 = vld [vmem:[%s1 + $0x580] sm:$0xff]
  %v201 = vld [vmem:[%s1 + $0x588] sm:$0xff]
  %v202 = vld [vmem:[%s1 + $0x590] sm:$0xff]
  %v203 = vld [vmem:[%s1 + $0x598] sm:$0xff]
  %v204 = vld [vmem:[%s1 + $0x5a0] sm:$0xff]
  %v205 = vld [vmem:[%s1 + $0x5a8] sm:$0xff]
  %v206 = vld [vmem:[%s1 + $0x5b0] sm:$0xff]
  %v207 = vld [vmem:[%s1 + $0x5b8] sm:$0xff]
  %v208 = vld [vmem:[%s1 + $0x5c0] sm:$0xff]
  %v209 = vld [vmem:[%s1 + $0x5c8] sm:$0xff]
  %v210 = vld [vmem:[%s1 + $0x5d0] sm:$0xff]
  %v211 = vld [vmem:[%s1 + $0x5d8] sm:$0xff]
  %v212 = vld [vmem:[%s1 + $0x5e0] sm:$0xff]
  %v213 = vld [vmem:[%s1 + $0x5e8] sm:$0xff]
  %v214 = vld [vmem:[%s1 + $0x5f0] sm:$0xff]
  %v215 = vld [vmem:[%s1 + $0x5f8] sm:$0xff]
  %v216 = vld [vmem:[%s1 + $0x600] sm:$0xff]
  %v217 = vld [vmem:[%s1 + $0x608] sm:$0xff]
  %v218 = vld [vmem:[%s1 + $0x610] sm:$0xff]
  %v219 = vld [vmem:[%s1 + $0x618] sm:$0xff]
  %v220 = vld [vmem:[%s1 + $0x620] sm:$0xff]
  %v221 = vld [vmem:[%s1 + $0x628] sm:$0xff]
  %v222 = vld [vmem:[%s1 + $0x630] sm:$0xff]
  %v223 = vld [vmem:[%s1 + $0x638] sm:$0xff]
  %v224 = vld [vmem:[%s1 + $0x640] sm:$0xff]
  %v225 = vld [vmem:[%s1 + $0x648] sm:$0xff]
  %v226 = vld [vmem:[%s1 + $0x650] sm:$0xff]
  %v227 = vld [vmem:[%s1 + $0x658] sm:$0xff]
  %v228 = vld [vmem:[%s1 + $0x660] sm:$0xff]
  %v229 = vld [vmem:[%s1 + $0x668] sm:$0xff]
  %v230 = vld [vmem:[%s1 + $0x670] sm:$0xff]
  %v231 = vld [vmem:[%s1 + $0x678] sm:$0xff]
  %v232 = vld [vmem:[%s1 + $0x680] sm:$0xff]
  %v233 = vld [vmem:[%s1 + $0x688] sm:$0xff]
  %v234 = vld [vmem:[%s1 + $0x690] sm:$0xff]
  %v235 = vld [vmem:[%s1 + $0x698] sm:$0xff]
  %v236 = vld [vmem:[%s1 + $0x6a0] sm:$0xff]
  %v237 = vld [vmem:[%s1 + $0x6a8] sm:$0xff]
  %v238 = vld [vmem:[%s1 + $0x6b0] sm:$0xff]
  %v239 = vld [vmem:[%s1 + $0x6b8] sm:$0xff]
  %v240 = vld [vmem:[%s1 + $0x6c0] sm:$0xff]
  %v241 = vld [vmem:[%s1 + $0x6c8] sm:$0xff]
  %v242 = vld [vmem:[%s1 + $0x6d0] sm:$0xff]
  %v243 = vld [vmem:[%s1 + $0x6d8] sm:$0xff]
  %v244 = vld [vmem:[%s1 + $0x6e0] sm:$0xff]
  %v245 = vld [vmem:[%s1 + $0x6e8] sm:$0xff]
  %v246 = vld [vmem:[%s1 + $0x6f0] sm:$0xff]
  %v247 = vld [vmem:[%s1 + $0x6f8] sm:$0xff]
  %v248 = vld [vmem:[%s1 + $0x700] sm:$0xff]
  %v249 = vld [vmem:[%s1 + $0x708] sm:$0xff]
  %v250 = vld [vmem:[%s1 + $0x710] sm:$0xff]
  %v251 = vld [vmem:[%s1 + $0x718] sm:$0xff]
  %v252 = vld [vmem:[%s1 + $0x720] sm:$0xff]
  %v253 = vld [vmem:[%s1 + $0x728] sm:$0xff]
  %v254 = vld [vmem:[%s1 + $0x730] sm:$0xff]
  %v255 = vld [vmem:[%s1 + $0x738] sm:$0xff]
  %v256 = vld [vmem:[%s1 + $0x740] sm:$0xff]
  %v257 = vld [vmem:[%s1 + $0x748] sm:$0xff]
  %v258 = vld [vmem:[%s1 + $0x750] sm:$0xff]
  %v259 = vld [vmem:[%s1 + $0x758] sm:$0xff]
  %v260 = vld [vmem:[%s1 + $0x760] sm:$0xff]
  %v261 = vld [vmem:[%s1 + $0x768] sm:$0xff]
  %v262 = vld [vmem:[%s1 + $0x770] sm:$0xff]
  %v263 = vld [vmem:[%s1 + $0x778] sm:$0xff]
  %v264 = vld [vmem:[%s1 + $0x780] sm:$0xff]
  %v265 = vld [vmem:[%s1 + $0x788] sm:$0xff]
  %v266 = vld [vmem:[%s1 + $0x790] sm:$0xff]
  %v267 = vld [vmem:[%s1 + $0x798] sm:$0xff]
  %v268 = vld [vmem:[%s1 + $0x7a0] sm:$0xff]
  %v269 = vld [vmem:[%s1 + $0x7a8] sm:$0xff]
  %v270 = vld [vmem:[%s1 + $0x7b0] sm:$0xff]
  %v271 = vld [vmem:[%s1 + $0x7b8] sm:$0xff]
  %v272 = vld [vmem:[%s1 + $0x7c0] sm:$0xff]
  %v273 = vld [vmem:[%s1 + $0x7c8] sm:$0xff]
  %v274 = vld [vmem:[%s1 + $0x7d0] sm:$0xff]
  %v275 = vld [vmem:[%s1 + $0x7d8] sm:$0xff]
  %v276 = vld [vmem:[%s1 + $0x7e0] sm:$0xff]
  %v277 = vld [vmem:[%s1 + $0x7e8] sm:$0xff]
  %v278 = vld [vmem:[%s1 + $0x7f0] sm:$0xff]
  %v279 = vld [vmem:[%s1 + $0x7f8] sm:$0xff]
  %v280 = vld [vmem:[%s1 + $0x800] sm:$0xff]
  %v281 = vld [vmem:[%s1 + $0x808] sm:$0xff]
  %v282 = vld [vmem:[%s1 + $0x810] sm:$0xff]
  %v283 = vld [vmem:[%s1 + $0x818] sm:$0xff]
  %v284 = vld [vmem:[%s1 + $0x820] sm:$0xff]
  %v285 = vld [vmem:[%s1 + $0x828] sm:$0xff]
  %v286 = vld [vmem:[%s1 + $0x830] sm:$0xff]
  %v287 = vld [vmem:[%s1 + $0x838] sm:$0xff]
  %v288 = vld [vmem:[%s1 + $0x840] sm:$0xff]
  %v289 = vld [vmem:[%s1 + $0x848] sm:$0xff]
  %v290 = vld [vmem:[%s1 + $0x850] sm:$0xff]
  %v291 = vld [vmem:[%s1 + $0x858] sm:$0xff]
  %v292 = vld [vmem:[%s1 + $0x860] sm:$0xff]
  %v293 = vld [vmem:[%s1 + $0x868] sm:$0xff]
  %v294 = vld [vmem:[%s1 + $0x870] sm:$0xff]
  %v295 = vld [vmem:[%s1 + $0x878] sm:$0xff]
  %v296 = vld [vmem:[%s1 + $0x880] sm:$0xff]
  %v297 = vld [vmem:[%s1 + $0x888] sm:$0xff]
  %v298 = vld [vmem:[%s1 + $0x890] sm:$0xff]
  %v299 = vld [vmem:[%s1 + $0x898] sm:$0xff]
  %v300 = vld [vmem:[%s1 + $0x8a0] sm:$0xff]
  %v301 = vld [vmem:[%s1 + $0x8a8] sm:$0xff]
  %v302 = vld [vmem:[%s1 + $0x8b0] sm:$0xff]
  %v303 = vld [vmem:[%s1 + $0x8b8] sm:$0xff]
  %v304 = vld [vmem:[%s1 + $0x8c0] sm:$0xff]
  %v305 = vld [vmem:[%s1 + $0x8c8] sm:$0xff]
  %v306 = vld [vmem:[%s1 + $0x8d0] sm:$0xff]
  %v307 = vld [vmem:[%s1 + $0x8d8] sm:$0xff]
  %v308 = vld [vmem:[%s1 + $0x8e0] sm:$0xff]
  %v309 = vld [vmem:[%s1 + $0x8e8] sm:$0xff]
  %v310 = vld [vmem:[%s1 + $0x8f0] sm:$0xff]
  %v311 = vld [vmem:[%s1 + $0x8f8] sm:$0xff]
  %v312 = vld [vmem:[%s2] sm:$0x3f]
  %v314 = vlaneseq
  %v315 = vshrl.u32 %v314, 7
  %v316 = vsub.s32 0, %v315
  %v317 = vrot.slane %v312, %v316
  %v318 = vlaneseq
  %v319 = vshrl.u32 %v318, 7
  %v320 = vsub.s32 1, %v319
  %v321 = vrot.slane %v312, %v320
  %v322 = vlaneseq
  %v323 = vshrl.u32 %v322, 7
  %v324 = vsub.s32 2, %v323
  %v325 = vrot.slane %v312, %v324
  %v326 = vlaneseq
  %v327 = vshrl.u32 %v326, 7
  %v328 = vsub.s32 3, %v327
  %v329 = vrot.slane %v312, %v328
  %v330 = vlaneseq
  %v331 = vshrl.u32 %v330, 7
  %v332 = vsub.s32 4, %v331
  %v333 = vrot.slane %v312, %v332
  %v334 = vlaneseq
  %v335 = vshrl.u32 %v334, 7
  %v336 = vsub.s32 5, %v335
  %v337 = vrot.slane %v312, %v336
  %v347 = vunpack.c.l.b16 %v21
  %v348 = vunpack.c.h.b16 %v21
  %v349 = vunpack.c.l.b16 %v22
  %v350 = vunpack.c.h.b16 %v22
  %v351 = vunpack.c.l.b16 %v23
  %v352 = vunpack.c.h.b16 %v23
  %v353 = vpack.c.b16 %v347, %v347
  %v354 = vpack.c.b16 %v348, %v348
  %v355 = vpack.c.b16 %v349, %v349
  %v356 = vpack.c.b16 %v350, %v350
  %v357 = vpack.c.b16 %v351, %v351
  %v358 = vpack.c.b16 %v352, %v352
  %v653 = vunpack.c.l.b16 %v24
  %v654 = vunpack.c.h.b16 %v24
  %v655 = vunpack.c.l.b16 %v25
  %v656 = vunpack.c.h.b16 %v25
  %v657 = vunpack.c.l.b16 %v26
  %v658 = vunpack.c.h.b16 %v26
  %v659 = vunpack.c.l.b16 %v27
  %v660 = vunpack.c.h.b16 %v27
  %v661 = vunpack.c.l.b16 %v28
  %v662 = vunpack.c.h.b16 %v28
  %v663 = vunpack.c.l.b16 %v29
  %v664 = vunpack.c.h.b16 %v29
  %v665 = vunpack.c.l.b16 %v30
  %v666 = vunpack.c.h.b16 %v30
  %v667 = vunpack.c.l.b16 %v31
  %v668 = vunpack.c.h.b16 %v31
  %v669 = vunpack.c.l.b16 %v32
  %v670 = vunpack.c.h.b16 %v32
  %v671 = vunpack.c.l.b16 %v33
  %v672 = vunpack.c.h.b16 %v33
  %v673 = vunpack.c.l.b16 %v34
  %v674 = vunpack.c.h.b16 %v34
  %v675 = vunpack.c.l.b16 %v35
  %v676 = vunpack.c.h.b16 %v35
  %v677 = vunpack.c.l.b16 %v36
  %v678 = vunpack.c.h.b16 %v36
  %v679 = vunpack.c.l.b16 %v37
  %v680 = vunpack.c.h.b16 %v37
  %v681 = vunpack.c.l.b16 %v38
  %v682 = vunpack.c.h.b16 %v38
  %v683 = vunpack.c.l.b16 %v39
  %v684 = vunpack.c.h.b16 %v39
  %v685 = vunpack.c.l.b16 %v40
  %v686 = vunpack.c.h.b16 %v40
  %v687 = vunpack.c.l.b16 %v41
  %v688 = vunpack.c.h.b16 %v41
  %v689 = vunpack.c.l.b16 %v42
  %v690 = vunpack.c.h.b16 %v42
  %v691 = vunpack.c.l.b16 %v43
  %v692 = vunpack.c.h.b16 %v43
  %v693 = vunpack.c.l.b16 %v44
  %v694 = vunpack.c.h.b16 %v44
  %v695 = vunpack.c.l.b16 %v45
  %v696 = vunpack.c.h.b16 %v45
  %v697 = vunpack.c.l.b16 %v46
  %v698 = vunpack.c.h.b16 %v46
  %v699 = vunpack.c.l.b16 %v47
  %v700 = vunpack.c.h.b16 %v47
  %v701 = vunpack.c.l.b16 %v48
  %v702 = vunpack.c.h.b16 %v48
  %v703 = vunpack.c.l.b16 %v49
  %v704 = vunpack.c.h.b16 %v49
  %v705 = vunpack.c.l.b16 %v50
  %v706 = vunpack.c.h.b16 %v50
  %v707 = vunpack.c.l.b16 %v51
  %v708 = vunpack.c.h.b16 %v51
  %v709 = vunpack.c.l.b16 %v52
  %v710 = vunpack.c.h.b16 %v52
  %v711 = vunpack.c.l.b16 %v53
  %v712 = vunpack.c.h.b16 %v53
  %v713 = vunpack.c.l.b16 %v54
  %v714 = vunpack.c.h.b16 %v54
  %v715 = vunpack.c.l.b16 %v55
  %v716 = vunpack.c.h.b16 %v55
  %v717 = vunpack.c.l.b16 %v56
  %v718 = vunpack.c.h.b16 %v56
  %v719 = vunpack.c.l.b16 %v57
  %v720 = vunpack.c.h.b16 %v57
  %v721 = vunpack.c.l.b16 %v58
  %v722 = vunpack.c.h.b16 %v58
  %v723 = vunpack.c.l.b16 %v59
  %v724 = vunpack.c.h.b16 %v59
  %v725 = vunpack.c.l.b16 %v60
  %v726 = vunpack.c.h.b16 %v60
  %v727 = vunpack.c.l.b16 %v61
  %v728 = vunpack.c.h.b16 %v61
  %v729 = vunpack.c.l.b16 %v62
  %v730 = vunpack.c.h.b16 %v62
  %v731 = vunpack.c.l.b16 %v63
  %v732 = vunpack.c.h.b16 %v63
  %v733 = vunpack.c.l.b16 %v64
  %v734 = vunpack.c.h.b16 %v64
  %v735 = vunpack.c.l.b16 %v65
  %v736 = vunpack.c.h.b16 %v65
  %v737 = vunpack.c.l.b16 %v66
  %v738 = vunpack.c.h.b16 %v66
  %v739 = vunpack.c.l.b16 %v67
  %v740 = vunpack.c.h.b16 %v67
  %v741 = vunpack.c.l.b16 %v68
  %v742 = vunpack.c.h.b16 %v68
  %v743 = vunpack.c.l.b16 %v69
  %v744 = vunpack.c.h.b16 %v69
  %v745 = vunpack.c.l.b16 %v70
  %v746 = vunpack.c.h.b16 %v70
  %v747 = vunpack.c.l.b16 %v71
  %v748 = vunpack.c.h.b16 %v71
  %v749 = vunpack.c.l.b16 %v72
  %v750 = vunpack.c.h.b16 %v72
  %v751 = vunpack.c.l.b16 %v73
  %v752 = vunpack.c.h.b16 %v73
  %v753 = vunpack.c.l.b16 %v74
  %v754 = vunpack.c.h.b16 %v74
  %v755 = vunpack.c.l.b16 %v75
  %v756 = vunpack.c.h.b16 %v75
  %v757 = vunpack.c.l.b16 %v76
  %v758 = vunpack.c.h.b16 %v76
  %v759 = vunpack.c.l.b16 %v77
  %v760 = vunpack.c.h.b16 %v77
  %v761 = vunpack.c.l.b16 %v78
  %v762 = vunpack.c.h.b16 %v78
  %v763 = vunpack.c.l.b16 %v79
  %v764 = vunpack.c.h.b16 %v79
  %v765 = vunpack.c.l.b16 %v80
  %v766 = vunpack.c.h.b16 %v80
  %v767 = vunpack.c.l.b16 %v81
  %v768 = vunpack.c.h.b16 %v81
  %v769 = vunpack.c.l.b16 %v82
  %v770 = vunpack.c.h.b16 %v82
  %v771 = vunpack.c.l.b16 %v83
  %v772 = vunpack.c.h.b16 %v83
  %v773 = vunpack.c.l.b16 %v84
  %v774 = vunpack.c.h.b16 %v84
  %v775 = vunpack.c.l.b16 %v85
  %v776 = vunpack.c.h.b16 %v85
  %v777 = vunpack.c.l.b16 %v86
  %v778 = vunpack.c.h.b16 %v86
  %v779 = vunpack.c.l.b16 %v87
  %v780 = vunpack.c.h.b16 %v87
  %v781 = vunpack.c.l.b16 %v88
  %v782 = vunpack.c.h.b16 %v88
  %v783 = vunpack.c.l.b16 %v89
  %v784 = vunpack.c.h.b16 %v89
  %v785 = vunpack.c.l.b16 %v90
  %v786 = vunpack.c.h.b16 %v90
  %v787 = vunpack.c.l.b16 %v91
  %v788 = vunpack.c.h.b16 %v91
  %v789 = vunpack.c.l.b16 %v92
  %v790 = vunpack.c.h.b16 %v92
  %v791 = vunpack.c.l.b16 %v93
  %v792 = vunpack.c.h.b16 %v93
  %v793 = vunpack.c.l.b16 %v94
  %v794 = vunpack.c.h.b16 %v94
  %v795 = vunpack.c.l.b16 %v95
  %v796 = vunpack.c.h.b16 %v95
  %v797 = vunpack.c.l.b16 %v96
  %v798 = vunpack.c.h.b16 %v96
  %v799 = vunpack.c.l.b16 %v97
  %v800 = vunpack.c.h.b16 %v97
  %v801 = vunpack.c.l.b16 %v98
  %v802 = vunpack.c.h.b16 %v98
  %v803 = vunpack.c.l.b16 %v99
  %v804 = vunpack.c.h.b16 %v99
  %v805 = vunpack.c.l.b16 %v100
  %v806 = vunpack.c.h.b16 %v100
  %v807 = vunpack.c.l.b16 %v101
  %v808 = vunpack.c.h.b16 %v101
  %v809 = vunpack.c.l.b16 %v102
  %v810 = vunpack.c.h.b16 %v102
  %v811 = vunpack.c.l.b16 %v103
  %v812 = vunpack.c.h.b16 %v103
  %v813 = vunpack.c.l.b16 %v104
  %v814 = vunpack.c.h.b16 %v104
  %v815 = vunpack.c.l.b16 %v105
  %v816 = vunpack.c.h.b16 %v105
  %v817 = vunpack.c.l.b16 %v106
  %v818 = vunpack.c.h.b16 %v106
  %v819 = vunpack.c.l.b16 %v107
  %v820 = vunpack.c.h.b16 %v107
  %v821 = vunpack.c.l.b16 %v108
  %v822 = vunpack.c.h.b16 %v108
  %v823 = vunpack.c.l.b16 %v109
  %v824 = vunpack.c.h.b16 %v109
  %v825 = vunpack.c.l.b16 %v110
  %v826 = vunpack.c.h.b16 %v110
  %v827 = vunpack.c.l.b16 %v111
  %v828 = vunpack.c.h.b16 %v111
  %v829 = vunpack.c.l.b16 %v112
  %v830 = vunpack.c.h.b16 %v112
  %v831 = vunpack.c.l.b16 %v113
  %v832 = vunpack.c.h.b16 %v113
  %v833 = vunpack.c.l.b16 %v114
  %v834 = vunpack.c.h.b16 %v114
  %v835 = vunpack.c.l.b16 %v115
  %v836 = vunpack.c.h.b16 %v115
  %v837 = vunpack.c.l.b16 %v116
  %v838 = vunpack.c.h.b16 %v116
  %v839 = vunpack.c.l.b16 %v117
  %v840 = vunpack.c.h.b16 %v117
  %v841 = vunpack.c.l.b16 %v118
  %v842 = vunpack.c.h.b16 %v118
  %v843 = vunpack.c.l.b16 %v119
  %v844 = vunpack.c.h.b16 %v119
  %v845 = vunpack.c.l.b16 %v120
  %v846 = vunpack.c.h.b16 %v120
  %v847 = vunpack.c.l.b16 %v121
  %v848 = vunpack.c.h.b16 %v121
  %v849 = vunpack.c.l.b16 %v122
  %v850 = vunpack.c.h.b16 %v122
  %v851 = vunpack.c.l.b16 %v123
  %v852 = vunpack.c.h.b16 %v123
  %v853 = vunpack.c.l.b16 %v124
  %v854 = vunpack.c.h.b16 %v124
  %v855 = vunpack.c.l.b16 %v125
  %v856 = vunpack.c.h.b16 %v125
  %v857 = vunpack.c.l.b16 %v126
  %v858 = vunpack.c.h.b16 %v126
  %v859 = vunpack.c.l.b16 %v127
  %v860 = vunpack.c.h.b16 %v127
  %v861 = vunpack.c.l.b16 %v128
  %v862 = vunpack.c.h.b16 %v128
  %v863 = vunpack.c.l.b16 %v129
  %v864 = vunpack.c.h.b16 %v129
  %v865 = vunpack.c.l.b16 %v130
  %v866 = vunpack.c.h.b16 %v130
  %v867 = vunpack.c.l.b16 %v131
  %v868 = vunpack.c.h.b16 %v131
  %v869 = vunpack.c.l.b16 %v132
  %v870 = vunpack.c.h.b16 %v132
  %v871 = vunpack.c.l.b16 %v133
  %v872 = vunpack.c.h.b16 %v133
  %v873 = vunpack.c.l.b16 %v134
  %v874 = vunpack.c.h.b16 %v134
  %v875 = vunpack.c.l.b16 %v135
  %v876 = vunpack.c.h.b16 %v135
  %v877 = vunpack.c.l.b16 %v136
  %v878 = vunpack.c.h.b16 %v136
  %v879 = vunpack.c.l.b16 %v137
  %v880 = vunpack.c.h.b16 %v137
  %v881 = vunpack.c.l.b16 %v138
  %v882 = vunpack.c.h.b16 %v138
  %v883 = vunpack.c.l.b16 %v139
  %v884 = vunpack.c.h.b16 %v139
  %v885 = vunpack.c.l.b16 %v140
  %v886 = vunpack.c.h.b16 %v140
  %v887 = vunpack.c.l.b16 %v141
  %v888 = vunpack.c.h.b16 %v141
  %v889 = vunpack.c.l.b16 %v142
  %v890 = vunpack.c.h.b16 %v142
  %v891 = vunpack.c.l.b16 %v143
  %v892 = vunpack.c.h.b16 %v143
  %v893 = vunpack.c.l.b16 %v144
  %v894 = vunpack.c.h.b16 %v144
  %v895 = vunpack.c.l.b16 %v145
  %v896 = vunpack.c.h.b16 %v145
  %v897 = vunpack.c.l.b16 %v146
  %v898 = vunpack.c.h.b16 %v146
  %v899 = vunpack.c.l.b16 %v147
  %v900 = vunpack.c.h.b16 %v147
  %v901 = vunpack.c.l.b16 %v148
  %v902 = vunpack.c.h.b16 %v148
  %v903 = vunpack.c.l.b16 %v149
  %v904 = vunpack.c.h.b16 %v149
  %v905 = vunpack.c.l.b16 %v150
  %v906 = vunpack.c.h.b16 %v150
  %v907 = vunpack.c.l.b16 %v151
  %v908 = vunpack.c.h.b16 %v151
  %v909 = vunpack.c.l.b16 %v152
  %v910 = vunpack.c.h.b16 %v152
  %v911 = vunpack.c.l.b16 %v153
  %v912 = vunpack.c.h.b16 %v153
  %v913 = vunpack.c.l.b16 %v154
  %v914 = vunpack.c.h.b16 %v154
  %v915 = vunpack.c.l.b16 %v155
  %v916 = vunpack.c.h.b16 %v155
  %v917 = vunpack.c.l.b16 %v156
  %v918 = vunpack.c.h.b16 %v156
  %v919 = vunpack.c.l.b16 %v157
  %v920 = vunpack.c.h.b16 %v157
  %v921 = vunpack.c.l.b16 %v158
  %v922 = vunpack.c.h.b16 %v158
  %v923 = vunpack.c.l.b16 %v159
  %v924 = vunpack.c.h.b16 %v159
  %v925 = vunpack.c.l.b16 %v160
  %v926 = vunpack.c.h.b16 %v160
  %v927 = vunpack.c.l.b16 %v161
  %v928 = vunpack.c.h.b16 %v161
  %v929 = vunpack.c.l.b16 %v162
  %v930 = vunpack.c.h.b16 %v162
  %v931 = vunpack.c.l.b16 %v163
  %v932 = vunpack.c.h.b16 %v163
  %v933 = vunpack.c.l.b16 %v164
  %v934 = vunpack.c.h.b16 %v164
  %v935 = vunpack.c.l.b16 %v165
  %v936 = vunpack.c.h.b16 %v165
  %v937 = vunpack.c.l.b16 %v166
  %v938 = vunpack.c.h.b16 %v166
  %v939 = vunpack.c.l.b16 %v167
  %v940 = vunpack.c.h.b16 %v167
  %v941 = vunpack.c.l.b16 %v168
  %v942 = vunpack.c.h.b16 %v168
  %v943 = vunpack.c.l.b16 %v169
  %v944 = vunpack.c.h.b16 %v169
  %v945 = vunpack.c.l.b16 %v170
  %v946 = vunpack.c.h.b16 %v170
  %v947 = vunpack.c.l.b16 %v171
  %v948 = vunpack.c.h.b16 %v171
  %v949 = vunpack.c.l.b16 %v172
  %v950 = vunpack.c.h.b16 %v172
  %v951 = vunpack.c.l.b16 %v173
  %v952 = vunpack.c.h.b16 %v173
  %v953 = vunpack.c.l.b16 %v174
  %v954 = vunpack.c.h.b16 %v174
  %v955 = vunpack.c.l.b16 %v175
  %v956 = vunpack.c.h.b16 %v175
  %v957 = vunpack.c.l.b16 %v176
  %v958 = vunpack.c.h.b16 %v176
  %v959 = vunpack.c.l.b16 %v177
  %v960 = vunpack.c.h.b16 %v177
  %v961 = vunpack.c.l.b16 %v178
  %v962 = vunpack.c.h.b16 %v178
  %v963 = vunpack.c.l.b16 %v179
  %v964 = vunpack.c.h.b16 %v179
  %v965 = vunpack.c.l.b16 %v180
  %v966 = vunpack.c.h.b16 %v180
  %v967 = vunpack.c.l.b16 %v181
  %v968 = vunpack.c.h.b16 %v181
  %v969 = vunpack.c.l.b16 %v182
  %v970 = vunpack.c.h.b16 %v182
  %v971 = vunpack.c.l.b16 %v183
  %v972 = vunpack.c.h.b16 %v183
  %v973 = vunpack.c.l.b16 %v184
  %v974 = vunpack.c.h.b16 %v184
  %v975 = vunpack.c.l.b16 %v185
  %v976 = vunpack.c.h.b16 %v185
  %v977 = vunpack.c.l.b16 %v186
  %v978 = vunpack.c.h.b16 %v186
  %v979 = vunpack.c.l.b16 %v187
  %v980 = vunpack.c.h.b16 %v187
  %v981 = vunpack.c.l.b16 %v188
  %v982 = vunpack.c.h.b16 %v188
  %v983 = vunpack.c.l.b16 %v189
  %v984 = vunpack.c.h.b16 %v189
  %v985 = vunpack.c.l.b16 %v190
  %v986 = vunpack.c.h.b16 %v190
  %v987 = vunpack.c.l.b16 %v191
  %v988 = vunpack.c.h.b16 %v191
  %v989 = vunpack.c.l.b16 %v192
  %v990 = vunpack.c.h.b16 %v192
  %v991 = vunpack.c.l.b16 %v193
  %v992 = vunpack.c.h.b16 %v193
  %v993 = vunpack.c.l.b16 %v194
  %v994 = vunpack.c.h.b16 %v194
  %v995 = vunpack.c.l.b16 %v195
  %v996 = vunpack.c.h.b16 %v195
  %v997 = vunpack.c.l.b16 %v196
  %v998 = vunpack.c.h.b16 %v196
  %v999 = vunpack.c.l.b16 %v197
  %v1000 = vunpack.c.h.b16 %v197
  %v1001 = vunpack.c.l.b16 %v198
  %v1002 = vunpack.c.h.b16 %v198
  %v1003 = vunpack.c.l.b16 %v199
  %v1004 = vunpack.c.h.b16 %v199
  %v1005 = vunpack.c.l.b16 %v200
  %v1006 = vunpack.c.h.b16 %v200
  %v1007 = vunpack.c.l.b16 %v201
  %v1008 = vunpack.c.h.b16 %v201
  %v1009 = vunpack.c.l.b16 %v202
  %v1010 = vunpack.c.h.b16 %v202
  %v1011 = vunpack.c.l.b16 %v203
  %v1012 = vunpack.c.h.b16 %v203
  %v1013 = vunpack.c.l.b16 %v204
  %v1014 = vunpack.c.h.b16 %v204
  %v1015 = vunpack.c.l.b16 %v205
  %v1016 = vunpack.c.h.b16 %v205
  %v1017 = vunpack.c.l.b16 %v206
  %v1018 = vunpack.c.h.b16 %v206
  %v1019 = vunpack.c.l.b16 %v207
  %v1020 = vunpack.c.h.b16 %v207
  %v1021 = vunpack.c.l.b16 %v208
  %v1022 = vunpack.c.h.b16 %v208
  %v1023 = vunpack.c.l.b16 %v209
  %v1024 = vunpack.c.h.b16 %v209
  %v1025 = vunpack.c.l.b16 %v210
  %v1026 = vunpack.c.h.b16 %v210
  %v1027 = vunpack.c.l.b16 %v211
  %v1028 = vunpack.c.h.b16 %v211
  %v1029 = vunpack.c.l.b16 %v212
  %v1030 = vunpack.c.h.b16 %v212
  %v1031 = vunpack.c.l.b16 %v213
  %v1032 = vunpack.c.h.b16 %v213
  %v1033 = vunpack.c.l.b16 %v214
  %v1034 = vunpack.c.h.b16 %v214
  %v1035 = vunpack.c.l.b16 %v215
  %v1036 = vunpack.c.h.b16 %v215
  %v1037 = vunpack.c.l.b16 %v216
  %v1038 = vunpack.c.h.b16 %v216
  %v1039 = vunpack.c.l.b16 %v217
  %v1040 = vunpack.c.h.b16 %v217
  %v1041 = vunpack.c.l.b16 %v218
  %v1042 = vunpack.c.h.b16 %v218
  %v1043 = vunpack.c.l.b16 %v219
  %v1044 = vunpack.c.h.b16 %v219
  %v1045 = vunpack.c.l.b16 %v220
  %v1046 = vunpack.c.h.b16 %v220
  %v1047 = vunpack.c.l.b16 %v221
  %v1048 = vunpack.c.h.b16 %v221
  %v1049 = vunpack.c.l.b16 %v222
  %v1050 = vunpack.c.h.b16 %v222
  %v1051 = vunpack.c.l.b16 %v223
  %v1052 = vunpack.c.h.b16 %v223
  %v1053 = vunpack.c.l.b16 %v224
  %v1054 = vunpack.c.h.b16 %v224
  %v1055 = vunpack.c.l.b16 %v225
  %v1056 = vunpack.c.h.b16 %v225
  %v1057 = vunpack.c.l.b16 %v226
  %v1058 = vunpack.c.h.b16 %v226
  %v1059 = vunpack.c.l.b16 %v227
  %v1060 = vunpack.c.h.b16 %v227
  %v1061 = vunpack.c.l.b16 %v228
  %v1062 = vunpack.c.h.b16 %v228
  %v1063 = vunpack.c.l.b16 %v229
  %v1064 = vunpack.c.h.b16 %v229
  %v1065 = vunpack.c.l.b16 %v230
  %v1066 = vunpack.c.h.b16 %v230
  %v1067 = vunpack.c.l.b16 %v231
  %v1068 = vunpack.c.h.b16 %v231
  %v1069 = vunpack.c.l.b16 %v232
  %v1070 = vunpack.c.h.b16 %v232
  %v1071 = vunpack.c.l.b16 %v233
  %v1072 = vunpack.c.h.b16 %v233
  %v1073 = vunpack.c.l.b16 %v234
  %v1074 = vunpack.c.h.b16 %v234
  %v1075 = vunpack.c.l.b16 %v235
  %v1076 = vunpack.c.h.b16 %v235
  %v1077 = vunpack.c.l.b16 %v236
  %v1078 = vunpack.c.h.b16 %v236
  %v1079 = vunpack.c.l.b16 %v237
  %v1080 = vunpack.c.h.b16 %v237
  %v1081 = vunpack.c.l.b16 %v238
  %v1082 = vunpack.c.h.b16 %v238
  %v1083 = vunpack.c.l.b16 %v239
  %v1084 = vunpack.c.h.b16 %v239
  %v1085 = vunpack.c.l.b16 %v240
  %v1086 = vunpack.c.h.b16 %v240
  %v1087 = vunpack.c.l.b16 %v241
  %v1088 = vunpack.c.h.b16 %v241
  %v1089 = vunpack.c.l.b16 %v242
  %v1090 = vunpack.c.h.b16 %v242
  %v1091 = vunpack.c.l.b16 %v243
  %v1092 = vunpack.c.h.b16 %v243
  %v1093 = vunpack.c.l.b16 %v244
  %v1094 = vunpack.c.h.b16 %v244
  %v1095 = vunpack.c.l.b16 %v245
  %v1096 = vunpack.c.h.b16 %v245
  %v1097 = vunpack.c.l.b16 %v246
  %v1098 = vunpack.c.h.b16 %v246
  %v1099 = vunpack.c.l.b16 %v247
  %v1100 = vunpack.c.h.b16 %v247
  %v1101 = vunpack.c.l.b16 %v248
  %v1102 = vunpack.c.h.b16 %v248
  %v1103 = vunpack.c.l.b16 %v249
  %v1104 = vunpack.c.h.b16 %v249
  %v1105 = vunpack.c.l.b16 %v250
  %v1106 = vunpack.c.h.b16 %v250
  %v1107 = vunpack.c.l.b16 %v251
  %v1108 = vunpack.c.h.b16 %v251
  %v1109 = vunpack.c.l.b16 %v252
  %v1110 = vunpack.c.h.b16 %v252
  %v1111 = vunpack.c.l.b16 %v253
  %v1112 = vunpack.c.h.b16 %v253
  %v1113 = vunpack.c.l.b16 %v254
  %v1114 = vunpack.c.h.b16 %v254
  %v1115 = vunpack.c.l.b16 %v255
  %v1116 = vunpack.c.h.b16 %v255
  %v1117 = vunpack.c.l.b16 %v256
  %v1118 = vunpack.c.h.b16 %v256
  %v1119 = vunpack.c.l.b16 %v257
  %v1120 = vunpack.c.h.b16 %v257
  %v1121 = vunpack.c.l.b16 %v258
  %v1122 = vunpack.c.h.b16 %v258
  %v1123 = vunpack.c.l.b16 %v259
  %v1124 = vunpack.c.h.b16 %v259
  %v1125 = vunpack.c.l.b16 %v260
  %v1126 = vunpack.c.h.b16 %v260
  %v1127 = vunpack.c.l.b16 %v261
  %v1128 = vunpack.c.h.b16 %v261
  %v1129 = vunpack.c.l.b16 %v262
  %v1130 = vunpack.c.h.b16 %v262
  %v1131 = vunpack.c.l.b16 %v263
  %v1132 = vunpack.c.h.b16 %v263
  %v1133 = vunpack.c.l.b16 %v264
  %v1134 = vunpack.c.h.b16 %v264
  %v1135 = vunpack.c.l.b16 %v265
  %v1136 = vunpack.c.h.b16 %v265
  %v1137 = vunpack.c.l.b16 %v266
  %v1138 = vunpack.c.h.b16 %v266
  %v1139 = vunpack.c.l.b16 %v267
  %v1140 = vunpack.c.h.b16 %v267
  %v1141 = vunpack.c.l.b16 %v268
  %v1142 = vunpack.c.h.b16 %v268
  %v1143 = vunpack.c.l.b16 %v269
  %v1144 = vunpack.c.h.b16 %v269
  %v1145 = vunpack.c.l.b16 %v270
  %v1146 = vunpack.c.h.b16 %v270
  %v1147 = vunpack.c.l.b16 %v271
  %v1148 = vunpack.c.h.b16 %v271
  %v1149 = vunpack.c.l.b16 %v272
  %v1150 = vunpack.c.h.b16 %v272
  %v1151 = vunpack.c.l.b16 %v273
  %v1152 = vunpack.c.h.b16 %v273
  %v1153 = vunpack.c.l.b16 %v274
  %v1154 = vunpack.c.h.b16 %v274
  %v1155 = vunpack.c.l.b16 %v275
  %v1156 = vunpack.c.h.b16 %v275
  %v1157 = vunpack.c.l.b16 %v276
  %v1158 = vunpack.c.h.b16 %v276
  %v1159 = vunpack.c.l.b16 %v277
  %v1160 = vunpack.c.h.b16 %v277
  %v1161 = vunpack.c.l.b16 %v278
  %v1162 = vunpack.c.h.b16 %v278
  %v1163 = vunpack.c.l.b16 %v279
  %v1164 = vunpack.c.h.b16 %v279
  %v1165 = vunpack.c.l.b16 %v280
  %v1166 = vunpack.c.h.b16 %v280
  %v1167 = vunpack.c.l.b16 %v281
  %v1168 = vunpack.c.h.b16 %v281
  %v1169 = vunpack.c.l.b16 %v282
  %v1170 = vunpack.c.h.b16 %v282
  %v1171 = vunpack.c.l.b16 %v283
  %v1172 = vunpack.c.h.b16 %v283
  %v1173 = vunpack.c.l.b16 %v284
  %v1174 = vunpack.c.h.b16 %v284
  %v1175 = vunpack.c.l.b16 %v285
  %v1176 = vunpack.c.h.b16 %v285
  %v1177 = vunpack.c.l.b16 %v286
  %v1178 = vunpack.c.h.b16 %v286
  %v1179 = vunpack.c.l.b16 %v287
  %v1180 = vunpack.c.h.b16 %v287
  %v1181 = vunpack.c.l.b16 %v288
  %v1182 = vunpack.c.h.b16 %v288
  %v1183 = vunpack.c.l.b16 %v289
  %v1184 = vunpack.c.h.b16 %v289
  %v1185 = vunpack.c.l.b16 %v290
  %v1186 = vunpack.c.h.b16 %v290
  %v1187 = vunpack.c.l.b16 %v291
  %v1188 = vunpack.c.h.b16 %v291
  %v1189 = vunpack.c.l.b16 %v292
  %v1190 = vunpack.c.h.b16 %v292
  %v1191 = vunpack.c.l.b16 %v293
  %v1192 = vunpack.c.h.b16 %v293
  %v1193 = vunpack.c.l.b16 %v294
  %v1194 = vunpack.c.h.b16 %v294
  %v1195 = vunpack.c.l.b16 %v295
  %v1196 = vunpack.c.h.b16 %v295
  %v1197 = vunpack.c.l.b16 %v296
  %v1198 = vunpack.c.h.b16 %v296
  %v1199 = vunpack.c.l.b16 %v297
  %v1200 = vunpack.c.h.b16 %v297
  %v1201 = vunpack.c.l.b16 %v298
  %v1202 = vunpack.c.h.b16 %v298
  %v1203 = vunpack.c.l.b16 %v299
  %v1204 = vunpack.c.h.b16 %v299
  %v1205 = vunpack.c.l.b16 %v300
  %v1206 = vunpack.c.h.b16 %v300
  %v1207 = vunpack.c.l.b16 %v301
  %v1208 = vunpack.c.h.b16 %v301
  %v1209 = vunpack.c.l.b16 %v302
  %v1210 = vunpack.c.h.b16 %v302
  %v1211 = vunpack.c.l.b16 %v303
  %v1212 = vunpack.c.h.b16 %v303
  %v1213 = vunpack.c.l.b16 %v304
  %v1214 = vunpack.c.h.b16 %v304
  %v1215 = vunpack.c.l.b16 %v305
  %v1216 = vunpack.c.h.b16 %v305
  %v1217 = vunpack.c.l.b16 %v306
  %v1218 = vunpack.c.h.b16 %v306
  %v1219 = vunpack.c.l.b16 %v307
  %v1220 = vunpack.c.h.b16 %v307
  %v1221 = vunpack.c.l.b16 %v308
  %v1222 = vunpack.c.h.b16 %v308
  %v1223 = vunpack.c.l.b16 %v309
  %v1224 = vunpack.c.h.b16 %v309
  %v1225 = vunpack.c.l.b16 %v310
  %v1226 = vunpack.c.h.b16 %v310
  %v1227 = vunpack.c.l.b16 %v311
  %v1228 = vunpack.c.h.b16 %v311
  %v1229 = vpack.c.b16 %v659, %v653
  %v1230 = vpack.c.b16 %v660, %v654
  %v1231 = vpack.c.b16 %v661, %v655
  %v1232 = vpack.c.b16 %v662, %v656
  %v1233 = vpack.c.b16 %v663, %v657
  %v1234 = vpack.c.b16 %v664, %v658
  %v1235 = vpack.c.b16 %v671, %v665
  %v1236 = vpack.c.b16 %v672, %v666
  %v1237 = vpack.c.b16 %v673, %v667
  %v1238 = vpack.c.b16 %v674, %v668
  %v1239 = vpack.c.b16 %v675, %v669
  %v1240 = vpack.c.b16 %v676, %v670
  %v1241 = vpack.c.b16 %v683, %v677
  %v1242 = vpack.c.b16 %v684, %v678
  %v1243 = vpack.c.b16 %v685, %v679
  %v1244 = vpack.c.b16 %v686, %v680
  %v1245 = vpack.c.b16 %v687, %v681
  %v1246 = vpack.c.b16 %v688, %v682
  %v1247 = vpack.c.b16 %v695, %v689
  %v1248 = vpack.c.b16 %v696, %v690
  %v1249 = vpack.c.b16 %v697, %v691
  %v1250 = vpack.c.b16 %v698, %v692
  %v1251 = vpack.c.b16 %v699, %v693
  %v1252 = vpack.c.b16 %v700, %v694
  %v1253 = vpack.c.b16 %v707, %v701
  %v1254 = vpack.c.b16 %v708, %v702
  %v1255 = vpack.c.b16 %v709, %v703
  %v1256 = vpack.c.b16 %v710, %v704
  %v1257 = vpack.c.b16 %v711, %v705
  %v1258 = vpack.c.b16 %v712, %v706
  %v1259 = vpack.c.b16 %v719, %v713
  %v1260 = vpack.c.b16 %v720, %v714
  %v1261 = vpack.c.b16 %v721, %v715
  %v1262 = vpack.c.b16 %v722, %v716
  %v1263 = vpack.c.b16 %v723, %v717
  %v1264 = vpack.c.b16 %v724, %v718
  %v1265 = vpack.c.b16 %v731, %v725
  %v1266 = vpack.c.b16 %v732, %v726
  %v1267 = vpack.c.b16 %v733, %v727
  %v1268 = vpack.c.b16 %v734, %v728
  %v1269 = vpack.c.b16 %v735, %v729
  %v1270 = vpack.c.b16 %v736, %v730
  %v1271 = vpack.c.b16 %v743, %v737
  %v1272 = vpack.c.b16 %v744, %v738
  %v1273 = vpack.c.b16 %v745, %v739
  %v1274 = vpack.c.b16 %v746, %v740
  %v1275 = vpack.c.b16 %v747, %v741
  %v1276 = vpack.c.b16 %v748, %v742
  %v1277 = vpack.c.b16 %v755, %v749
  %v1278 = vpack.c.b16 %v756, %v750
  %v1279 = vpack.c.b16 %v757, %v751
  %v1280 = vpack.c.b16 %v758, %v752
  %v1281 = vpack.c.b16 %v759, %v753
  %v1282 = vpack.c.b16 %v760, %v754
  %v1283 = vpack.c.b16 %v767, %v761
  %v1284 = vpack.c.b16 %v768, %v762
  %v1285 = vpack.c.b16 %v769, %v763
  %v1286 = vpack.c.b16 %v770, %v764
  %v1287 = vpack.c.b16 %v771, %v765
  %v1288 = vpack.c.b16 %v772, %v766
  %v1289 = vpack.c.b16 %v779, %v773
  %v1290 = vpack.c.b16 %v780, %v774
  %v1291 = vpack.c.b16 %v781, %v775
  %v1292 = vpack.c.b16 %v782, %v776
  %v1293 = vpack.c.b16 %v783, %v777
  %v1294 = vpack.c.b16 %v784, %v778
  %v1295 = vpack.c.b16 %v791, %v785
  %v1296 = vpack.c.b16 %v792, %v786
  %v1297 = vpack.c.b16 %v793, %v787
  %v1298 = vpack.c.b16 %v794, %v788
  %v1299 = vpack.c.b16 %v795, %v789
  %v1300 = vpack.c.b16 %v796, %v790
  %v1301 = vpack.c.b16 %v803, %v797
  %v1302 = vpack.c.b16 %v804, %v798
  %v1303 = vpack.c.b16 %v805, %v799
  %v1304 = vpack.c.b16 %v806, %v800
  %v1305 = vpack.c.b16 %v807, %v801
  %v1306 = vpack.c.b16 %v808, %v802
  %v1307 = vpack.c.b16 %v815, %v809
  %v1308 = vpack.c.b16 %v816, %v810
  %v1309 = vpack.c.b16 %v817, %v811
  %v1310 = vpack.c.b16 %v818, %v812
  %v1311 = vpack.c.b16 %v819, %v813
  %v1312 = vpack.c.b16 %v820, %v814
  %v1313 = vpack.c.b16 %v827, %v821
  %v1314 = vpack.c.b16 %v828, %v822
  %v1315 = vpack.c.b16 %v829, %v823
  %v1316 = vpack.c.b16 %v830, %v824
  %v1317 = vpack.c.b16 %v831, %v825
  %v1318 = vpack.c.b16 %v832, %v826
  %v1319 = vpack.c.b16 %v839, %v833
  %v1320 = vpack.c.b16 %v840, %v834
  %v1321 = vpack.c.b16 %v841, %v835
  %v1322 = vpack.c.b16 %v842, %v836
  %v1323 = vpack.c.b16 %v843, %v837
  %v1324 = vpack.c.b16 %v844, %v838
  %v1325 = vpack.c.b16 %v851, %v845
  %v1326 = vpack.c.b16 %v852, %v846
  %v1327 = vpack.c.b16 %v853, %v847
  %v1328 = vpack.c.b16 %v854, %v848
  %v1329 = vpack.c.b16 %v855, %v849
  %v1330 = vpack.c.b16 %v856, %v850
  %v1331 = vpack.c.b16 %v863, %v857
  %v1332 = vpack.c.b16 %v864, %v858
  %v1333 = vpack.c.b16 %v865, %v859
  %v1334 = vpack.c.b16 %v866, %v860
  %v1335 = vpack.c.b16 %v867, %v861
  %v1336 = vpack.c.b16 %v868, %v862
  %v1337 = vpack.c.b16 %v875, %v869
  %v1338 = vpack.c.b16 %v876, %v870
  %v1339 = vpack.c.b16 %v877, %v871
  %v1340 = vpack.c.b16 %v878, %v872
  %v1341 = vpack.c.b16 %v879, %v873
  %v1342 = vpack.c.b16 %v880, %v874
  %v1343 = vpack.c.b16 %v887, %v881
  %v1344 = vpack.c.b16 %v888, %v882
  %v1345 = vpack.c.b16 %v889, %v883
  %v1346 = vpack.c.b16 %v890, %v884
  %v1347 = vpack.c.b16 %v891, %v885
  %v1348 = vpack.c.b16 %v892, %v886
  %v1349 = vpack.c.b16 %v899, %v893
  %v1350 = vpack.c.b16 %v900, %v894
  %v1351 = vpack.c.b16 %v901, %v895
  %v1352 = vpack.c.b16 %v902, %v896
  %v1353 = vpack.c.b16 %v903, %v897
  %v1354 = vpack.c.b16 %v904, %v898
  %v1355 = vpack.c.b16 %v911, %v905
  %v1356 = vpack.c.b16 %v912, %v906
  %v1357 = vpack.c.b16 %v913, %v907
  %v1358 = vpack.c.b16 %v914, %v908
  %v1359 = vpack.c.b16 %v915, %v909
  %v1360 = vpack.c.b16 %v916, %v910
  %v1361 = vpack.c.b16 %v923, %v917
  %v1362 = vpack.c.b16 %v924, %v918
  %v1363 = vpack.c.b16 %v925, %v919
  %v1364 = vpack.c.b16 %v926, %v920
  %v1365 = vpack.c.b16 %v927, %v921
  %v1366 = vpack.c.b16 %v928, %v922
  %v1367 = vpack.c.b16 %v935, %v929
  %v1368 = vpack.c.b16 %v936, %v930
  %v1369 = vpack.c.b16 %v937, %v931
  %v1370 = vpack.c.b16 %v938, %v932
  %v1371 = vpack.c.b16 %v939, %v933
  %v1372 = vpack.c.b16 %v940, %v934
  %v1373 = vpack.c.b16 %v947, %v941
  %v1374 = vpack.c.b16 %v948, %v942
  %v1375 = vpack.c.b16 %v949, %v943
  %v1376 = vpack.c.b16 %v950, %v944
  %v1377 = vpack.c.b16 %v951, %v945
  %v1378 = vpack.c.b16 %v952, %v946
  %v1379 = vpack.c.b16 %v959, %v953
  %v1380 = vpack.c.b16 %v960, %v954
  %v1381 = vpack.c.b16 %v961, %v955
  %v1382 = vpack.c.b16 %v962, %v956
  %v1383 = vpack.c.b16 %v963, %v957
  %v1384 = vpack.c.b16 %v964, %v958
  %v1385 = vpack.c.b16 %v971, %v965
  %v1386 = vpack.c.b16 %v972, %v966
  %v1387 = vpack.c.b16 %v973, %v967
  %v1388 = vpack.c.b16 %v974, %v968
  %v1389 = vpack.c.b16 %v975, %v969
  %v1390 = vpack.c.b16 %v976, %v970
  %v1391 = vpack.c.b16 %v983, %v977
  %v1392 = vpack.c.b16 %v984, %v978
  %v1393 = vpack.c.b16 %v985, %v979
  %v1394 = vpack.c.b16 %v986, %v980
  %v1395 = vpack.c.b16 %v987, %v981
  %v1396 = vpack.c.b16 %v988, %v982
  %v1397 = vpack.c.b16 %v995, %v989
  %v1398 = vpack.c.b16 %v996, %v990
  %v1399 = vpack.c.b16 %v997, %v991
  %v1400 = vpack.c.b16 %v998, %v992
  %v1401 = vpack.c.b16 %v999, %v993
  %v1402 = vpack.c.b16 %v1000, %v994
  %v1403 = vpack.c.b16 %v1007, %v1001
  %v1404 = vpack.c.b16 %v1008, %v1002
  %v1405 = vpack.c.b16 %v1009, %v1003
  %v1406 = vpack.c.b16 %v1010, %v1004
  %v1407 = vpack.c.b16 %v1011, %v1005
  %v1408 = vpack.c.b16 %v1012, %v1006
  %v1409 = vpack.c.b16 %v1019, %v1013
  %v1410 = vpack.c.b16 %v1020, %v1014
  %v1411 = vpack.c.b16 %v1021, %v1015
  %v1412 = vpack.c.b16 %v1022, %v1016
  %v1413 = vpack.c.b16 %v1023, %v1017
  %v1414 = vpack.c.b16 %v1024, %v1018
  %v1415 = vpack.c.b16 %v1031, %v1025
  %v1416 = vpack.c.b16 %v1032, %v1026
  %v1417 = vpack.c.b16 %v1033, %v1027
  %v1418 = vpack.c.b16 %v1034, %v1028
  %v1419 = vpack.c.b16 %v1035, %v1029
  %v1420 = vpack.c.b16 %v1036, %v1030
  %v1421 = vpack.c.b16 %v1043, %v1037
  %v1422 = vpack.c.b16 %v1044, %v1038
  %v1423 = vpack.c.b16 %v1045, %v1039
  %v1424 = vpack.c.b16 %v1046, %v1040
  %v1425 = vpack.c.b16 %v1047, %v1041
  %v1426 = vpack.c.b16 %v1048, %v1042
  %v1427 = vpack.c.b16 %v1055, %v1049
  %v1428 = vpack.c.b16 %v1056, %v1050
  %v1429 = vpack.c.b16 %v1057, %v1051
  %v1430 = vpack.c.b16 %v1058, %v1052
  %v1431 = vpack.c.b16 %v1059, %v1053
  %v1432 = vpack.c.b16 %v1060, %v1054
  %v1433 = vpack.c.b16 %v1067, %v1061
  %v1434 = vpack.c.b16 %v1068, %v1062
  %v1435 = vpack.c.b16 %v1069, %v1063
  %v1436 = vpack.c.b16 %v1070, %v1064
  %v1437 = vpack.c.b16 %v1071, %v1065
  %v1438 = vpack.c.b16 %v1072, %v1066
  %v1439 = vpack.c.b16 %v1079, %v1073
  %v1440 = vpack.c.b16 %v1080, %v1074
  %v1441 = vpack.c.b16 %v1081, %v1075
  %v1442 = vpack.c.b16 %v1082, %v1076
  %v1443 = vpack.c.b16 %v1083, %v1077
  %v1444 = vpack.c.b16 %v1084, %v1078
  %v1445 = vpack.c.b16 %v1091, %v1085
  %v1446 = vpack.c.b16 %v1092, %v1086
  %v1447 = vpack.c.b16 %v1093, %v1087
  %v1448 = vpack.c.b16 %v1094, %v1088
  %v1449 = vpack.c.b16 %v1095, %v1089
  %v1450 = vpack.c.b16 %v1096, %v1090
  %v1451 = vpack.c.b16 %v1103, %v1097
  %v1452 = vpack.c.b16 %v1104, %v1098
  %v1453 = vpack.c.b16 %v1105, %v1099
  %v1454 = vpack.c.b16 %v1106, %v1100
  %v1455 = vpack.c.b16 %v1107, %v1101
  %v1456 = vpack.c.b16 %v1108, %v1102
  %v1457 = vpack.c.b16 %v1115, %v1109
  %v1458 = vpack.c.b16 %v1116, %v1110
  %v1459 = vpack.c.b16 %v1117, %v1111
  %v1460 = vpack.c.b16 %v1118, %v1112
  %v1461 = vpack.c.b16 %v1119, %v1113
  %v1462 = vpack.c.b16 %v1120, %v1114
  %v1463 = vpack.c.b16 %v1127, %v1121
  %v1464 = vpack.c.b16 %v1128, %v1122
  %v1465 = vpack.c.b16 %v1129, %v1123
  %v1466 = vpack.c.b16 %v1130, %v1124
  %v1467 = vpack.c.b16 %v1131, %v1125
  %v1468 = vpack.c.b16 %v1132, %v1126
  %v1469 = vpack.c.b16 %v1139, %v1133
  %v1470 = vpack.c.b16 %v1140, %v1134
  %v1471 = vpack.c.b16 %v1141, %v1135
  %v1472 = vpack.c.b16 %v1142, %v1136
  %v1473 = vpack.c.b16 %v1143, %v1137
  %v1474 = vpack.c.b16 %v1144, %v1138
  %v1475 = vpack.c.b16 %v1151, %v1145
  %v1476 = vpack.c.b16 %v1152, %v1146
  %v1477 = vpack.c.b16 %v1153, %v1147
  %v1478 = vpack.c.b16 %v1154, %v1148
  %v1479 = vpack.c.b16 %v1155, %v1149
  %v1480 = vpack.c.b16 %v1156, %v1150
  %v1481 = vpack.c.b16 %v1163, %v1157
  %v1482 = vpack.c.b16 %v1164, %v1158
  %v1483 = vpack.c.b16 %v1165, %v1159
  %v1484 = vpack.c.b16 %v1166, %v1160
  %v1485 = vpack.c.b16 %v1167, %v1161
  %v1486 = vpack.c.b16 %v1168, %v1162
  %v1487 = vpack.c.b16 %v1175, %v1169
  %v1488 = vpack.c.b16 %v1176, %v1170
  %v1489 = vpack.c.b16 %v1177, %v1171
  %v1490 = vpack.c.b16 %v1178, %v1172
  %v1491 = vpack.c.b16 %v1179, %v1173
  %v1492 = vpack.c.b16 %v1180, %v1174
  %v1493 = vpack.c.b16 %v1187, %v1181
  %v1494 = vpack.c.b16 %v1188, %v1182
  %v1495 = vpack.c.b16 %v1189, %v1183
  %v1496 = vpack.c.b16 %v1190, %v1184
  %v1497 = vpack.c.b16 %v1191, %v1185
  %v1498 = vpack.c.b16 %v1192, %v1186
  %v1499 = vpack.c.b16 %v1199, %v1193
  %v1500 = vpack.c.b16 %v1200, %v1194
  %v1501 = vpack.c.b16 %v1201, %v1195
  %v1502 = vpack.c.b16 %v1202, %v1196
  %v1503 = vpack.c.b16 %v1203, %v1197
  %v1504 = vpack.c.b16 %v1204, %v1198
  %v1505 = vpack.c.b16 %v1211, %v1205
  %v1506 = vpack.c.b16 %v1212, %v1206
  %v1507 = vpack.c.b16 %v1213, %v1207
  %v1508 = vpack.c.b16 %v1214, %v1208
  %v1509 = vpack.c.b16 %v1215, %v1209
  %v1510 = vpack.c.b16 %v1216, %v1210
  %v1511 = vpack.c.b16 %v1223, %v1217
  %v1512 = vpack.c.b16 %v1224, %v1218
  %v1513 = vpack.c.b16 %v1225, %v1219
  %v1514 = vpack.c.b16 %v1226, %v1220
  %v1515 = vpack.c.b16 %v1227, %v1221
  %v1516 = vpack.c.b16 %v1228, %v1222
  %1805 = vmatprep.subr.bf16.mxu0 %v1230
  %1806 = vmatpush1.bf16.msra.mxu0 %v1229
  %1807 = vmatprep.subr.bf16.mxu0 %v1236
  %1808 = vmatpush1.bf16.msra.mxu0 %v1235
  %1809 = vmatprep.subr.bf16.mxu0 %v1242
  %1810 = vmatpush1.bf16.msra.mxu0 %v1241
  %1811 = vmatprep.subr.bf16.mxu0 %v1248
  %1812 = vmatpush1.bf16.msra.mxu0 %v1247
  %1813 = vmatprep.subr.bf16.mxu0 %v1254
  %1814 = vmatpush1.bf16.msra.mxu0 %v1253
  %1815 = vmatprep.subr.bf16.mxu0 %v1260
  %1816 = vmatpush1.bf16.msra.mxu0 %v1259
  %1817 = vmatprep.subr.bf16.mxu0 %v1266
  %1818 = vmatpush1.bf16.msra.mxu0 %v1265
  %1819 = vmatprep.subr.bf16.mxu0 %v1272
  %1820 = vmatpush1.bf16.msra.mxu0 %v1271
  %1821 = vmatprep.subr.bf16.mxu0 %v1278
  %1822 = vmatpush1.bf16.msra.mxu0 %v1277
  %1823 = vmatprep.subr.bf16.mxu0 %v1284
  %1824 = vmatpush1.bf16.msra.mxu0 %v1283
  %1825 = vmatprep.subr.bf16.mxu0 %v1290
  %1826 = vmatpush1.bf16.msra.mxu0 %v1289
  %1827 = vmatprep.subr.bf16.mxu0 %v1296
  %1828 = vmatpush1.bf16.msra.mxu0 %v1295
  %1829 = vmatprep.subr.bf16.mxu0 %v1302
  %1830 = vmatpush1.bf16.msra.mxu0 %v1301
  %1831 = vmatprep.subr.bf16.mxu0 %v1308
  %1832 = vmatpush1.bf16.msra.mxu0 %v1307
  %1833 = vmatprep.subr.bf16.mxu0 %v1314
  %1834 = vmatpush1.bf16.msra.mxu0 %v1313
  %1835 = vmatprep.subr.bf16.mxu0 %v1320
  %1836 = vmatpush1.bf16.msra.mxu0 %v1319
  %1837 = vmatprep.mubr.bf16.mxu0 %v354
  %1838 = vmatmul.mubr.bf16.gmra.mrb[0].mxu0 %v353
  %v1839 = vpop.f32.mrb[0].mxu0
  %v1840 = vadd.f32 %v317, %v1839
  %v1841 = vpop.f32.mrb[0].mxu0
  %v1842 = vadd.f32 %v321, %v1841
  %v1843 = vpop.f32.mrb[0].mxu0
  %v1844 = vpop.f32.mrb[0].mxu0
  %1845 = vdwg.mxu0
  %1846 = vmatprep.subr.bf16.mxu0 %v1326
  %1847 = vmatpush1.bf16.msra.mxu0 %v1325
  %1848 = vmatprep.subr.bf16.mxu0 %v1332
  %1849 = vmatpush1.bf16.msra.mxu0 %v1331
  %1850 = vmatprep.subr.bf16.mxu0 %v1338
  %1851 = vmatpush1.bf16.msra.mxu0 %v1337
  %1852 = vmatprep.subr.bf16.mxu0 %v1344
  %1853 = vmatpush1.bf16.msra.mxu0 %v1343
  %1854 = vmatprep.subr.bf16.mxu0 %v1350
  %1855 = vmatpush1.bf16.msra.mxu0 %v1349
  %1856 = vmatprep.subr.bf16.mxu0 %v1356
  %1857 = vmatpush1.bf16.msra.mxu0 %v1355
  %1858 = vmatprep.subr.bf16.mxu0 %v1362
  %1859 = vmatpush1.bf16.msra.mxu0 %v1361
  %1860 = vmatprep.subr.bf16.mxu0 %v1368
  %1861 = vmatpush1.bf16.msra.mxu0 %v1367
  %1862 = vmatprep.subr.bf16.mxu0 %v1374
  %1863 = vmatpush1.bf16.msra.mxu0 %v1373
  %1864 = vmatprep.subr.bf16.mxu0 %v1380
  %1865 = vmatpush1.bf16.msra.mxu0 %v1379
  %1866 = vmatprep.subr.bf16.mxu0 %v1386
  %1867 = vmatpush1.bf16.msra.mxu0 %v1385
  %1868 = vmatprep.subr.bf16.mxu0 %v1392
  %1869 = vmatpush1.bf16.msra.mxu0 %v1391
  %1870 = vmatprep.subr.bf16.mxu0 %v1398
  %1871 = vmatpush1.bf16.msra.mxu0 %v1397
  %1872 = vmatprep.subr.bf16.mxu0 %v1404
  %1873 = vmatpush1.bf16.msra.mxu0 %v1403
  %1874 = vmatprep.subr.bf16.mxu0 %v1410
  %1875 = vmatpush1.bf16.msra.mxu0 %v1409
  %1876 = vmatprep.subr.bf16.mxu0 %v1416
  %1877 = vmatpush1.bf16.msra.mxu0 %v1415
  %1878 = vmatprep.mubr.bf16.mxu0 %v356
  %1879 = vmatmul.mubr.bf16.gmra.mrb[0].mxu0 %v355
  %v1880 = vpop.f32.mrb[0].mxu0
  %v1881 = vadd.f32 %v1840, %v1880
  %v1882 = vpop.f32.mrb[0].mxu0
  %v1883 = vadd.f32 %v1842, %v1882
  %v1884 = vpop.f32.mrb[0].mxu0
  %v1885 = vpop.f32.mrb[0].mxu0
  %1886 = vdwg.mxu0
  %1887 = vmatprep.subr.bf16.mxu0 %v1422
  %1888 = vmatpush1.bf16.msra.mxu0 %v1421
  %1889 = vmatprep.subr.bf16.mxu0 %v1428
  %1890 = vmatpush1.bf16.msra.mxu0 %v1427
  %1891 = vmatprep.subr.bf16.mxu0 %v1434
  %1892 = vmatpush1.bf16.msra.mxu0 %v1433
  %1893 = vmatprep.subr.bf16.mxu0 %v1440
  %1894 = vmatpush1.bf16.msra.mxu0 %v1439
  %1895 = vmatprep.subr.bf16.mxu0 %v1446
  %1896 = vmatpush1.bf16.msra.mxu0 %v1445
  %1897 = vmatprep.subr.bf16.mxu0 %v1452
  %1898 = vmatpush1.bf16.msra.mxu0 %v1451
  %1899 = vmatprep.subr.bf16.mxu0 %v1458
  %1900 = vmatpush1.bf16.msra.mxu0 %v1457
  %1901 = vmatprep.subr.bf16.mxu0 %v1464
  %1902 = vmatpush1.bf16.msra.mxu0 %v1463
  %1903 = vmatprep.subr.bf16.mxu0 %v1470
  %1904 = vmatpush1.bf16.msra.mxu0 %v1469
  %1905 = vmatprep.subr.bf16.mxu0 %v1476
  %1906 = vmatpush1.bf16.msra.mxu0 %v1475
  %1907 = vmatprep.subr.bf16.mxu0 %v1482
  %1908 = vmatpush1.bf16.msra.mxu0 %v1481
  %1909 = vmatprep.subr.bf16.mxu0 %v1488
  %1910 = vmatpush1.bf16.msra.mxu0 %v1487
  %1911 = vmatprep.subr.bf16.mxu0 %v1494
  %1912 = vmatpush1.bf16.msra.mxu0 %v1493
  %1913 = vmatprep.subr.bf16.mxu0 %v1500
  %1914 = vmatpush1.bf16.msra.mxu0 %v1499
  %1915 = vmatprep.subr.bf16.mxu0 %v1506
  %1916 = vmatpush1.bf16.msra.mxu0 %v1505
  %1917 = vmatprep.subr.bf16.mxu0 %v1512
  %1918 = vmatpush1.bf16.msra.mxu0 %v1511
  %1919 = vmatprep.mubr.bf16.mxu0 %v358
  %1920 = vmatmul.mubr.bf16.gmra.mrb[0].mxu0 %v357
  %v1921 = vpop.f32.mrb[0].mxu0
  %v1922 = vadd.f32 %v1881, %v1921
  %v1923 = vpop.f32.mrb[0].mxu0
  %v1924 = vadd.f32 %v1883, %v1923
  %v1925 = vpop.f32.mrb[0].mxu0
  %v1926 = vpop.f32.mrb[0].mxu0
  %1927 = vdwg.mxu0
  %1928 = vmatprep.subr.bf16.mxu0 %v1232
  %1929 = vmatpush1.bf16.msra.mxu0 %v1231
  %1930 = vmatprep.subr.bf16.mxu0 %v1238
  %1931 = vmatpush1.bf16.msra.mxu0 %v1237
  %1932 = vmatprep.subr.bf16.mxu0 %v1244
  %1933 = vmatpush1.bf16.msra.mxu0 %v1243
  %1934 = vmatprep.subr.bf16.mxu0 %v1250
  %1935 = vmatpush1.bf16.msra.mxu0 %v1249
  %1936 = vmatprep.subr.bf16.mxu0 %v1256
  %1937 = vmatpush1.bf16.msra.mxu0 %v1255
  %1938 = vmatprep.subr.bf16.mxu0 %v1262
  %1939 = vmatpush1.bf16.msra.mxu0 %v1261
  %1940 = vmatprep.subr.bf16.mxu0 %v1268
  %1941 = vmatpush1.bf16.msra.mxu0 %v1267
  %1942 = vmatprep.subr.bf16.mxu0 %v1274
  %1943 = vmatpush1.bf16.msra.mxu0 %v1273
  %1944 = vmatprep.subr.bf16.mxu0 %v1280
  %1945 = vmatpush1.bf16.msra.mxu0 %v1279
  %1946 = vmatprep.subr.bf16.mxu0 %v1286
  %1947 = vmatpush1.bf16.msra.mxu0 %v1285
  %1948 = vmatprep.subr.bf16.mxu0 %v1292
  %1949 = vmatpush1.bf16.msra.mxu0 %v1291
  %1950 = vmatprep.subr.bf16.mxu0 %v1298
  %1951 = vmatpush1.bf16.msra.mxu0 %v1297
  %1952 = vmatprep.subr.bf16.mxu0 %v1304
  %1953 = vmatpush1.bf16.msra.mxu0 %v1303
  %1954 = vmatprep.subr.bf16.mxu0 %v1310
  %1955 = vmatpush1.bf16.msra.mxu0 %v1309
  %1956 = vmatprep.subr.bf16.mxu0 %v1316
  %1957 = vmatpush1.bf16.msra.mxu0 %v1315
  %1958 = vmatprep.subr.bf16.mxu0 %v1322
  %1959 = vmatpush1.bf16.msra.mxu0 %v1321
  %1960 = vmatprep.mubr.bf16.mxu0 %v354
  %1961 = vmatmul.mubr.bf16.gmra.mrb[0].mxu0 %v353
  %v1962 = vpop.f32.mrb[0].mxu0
  %v1963 = vadd.f32 %v325, %v1962
  %v1964 = vpop.f32.mrb[0].mxu0
  %v1965 = vadd.f32 %v329, %v1964
  %v1966 = vpop.f32.mrb[0].mxu0
  %v1967 = vpop.f32.mrb[0].mxu0
  %1968 = vdwg.mxu0
  %1969 = vmatprep.subr.bf16.mxu0 %v1328
  %1970 = vmatpush1.bf16.msra.mxu0 %v1327
  %1971 = vmatprep.subr.bf16.mxu0 %v1334
  %1972 = vmatpush1.bf16.msra.mxu0 %v1333
  %1973 = vmatprep.subr.bf16.mxu0 %v1340
  %1974 = vmatpush1.bf16.msra.mxu0 %v1339
  %1975 = vmatprep.subr.bf16.mxu0 %v1346
  %1976 = vmatpush1.bf16.msra.mxu0 %v1345
  %1977 = vmatprep.subr.bf16.mxu0 %v1352
  %1978 = vmatpush1.bf16.msra.mxu0 %v1351
  %1979 = vmatprep.subr.bf16.mxu0 %v1358
  %1980 = vmatpush1.bf16.msra.mxu0 %v1357
  %1981 = vmatprep.subr.bf16.mxu0 %v1364
  %1982 = vmatpush1.bf16.msra.mxu0 %v1363
  %1983 = vmatprep.subr.bf16.mxu0 %v1370
  %1984 = vmatpush1.bf16.msra.mxu0 %v1369
  %1985 = vmatprep.subr.bf16.mxu0 %v1376
  %1986 = vmatpush1.bf16.msra.mxu0 %v1375
  %1987 = vmatprep.subr.bf16.mxu0 %v1382
  %1988 = vmatpush1.bf16.msra.mxu0 %v1381
  %1989 = vmatprep.subr.bf16.mxu0 %v1388
  %1990 = vmatpush1.bf16.msra.mxu0 %v1387
  %1991 = vmatprep.subr.bf16.mxu0 %v1394
  %1992 = vmatpush1.bf16.msra.mxu0 %v1393
  %1993 = vmatprep.subr.bf16.mxu0 %v1400
  %1994 = vmatpush1.bf16.msra.mxu0 %v1399
  %1995 = vmatprep.subr.bf16.mxu0 %v1406
  %1996 = vmatpush1.bf16.msra.mxu0 %v1405
  %1997 = vmatprep.subr.bf16.mxu0 %v1412
  %1998 = vmatpush1.bf16.msra.mxu0 %v1411
  %1999 = vmatprep.subr.bf16.mxu0 %v1418
  %2000 = vmatpush1.bf16.msra.mxu0 %v1417
  %2001 = vmatprep.mubr.bf16.mxu0 %v356
  %2002 = vmatmul.mubr.bf16.gmra.mrb[0].mxu0 %v355
  %v2003 = vpop.f32.mrb[0].mxu0
  %v2004 = vadd.f32 %v1963, %v2003
  %v2005 = vpop.f32.mrb[0].mxu0
  %v2006 = vadd.f32 %v1965, %v2005
  %v2007 = vpop.f32.mrb[0].mxu0
  %v2008 = vpop.f32.mrb[0].mxu0
  %2009 = vdwg.mxu0
  %2010 = vmatprep.subr.bf16.mxu0 %v1424
  %2011 = vmatpush1.bf16.msra.mxu0 %v1423
  %2012 = vmatprep.subr.bf16.mxu0 %v1430
  %2013 = vmatpush1.bf16.msra.mxu0 %v1429
  %2014 = vmatprep.subr.bf16.mxu0 %v1436
  %2015 = vmatpush1.bf16.msra.mxu0 %v1435
  %2016 = vmatprep.subr.bf16.mxu0 %v1442
  %2017 = vmatpush1.bf16.msra.mxu0 %v1441
  %2018 = vmatprep.subr.bf16.mxu0 %v1448
  %2019 = vmatpush1.bf16.msra.mxu0 %v1447
  %2020 = vmatprep.subr.bf16.mxu0 %v1454
  %2021 = vmatpush1.bf16.msra.mxu0 %v1453
  %2022 = vmatprep.subr.bf16.mxu0 %v1460
  %2023 = vmatpush1.bf16.msra.mxu0 %v1459
  %2024 = vmatprep.subr.bf16.mxu0 %v1466
  %2025 = vmatpush1.bf16.msra.mxu0 %v1465
  %2026 = vmatprep.subr.bf16.mxu0 %v1472
  %2027 = vmatpush1.bf16.msra.mxu0 %v1471
  %2028 = vmatprep.subr.bf16.mxu0 %v1478
  %2029 = vmatpush1.bf16.msra.mxu0 %v1477
  %2030 = vmatprep.subr.bf16.mxu0 %v1484
  %2031 = vmatpush1.bf16.msra.mxu0 %v1483
  %2032 = vmatprep.subr.bf16.mxu0 %v1490
  %2033 = vmatpush1.bf16.msra.mxu0 %v1489
  %2034 = vmatprep.subr.bf16.mxu0 %v1496
  %2035 = vmatpush1.bf16.msra.mxu0 %v1495
  %2036 = vmatprep.subr.bf16.mxu0 %v1502
  %2037 = vmatpush1.bf16.msra.mxu0 %v1501
  %2038 = vmatprep.subr.bf16.mxu0 %v1508
  %2039 = vmatpush1.bf16.msra.mxu0 %v1507
  %2040 = vmatprep.subr.bf16.mxu0 %v1514
  %2041 = vmatpush1.bf16.msra.mxu0 %v1513
  %2042 = vmatprep.mubr.bf16.mxu0 %v358
  %2043 = vmatmul.mubr.bf16.gmra.mrb[0].mxu0 %v357
  %v2044 = vpop.f32.mrb[0].mxu0
  %v2045 = vadd.f32 %v2004, %v2044
  %v2046 = vpop.f32.mrb[0].mxu0
  %v2047 = vadd.f32 %v2006, %v2046
  %v2048 = vpop.f32.mrb[0].mxu0
  %v2049 = vpop.f32.mrb[0].mxu0
  %2050 = vdwg.mxu0
  %2051 = vmatprep.subr.bf16.mxu0 %v1234
  %2052 = vmatpush1.bf16.msra.mxu0 %v1233
  %2053 = vmatprep.subr.bf16.mxu0 %v1240
  %2054 = vmatpush1.bf16.msra.mxu0 %v1239
  %2055 = vmatprep.subr.bf16.mxu0 %v1246
  %2056 = vmatpush1.bf16.msra.mxu0 %v1245
  %2057 = vmatprep.subr.bf16.mxu0 %v1252
  %2058 = vmatpush1.bf16.msra.mxu0 %v1251
  %2059 = vmatprep.subr.bf16.mxu0 %v1258
  %2060 = vmatpush1.bf16.msra.mxu0 %v1257
  %2061 = vmatprep.subr.bf16.mxu0 %v1264
  %2062 = vmatpush1.bf16.msra.mxu0 %v1263
  %2063 = vmatprep.subr.bf16.mxu0 %v1270
  %2064 = vmatpush1.bf16.msra.mxu0 %v1269
  %2065 = vmatprep.subr.bf16.mxu0 %v1276
  %2066 = vmatpush1.bf16.msra.mxu0 %v1275
  %2067 = vmatprep.subr.bf16.mxu0 %v1282
  %2068 = vmatpush1.bf16.msra.mxu0 %v1281
  %2069 = vmatprep.subr.bf16.mxu0 %v1288
  %2070 = vmatpush1.bf16.msra.mxu0 %v1287
  %2071 = vmatprep.subr.bf16.mxu0 %v1294
  %2072 = vmatpush1.bf16.msra.mxu0 %v1293
  %2073 = vmatprep.subr.bf16.mxu0 %v1300
  %2074 = vmatpush1.bf16.msra.mxu0 %v1299
  %2075 = vmatprep.subr.bf16.mxu0 %v1306
  %2076 = vmatpush1.bf16.msra.mxu0 %v1305
  %2077 = vmatprep.subr.bf16.mxu0 %v1312
  %2078 = vmatpush1.bf16.msra.mxu0 %v1311
  %2079 = vmatprep.subr.bf16.mxu0 %v1318
  %2080 = vmatpush1.bf16.msra.mxu0 %v1317
  %2081 = vmatprep.subr.bf16.mxu0 %v1324
  %2082 = vmatpush1.bf16.msra.mxu0 %v1323
  %2083 = vmatprep.mubr.bf16.mxu0 %v354
  %2084 = vmatmul.mubr.bf16.gmra.mrb[0].mxu0 %v353
  %v2085 = vpop.f32.mrb[0].mxu0
  %v2086 = vadd.f32 %v333, %v2085
  %v2087 = vpop.f32.mrb[0].mxu0
  %v2088 = vadd.f32 %v337, %v2087
  %v2089 = vpop.f32.mrb[0].mxu0
  %v2090 = vpop.f32.mrb[0].mxu0
  %2091 = vdwg.mxu0
  %2092 = vmatprep.subr.bf16.mxu0 %v1330
  %2093 = vmatpush1.bf16.msra.mxu0 %v1329
  %2094 = vmatprep.subr.bf16.mxu0 %v1336
  %2095 = vmatpush1.bf16.msra.mxu0 %v1335
  %2096 = vmatprep.subr.bf16.mxu0 %v1342
  %2097 = vmatpush1.bf16.msra.mxu0 %v1341
  %2098 = vmatprep.subr.bf16.mxu0 %v1348
  %2099 = vmatpush1.bf16.msra.mxu0 %v1347
  %2100 = vmatprep.subr.bf16.mxu0 %v1354
  %2101 = vmatpush1.bf16.msra.mxu0 %v1353
  %2102 = vmatprep.subr.bf16.mxu0 %v1360
  %2103 = vmatpush1.bf16.msra.mxu0 %v1359
  %2104 = vmatprep.subr.bf16.mxu0 %v1366
  %2105 = vmatpush1.bf16.msra.mxu0 %v1365
  %2106 = vmatprep.subr.bf16.mxu0 %v1372
  %2107 = vmatpush1.bf16.msra.mxu0 %v1371
  %2108 = vmatprep.subr.bf16.mxu0 %v1378
  %2109 = vmatpush1.bf16.msra.mxu0 %v1377
  %2110 = vmatprep.subr.bf16.mxu0 %v1384
  %2111 = vmatpush1.bf16.msra.mxu0 %v1383
  %2112 = vmatprep.subr.bf16.mxu0 %v1390
  %2113 = vmatpush1.bf16.msra.mxu0 %v1389
  %2114 = vmatprep.subr.bf16.mxu0 %v1396
  %2115 = vmatpush1.bf16.msra.mxu0 %v1395
  %2116 = vmatprep.subr.bf16.mxu0 %v1402
  %2117 = vmatpush1.bf16.msra.mxu0 %v1401
  %2118 = vmatprep.subr.bf16.mxu0 %v1408
  %2119 = vmatpush1.bf16.msra.mxu0 %v1407
  %2120 = vmatprep.subr.bf16.mxu0 %v1414
  %2121 = vmatpush1.bf16.msra.mxu0 %v1413
  %2122 = vmatprep.subr.bf16.mxu0 %v1420
  %2123 = vmatpush1.bf16.msra.mxu0 %v1419
  %2124 = vmatprep.mubr.bf16.mxu0 %v356
  %2125 = vmatmul.mubr.bf16.gmra.mrb[0].mxu0 %v355
  %v2126 = vpop.f32.mrb[0].mxu0
  %v2127 = vadd.f32 %v2086, %v2126
  %v2128 = vpop.f32.mrb[0].mxu0
  %v2129 = vadd.f32 %v2088, %v2128
  %v2130 = vpop.f32.mrb[0].mxu0
  %v2131 = vpop.f32.mrb[0].mxu0
  %2132 = vdwg.mxu0
  %2133 = vmatprep.subr.bf16.mxu0 %v1426
  %2134 = vmatpush1.bf16.msra.mxu0 %v1425
  %2135 = vmatprep.subr.bf16.mxu0 %v1432
  %2136 = vmatpush1.bf16.msra.mxu0 %v1431
  %2137 = vmatprep.subr.bf16.mxu0 %v1438
  %2138 = vmatpush1.bf16.msra.mxu0 %v1437
  %2139 = vmatprep.subr.bf16.mxu0 %v1444
  %2140 = vmatpush1.bf16.msra.mxu0 %v1443
  %2141 = vmatprep.subr.bf16.mxu0 %v1450
  %2142 = vmatpush1.bf16.msra.mxu0 %v1449
  %2143 = vmatprep.subr.bf16.mxu0 %v1456
  %2144 = vmatpush1.bf16.msra.mxu0 %v1455
  %2145 = vmatprep.subr.bf16.mxu0 %v1462
  %2146 = vmatpush1.bf16.msra.mxu0 %v1461
  %2147 = vmatprep.subr.bf16.mxu0 %v1468
  %2148 = vmatpush1.bf16.msra.mxu0 %v1467
  %2149 = vmatprep.subr.bf16.mxu0 %v1474
  %2150 = vmatpush1.bf16.msra.mxu0 %v1473
  %2151 = vmatprep.subr.bf16.mxu0 %v1480
  %2152 = vmatpush1.bf16.msra.mxu0 %v1479
  %2153 = vmatprep.subr.bf16.mxu0 %v1486
  %2154 = vmatpush1.bf16.msra.mxu0 %v1485
  %2155 = vmatprep.subr.bf16.mxu0 %v1492
  %2156 = vmatpush1.bf16.msra.mxu0 %v1491
  %2157 = vmatprep.subr.bf16.mxu0 %v1498
  %2158 = vmatpush1.bf16.msra.mxu0 %v1497
  %2159 = vmatprep.subr.bf16.mxu0 %v1504
  %2160 = vmatpush1.bf16.msra.mxu0 %v1503
  %2161 = vmatprep.subr.bf16.mxu0 %v1510
  %2162 = vmatpush1.bf16.msra.mxu0 %v1509
  %2163 = vmatprep.subr.bf16.mxu0 %v1516
  %2164 = vmatpush1.bf16.msra.mxu0 %v1515
  %2165 = vmatprep.mubr.bf16.mxu0 %v358
  %2166 = vmatmul.mubr.bf16.gmra.mrb[0].mxu0 %v357
  %v2167 = vpop.f32.mrb[0].mxu0
  %v2168 = vadd.f32 %v2127, %v2167
  %v2169 = vpop.f32.mrb[0].mxu0
  %v2170 = vadd.f32 %v2129, %v2169
  %v2171 = vpop.f32.mrb[0].mxu0
  %v2172 = vpop.f32.mrb[0].mxu0
  %2173 = vdwg.mxu0
  %v2174 = vtanh.pop %v1922
  %v2175 = vtanh.pop %v1924
  %v2176 = vtanh.pop %v2045
  %v2177 = vtanh.pop %v2047
  %v2178 = vtanh.pop %v2168
  %v2179 = vtanh.pop %v2170
  %v2180 = vpack.c.bf16 %v2174, %v2174
  %v2181 = vpack.c.bf16 %v2175, %v2175
  %v2182 = vpack.c.bf16 %v2176, %v2176
  %v2183 = vpack.c.bf16 %v2177, %v2177
  %v2184 = vpack.c.bf16 %v2178, %v2178
  %v2185 = vpack.c.bf16 %v2179, %v2179
  %v2186 = vld [vmem:[%s3] sm:$0xf]
  %v2187 = vld [vmem:[%s3 + $0x4] sm:$0xf]
  %v2188 = vld [vmem:[%s3 + $0x8] sm:$0xf]
  %v2189 = vld [vmem:[%s3 + $0xc] sm:$0xf]
  %v2190 = vld [vmem:[%s3 + $0x10] sm:$0xf]
  %v2191 = vld [vmem:[%s3 + $0x14] sm:$0xf]
  %v2192 = vld [vmem:[%s3 + $0x18] sm:$0xf]
  %v2193 = vld [vmem:[%s3 + $0x1c] sm:$0xf]
  %v2194 = vld [vmem:[%s3 + $0x20] sm:$0xf]
  %v2195 = vld [vmem:[%s3 + $0x24] sm:$0xf]
  %v2196 = vld [vmem:[%s3 + $0x28] sm:$0xf]
  %v2197 = vld [vmem:[%s3 + $0x2c] sm:$0xf]
  %v2198 = vld [vmem:[%s3 + $0x30] sm:$0xf]
  %v2199 = vld [vmem:[%s3 + $0x34] sm:$0xf]
  %v2200 = vld [vmem:[%s3 + $0x38] sm:$0xf]
  %v2201 = vld [vmem:[%s3 + $0x3c] sm:$0xf]
  %v2202 = vld [vmem:[%s3 + $0x40] sm:$0xf]
  %v2203 = vld [vmem:[%s3 + $0x44] sm:$0xf]
  %v2204 = vld [vmem:[%s3 + $0x48] sm:$0xf]
  %v2205 = vld [vmem:[%s3 + $0x4c] sm:$0xf]
  %v2206 = vld [vmem:[%s3 + $0x50] sm:$0xf]
  %v2207 = vld [vmem:[%s3 + $0x54] sm:$0xf]
  %v2208 = vld [vmem:[%s3 + $0x58] sm:$0xf]
  %v2209 = vld [vmem:[%s3 + $0x5c] sm:$0xf]
  %v2210 = vld [vmem:[%s3 + $0x60] sm:$0xf]
  %v2211 = vld [vmem:[%s3 + $0x64] sm:$0xf]
  %v2212 = vld [vmem:[%s3 + $0x68] sm:$0xf]
  %v2213 = vld [vmem:[%s3 + $0x6c] sm:$0xf]
  %v2214 = vld [vmem:[%s3 + $0x70] sm:$0xf]
  %v2215 = vld [vmem:[%s3 + $0x74] sm:$0xf]
  %v2216 = vld [vmem:[%s3 + $0x78] sm:$0xf]
  %v2217 = vld [vmem:[%s3 + $0x7c] sm:$0xf]
  %v2218 = vld [vmem:[%s3 + $0x80] sm:$0xf]
  %v2219 = vld [vmem:[%s3 + $0x84] sm:$0xf]
  %v2220 = vld [vmem:[%s3 + $0x88] sm:$0xf]
  %v2221 = vld [vmem:[%s3 + $0x8c] sm:$0xf]
  %v2222 = vld [vmem:[%s3 + $0x90] sm:$0xf]
  %v2223 = vld [vmem:[%s3 + $0x94] sm:$0xf]
  %v2224 = vld [vmem:[%s3 + $0x98] sm:$0xf]
  %v2225 = vld [vmem:[%s3 + $0x9c] sm:$0xf]
  %v2226 = vld [vmem:[%s3 + $0xa0] sm:$0xf]
  %v2227 = vld [vmem:[%s3 + $0xa4] sm:$0xf]
  %v2228 = vld [vmem:[%s3 + $0xa8] sm:$0xf]
  %v2229 = vld [vmem:[%s3 + $0xac] sm:$0xf]
  %v2230 = vld [vmem:[%s3 + $0xb0] sm:$0xf]
  %v2231 = vld [vmem:[%s3 + $0xb4] sm:$0xf]
  %v2232 = vld [vmem:[%s3 + $0xb8] sm:$0xf]
  %v2233 = vld [vmem:[%s3 + $0xbc] sm:$0xf]
  %v2234 = vld [vmem:[%s3 + $0xc0] sm:$0xf]
  %v2235 = vld [vmem:[%s3 + $0xc4] sm:$0xf]
  %v2236 = vld [vmem:[%s3 + $0xc8] sm:$0xf]
  %v2237 = vld [vmem:[%s3 + $0xcc] sm:$0xf]
  %v2238 = vld [vmem:[%s3 + $0xd0] sm:$0xf]
  %v2239 = vld [vmem:[%s3 + $0xd4] sm:$0xf]
  %v2240 = vld [vmem:[%s3 + $0xd8] sm:$0xf]
  %v2241 = vld [vmem:[%s3 + $0xdc] sm:$0xf]
  %v2242 = vld [vmem:[%s3 + $0xe0] sm:$0xf]
  %v2243 = vld [vmem:[%s3 + $0xe4] sm:$0xf]
  %v2244 = vld [vmem:[%s3 + $0xe8] sm:$0xf]
  %v2245 = vld [vmem:[%s3 + $0xec] sm:$0xf]
  %v2246 = vld [vmem:[%s3 + $0xf0] sm:$0xf]
  %v2247 = vld [vmem:[%s3 + $0xf4] sm:$0xf]
  %v2248 = vld [vmem:[%s3 + $0xf8] sm:$0xf]
  %v2249 = vld [vmem:[%s3 + $0xfc] sm:$0xf]
  %v2250 = vld [vmem:[%s3 + $0x100] sm:$0xf]
  %v2251 = vld [vmem:[%s3 + $0x104] sm:$0xf]
  %v2252 = vld [vmem:[%s3 + $0x108] sm:$0xf]
  %v2253 = vld [vmem:[%s3 + $0x10c] sm:$0xf]
  %v2254 = vld [vmem:[%s3 + $0x110] sm:$0xf]
  %v2255 = vld [vmem:[%s3 + $0x114] sm:$0xf]
  %v2256 = vld [vmem:[%s3 + $0x118] sm:$0xf]
  %v2257 = vld [vmem:[%s3 + $0x11c] sm:$0xf]
  %v2258 = vld [vmem:[%s3 + $0x120] sm:$0xf]
  %v2259 = vld [vmem:[%s3 + $0x124] sm:$0xf]
  %v2260 = vld [vmem:[%s3 + $0x128] sm:$0xf]
  %v2261 = vld [vmem:[%s3 + $0x12c] sm:$0xf]
  %v2262 = vld [vmem:[%s3 + $0x130] sm:$0xf]
  %v2263 = vld [vmem:[%s3 + $0x134] sm:$0xf]
  %v2264 = vld [vmem:[%s3 + $0x138] sm:$0xf]
  %v2265 = vld [vmem:[%s3 + $0x13c] sm:$0xf]
  %v2266 = vld [vmem:[%s3 + $0x140] sm:$0xf]
  %v2267 = vld [vmem:[%s3 + $0x144] sm:$0xf]
  %v2268 = vld [vmem:[%s3 + $0x148] sm:$0xf]
  %v2269 = vld [vmem:[%s3 + $0x14c] sm:$0xf]
  %v2270 = vld [vmem:[%s3 + $0x150] sm:$0xf]
  %v2271 = vld [vmem:[%s3 + $0x154] sm:$0xf]
  %v2272 = vld [vmem:[%s3 + $0x158] sm:$0xf]
  %v2273 = vld [vmem:[%s3 + $0x15c] sm:$0xf]
  %v2274 = vld [vmem:[%s3 + $0x160] sm:$0xf]
  %v2275 = vld [vmem:[%s3 + $0x164] sm:$0xf]
  %v2276 = vld [vmem:[%s3 + $0x168] sm:$0xf]
  %v2277 = vld [vmem:[%s3 + $0x16c] sm:$0xf]
  %v2278 = vld [vmem:[%s3 + $0x170] sm:$0xf]
  %v2279 = vld [vmem:[%s3 + $0x174] sm:$0xf]
  %v2280 = vld [vmem:[%s3 + $0x178] sm:$0xf]
  %v2281 = vld [vmem:[%s3 + $0x17c] sm:$0xf]
  %v2282 = vld [vmem:[%s4] sm:$0x1]
  %v2284 = vlaneseq
  %v2285 = vshrl.u32 %v2284, 7
  %v2286 = vsub.s32 0, %v2285
  %v2287 = vrot.slane %v2282, %v2286
  %v2385 = vunpack.c.l.b16 %v2186
  %v2386 = vunpack.c.l.b16 %v2187
  %v2387 = vunpack.c.l.b16 %v2188
  %v2388 = vunpack.c.l.b16 %v2189
  %v2389 = vunpack.c.l.b16 %v2190
  %v2390 = vunpack.c.l.b16 %v2191
  %v2391 = vunpack.c.l.b16 %v2192
  %v2392 = vunpack.c.l.b16 %v2193
  %v2393 = vunpack.c.l.b16 %v2194
  %v2394 = vunpack.c.l.b16 %v2195
  %v2395 = vunpack.c.l.b16 %v2196
  %v2396 = vunpack.c.l.b16 %v2197
  %v2397 = vunpack.c.l.b16 %v2198
  %v2398 = vunpack.c.l.b16 %v2199
  %v2399 = vunpack.c.l.b16 %v2200
  %v2400 = vunpack.c.l.b16 %v2201
  %v2401 = vunpack.c.l.b16 %v2202
  %v2402 = vunpack.c.l.b16 %v2203
  %v2403 = vunpack.c.l.b16 %v2204
  %v2404 = vunpack.c.l.b16 %v2205
  %v2405 = vunpack.c.l.b16 %v2206
  %v2406 = vunpack.c.l.b16 %v2207
  %v2407 = vunpack.c.l.b16 %v2208
  %v2408 = vunpack.c.l.b16 %v2209
  %v2409 = vunpack.c.l.b16 %v2210
  %v2410 = vunpack.c.l.b16 %v2211
  %v2411 = vunpack.c.l.b16 %v2212
  %v2412 = vunpack.c.l.b16 %v2213
  %v2413 = vunpack.c.l.b16 %v2214
  %v2414 = vunpack.c.l.b16 %v2215
  %v2415 = vunpack.c.l.b16 %v2216
  %v2416 = vunpack.c.l.b16 %v2217
  %v2417 = vunpack.c.l.b16 %v2218
  %v2418 = vunpack.c.l.b16 %v2219
  %v2419 = vunpack.c.l.b16 %v2220
  %v2420 = vunpack.c.l.b16 %v2221
  %v2421 = vunpack.c.l.b16 %v2222
  %v2422 = vunpack.c.l.b16 %v2223
  %v2423 = vunpack.c.l.b16 %v2224
  %v2424 = vunpack.c.l.b16 %v2225
  %v2425 = vunpack.c.l.b16 %v2226
  %v2426 = vunpack.c.l.b16 %v2227
  %v2427 = vunpack.c.l.b16 %v2228
  %v2428 = vunpack.c.l.b16 %v2229
  %v2429 = vunpack.c.l.b16 %v2230
  %v2430 = vunpack.c.l.b16 %v2231
  %v2431 = vunpack.c.l.b16 %v2232
  %v2432 = vunpack.c.l.b16 %v2233
  %v2433 = vunpack.c.l.b16 %v2234
  %v2434 = vunpack.c.l.b16 %v2235
  %v2435 = vunpack.c.l.b16 %v2236
  %v2436 = vunpack.c.l.b16 %v2237
  %v2437 = vunpack.c.l.b16 %v2238
  %v2438 = vunpack.c.l.b16 %v2239
  %v2439 = vunpack.c.l.b16 %v2240
  %v2440 = vunpack.c.l.b16 %v2241
  %v2441 = vunpack.c.l.b16 %v2242
  %v2442 = vunpack.c.l.b16 %v2243
  %v2443 = vunpack.c.l.b16 %v2244
  %v2444 = vunpack.c.l.b16 %v2245
  %v2445 = vunpack.c.l.b16 %v2246
  %v2446 = vunpack.c.l.b16 %v2247
  %v2447 = vunpack.c.l.b16 %v2248
  %v2448 = vunpack.c.l.b16 %v2249
  %v2449 = vunpack.c.l.b16 %v2250
  %v2450 = vunpack.c.l.b16 %v2251
  %v2451 = vunpack.c.l.b16 %v2252
  %v2452 = vunpack.c.l.b16 %v2253
  %v2453 = vunpack.c.l.b16 %v2254
  %v2454 = vunpack.c.l.b16 %v2255
  %v2455 = vunpack.c.l.b16 %v2256
  %v2456 = vunpack.c.l.b16 %v2257
  %v2457 = vunpack.c.l.b16 %v2258
  %v2458 = vunpack.c.l.b16 %v2259
  %v2459 = vunpack.c.l.b16 %v2260
  %v2460 = vunpack.c.l.b16 %v2261
  %v2461 = vunpack.c.l.b16 %v2262
  %v2462 = vunpack.c.l.b16 %v2263
  %v2463 = vunpack.c.l.b16 %v2264
  %v2464 = vunpack.c.l.b16 %v2265
  %v2465 = vunpack.c.l.b16 %v2266
  %v2466 = vunpack.c.l.b16 %v2267
  %v2467 = vunpack.c.l.b16 %v2268
  %v2468 = vunpack.c.l.b16 %v2269
  %v2469 = vunpack.c.l.b16 %v2270
  %v2470 = vunpack.c.l.b16 %v2271
  %v2471 = vunpack.c.l.b16 %v2272
  %v2472 = vunpack.c.l.b16 %v2273
  %v2473 = vunpack.c.l.b16 %v2274
  %v2474 = vunpack.c.l.b16 %v2275
  %v2475 = vunpack.c.l.b16 %v2276
  %v2476 = vunpack.c.l.b16 %v2277
  %v2477 = vunpack.c.l.b16 %v2278
  %v2478 = vunpack.c.l.b16 %v2279
  %v2479 = vunpack.c.l.b16 %v2280
  %v2480 = vunpack.c.l.b16 %v2281
  %v2481 = vpack.c.b16 %v2386, %v2385
  %v2482 = vpack.c.b16 %v2388, %v2387
  %v2483 = vpack.c.b16 %v2390, %v2389
  %v2484 = vpack.c.b16 %v2392, %v2391
  %v2485 = vpack.c.b16 %v2394, %v2393
  %v2486 = vpack.c.b16 %v2396, %v2395
  %v2487 = vpack.c.b16 %v2398, %v2397
  %v2488 = vpack.c.b16 %v2400, %v2399
  %v2489 = vpack.c.b16 %v2402, %v2401
  %v2490 = vpack.c.b16 %v2404, %v2403
  %v2491 = vpack.c.b16 %v2406, %v2405
  %v2492 = vpack.c.b16 %v2408, %v2407
  %v2493 = vpack.c.b16 %v2410, %v2409
  %v2494 = vpack.c.b16 %v2412, %v2411
  %v2495 = vpack.c.b16 %v2414, %v2413
  %v2496 = vpack.c.b16 %v2416, %v2415
  %v2497 = vpack.c.b16 %v2418, %v2417
  %v2498 = vpack.c.b16 %v2420, %v2419
  %v2499 = vpack.c.b16 %v2422, %v2421
  %v2500 = vpack.c.b16 %v2424, %v2423
  %v2501 = vpack.c.b16 %v2426, %v2425
  %v2502 = vpack.c.b16 %v2428, %v2427
  %v2503 = vpack.c.b16 %v2430, %v2429
  %v2504 = vpack.c.b16 %v2432, %v2431
  %v2505 = vpack.c.b16 %v2434, %v2433
  %v2506 = vpack.c.b16 %v2436, %v2435
  %v2507 = vpack.c.b16 %v2438, %v2437
  %v2508 = vpack.c.b16 %v2440, %v2439
  %v2509 = vpack.c.b16 %v2442, %v2441
  %v2510 = vpack.c.b16 %v2444, %v2443
  %v2511 = vpack.c.b16 %v2446, %v2445
  %v2512 = vpack.c.b16 %v2448, %v2447
  %v2513 = vpack.c.b16 %v2450, %v2449
  %v2514 = vpack.c.b16 %v2452, %v2451
  %v2515 = vpack.c.b16 %v2454, %v2453
  %v2516 = vpack.c.b16 %v2456, %v2455
  %v2517 = vpack.c.b16 %v2458, %v2457
  %v2518 = vpack.c.b16 %v2460, %v2459
  %v2519 = vpack.c.b16 %v2462, %v2461
  %v2520 = vpack.c.b16 %v2464, %v2463
  %v2521 = vpack.c.b16 %v2466, %v2465
  %v2522 = vpack.c.b16 %v2468, %v2467
  %v2523 = vpack.c.b16 %v2470, %v2469
  %v2524 = vpack.c.b16 %v2472, %v2471
  %v2525 = vpack.c.b16 %v2474, %v2473
  %v2526 = vpack.c.b16 %v2476, %v2475
  %v2527 = vpack.c.b16 %v2478, %v2477
  %v2528 = vpack.c.b16 %v2480, %v2479
  %2577 = vmatprep.subr.bf16.mxu0 0
  %2578 = vmatpush1.bf16.msra.mxu0 %v2481
  %2579 = vmatprep.subr.bf16.mxu0 0
  %2580 = vmatpush1.bf16.msra.mxu0 %v2482
  %2581 = vmatprep.subr.bf16.mxu0 0
  %2582 = vmatpush1.bf16.msra.mxu0 %v2483
  %2583 = vmatprep.subr.bf16.mxu0 0
  %2584 = vmatpush1.bf16.msra.mxu0 %v2484
  %2585 = vmatprep.subr.bf16.mxu0 0
  %2586 = vmatpush1.bf16.msra.mxu0 %v2485
  %2587 = vmatprep.subr.bf16.mxu0 0
  %2588 = vmatpush1.bf16.msra.mxu0 %v2486
  %2589 = vmatprep.subr.bf16.mxu0 0
  %2590 = vmatpush1.bf16.msra.mxu0 %v2487
  %2591 = vmatprep.subr.bf16.mxu0 0
  %2592 = vmatpush1.bf16.msra.mxu0 %v2488
  %2593 = vmatprep.subr.bf16.mxu0 0
  %2594 = vmatpush1.bf16.msra.mxu0 %v2489
  %2595 = vmatprep.subr.bf16.mxu0 0
  %2596 = vmatpush1.bf16.msra.mxu0 %v2490
  %2597 = vmatprep.subr.bf16.mxu0 0
  %2598 = vmatpush1.bf16.msra.mxu0 %v2491
  %2599 = vmatprep.subr.bf16.mxu0 0
  %2600 = vmatpush1.bf16.msra.mxu0 %v2492
  %2601 = vmatprep.subr.bf16.mxu0 0
  %2602 = vmatpush1.bf16.msra.mxu0 %v2493
  %2603 = vmatprep.subr.bf16.mxu0 0
  %2604 = vmatpush1.bf16.msra.mxu0 %v2494
  %2605 = vmatprep.subr.bf16.mxu0 0
  %2606 = vmatpush1.bf16.msra.mxu0 %v2495
  %2607 = vmatprep.subr.bf16.mxu0 0
  %2608 = vmatpush1.bf16.msra.mxu0 %v2496
  %2609 = vmatprep.mubr.bf16.mxu0 %v2181
  %2610 = vmatmul.mubr.bf16.gmra.mrb[0].mxu0 %v2180
  %v2611 = vpop.f32.mrb[0].mxu0
  %v2612 = vadd.f32 %v2287, %v2611
  %v2613 = vpop.f32.mrb[0].mxu0
  %v2614 = vpop.f32.mrb[0].mxu0
  %v2615 = vpop.f32.mrb[0].mxu0
  %2616 = vdwg.mxu0
  %2617 = vmatprep.subr.bf16.mxu0 0
  %2618 = vmatpush1.bf16.msra.mxu0 %v2497
  %2619 = vmatprep.subr.bf16.mxu0 0
  %2620 = vmatpush1.bf16.msra.mxu0 %v2498
  %2621 = vmatprep.subr.bf16.mxu0 0
  %2622 = vmatpush1.bf16.msra.mxu0 %v2499
  %2623 = vmatprep.subr.bf16.mxu0 0
  %2624 = vmatpush1.bf16.msra.mxu0 %v2500
  %2625 = vmatprep.subr.bf16.mxu0 0
  %2626 = vmatpush1.bf16.msra.mxu0 %v2501
  %2627 = vmatprep.subr.bf16.mxu0 0
  %2628 = vmatpush1.bf16.msra.mxu0 %v2502
  %2629 = vmatprep.subr.bf16.mxu0 0
  %2630 = vmatpush1.bf16.msra.mxu0 %v2503
  %2631 = vmatprep.subr.bf16.mxu0 0
  %2632 = vmatpush1.bf16.msra.mxu0 %v2504
  %2633 = vmatprep.subr.bf16.mxu0 0
  %2634 = vmatpush1.bf16.msra.mxu0 %v2505
  %2635 = vmatprep.subr.bf16.mxu0 0
  %2636 = vmatpush1.bf16.msra.mxu0 %v2506
  %2637 = vmatprep.subr.bf16.mxu0 0
  %2638 = vmatpush1.bf16.msra.mxu0 %v2507
  %2639 = vmatprep.subr.bf16.mxu0 0
  %2640 = vmatpush1.bf16.msra.mxu0 %v2508
  %2641 = vmatprep.subr.bf16.mxu0 0
  %2642 = vmatpush1.bf16.msra.mxu0 %v2509
  %2643 = vmatprep.subr.bf16.mxu0 0
  %2644 = vmatpush1.bf16.msra.mxu0 %v2510
  %2645 = vmatprep.subr.bf16.mxu0 0
  %2646 = vmatpush1.bf16.msra.mxu0 %v2511
  %2647 = vmatprep.subr.bf16.mxu0 0
  %2648 = vmatpush1.bf16.msra.mxu0 %v2512
  %2649 = vmatprep.mubr.bf16.mxu0 %v2183
  %2650 = vmatmul.mubr.bf16.gmra.mrb[0].mxu0 %v2182
  %v2651 = vpop.f32.mrb[0].mxu0
  %v2652 = vadd.f32 %v2612, %v2651
  %v2653 = vpop.f32.mrb[0].mxu0
  %v2654 = vpop.f32.mrb[0].mxu0
  %v2655 = vpop.f32.mrb[0].mxu0
  %2656 = vdwg.mxu0
  %2657 = vmatprep.subr.bf16.mxu0 0
  %2658 = vmatpush1.bf16.msra.mxu0 %v2513
  %2659 = vmatprep.subr.bf16.mxu0 0
  %2660 = vmatpush1.bf16.msra.mxu0 %v2514
  %2661 = vmatprep.subr.bf16.mxu0 0
  %2662 = vmatpush1.bf16.msra.mxu0 %v2515
  %2663 = vmatprep.subr.bf16.mxu0 0
  %2664 = vmatpush1.bf16.msra.mxu0 %v2516
  %2665 = vmatprep.subr.bf16.mxu0 0
  %2666 = vmatpush1.bf16.msra.mxu0 %v2517
  %2667 = vmatprep.subr.bf16.mxu0 0
  %2668 = vmatpush1.bf16.msra.mxu0 %v2518
  %2669 = vmatprep.subr.bf16.mxu0 0
  %2670 = vmatpush1.bf16.msra.mxu0 %v2519
  %2671 = vmatprep.subr.bf16.mxu0 0
  %2672 = vmatpush1.bf16.msra.mxu0 %v2520
  %2673 = vmatprep.subr.bf16.mxu0 0
  %2674 = vmatpush1.bf16.msra.mxu0 %v2521
  %2675 = vmatprep.subr.bf16.mxu0 0
  %2676 = vmatpush1.bf16.msra.mxu0 %v2522
  %2677 = vmatprep.subr.bf16.mxu0 0
  %2678 = vmatpush1.bf16.msra.mxu0 %v2523
  %2679 = vmatprep.subr.bf16.mxu0 0
  %2680 = vmatpush1.bf16.msra.mxu0 %v2524
  %2681 = vmatprep.subr.bf16.mxu0 0
  %2682 = vmatpush1.bf16.msra.mxu0 %v2525
  %2683 = vmatprep.subr.bf16.mxu0 0
  %2684 = vmatpush1.bf16.msra.mxu0 %v2526
  %2685 = vmatprep.subr.bf16.mxu0 0
  %2686 = vmatpush1.bf16.msra.mxu0 %v2527
  %2687 = vmatprep.subr.bf16.mxu0 0
  %2688 = vmatpush1.bf16.msra.mxu0 %v2528
  %2689 = vmatprep.mubr.bf16.mxu0 %v2185
  %2690 = vmatmul.mubr.bf16.gmra.mrb[0].mxu0 %v2184
  %v2691 = vpop.f32.mrb[0].mxu0
  %v2692 = vadd.f32 %v2652, %v2691
  %v2693 = vpop.f32.mrb[0].mxu0
  %v2694 = vpop.f32.mrb[0].mxu0
  %v2695 = vpop.f32.mrb[0].mxu0
  %2696 = vdwg.mxu0
  %2697 = vst [vmem:[%s5] sm:$0xff] %v2692
  // Predicated region
  $region22: #{masker_net_mkr_forward.4} parent=0 // pred_check
    _
  $region23: #{masker_net_mkr_forward.4} parent=0 // pred_check_branch
    %2699 = sbr.rel (0) target = $region25
  $region24: #{masker_net_mkr_forward.4} parent=0 // pred_region
    _
  $region25: #{masker_net_mkr_forward.4} parent=0 // pred_fallthru
    _
  // Predicated region
  $region26: #{masker_net_mkr_forward.4} parent=0 // pred_check
    _
  $region27: #{masker_net_mkr_forward.4} parent=0 // pred_check_branch
    %2701 = sbr.rel (0) target = $region29
  $region28: #{masker_net_mkr_forward.4} parent=0 // pred_region
    _
  $region29: #{masker_net_mkr_forward.4} parent=0 // pred_fallthru
    _

// kernel: masker_net_mkr_forward.5
$region0: #{masker_net_mkr_forward.5}
  #allocation0 [shape = 'u32[]', space=smem, size = 0x4, offset = 0x4, fixed_abs, tag = 'smem constant byte address 0x4 - core index']
  #allocation1 [shape = 'u32[144,128]{1,0:T(1,128)}', space=vmem, size = 0x12000, scoped, tag = 'internal scratch']
  %s0 = inlined_call_operand.vmem [shape: bf16[16,768], index: 0, kind: input, shape index: {}]
  %s1 = inlined_call_operand.vmem [shape: bf16[768,768], index: 1, kind: input, shape index: {}]
  %s2 = inlined_call_operand.vmem [shape: f32[1,768], index: 2, kind: input, shape index: {}]
  %s3 = inlined_call_operand.vmem [shape: bf16[768,1024], index: 3, kind: input, shape index: {}]
  %s4 = inlined_call_operand.vmem [shape: f32[1,1024], index: 4, kind: input, shape index: {}]
  %s5 = inlined_call_operand.hbm [shape: f32[16,1024], index: 5, kind: output, shape index: {}]
  %s6 = sld [smem:[#allocation0]]
  $region30: #{masker_net_mkr_forward.5} parent=0
    _
  %s8 = ssub.s32 1, %s6
  %s9 = scalar_select 0, %s8, %s6
  $region1: #{masker_net_mkr_forward.5} parent=0
    #allocation2 [shape = 'u8[65536]{0}', space=vmem, size = 0x10000, scoped, tag = 'output window, operand 0, single buffered']
    #allocation3 [shape = 's32[1]{0}', space=sflag, size = 0x4, scoped, tag = 'scoped memory for masker_net_mkr_forward.5']
    %10 = vsyncpa [#allocation3], 0
    // Predicated region
    $region2: #{masker_net_mkr_forward.5} parent=1 // pred_check
      _
    $region3: #{masker_net_mkr_forward.5} parent=1 // pred_check_branch
      %12 = sbr.rel (0) target = $region5
    $region4: #{masker_net_mkr_forward.5} parent=1 // pred_region
      _
    $region5: #{masker_net_mkr_forward.5} parent=1 // pred_fallthru
      _
    // Predicated region
    $region6: #{masker_net_mkr_forward.5} parent=1 // pred_check
      _
    $region7: #{masker_net_mkr_forward.5} parent=1 // pred_check_branch
      %14 = sbr.rel (0) target = $region9
    $region8: #{masker_net_mkr_forward.5} parent=1 // pred_region
      _
    $region9: #{masker_net_mkr_forward.5} parent=1 // pred_fallthru
      _
    // Predicated region
    $region10: #{masker_net_mkr_forward.5} parent=1 // pred_check
      _
    $region11: #{masker_net_mkr_forward.5} parent=1 // pred_check_branch
      %16 = sbr.rel (0) target = $region13
    $region12: #{masker_net_mkr_forward.5} parent=1 // pred_region
      _
    $region13: #{masker_net_mkr_forward.5} parent=1 // pred_fallthru
      _
    // Predicated region
    $region14: #{masker_net_mkr_forward.5} parent=1 // pred_check
      _
    $region15: #{masker_net_mkr_forward.5} parent=1 // pred_check_branch
      %18 = sbr.rel (0) target = $region17
    $region16: #{masker_net_mkr_forward.5} parent=1 // pred_region
      _
    $region17: #{masker_net_mkr_forward.5} parent=1 // pred_fallthru
      _
    // Predicated region
    $region18: #{masker_net_mkr_forward.5} parent=1 // pred_check
      _
    $region19: #{masker_net_mkr_forward.5} parent=1 // pred_check_branch
      %20 = sbr.rel (0) target = $region21
    $region20: #{masker_net_mkr_forward.5} parent=1 // pred_region
      _
    $region21: #{masker_net_mkr_forward.5} parent=1 // pred_fallthru
      _
    %v21 = vld [vmem:[%s0] sm:$0xff]
    %v22 = vld [vmem:[%s0 + $0x8] sm:$0xff]
    %v23 = vld [vmem:[%s0 + $0x10] sm:$0xff]
    %v24 = vld [vmem:[%s0 + $0x18] sm:$0xff]
    %v25 = vld [vmem:[%s0 + $0x20] sm:$0xff]
    %v26 = vld [vmem:[%s0 + $0x28] sm:$0xff]
    %v27 = vld [vmem:[%s1] sm:$0xff]
    %v28 = vld [vmem:[%s1 + $0x8] sm:$0xff]
    %v29 = vld [vmem:[%s1 + $0x10] sm:$0xff]
    %v30 = vld [vmem:[%s1 + $0x18] sm:$0xff]
    %v31 = vld [vmem:[%s1 + $0x20] sm:$0xff]
    %v32 = vld [vmem:[%s1 + $0x28] sm:$0xff]
    %v33 = vld [vmem:[%s1 + $0x30] sm:$0xff]
    %v34 = vld [vmem:[%s1 + $0x38] sm:$0xff]
    %v35 = vld [vmem:[%s1 + $0x40] sm:$0xff]
    %v36 = vld [vmem:[%s1 + $0x48] sm:$0xff]
    %v37 = vld [vmem:[%s1 + $0x50] sm:$0xff]
    %v38 = vld [vmem:[%s1 + $0x58] sm:$0xff]
    %v39 = vld [vmem:[%s1 + $0x60] sm:$0xff]
    %v40 = vld [vmem:[%s1 + $0x68] sm:$0xff]
    %v41 = vld [vmem:[%s1 + $0x70] sm:$0xff]
    %v42 = vld [vmem:[%s1 + $0x78] sm:$0xff]
    %v43 = vld [vmem:[%s1 + $0x80] sm:$0xff]
    %v44 = vld [vmem:[%s1 + $0x88] sm:$0xff]
    %v45 = vld [vmem:[%s1 + $0x90] sm:$0xff]
    %v46 = vld [vmem:[%s1 + $0x98] sm:$0xff]
    %v47 = vld [vmem:[%s1 + $0xa0] sm:$0xff]
    %v48 = vld [vmem:[%s1 + $0xa8] sm:$0xff]
    %v49 = vld [vmem:[%s1 + $0xb0] sm:$0xff]
    %v50 = vld [vmem:[%s1 + $0xb8] sm:$0xff]
    %v51 = vld [vmem:[%s1 + $0xc0] sm:$0xff]
    %v52 = vld [vmem:[%s1 + $0xc8] sm:$0xff]
    %v53 = vld [vmem:[%s1 + $0xd0] sm:$0xff]
    %v54 = vld [vmem:[%s1 + $0xd8] sm:$0xff]
    %v55 = vld [vmem:[%s1 + $0xe0] sm:$0xff]
    %v56 = vld [vmem:[%s1 + $0xe8] sm:$0xff]
    %v57 = vld [vmem:[%s1 + $0xf0] sm:$0xff]
    %v58 = vld [vmem:[%s1 + $0xf8] sm:$0xff]
    %v59 = vld [vmem:[%s1 + $0x100] sm:$0xff]
    %v60 = vld [vmem:[%s1 + $0x108] sm:$0xff]
    %v61 = vld [vmem:[%s1 + $0x110] sm:$0xff]
    %v62 = vld [vmem:[%s1 + $0x118] sm:$0xff]
    %v63 = vld [vmem:[%s1 + $0x120] sm:$0xff]
    %v64 = vld [vmem:[%s1 + $0x128] sm:$0xff]
    %v65 = vld [vmem:[%s1 + $0x130] sm:$0xff]
    %v66 = vld [vmem:[%s1 + $0x138] sm:$0xff]
    %v67 = vld [vmem:[%s1 + $0x140] sm:$0xff]
    %v68 = vld [vmem:[%s1 + $0x148] sm:$0xff]
    %v69 = vld [vmem:[%s1 + $0x150] sm:$0xff]
    %v70 = vld [vmem:[%s1 + $0x158] sm:$0xff]
    %v71 = vld [vmem:[%s1 + $0x160] sm:$0xff]
    %v72 = vld [vmem:[%s1 + $0x168] sm:$0xff]
    %v73 = vld [vmem:[%s1 + $0x170] sm:$0xff]
    %v74 = vld [vmem:[%s1 + $0x178] sm:$0xff]
    %v75 = vld [vmem:[%s1 + $0x180] sm:$0xff]
    %v76 = vld [vmem:[%s1 + $0x188] sm:$0xff]
    %v77 = vld [vmem:[%s1 + $0x190] sm:$0xff]
    %v78 = vld [vmem:[%s1 + $0x198] sm:$0xff]
    %v79 = vld [vmem:[%s1 + $0x1a0] sm:$0xff]
    %v80 = vld [vmem:[%s1 + $0x1a8] sm:$0xff]
    %v81 = vld [vmem:[%s1 + $0x1b0] sm:$0xff]
    %v82 = vld [vmem:[%s1 + $0x1b8] sm:$0xff]
    %v83 = vld [vmem:[%s1 + $0x1c0] sm:$0xff]
    %v84 = vld [vmem:[%s1 + $0x1c8] sm:$0xff]
    %v85 = vld [vmem:[%s1 + $0x1d0] sm:$0xff]
    %v86 = vld [vmem:[%s1 + $0x1d8] sm:$0xff]
    %v87 = vld [vmem:[%s1 + $0x1e0] sm:$0xff]
    %v88 = vld [vmem:[%s1 + $0x1e8] sm:$0xff]
    %v89 = vld [vmem:[%s1 + $0x1f0] sm:$0xff]
    %v90 = vld [vmem:[%s1 + $0x1f8] sm:$0xff]
    %v91 = vld [vmem:[%s1 + $0x200] sm:$0xff]
    %v92 = vld [vmem:[%s1 + $0x208] sm:$0xff]
    %v93 = vld [vmem:[%s1 + $0x210] sm:$0xff]
    %v94 = vld [vmem:[%s1 + $0x218] sm:$0xff]
    %v95 = vld [vmem:[%s1 + $0x220] sm:$0xff]
    %v96 = vld [vmem:[%s1 + $0x228] sm:$0xff]
    %v97 = vld [vmem:[%s1 + $0x230] sm:$0xff]
    %v98 = vld [vmem:[%s1 + $0x238] sm:$0xff]
    %v99 = vld [vmem:[%s1 + $0x240] sm:$0xff]
    %v100 = vld [vmem:[%s1 + $0x248] sm:$0xff]
    %v101 = vld [vmem:[%s1 + $0x250] sm:$0xff]
    %v102 = vld [vmem:[%s1 + $0x258] sm:$0xff]
    %v103 = vld [vmem:[%s1 + $0x260] sm:$0xff]
    %v104 = vld [vmem:[%s1 + $0x268] sm:$0xff]
    %v105 = vld [vmem:[%s1 + $0x270] sm:$0xff]
    %v106 = vld [vmem:[%s1 + $0x278] sm:$0xff]
    %v107 = vld [vmem:[%s1 + $0x280] sm:$0xff]
    %v108 = vld [vmem:[%s1 + $0x288] sm:$0xff]
    %v109 = vld [vmem:[%s1 + $0x290] sm:$0xff]
    %v110 = vld [vmem:[%s1 + $0x298] sm:$0xff]
    %v111 = vld [vmem:[%s1 + $0x2a0] sm:$0xff]
    %v112 = vld [vmem:[%s1 + $0x2a8] sm:$0xff]
    %v113 = vld [vmem:[%s1 + $0x2b0] sm:$0xff]
    %v114 = vld [vmem:[%s1 + $0x2b8] sm:$0xff]
    %v115 = vld [vmem:[%s1 + $0x2c0] sm:$0xff]
    %v116 = vld [vmem:[%s1 + $0x2c8] sm:$0xff]
    %v117 = vld [vmem:[%s1 + $0x2d0] sm:$0xff]
    %v118 = vld [vmem:[%s1 + $0x2d8] sm:$0xff]
    %v119 = vld [vmem:[%s1 + $0x2e0] sm:$0xff]
    %v120 = vld [vmem:[%s1 + $0x2e8] sm:$0xff]
    %v121 = vld [vmem:[%s1 + $0x2f0] sm:$0xff]
    %v122 = vld [vmem:[%s1 + $0x2f8] sm:$0xff]
    %v123 = vld [vmem:[%s1 + $0x300] sm:$0xff]
    %v124 = vld [vmem:[%s1 + $0x308] sm:$0xff]
    %v125 = vld [vmem:[%s1 + $0x310] sm:$0xff]
    %v126 = vld [vmem:[%s1 + $0x318] sm:$0xff]
    %v127 = vld [vmem:[%s1 + $0x320] sm:$0xff]
    %v128 = vld [vmem:[%s1 + $0x328] sm:$0xff]
    %v129 = vld [vmem:[%s1 + $0x330] sm:$0xff]
    %v130 = vld [vmem:[%s1 + $0x338] sm:$0xff]
    %v131 = vld [vmem:[%s1 + $0x340] sm:$0xff]
    %v132 = vld [vmem:[%s1 + $0x348] sm:$0xff]
    %v133 = vld [vmem:[%s1 + $0x350] sm:$0xff]
    %v134 = vld [vmem:[%s1 + $0x358] sm:$0xff]
    %v135 = vld [vmem:[%s1 + $0x360] sm:$0xff]
    %v136 = vld [vmem:[%s1 + $0x368] sm:$0xff]
    %v137 = vld [vmem:[%s1 + $0x370] sm:$0xff]
    %v138 = vld [vmem:[%s1 + $0x378] sm:$0xff]
    %v139 = vld [vmem:[%s1 + $0x380] sm:$0xff]
    %v140 = vld [vmem:[%s1 + $0x388] sm:$0xff]
    %v141 = vld [vmem:[%s1 + $0x390] sm:$0xff]
    %v142 = vld [vmem:[%s1 + $0x398] sm:$0xff]
    %v143 = vld [vmem:[%s1 + $0x3a0] sm:$0xff]
    %v144 = vld [vmem:[%s1 + $0x3a8] sm:$0xff]
    %v145 = vld [vmem:[%s1 + $0x3b0] sm:$0xff]
    %v146 = vld [vmem:[%s1 + $0x3b8] sm:$0xff]
    %v147 = vld [vmem:[%s1 + $0x3c0] sm:$0xff]
    %v148 = vld [vmem:[%s1 + $0x3c8] sm:$0xff]
    %v149 = vld [vmem:[%s1 + $0x3d0] sm:$0xff]
    %v150 = vld [vmem:[%s1 + $0x3d8] sm:$0xff]
    %v151 = vld [vmem:[%s1 + $0x3e0] sm:$0xff]
    %v152 = vld [vmem:[%s1 + $0x3e8] sm:$0xff]
    %v153 = vld [vmem:[%s1 + $0x3f0] sm:$0xff]
    %v154 = vld [vmem:[%s1 + $0x3f8] sm:$0xff]
    %v155 = vld [vmem:[%s1 + $0x400] sm:$0xff]
    %v156 = vld [vmem:[%s1 + $0x408] sm:$0xff]
    %v157 = vld [vmem:[%s1 + $0x410] sm:$0xff]
    %v158 = vld [vmem:[%s1 + $0x418] sm:$0xff]
    %v159 = vld [vmem:[%s1 + $0x420] sm:$0xff]
    %v160 = vld [vmem:[%s1 + $0x428] sm:$0xff]
    %v161 = vld [vmem:[%s1 + $0x430] sm:$0xff]
    %v162 = vld [vmem:[%s1 + $0x438] sm:$0xff]
    %v163 = vld [vmem:[%s1 + $0x440] sm:$0xff]
    %v164 = vld [vmem:[%s1 + $0x448] sm:$0xff]
    %v165 = vld [vmem:[%s1 + $0x450] sm:$0xff]
    %v166 = vld [vmem:[%s1 + $0x458] sm:$0xff]
    %v167 = vld [vmem:[%s1 + $0x460] sm:$0xff]
    %v168 = vld [vmem:[%s1 + $0x468] sm:$0xff]
    %v169 = vld [vmem:[%s1 + $0x470] sm:$0xff]
    %v170 = vld [vmem:[%s1 + $0x478] sm:$0xff]
    %v171 = vld [vmem:[%s1 + $0x480] sm:$0xff]
    %v172 = vld [vmem:[%s1 + $0x488] sm:$0xff]
    %v173 = vld [vmem:[%s1 + $0x490] sm:$0xff]
    %v174 = vld [vmem:[%s1 + $0x498] sm:$0xff]
    %v175 = vld [vmem:[%s1 + $0x4a0] sm:$0xff]
    %v176 = vld [vmem:[%s1 + $0x4a8] sm:$0xff]
    %v177 = vld [vmem:[%s1 + $0x4b0] sm:$0xff]
    %v178 = vld [vmem:[%s1 + $0x4b8] sm:$0xff]
    %v179 = vld [vmem:[%s1 + $0x4c0] sm:$0xff]
    %v180 = vld [vmem:[%s1 + $0x4c8] sm:$0xff]
    %v181 = vld [vmem:[%s1 + $0x4d0] sm:$0xff]
    %v182 = vld [vmem:[%s1 + $0x4d8] sm:$0xff]
    %v183 = vld [vmem:[%s1 + $0x4e0] sm:$0xff]
    %v184 = vld [vmem:[%s1 + $0x4e8] sm:$0xff]
    %v185 = vld [vmem:[%s1 + $0x4f0] sm:$0xff]
    %v186 = vld [vmem:[%s1 + $0x4f8] sm:$0xff]
    %v187 = vld [vmem:[%s1 + $0x500] sm:$0xff]
    %v188 = vld [vmem:[%s1 + $0x508] sm:$0xff]
    %v189 = vld [vmem:[%s1 + $0x510] sm:$0xff]
    %v190 = vld [vmem:[%s1 + $0x518] sm:$0xff]
    %v191 = vld [vmem:[%s1 + $0x520] sm:$0xff]
    %v192 = vld [vmem:[%s1 + $0x528] sm:$0xff]
    %v193 = vld [vmem:[%s1 + $0x530] sm:$0xff]
    %v194 = vld [vmem:[%s1 + $0x538] sm:$0xff]
    %v195 = vld [vmem:[%s1 + $0x540] sm:$0xff]
    %v196 = vld [vmem:[%s1 + $0x548] sm:$0xff]
    %v197 = vld [vmem:[%s1 + $0x550] sm:$0xff]
    %v198 = vld [vmem:[%s1 + $0x558] sm:$0xff]
    %v199 = vld [vmem:[%s1 + $0x560] sm:$0xff]
    %v200 = vld [vmem:[%s1 + $0x568] sm:$0xff]
    %v201 = vld [vmem:[%s1 + $0x570] sm:$0xff]
    %v202 = vld [vmem:[%s1 + $0x578] sm:$0xff]
    %v203 = vld [vmem:[%s1 + $0x580] sm:$0xff]
    %v204 = vld [vmem:[%s1 + $0x588] sm:$0xff]
    %v205 = vld [vmem:[%s1 + $0x590] sm:$0xff]
    %v206 = vld [vmem:[%s1 + $0x598] sm:$0xff]
    %v207 = vld [vmem:[%s1 + $0x5a0] sm:$0xff]
    %v208 = vld [vmem:[%s1 + $0x5a8] sm:$0xff]
    %v209 = vld [vmem:[%s1 + $0x5b0] sm:$0xff]
    %v210 = vld [vmem:[%s1 + $0x5b8] sm:$0xff]
    %v211 = vld [vmem:[%s1 + $0x5c0] sm:$0xff]
    %v212 = vld [vmem:[%s1 + $0x5c8] sm:$0xff]
    %v213 = vld [vmem:[%s1 + $0x5d0] sm:$0xff]
    %v214 = vld [vmem:[%s1 + $0x5d8] sm:$0xff]
    %v215 = vld [vmem:[%s1 + $0x5e0] sm:$0xff]
    %v216 = vld [vmem:[%s1 + $0x5e8] sm:$0xff]
    %v217 = vld [vmem:[%s1 + $0x5f0] sm:$0xff]
    %v218 = vld [vmem:[%s1 + $0x5f8] sm:$0xff]
    %v219 = vld [vmem:[%s1 + $0x600] sm:$0xff]
    %v220 = vld [vmem:[%s1 + $0x608] sm:$0xff]
    %v221 = vld [vmem:[%s1 + $0x610] sm:$0xff]
    %v222 = vld [vmem:[%s1 + $0x618] sm:$0xff]
    %v223 = vld [vmem:[%s1 + $0x620] sm:$0xff]
    %v224 = vld [vmem:[%s1 + $0x628] sm:$0xff]
    %v225 = vld [vmem:[%s1 + $0x630] sm:$0xff]
    %v226 = vld [vmem:[%s1 + $0x638] sm:$0xff]
    %v227 = vld [vmem:[%s1 + $0x640] sm:$0xff]
    %v228 = vld [vmem:[%s1 + $0x648] sm:$0xff]
    %v229 = vld [vmem:[%s1 + $0x650] sm:$0xff]
    %v230 = vld [vmem:[%s1 + $0x658] sm:$0xff]
    %v231 = vld [vmem:[%s1 + $0x660] sm:$0xff]
    %v232 = vld [vmem:[%s1 + $0x668] sm:$0xff]
    %v233 = vld [vmem:[%s1 + $0x670] sm:$0xff]
    %v234 = vld [vmem:[%s1 + $0x678] sm:$0xff]
    %v235 = vld [vmem:[%s1 + $0x680] sm:$0xff]
    %v236 = vld [vmem:[%s1 + $0x688] sm:$0xff]
    %v237 = vld [vmem:[%s1 + $0x690] sm:$0xff]
    %v238 = vld [vmem:[%s1 + $0x698] sm:$0xff]
    %v239 = vld [vmem:[%s1 + $0x6a0] sm:$0xff]
    %v240 = vld [vmem:[%s1 + $0x6a8] sm:$0xff]
    %v241 = vld [vmem:[%s1 + $0x6b0] sm:$0xff]
    %v242 = vld [vmem:[%s1 + $0x6b8] sm:$0xff]
    %v243 = vld [vmem:[%s1 + $0x6c0] sm:$0xff]
    %v244 = vld [vmem:[%s1 + $0x6c8] sm:$0xff]
    %v245 = vld [vmem:[%s1 + $0x6d0] sm:$0xff]
    %v246 = vld [vmem:[%s1 + $0x6d8] sm:$0xff]
    %v247 = vld [vmem:[%s1 + $0x6e0] sm:$0xff]
    %v248 = vld [vmem:[%s1 + $0x6e8] sm:$0xff]
    %v249 = vld [vmem:[%s1 + $0x6f0] sm:$0xff]
    %v250 = vld [vmem:[%s1 + $0x6f8] sm:$0xff]
    %v251 = vld [vmem:[%s1 + $0x700] sm:$0xff]
    %v252 = vld [vmem:[%s1 + $0x708] sm:$0xff]
    %v253 = vld [vmem:[%s1 + $0x710] sm:$0xff]
    %v254 = vld [vmem:[%s1 + $0x718] sm:$0xff]
    %v255 = vld [vmem:[%s1 + $0x720] sm:$0xff]
    %v256 = vld [vmem:[%s1 + $0x728] sm:$0xff]
    %v257 = vld [vmem:[%s1 + $0x730] sm:$0xff]
    %v258 = vld [vmem:[%s1 + $0x738] sm:$0xff]
    %v259 = vld [vmem:[%s1 + $0x740] sm:$0xff]
    %v260 = vld [vmem:[%s1 + $0x748] sm:$0xff]
    %v261 = vld [vmem:[%s1 + $0x750] sm:$0xff]
    %v262 = vld [vmem:[%s1 + $0x758] sm:$0xff]
    %v263 = vld [vmem:[%s1 + $0x760] sm:$0xff]
    %v264 = vld [vmem:[%s1 + $0x768] sm:$0xff]
    %v265 = vld [vmem:[%s1 + $0x770] sm:$0xff]
    %v266 = vld [vmem:[%s1 + $0x778] sm:$0xff]
    %v267 = vld [vmem:[%s1 + $0x780] sm:$0xff]
    %v268 = vld [vmem:[%s1 + $0x788] sm:$0xff]
    %v269 = vld [vmem:[%s1 + $0x790] sm:$0xff]
    %v270 = vld [vmem:[%s1 + $0x798] sm:$0xff]
    %v271 = vld [vmem:[%s1 + $0x7a0] sm:$0xff]
    %v272 = vld [vmem:[%s1 + $0x7a8] sm:$0xff]
    %v273 = vld [vmem:[%s1 + $0x7b0] sm:$0xff]
    %v274 = vld [vmem:[%s1 + $0x7b8] sm:$0xff]
    %v275 = vld [vmem:[%s1 + $0x7c0] sm:$0xff]
    %v276 = vld [vmem:[%s1 + $0x7c8] sm:$0xff]
    %v277 = vld [vmem:[%s1 + $0x7d0] sm:$0xff]
    %v278 = vld [vmem:[%s1 + $0x7d8] sm:$0xff]
    %v279 = vld [vmem:[%s1 + $0x7e0] sm:$0xff]
    %v280 = vld [vmem:[%s1 + $0x7e8] sm:$0xff]
    %v281 = vld [vmem:[%s1 + $0x7f0] sm:$0xff]
    %v282 = vld [vmem:[%s1 + $0x7f8] sm:$0xff]
    %v283 = vld [vmem:[%s1 + $0x800] sm:$0xff]
    %v284 = vld [vmem:[%s1 + $0x808] sm:$0xff]
    %v285 = vld [vmem:[%s1 + $0x810] sm:$0xff]
    %v286 = vld [vmem:[%s1 + $0x818] sm:$0xff]
    %v287 = vld [vmem:[%s1 + $0x820] sm:$0xff]
    %v288 = vld [vmem:[%s1 + $0x828] sm:$0xff]
    %v289 = vld [vmem:[%s1 + $0x830] sm:$0xff]
    %v290 = vld [vmem:[%s1 + $0x838] sm:$0xff]
    %v291 = vld [vmem:[%s1 + $0x840] sm:$0xff]
    %v292 = vld [vmem:[%s1 + $0x848] sm:$0xff]
    %v293 = vld [vmem:[%s1 + $0x850] sm:$0xff]
    %v294 = vld [vmem:[%s1 + $0x858] sm:$0xff]
    %v295 = vld [vmem:[%s1 + $0x860] sm:$0xff]
    %v296 = vld [vmem:[%s1 + $0x868] sm:$0xff]
    %v297 = vld [vmem:[%s1 + $0x870] sm:$0xff]
    %v298 = vld [vmem:[%s1 + $0x878] sm:$0xff]
    %v299 = vld [vmem:[%s1 + $0x880] sm:$0xff]
    %v300 = vld [vmem:[%s1 + $0x888] sm:$0xff]
    %v301 = vld [vmem:[%s1 + $0x890] sm:$0xff]
    %v302 = vld [vmem:[%s1 + $0x898] sm:$0xff]
    %v303 = vld [vmem:[%s1 + $0x8a0] sm:$0xff]
    %v304 = vld [vmem:[%s1 + $0x8a8] sm:$0xff]
    %v305 = vld [vmem:[%s1 + $0x8b0] sm:$0xff]
    %v306 = vld [vmem:[%s1 + $0x8b8] sm:$0xff]
    %v307 = vld [vmem:[%s1 + $0x8c0] sm:$0xff]
    %v308 = vld [vmem:[%s1 + $0x8c8] sm:$0xff]
    %v309 = vld [vmem:[%s1 + $0x8d0] sm:$0xff]
    %v310 = vld [vmem:[%s1 + $0x8d8] sm:$0xff]
    %v311 = vld [vmem:[%s1 + $0x8e0] sm:$0xff]
    %v312 = vld [vmem:[%s1 + $0x8e8] sm:$0xff]
    %v313 = vld [vmem:[%s1 + $0x8f0] sm:$0xff]
    %v314 = vld [vmem:[%s1 + $0x8f8] sm:$0xff]
    %v315 = vld [vmem:[%s2] sm:$0x3f]
    %v317 = vlaneseq
    %v318 = vshrl.u32 %v317, 7
    %v319 = vsub.s32 0, %v318
    %v320 = vrot.slane %v315, %v319
    %v321 = vlaneseq
    %v322 = vshrl.u32 %v321, 7
    %v323 = vsub.s32 1, %v322
    %v324 = vrot.slane %v315, %v323
    %v325 = vlaneseq
    %v326 = vshrl.u32 %v325, 7
    %v327 = vsub.s32 2, %v326
    %v328 = vrot.slane %v315, %v327
    %v329 = vlaneseq
    %v330 = vshrl.u32 %v329, 7
    %v331 = vsub.s32 3, %v330
    %v332 = vrot.slane %v315, %v331
    %v333 = vlaneseq
    %v334 = vshrl.u32 %v333, 7
    %v335 = vsub.s32 4, %v334
    %v336 = vrot.slane %v315, %v335
    %v337 = vlaneseq
    %v338 = vshrl.u32 %v337, 7
    %v339 = vsub.s32 5, %v338
    %v340 = vrot.slane %v315, %v339
    %v353 = vunpack.c.l.b16 %v21
    %v354 = vunpack.c.h.b16 %v21
    %v355 = vunpack.c.l.b16 %v22
    %v356 = vunpack.c.h.b16 %v22
    %v357 = vunpack.c.l.b16 %v23
    %v358 = vunpack.c.h.b16 %v23
    %v359 = vunpack.c.l.b16 %v24
    %v360 = vunpack.c.h.b16 %v24
    %v361 = vunpack.c.l.b16 %v25
    %v362 = vunpack.c.h.b16 %v25
    %v363 = vunpack.c.l.b16 %v26
    %v364 = vunpack.c.h.b16 %v26
    %v365 = vpack.c.b16 %v359, %v353
    %v366 = vpack.c.b16 %v360, %v354
    %v367 = vpack.c.b16 %v361, %v355
    %v368 = vpack.c.b16 %v362, %v356
    %v369 = vpack.c.b16 %v363, %v357
    %v370 = vpack.c.b16 %v364, %v358
    %v665 = vunpack.c.l.b16 %v27
    %v666 = vunpack.c.h.b16 %v27
    %v667 = vunpack.c.l.b16 %v28
    %v668 = vunpack.c.h.b16 %v28
    %v669 = vunpack.c.l.b16 %v29
    %v670 = vunpack.c.h.b16 %v29
    %v671 = vunpack.c.l.b16 %v30
    %v672 = vunpack.c.h.b16 %v30
    %v673 = vunpack.c.l.b16 %v31
    %v674 = vunpack.c.h.b16 %v31
    %v675 = vunpack.c.l.b16 %v32
    %v676 = vunpack.c.h.b16 %v32
    %v677 = vunpack.c.l.b16 %v33
    %v678 = vunpack.c.h.b16 %v33
    %v679 = vunpack.c.l.b16 %v34
    %v680 = vunpack.c.h.b16 %v34
    %v681 = vunpack.c.l.b16 %v35
    %v682 = vunpack.c.h.b16 %v35
    %v683 = vunpack.c.l.b16 %v36
    %v684 = vunpack.c.h.b16 %v36
    %v685 = vunpack.c.l.b16 %v37
    %v686 = vunpack.c.h.b16 %v37
    %v687 = vunpack.c.l.b16 %v38
    %v688 = vunpack.c.h.b16 %v38
    %v689 = vunpack.c.l.b16 %v39
    %v690 = vunpack.c.h.b16 %v39
    %v691 = vunpack.c.l.b16 %v40
    %v692 = vunpack.c.h.b16 %v40
    %v693 = vunpack.c.l.b16 %v41
    %v694 = vunpack.c.h.b16 %v41
    %v695 = vunpack.c.l.b16 %v42
    %v696 = vunpack.c.h.b16 %v42
    %v697 = vunpack.c.l.b16 %v43
    %v698 = vunpack.c.h.b16 %v43
    %v699 = vunpack.c.l.b16 %v44
    %v700 = vunpack.c.h.b16 %v44
    %v701 = vunpack.c.l.b16 %v45
    %v702 = vunpack.c.h.b16 %v45
    %v703 = vunpack.c.l.b16 %v46
    %v704 = vunpack.c.h.b16 %v46
    %v705 = vunpack.c.l.b16 %v47
    %v706 = vunpack.c.h.b16 %v47
    %v707 = vunpack.c.l.b16 %v48
    %v708 = vunpack.c.h.b16 %v48
    %v709 = vunpack.c.l.b16 %v49
    %v710 = vunpack.c.h.b16 %v49
    %v711 = vunpack.c.l.b16 %v50
    %v712 = vunpack.c.h.b16 %v50
    %v713 = vunpack.c.l.b16 %v51
    %v714 = vunpack.c.h.b16 %v51
    %v715 = vunpack.c.l.b16 %v52
    %v716 = vunpack.c.h.b16 %v52
    %v717 = vunpack.c.l.b16 %v53
    %v718 = vunpack.c.h.b16 %v53
    %v719 = vunpack.c.l.b16 %v54
    %v720 = vunpack.c.h.b16 %v54
    %v721 = vunpack.c.l.b16 %v55
    %v722 = vunpack.c.h.b16 %v55
    %v723 = vunpack.c.l.b16 %v56
    %v724 = vunpack.c.h.b16 %v56
    %v725 = vunpack.c.l.b16 %v57
    %v726 = vunpack.c.h.b16 %v57
    %v727 = vunpack.c.l.b16 %v58
    %v728 = vunpack.c.h.b16 %v58
    %v729 = vunpack.c.l.b16 %v59
    %v730 = vunpack.c.h.b16 %v59
    %v731 = vunpack.c.l.b16 %v60
    %v732 = vunpack.c.h.b16 %v60
    %v733 = vunpack.c.l.b16 %v61
    %v734 = vunpack.c.h.b16 %v61
    %v735 = vunpack.c.l.b16 %v62
    %v736 = vunpack.c.h.b16 %v62
    %v737 = vunpack.c.l.b16 %v63
    %v738 = vunpack.c.h.b16 %v63
    %v739 = vunpack.c.l.b16 %v64
    %v740 = vunpack.c.h.b16 %v64
    %v741 = vunpack.c.l.b16 %v65
    %v742 = vunpack.c.h.b16 %v65
    %v743 = vunpack.c.l.b16 %v66
    %v744 = vunpack.c.h.b16 %v66
    %v745 = vunpack.c.l.b16 %v67
    %v746 = vunpack.c.h.b16 %v67
    %v747 = vunpack.c.l.b16 %v68
    %v748 = vunpack.c.h.b16 %v68
    %v749 = vunpack.c.l.b16 %v69
    %v750 = vunpack.c.h.b16 %v69
    %v751 = vunpack.c.l.b16 %v70
    %v752 = vunpack.c.h.b16 %v70
    %v753 = vunpack.c.l.b16 %v71
    %v754 = vunpack.c.h.b16 %v71
    %v755 = vunpack.c.l.b16 %v72
    %v756 = vunpack.c.h.b16 %v72
    %v757 = vunpack.c.l.b16 %v73
    %v758 = vunpack.c.h.b16 %v73
    %v759 = vunpack.c.l.b16 %v74
    %v760 = vunpack.c.h.b16 %v74
    %v761 = vunpack.c.l.b16 %v75
    %v762 = vunpack.c.h.b16 %v75
    %v763 = vunpack.c.l.b16 %v76
    %v764 = vunpack.c.h.b16 %v76
    %v765 = vunpack.c.l.b16 %v77
    %v766 = vunpack.c.h.b16 %v77
    %v767 = vunpack.c.l.b16 %v78
    %v768 = vunpack.c.h.b16 %v78
    %v769 = vunpack.c.l.b16 %v79
    %v770 = vunpack.c.h.b16 %v79
    %v771 = vunpack.c.l.b16 %v80
    %v772 = vunpack.c.h.b16 %v80
    %v773 = vunpack.c.l.b16 %v81
    %v774 = vunpack.c.h.b16 %v81
    %v775 = vunpack.c.l.b16 %v82
    %v776 = vunpack.c.h.b16 %v82
    %v777 = vunpack.c.l.b16 %v83
    %v778 = vunpack.c.h.b16 %v83
    %v779 = vunpack.c.l.b16 %v84
    %v780 = vunpack.c.h.b16 %v84
    %v781 = vunpack.c.l.b16 %v85
    %v782 = vunpack.c.h.b16 %v85
    %v783 = vunpack.c.l.b16 %v86
    %v784 = vunpack.c.h.b16 %v86
    %v785 = vunpack.c.l.b16 %v87
    %v786 = vunpack.c.h.b16 %v87
    %v787 = vunpack.c.l.b16 %v88
    %v788 = vunpack.c.h.b16 %v88
    %v789 = vunpack.c.l.b16 %v89
    %v790 = vunpack.c.h.b16 %v89
    %v791 = vunpack.c.l.b16 %v90
    %v792 = vunpack.c.h.b16 %v90
    %v793 = vunpack.c.l.b16 %v91
    %v794 = vunpack.c.h.b16 %v91
    %v795 = vunpack.c.l.b16 %v92
    %v796 = vunpack.c.h.b16 %v92
    %v797 = vunpack.c.l.b16 %v93
    %v798 = vunpack.c.h.b16 %v93
    %v799 = vunpack.c.l.b16 %v94
    %v800 = vunpack.c.h.b16 %v94
    %v801 = vunpack.c.l.b16 %v95
    %v802 = vunpack.c.h.b16 %v95
    %v803 = vunpack.c.l.b16 %v96
    %v804 = vunpack.c.h.b16 %v96
    %v805 = vunpack.c.l.b16 %v97
    %v806 = vunpack.c.h.b16 %v97
    %v807 = vunpack.c.l.b16 %v98
    %v808 = vunpack.c.h.b16 %v98
    %v809 = vunpack.c.l.b16 %v99
    %v810 = vunpack.c.h.b16 %v99
    %v811 = vunpack.c.l.b16 %v100
    %v812 = vunpack.c.h.b16 %v100
    %v813 = vunpack.c.l.b16 %v101
    %v814 = vunpack.c.h.b16 %v101
    %v815 = vunpack.c.l.b16 %v102
    %v816 = vunpack.c.h.b16 %v102
    %v817 = vunpack.c.l.b16 %v103
    %v818 = vunpack.c.h.b16 %v103
    %v819 = vunpack.c.l.b16 %v104
    %v820 = vunpack.c.h.b16 %v104
    %v821 = vunpack.c.l.b16 %v105
    %v822 = vunpack.c.h.b16 %v105
    %v823 = vunpack.c.l.b16 %v106
    %v824 = vunpack.c.h.b16 %v106
    %v825 = vunpack.c.l.b16 %v107
    %v826 = vunpack.c.h.b16 %v107
    %v827 = vunpack.c.l.b16 %v108
    %v828 = vunpack.c.h.b16 %v108
    %v829 = vunpack.c.l.b16 %v109
    %v830 = vunpack.c.h.b16 %v109
    %v831 = vunpack.c.l.b16 %v110
    %v832 = vunpack.c.h.b16 %v110
    %v833 = vunpack.c.l.b16 %v111
    %v834 = vunpack.c.h.b16 %v111
    %v835 = vunpack.c.l.b16 %v112
    %v836 = vunpack.c.h.b16 %v112
    %v837 = vunpack.c.l.b16 %v113
    %v838 = vunpack.c.h.b16 %v113
    %v839 = vunpack.c.l.b16 %v114
    %v840 = vunpack.c.h.b16 %v114
    %v841 = vunpack.c.l.b16 %v115
    %v842 = vunpack.c.h.b16 %v115
    %v843 = vunpack.c.l.b16 %v116
    %v844 = vunpack.c.h.b16 %v116
    %v845 = vunpack.c.l.b16 %v117
    %v846 = vunpack.c.h.b16 %v117
    %v847 = vunpack.c.l.b16 %v118
    %v848 = vunpack.c.h.b16 %v118
    %v849 = vunpack.c.l.b16 %v119
    %v850 = vunpack.c.h.b16 %v119
    %v851 = vunpack.c.l.b16 %v120
    %v852 = vunpack.c.h.b16 %v120
    %v853 = vunpack.c.l.b16 %v121
    %v854 = vunpack.c.h.b16 %v121
    %v855 = vunpack.c.l.b16 %v122
    %v856 = vunpack.c.h.b16 %v122
    %v857 = vunpack.c.l.b16 %v123
    %v858 = vunpack.c.h.b16 %v123
    %v859 = vunpack.c.l.b16 %v124
    %v860 = vunpack.c.h.b16 %v124
    %v861 = vunpack.c.l.b16 %v125
    %v862 = vunpack.c.h.b16 %v125
    %v863 = vunpack.c.l.b16 %v126
    %v864 = vunpack.c.h.b16 %v126
    %v865 = vunpack.c.l.b16 %v127
    %v866 = vunpack.c.h.b16 %v127
    %v867 = vunpack.c.l.b16 %v128
    %v868 = vunpack.c.h.b16 %v128
    %v869 = vunpack.c.l.b16 %v129
    %v870 = vunpack.c.h.b16 %v129
    %v871 = vunpack.c.l.b16 %v130
    %v872 = vunpack.c.h.b16 %v130
    %v873 = vunpack.c.l.b16 %v131
    %v874 = vunpack.c.h.b16 %v131
    %v875 = vunpack.c.l.b16 %v132
    %v876 = vunpack.c.h.b16 %v132
    %v877 = vunpack.c.l.b16 %v133
    %v878 = vunpack.c.h.b16 %v133
    %v879 = vunpack.c.l.b16 %v134
    %v880 = vunpack.c.h.b16 %v134
    %v881 = vunpack.c.l.b16 %v135
    %v882 = vunpack.c.h.b16 %v135
    %v883 = vunpack.c.l.b16 %v136
    %v884 = vunpack.c.h.b16 %v136
    %v885 = vunpack.c.l.b16 %v137
    %v886 = vunpack.c.h.b16 %v137
    %v887 = vunpack.c.l.b16 %v138
    %v888 = vunpack.c.h.b16 %v138
    %v889 = vunpack.c.l.b16 %v139
    %v890 = vunpack.c.h.b16 %v139
    %v891 = vunpack.c.l.b16 %v140
    %v892 = vunpack.c.h.b16 %v140
    %v893 = vunpack.c.l.b16 %v141
    %v894 = vunpack.c.h.b16 %v141
    %v895 = vunpack.c.l.b16 %v142
    %v896 = vunpack.c.h.b16 %v142
    %v897 = vunpack.c.l.b16 %v143
    %v898 = vunpack.c.h.b16 %v143
    %v899 = vunpack.c.l.b16 %v144
    %v900 = vunpack.c.h.b16 %v144
    %v901 = vunpack.c.l.b16 %v145
    %v902 = vunpack.c.h.b16 %v145
    %v903 = vunpack.c.l.b16 %v146
    %v904 = vunpack.c.h.b16 %v146
    %v905 = vunpack.c.l.b16 %v147
    %v906 = vunpack.c.h.b16 %v147
    %v907 = vunpack.c.l.b16 %v148
    %v908 = vunpack.c.h.b16 %v148
    %v909 = vunpack.c.l.b16 %v149
    %v910 = vunpack.c.h.b16 %v149
    %v911 = vunpack.c.l.b16 %v150
    %v912 = vunpack.c.h.b16 %v150
    %v913 = vunpack.c.l.b16 %v151
    %v914 = vunpack.c.h.b16 %v151
    %v915 = vunpack.c.l.b16 %v152
    %v916 = vunpack.c.h.b16 %v152
    %v917 = vunpack.c.l.b16 %v153
    %v918 = vunpack.c.h.b16 %v153
    %v919 = vunpack.c.l.b16 %v154
    %v920 = vunpack.c.h.b16 %v154
    %v921 = vunpack.c.l.b16 %v155
    %v922 = vunpack.c.h.b16 %v155
    %v923 = vunpack.c.l.b16 %v156
    %v924 = vunpack.c.h.b16 %v156
    %v925 = vunpack.c.l.b16 %v157
    %v926 = vunpack.c.h.b16 %v157
    %v927 = vunpack.c.l.b16 %v158
    %v928 = vunpack.c.h.b16 %v158
    %v929 = vunpack.c.l.b16 %v159
    %v930 = vunpack.c.h.b16 %v159
    %v931 = vunpack.c.l.b16 %v160
    %v932 = vunpack.c.h.b16 %v160
    %v933 = vunpack.c.l.b16 %v161
    %v934 = vunpack.c.h.b16 %v161
    %v935 = vunpack.c.l.b16 %v162
    %v936 = vunpack.c.h.b16 %v162
    %v937 = vunpack.c.l.b16 %v163
    %v938 = vunpack.c.h.b16 %v163
    %v939 = vunpack.c.l.b16 %v164
    %v940 = vunpack.c.h.b16 %v164
    %v941 = vunpack.c.l.b16 %v165
    %v942 = vunpack.c.h.b16 %v165
    %v943 = vunpack.c.l.b16 %v166
    %v944 = vunpack.c.h.b16 %v166
    %v945 = vunpack.c.l.b16 %v167
    %v946 = vunpack.c.h.b16 %v167
    %v947 = vunpack.c.l.b16 %v168
    %v948 = vunpack.c.h.b16 %v168
    %v949 = vunpack.c.l.b16 %v169
    %v950 = vunpack.c.h.b16 %v169
    %v951 = vunpack.c.l.b16 %v170
    %v952 = vunpack.c.h.b16 %v170
    %v953 = vunpack.c.l.b16 %v171
    %v954 = vunpack.c.h.b16 %v171
    %v955 = vunpack.c.l.b16 %v172
    %v956 = vunpack.c.h.b16 %v172
    %v957 = vunpack.c.l.b16 %v173
    %v958 = vunpack.c.h.b16 %v173
    %v959 = vunpack.c.l.b16 %v174
    %v960 = vunpack.c.h.b16 %v174
    %v961 = vunpack.c.l.b16 %v175
    %v962 = vunpack.c.h.b16 %v175
    %v963 = vunpack.c.l.b16 %v176
    %v964 = vunpack.c.h.b16 %v176
    %v965 = vunpack.c.l.b16 %v177
    %v966 = vunpack.c.h.b16 %v177
    %v967 = vunpack.c.l.b16 %v178
    %v968 = vunpack.c.h.b16 %v178
    %v969 = vunpack.c.l.b16 %v179
    %v970 = vunpack.c.h.b16 %v179
    %v971 = vunpack.c.l.b16 %v180
    %v972 = vunpack.c.h.b16 %v180
    %v973 = vunpack.c.l.b16 %v181
    %v974 = vunpack.c.h.b16 %v181
    %v975 = vunpack.c.l.b16 %v182
    %v976 = vunpack.c.h.b16 %v182
    %v977 = vunpack.c.l.b16 %v183
    %v978 = vunpack.c.h.b16 %v183
    %v979 = vunpack.c.l.b16 %v184
    %v980 = vunpack.c.h.b16 %v184
    %v981 = vunpack.c.l.b16 %v185
    %v982 = vunpack.c.h.b16 %v185
    %v983 = vunpack.c.l.b16 %v186
    %v984 = vunpack.c.h.b16 %v186
    %v985 = vunpack.c.l.b16 %v187
    %v986 = vunpack.c.h.b16 %v187
    %v987 = vunpack.c.l.b16 %v188
    %v988 = vunpack.c.h.b16 %v188
    %v989 = vunpack.c.l.b16 %v189
    %v990 = vunpack.c.h.b16 %v189
    %v991 = vunpack.c.l.b16 %v190
    %v992 = vunpack.c.h.b16 %v190
    %v993 = vunpack.c.l.b16 %v191
    %v994 = vunpack.c.h.b16 %v191
    %v995 = vunpack.c.l.b16 %v192
    %v996 = vunpack.c.h.b16 %v192
    %v997 = vunpack.c.l.b16 %v193
    %v998 = vunpack.c.h.b16 %v193
    %v999 = vunpack.c.l.b16 %v194
    %v1000 = vunpack.c.h.b16 %v194
    %v1001 = vunpack.c.l.b16 %v195
    %v1002 = vunpack.c.h.b16 %v195
    %v1003 = vunpack.c.l.b16 %v196
    %v1004 = vunpack.c.h.b16 %v196
    %v1005 = vunpack.c.l.b16 %v197
    %v1006 = vunpack.c.h.b16 %v197
    %v1007 = vunpack.c.l.b16 %v198
    %v1008 = vunpack.c.h.b16 %v198
    %v1009 = vunpack.c.l.b16 %v199
    %v1010 = vunpack.c.h.b16 %v199
    %v1011 = vunpack.c.l.b16 %v200
    %v1012 = vunpack.c.h.b16 %v200
    %v1013 = vunpack.c.l.b16 %v201
    %v1014 = vunpack.c.h.b16 %v201
    %v1015 = vunpack.c.l.b16 %v202
    %v1016 = vunpack.c.h.b16 %v202
    %v1017 = vunpack.c.l.b16 %v203
    %v1018 = vunpack.c.h.b16 %v203
    %v1019 = vunpack.c.l.b16 %v204
    %v1020 = vunpack.c.h.b16 %v204
    %v1021 = vunpack.c.l.b16 %v205
    %v1022 = vunpack.c.h.b16 %v205
    %v1023 = vunpack.c.l.b16 %v206
    %v1024 = vunpack.c.h.b16 %v206
    %v1025 = vunpack.c.l.b16 %v207
    %v1026 = vunpack.c.h.b16 %v207
    %v1027 = vunpack.c.l.b16 %v208
    %v1028 = vunpack.c.h.b16 %v208
    %v1029 = vunpack.c.l.b16 %v209
    %v1030 = vunpack.c.h.b16 %v209
    %v1031 = vunpack.c.l.b16 %v210
    %v1032 = vunpack.c.h.b16 %v210
    %v1033 = vunpack.c.l.b16 %v211
    %v1034 = vunpack.c.h.b16 %v211
    %v1035 = vunpack.c.l.b16 %v212
    %v1036 = vunpack.c.h.b16 %v212
    %v1037 = vunpack.c.l.b16 %v213
    %v1038 = vunpack.c.h.b16 %v213
    %v1039 = vunpack.c.l.b16 %v214
    %v1040 = vunpack.c.h.b16 %v214
    %v1041 = vunpack.c.l.b16 %v215
    %v1042 = vunpack.c.h.b16 %v215
    %v1043 = vunpack.c.l.b16 %v216
    %v1044 = vunpack.c.h.b16 %v216
    %v1045 = vunpack.c.l.b16 %v217
    %v1046 = vunpack.c.h.b16 %v217
    %v1047 = vunpack.c.l.b16 %v218
    %v1048 = vunpack.c.h.b16 %v218
    %v1049 = vunpack.c.l.b16 %v219
    %v1050 = vunpack.c.h.b16 %v219
    %v1051 = vunpack.c.l.b16 %v220
    %v1052 = vunpack.c.h.b16 %v220
    %v1053 = vunpack.c.l.b16 %v221
    %v1054 = vunpack.c.h.b16 %v221
    %v1055 = vunpack.c.l.b16 %v222
    %v1056 = vunpack.c.h.b16 %v222
    %v1057 = vunpack.c.l.b16 %v223
    %v1058 = vunpack.c.h.b16 %v223
    %v1059 = vunpack.c.l.b16 %v224
    %v1060 = vunpack.c.h.b16 %v224
    %v1061 = vunpack.c.l.b16 %v225
    %v1062 = vunpack.c.h.b16 %v225
    %v1063 = vunpack.c.l.b16 %v226
    %v1064 = vunpack.c.h.b16 %v226
    %v1065 = vunpack.c.l.b16 %v227
    %v1066 = vunpack.c.h.b16 %v227
    %v1067 = vunpack.c.l.b16 %v228
    %v1068 = vunpack.c.h.b16 %v228
    %v1069 = vunpack.c.l.b16 %v229
    %v1070 = vunpack.c.h.b16 %v229
    %v1071 = vunpack.c.l.b16 %v230
    %v1072 = vunpack.c.h.b16 %v230
    %v1073 = vunpack.c.l.b16 %v231
    %v1074 = vunpack.c.h.b16 %v231
    %v1075 = vunpack.c.l.b16 %v232
    %v1076 = vunpack.c.h.b16 %v232
    %v1077 = vunpack.c.l.b16 %v233
    %v1078 = vunpack.c.h.b16 %v233
    %v1079 = vunpack.c.l.b16 %v234
    %v1080 = vunpack.c.h.b16 %v234
    %v1081 = vunpack.c.l.b16 %v235
    %v1082 = vunpack.c.h.b16 %v235
    %v1083 = vunpack.c.l.b16 %v236
    %v1084 = vunpack.c.h.b16 %v236
    %v1085 = vunpack.c.l.b16 %v237
    %v1086 = vunpack.c.h.b16 %v237
    %v1087 = vunpack.c.l.b16 %v238
    %v1088 = vunpack.c.h.b16 %v238
    %v1089 = vunpack.c.l.b16 %v239
    %v1090 = vunpack.c.h.b16 %v239
    %v1091 = vunpack.c.l.b16 %v240
    %v1092 = vunpack.c.h.b16 %v240
    %v1093 = vunpack.c.l.b16 %v241
    %v1094 = vunpack.c.h.b16 %v241
    %v1095 = vunpack.c.l.b16 %v242
    %v1096 = vunpack.c.h.b16 %v242
    %v1097 = vunpack.c.l.b16 %v243
    %v1098 = vunpack.c.h.b16 %v243
    %v1099 = vunpack.c.l.b16 %v244
    %v1100 = vunpack.c.h.b16 %v244
    %v1101 = vunpack.c.l.b16 %v245
    %v1102 = vunpack.c.h.b16 %v245
    %v1103 = vunpack.c.l.b16 %v246
    %v1104 = vunpack.c.h.b16 %v246
    %v1105 = vunpack.c.l.b16 %v247
    %v1106 = vunpack.c.h.b16 %v247
    %v1107 = vunpack.c.l.b16 %v248
    %v1108 = vunpack.c.h.b16 %v248
    %v1109 = vunpack.c.l.b16 %v249
    %v1110 = vunpack.c.h.b16 %v249
    %v1111 = vunpack.c.l.b16 %v250
    %v1112 = vunpack.c.h.b16 %v250
    %v1113 = vunpack.c.l.b16 %v251
    %v1114 = vunpack.c.h.b16 %v251
    %v1115 = vunpack.c.l.b16 %v252
    %v1116 = vunpack.c.h.b16 %v252
    %v1117 = vunpack.c.l.b16 %v253
    %v1118 = vunpack.c.h.b16 %v253
    %v1119 = vunpack.c.l.b16 %v254
    %v1120 = vunpack.c.h.b16 %v254
    %v1121 = vunpack.c.l.b16 %v255
    %v1122 = vunpack.c.h.b16 %v255
    %v1123 = vunpack.c.l.b16 %v256
    %v1124 = vunpack.c.h.b16 %v256
    %v1125 = vunpack.c.l.b16 %v257
    %v1126 = vunpack.c.h.b16 %v257
    %v1127 = vunpack.c.l.b16 %v258
    %v1128 = vunpack.c.h.b16 %v258
    %v1129 = vunpack.c.l.b16 %v259
    %v1130 = vunpack.c.h.b16 %v259
    %v1131 = vunpack.c.l.b16 %v260
    %v1132 = vunpack.c.h.b16 %v260
    %v1133 = vunpack.c.l.b16 %v261
    %v1134 = vunpack.c.h.b16 %v261
    %v1135 = vunpack.c.l.b16 %v262
    %v1136 = vunpack.c.h.b16 %v262
    %v1137 = vunpack.c.l.b16 %v263
    %v1138 = vunpack.c.h.b16 %v263
    %v1139 = vunpack.c.l.b16 %v264
    %v1140 = vunpack.c.h.b16 %v264
    %v1141 = vunpack.c.l.b16 %v265
    %v1142 = vunpack.c.h.b16 %v265
    %v1143 = vunpack.c.l.b16 %v266
    %v1144 = vunpack.c.h.b16 %v266
    %v1145 = vunpack.c.l.b16 %v267
    %v1146 = vunpack.c.h.b16 %v267
    %v1147 = vunpack.c.l.b16 %v268
    %v1148 = vunpack.c.h.b16 %v268
    %v1149 = vunpack.c.l.b16 %v269
    %v1150 = vunpack.c.h.b16 %v269
    %v1151 = vunpack.c.l.b16 %v270
    %v1152 = vunpack.c.h.b16 %v270
    %v1153 = vunpack.c.l.b16 %v271
    %v1154 = vunpack.c.h.b16 %v271
    %v1155 = vunpack.c.l.b16 %v272
    %v1156 = vunpack.c.h.b16 %v272
    %v1157 = vunpack.c.l.b16 %v273
    %v1158 = vunpack.c.h.b16 %v273
    %v1159 = vunpack.c.l.b16 %v274
    %v1160 = vunpack.c.h.b16 %v274
    %v1161 = vunpack.c.l.b16 %v275
    %v1162 = vunpack.c.h.b16 %v275
    %v1163 = vunpack.c.l.b16 %v276
    %v1164 = vunpack.c.h.b16 %v276
    %v1165 = vunpack.c.l.b16 %v277
    %v1166 = vunpack.c.h.b16 %v277
    %v1167 = vunpack.c.l.b16 %v278
    %v1168 = vunpack.c.h.b16 %v278
    %v1169 = vunpack.c.l.b16 %v279
    %v1170 = vunpack.c.h.b16 %v279
    %v1171 = vunpack.c.l.b16 %v280
    %v1172 = vunpack.c.h.b16 %v280
    %v1173 = vunpack.c.l.b16 %v281
    %v1174 = vunpack.c.h.b16 %v281
    %v1175 = vunpack.c.l.b16 %v282
    %v1176 = vunpack.c.h.b16 %v282
    %v1177 = vunpack.c.l.b16 %v283
    %v1178 = vunpack.c.h.b16 %v283
    %v1179 = vunpack.c.l.b16 %v284
    %v1180 = vunpack.c.h.b16 %v284
    %v1181 = vunpack.c.l.b16 %v285
    %v1182 = vunpack.c.h.b16 %v285
    %v1183 = vunpack.c.l.b16 %v286
    %v1184 = vunpack.c.h.b16 %v286
    %v1185 = vunpack.c.l.b16 %v287
    %v1186 = vunpack.c.h.b16 %v287
    %v1187 = vunpack.c.l.b16 %v288
    %v1188 = vunpack.c.h.b16 %v288
    %v1189 = vunpack.c.l.b16 %v289
    %v1190 = vunpack.c.h.b16 %v289
    %v1191 = vunpack.c.l.b16 %v290
    %v1192 = vunpack.c.h.b16 %v290
    %v1193 = vunpack.c.l.b16 %v291
    %v1194 = vunpack.c.h.b16 %v291
    %v1195 = vunpack.c.l.b16 %v292
    %v1196 = vunpack.c.h.b16 %v292
    %v1197 = vunpack.c.l.b16 %v293
    %v1198 = vunpack.c.h.b16 %v293
    %v1199 = vunpack.c.l.b16 %v294
    %v1200 = vunpack.c.h.b16 %v294
    %v1201 = vunpack.c.l.b16 %v295
    %v1202 = vunpack.c.h.b16 %v295
    %v1203 = vunpack.c.l.b16 %v296
    %v1204 = vunpack.c.h.b16 %v296
    %v1205 = vunpack.c.l.b16 %v297
    %v1206 = vunpack.c.h.b16 %v297
    %v1207 = vunpack.c.l.b16 %v298
    %v1208 = vunpack.c.h.b16 %v298
    %v1209 = vunpack.c.l.b16 %v299
    %v1210 = vunpack.c.h.b16 %v299
    %v1211 = vunpack.c.l.b16 %v300
    %v1212 = vunpack.c.h.b16 %v300
    %v1213 = vunpack.c.l.b16 %v301
    %v1214 = vunpack.c.h.b16 %v301
    %v1215 = vunpack.c.l.b16 %v302
    %v1216 = vunpack.c.h.b16 %v302
    %v1217 = vunpack.c.l.b16 %v303
    %v1218 = vunpack.c.h.b16 %v303
    %v1219 = vunpack.c.l.b16 %v304
    %v1220 = vunpack.c.h.b16 %v304
    %v1221 = vunpack.c.l.b16 %v305
    %v1222 = vunpack.c.h.b16 %v305
    %v1223 = vunpack.c.l.b16 %v306
    %v1224 = vunpack.c.h.b16 %v306
    %v1225 = vunpack.c.l.b16 %v307
    %v1226 = vunpack.c.h.b16 %v307
    %v1227 = vunpack.c.l.b16 %v308
    %v1228 = vunpack.c.h.b16 %v308
    %v1229 = vunpack.c.l.b16 %v309
    %v1230 = vunpack.c.h.b16 %v309
    %v1231 = vunpack.c.l.b16 %v310
    %v1232 = vunpack.c.h.b16 %v310
    %v1233 = vunpack.c.l.b16 %v311
    %v1234 = vunpack.c.h.b16 %v311
    %v1235 = vunpack.c.l.b16 %v312
    %v1236 = vunpack.c.h.b16 %v312
    %v1237 = vunpack.c.l.b16 %v313
    %v1238 = vunpack.c.h.b16 %v313
    %v1239 = vunpack.c.l.b16 %v314
    %v1240 = vunpack.c.h.b16 %v314
    %v1241 = vpack.c.b16 %v671, %v665
    %v1242 = vpack.c.b16 %v672, %v666
    %v1243 = vpack.c.b16 %v673, %v667
    %v1244 = vpack.c.b16 %v674, %v668
    %v1245 = vpack.c.b16 %v675, %v669
    %v1246 = vpack.c.b16 %v676, %v670
    %v1247 = vpack.c.b16 %v683, %v677
    %v1248 = vpack.c.b16 %v684, %v678
    %v1249 = vpack.c.b16 %v685, %v679
    %v1250 = vpack.c.b16 %v686, %v680
    %v1251 = vpack.c.b16 %v687, %v681
    %v1252 = vpack.c.b16 %v688, %v682
    %v1253 = vpack.c.b16 %v695, %v689
    %v1254 = vpack.c.b16 %v696, %v690
    %v1255 = vpack.c.b16 %v697, %v691
    %v1256 = vpack.c.b16 %v698, %v692
    %v1257 = vpack.c.b16 %v699, %v693
    %v1258 = vpack.c.b16 %v700, %v694
    %v1259 = vpack.c.b16 %v707, %v701
    %v1260 = vpack.c.b16 %v708, %v702
    %v1261 = vpack.c.b16 %v709, %v703
    %v1262 = vpack.c.b16 %v710, %v704
    %v1263 = vpack.c.b16 %v711, %v705
    %v1264 = vpack.c.b16 %v712, %v706
    %v1265 = vpack.c.b16 %v719, %v713
    %v1266 = vpack.c.b16 %v720, %v714
    %v1267 = vpack.c.b16 %v721, %v715
    %v1268 = vpack.c.b16 %v722, %v716
    %v1269 = vpack.c.b16 %v723, %v717
    %v1270 = vpack.c.b16 %v724, %v718
    %v1271 = vpack.c.b16 %v731, %v725
    %v1272 = vpack.c.b16 %v732, %v726
    %v1273 = vpack.c.b16 %v733, %v727
    %v1274 = vpack.c.b16 %v734, %v728
    %v1275 = vpack.c.b16 %v735, %v729
    %v1276 = vpack.c.b16 %v736, %v730
    %v1277 = vpack.c.b16 %v743, %v737
    %v1278 = vpack.c.b16 %v744, %v738
    %v1279 = vpack.c.b16 %v745, %v739
    %v1280 = vpack.c.b16 %v746, %v740
    %v1281 = vpack.c.b16 %v747, %v741
    %v1282 = vpack.c.b16 %v748, %v742
    %v1283 = vpack.c.b16 %v755, %v749
    %v1284 = vpack.c.b16 %v756, %v750
    %v1285 = vpack.c.b16 %v757, %v751
    %v1286 = vpack.c.b16 %v758, %v752
    %v1287 = vpack.c.b16 %v759, %v753
    %v1288 = vpack.c.b16 %v760, %v754
    %v1289 = vpack.c.b16 %v767, %v761
    %v1290 = vpack.c.b16 %v768, %v762
    %v1291 = vpack.c.b16 %v769, %v763
    %v1292 = vpack.c.b16 %v770, %v764
    %v1293 = vpack.c.b16 %v771, %v765
    %v1294 = vpack.c.b16 %v772, %v766
    %v1295 = vpack.c.b16 %v779, %v773
    %v1296 = vpack.c.b16 %v780, %v774
    %v1297 = vpack.c.b16 %v781, %v775
    %v1298 = vpack.c.b16 %v782, %v776
    %v1299 = vpack.c.b16 %v783, %v777
    %v1300 = vpack.c.b16 %v784, %v778
    %v1301 = vpack.c.b16 %v791, %v785
    %v1302 = vpack.c.b16 %v792, %v786
    %v1303 = vpack.c.b16 %v793, %v787
    %v1304 = vpack.c.b16 %v794, %v788
    %v1305 = vpack.c.b16 %v795, %v789
    %v1306 = vpack.c.b16 %v796, %v790
    %v1307 = vpack.c.b16 %v803, %v797
    %v1308 = vpack.c.b16 %v804, %v798
    %v1309 = vpack.c.b16 %v805, %v799
    %v1310 = vpack.c.b16 %v806, %v800
    %v1311 = vpack.c.b16 %v807, %v801
    %v1312 = vpack.c.b16 %v808, %v802
    %v1313 = vpack.c.b16 %v815, %v809
    %v1314 = vpack.c.b16 %v816, %v810
    %v1315 = vpack.c.b16 %v817, %v811
    %v1316 = vpack.c.b16 %v818, %v812
    %v1317 = vpack.c.b16 %v819, %v813
    %v1318 = vpack.c.b16 %v820, %v814
    %v1319 = vpack.c.b16 %v827, %v821
    %v1320 = vpack.c.b16 %v828, %v822
    %v1321 = vpack.c.b16 %v829, %v823
    %v1322 = vpack.c.b16 %v830, %v824
    %v1323 = vpack.c.b16 %v831, %v825
    %v1324 = vpack.c.b16 %v832, %v826
    %v1325 = vpack.c.b16 %v839, %v833
    %v1326 = vpack.c.b16 %v840, %v834
    %v1327 = vpack.c.b16 %v841, %v835
    %v1328 = vpack.c.b16 %v842, %v836
    %v1329 = vpack.c.b16 %v843, %v837
    %v1330 = vpack.c.b16 %v844, %v838
    %v1331 = vpack.c.b16 %v851, %v845
    %v1332 = vpack.c.b16 %v852, %v846
    %v1333 = vpack.c.b16 %v853, %v847
    %v1334 = vpack.c.b16 %v854, %v848
    %v1335 = vpack.c.b16 %v855, %v849
    %v1336 = vpack.c.b16 %v856, %v850
    %v1337 = vpack.c.b16 %v863, %v857
    %v1338 = vpack.c.b16 %v864, %v858
    %v1339 = vpack.c.b16 %v865, %v859
    %v1340 = vpack.c.b16 %v866, %v860
    %v1341 = vpack.c.b16 %v867, %v861
    %v1342 = vpack.c.b16 %v868, %v862
    %v1343 = vpack.c.b16 %v875, %v869
    %v1344 = vpack.c.b16 %v876, %v870
    %v1345 = vpack.c.b16 %v877, %v871
    %v1346 = vpack.c.b16 %v878, %v872
    %v1347 = vpack.c.b16 %v879, %v873
    %v1348 = vpack.c.b16 %v880, %v874
    %v1349 = vpack.c.b16 %v887, %v881
    %v1350 = vpack.c.b16 %v888, %v882
    %v1351 = vpack.c.b16 %v889, %v883
    %v1352 = vpack.c.b16 %v890, %v884
    %v1353 = vpack.c.b16 %v891, %v885
    %v1354 = vpack.c.b16 %v892, %v886
    %v1355 = vpack.c.b16 %v899, %v893
    %v1356 = vpack.c.b16 %v900, %v894
    %v1357 = vpack.c.b16 %v901, %v895
    %v1358 = vpack.c.b16 %v902, %v896
    %v1359 = vpack.c.b16 %v903, %v897
    %v1360 = vpack.c.b16 %v904, %v898
    %v1361 = vpack.c.b16 %v911, %v905
    %v1362 = vpack.c.b16 %v912, %v906
    %v1363 = vpack.c.b16 %v913, %v907
    %v1364 = vpack.c.b16 %v914, %v908
    %v1365 = vpack.c.b16 %v915, %v909
    %v1366 = vpack.c.b16 %v916, %v910
    %v1367 = vpack.c.b16 %v923, %v917
    %v1368 = vpack.c.b16 %v924, %v918
    %v1369 = vpack.c.b16 %v925, %v919
    %v1370 = vpack.c.b16 %v926, %v920
    %v1371 = vpack.c.b16 %v927, %v921
    %v1372 = vpack.c.b16 %v928, %v922
    %v1373 = vpack.c.b16 %v935, %v929
    %v1374 = vpack.c.b16 %v936, %v930
    %v1375 = vpack.c.b16 %v937, %v931
    %v1376 = vpack.c.b16 %v938, %v932
    %v1377 = vpack.c.b16 %v939, %v933
    %v1378 = vpack.c.b16 %v940, %v934
    %v1379 = vpack.c.b16 %v947, %v941
    %v1380 = vpack.c.b16 %v948, %v942
    %v1381 = vpack.c.b16 %v949, %v943
    %v1382 = vpack.c.b16 %v950, %v944
    %v1383 = vpack.c.b16 %v951, %v945
    %v1384 = vpack.c.b16 %v952, %v946
    %v1385 = vpack.c.b16 %v959, %v953
    %v1386 = vpack.c.b16 %v960, %v954
    %v1387 = vpack.c.b16 %v961, %v955
    %v1388 = vpack.c.b16 %v962, %v956
    %v1389 = vpack.c.b16 %v963, %v957
    %v1390 = vpack.c.b16 %v964, %v958
    %v1391 = vpack.c.b16 %v971, %v965
    %v1392 = vpack.c.b16 %v972, %v966
    %v1393 = vpack.c.b16 %v973, %v967
    %v1394 = vpack.c.b16 %v974, %v968
    %v1395 = vpack.c.b16 %v975, %v969
    %v1396 = vpack.c.b16 %v976, %v970
    %v1397 = vpack.c.b16 %v983, %v977
    %v1398 = vpack.c.b16 %v984, %v978
    %v1399 = vpack.c.b16 %v985, %v979
    %v1400 = vpack.c.b16 %v986, %v980
    %v1401 = vpack.c.b16 %v987, %v981
    %v1402 = vpack.c.b16 %v988, %v982
    %v1403 = vpack.c.b16 %v995, %v989
    %v1404 = vpack.c.b16 %v996, %v990
    %v1405 = vpack.c.b16 %v997, %v991
    %v1406 = vpack.c.b16 %v998, %v992
    %v1407 = vpack.c.b16 %v999, %v993
    %v1408 = vpack.c.b16 %v1000, %v994
    %v1409 = vpack.c.b16 %v1007, %v1001
    %v1410 = vpack.c.b16 %v1008, %v1002
    %v1411 = vpack.c.b16 %v1009, %v1003
    %v1412 = vpack.c.b16 %v1010, %v1004
    %v1413 = vpack.c.b16 %v1011, %v1005
    %v1414 = vpack.c.b16 %v1012, %v1006
    %v1415 = vpack.c.b16 %v1019, %v1013
    %v1416 = vpack.c.b16 %v1020, %v1014
    %v1417 = vpack.c.b16 %v1021, %v1015
    %v1418 = vpack.c.b16 %v1022, %v1016
    %v1419 = vpack.c.b16 %v1023, %v1017
    %v1420 = vpack.c.b16 %v1024, %v1018
    %v1421 = vpack.c.b16 %v1031, %v1025
    %v1422 = vpack.c.b16 %v1032, %v1026
    %v1423 = vpack.c.b16 %v1033, %v1027
    %v1424 = vpack.c.b16 %v1034, %v1028
    %v1425 = vpack.c.b16 %v1035, %v1029
    %v1426 = vpack.c.b16 %v1036, %v1030
    %v1427 = vpack.c.b16 %v1043, %v1037
    %v1428 = vpack.c.b16 %v1044, %v1038
    %v1429 = vpack.c.b16 %v1045, %v1039
    %v1430 = vpack.c.b16 %v1046, %v1040
    %v1431 = vpack.c.b16 %v1047, %v1041
    %v1432 = vpack.c.b16 %v1048, %v1042
    %v1433 = vpack.c.b16 %v1055, %v1049
    %v1434 = vpack.c.b16 %v1056, %v1050
    %v1435 = vpack.c.b16 %v1057, %v1051
    %v1436 = vpack.c.b16 %v1058, %v1052
    %v1437 = vpack.c.b16 %v1059, %v1053
    %v1438 = vpack.c.b16 %v1060, %v1054
    %v1439 = vpack.c.b16 %v1067, %v1061
    %v1440 = vpack.c.b16 %v1068, %v1062
    %v1441 = vpack.c.b16 %v1069, %v1063
    %v1442 = vpack.c.b16 %v1070, %v1064
    %v1443 = vpack.c.b16 %v1071, %v1065
    %v1444 = vpack.c.b16 %v1072, %v1066
    %v1445 = vpack.c.b16 %v1079, %v1073
    %v1446 = vpack.c.b16 %v1080, %v1074
    %v1447 = vpack.c.b16 %v1081, %v1075
    %v1448 = vpack.c.b16 %v1082, %v1076
    %v1449 = vpack.c.b16 %v1083, %v1077
    %v1450 = vpack.c.b16 %v1084, %v1078
    %v1451 = vpack.c.b16 %v1091, %v1085
    %v1452 = vpack.c.b16 %v1092, %v1086
    %v1453 = vpack.c.b16 %v1093, %v1087
    %v1454 = vpack.c.b16 %v1094, %v1088
    %v1455 = vpack.c.b16 %v1095, %v1089
    %v1456 = vpack.c.b16 %v1096, %v1090
    %v1457 = vpack.c.b16 %v1103, %v1097
    %v1458 = vpack.c.b16 %v1104, %v1098
    %v1459 = vpack.c.b16 %v1105, %v1099
    %v1460 = vpack.c.b16 %v1106, %v1100
    %v1461 = vpack.c.b16 %v1107, %v1101
    %v1462 = vpack.c.b16 %v1108, %v1102
    %v1463 = vpack.c.b16 %v1115, %v1109
    %v1464 = vpack.c.b16 %v1116, %v1110
    %v1465 = vpack.c.b16 %v1117, %v1111
    %v1466 = vpack.c.b16 %v1118, %v1112
    %v1467 = vpack.c.b16 %v1119, %v1113
    %v1468 = vpack.c.b16 %v1120, %v1114
    %v1469 = vpack.c.b16 %v1127, %v1121
    %v1470 = vpack.c.b16 %v1128, %v1122
    %v1471 = vpack.c.b16 %v1129, %v1123
    %v1472 = vpack.c.b16 %v1130, %v1124
    %v1473 = vpack.c.b16 %v1131, %v1125
    %v1474 = vpack.c.b16 %v1132, %v1126
    %v1475 = vpack.c.b16 %v1139, %v1133
    %v1476 = vpack.c.b16 %v1140, %v1134
    %v1477 = vpack.c.b16 %v1141, %v1135
    %v1478 = vpack.c.b16 %v1142, %v1136
    %v1479 = vpack.c.b16 %v1143, %v1137
    %v1480 = vpack.c.b16 %v1144, %v1138
    %v1481 = vpack.c.b16 %v1151, %v1145
    %v1482 = vpack.c.b16 %v1152, %v1146
    %v1483 = vpack.c.b16 %v1153, %v1147
    %v1484 = vpack.c.b16 %v1154, %v1148
    %v1485 = vpack.c.b16 %v1155, %v1149
    %v1486 = vpack.c.b16 %v1156, %v1150
    %v1487 = vpack.c.b16 %v1163, %v1157
    %v1488 = vpack.c.b16 %v1164, %v1158
    %v1489 = vpack.c.b16 %v1165, %v1159
    %v1490 = vpack.c.b16 %v1166, %v1160
    %v1491 = vpack.c.b16 %v1167, %v1161
    %v1492 = vpack.c.b16 %v1168, %v1162
    %v1493 = vpack.c.b16 %v1175, %v1169
    %v1494 = vpack.c.b16 %v1176, %v1170
    %v1495 = vpack.c.b16 %v1177, %v1171
    %v1496 = vpack.c.b16 %v1178, %v1172
    %v1497 = vpack.c.b16 %v1179, %v1173
    %v1498 = vpack.c.b16 %v1180, %v1174
    %v1499 = vpack.c.b16 %v1187, %v1181
    %v1500 = vpack.c.b16 %v1188, %v1182
    %v1501 = vpack.c.b16 %v1189, %v1183
    %v1502 = vpack.c.b16 %v1190, %v1184
    %v1503 = vpack.c.b16 %v1191, %v1185
    %v1504 = vpack.c.b16 %v1192, %v1186
    %v1505 = vpack.c.b16 %v1199, %v1193
    %v1506 = vpack.c.b16 %v1200, %v1194
    %v1507 = vpack.c.b16 %v1201, %v1195
    %v1508 = vpack.c.b16 %v1202, %v1196
    %v1509 = vpack.c.b16 %v1203, %v1197
    %v1510 = vpack.c.b16 %v1204, %v1198
    %v1511 = vpack.c.b16 %v1211, %v1205
    %v1512 = vpack.c.b16 %v1212, %v1206
    %v1513 = vpack.c.b16 %v1213, %v1207
    %v1514 = vpack.c.b16 %v1214, %v1208
    %v1515 = vpack.c.b16 %v1215, %v1209
    %v1516 = vpack.c.b16 %v1216, %v1210
    %v1517 = vpack.c.b16 %v1223, %v1217
    %v1518 = vpack.c.b16 %v1224, %v1218
    %v1519 = vpack.c.b16 %v1225, %v1219
    %v1520 = vpack.c.b16 %v1226, %v1220
    %v1521 = vpack.c.b16 %v1227, %v1221
    %v1522 = vpack.c.b16 %v1228, %v1222
    %v1523 = vpack.c.b16 %v1235, %v1229
    %v1524 = vpack.c.b16 %v1236, %v1230
    %v1525 = vpack.c.b16 %v1237, %v1231
    %v1526 = vpack.c.b16 %v1238, %v1232
    %v1527 = vpack.c.b16 %v1239, %v1233
    %v1528 = vpack.c.b16 %v1240, %v1234
    %1817 = vmatprep.subr.bf16.mxu0 %v1242
    %1818 = vmatpush1.bf16.msra.mxu0 %v1241
    %1819 = vmatprep.subr.bf16.mxu0 %v1248
    %1820 = vmatpush1.bf16.msra.mxu0 %v1247
    %1821 = vmatprep.subr.bf16.mxu0 %v1254
    %1822 = vmatpush1.bf16.msra.mxu0 %v1253
    %1823 = vmatprep.subr.bf16.mxu0 %v1260
    %1824 = vmatpush1.bf16.msra.mxu0 %v1259
    %1825 = vmatprep.subr.bf16.mxu0 %v1266
    %1826 = vmatpush1.bf16.msra.mxu0 %v1265
    %1827 = vmatprep.subr.bf16.mxu0 %v1272
    %1828 = vmatpush1.bf16.msra.mxu0 %v1271
    %1829 = vmatprep.subr.bf16.mxu0 %v1278
    %1830 = vmatpush1.bf16.msra.mxu0 %v1277
    %1831 = vmatprep.subr.bf16.mxu0 %v1284
    %1832 = vmatpush1.bf16.msra.mxu0 %v1283
    %1833 = vmatprep.subr.bf16.mxu0 %v1290
    %1834 = vmatpush1.bf16.msra.mxu0 %v1289
    %1835 = vmatprep.subr.bf16.mxu0 %v1296
    %1836 = vmatpush1.bf16.msra.mxu0 %v1295
    %1837 = vmatprep.subr.bf16.mxu0 %v1302
    %1838 = vmatpush1.bf16.msra.mxu0 %v1301
    %1839 = vmatprep.subr.bf16.mxu0 %v1308
    %1840 = vmatpush1.bf16.msra.mxu0 %v1307
    %1841 = vmatprep.subr.bf16.mxu0 %v1314
    %1842 = vmatpush1.bf16.msra.mxu0 %v1313
    %1843 = vmatprep.subr.bf16.mxu0 %v1320
    %1844 = vmatpush1.bf16.msra.mxu0 %v1319
    %1845 = vmatprep.subr.bf16.mxu0 %v1326
    %1846 = vmatpush1.bf16.msra.mxu0 %v1325
    %1847 = vmatprep.subr.bf16.mxu0 %v1332
    %1848 = vmatpush1.bf16.msra.mxu0 %v1331
    %1849 = vmatprep.mubr.bf16.mxu0 %v366
    %1850 = vmatmul.mubr.bf16.gmra.mrb[0].mxu0 %v365
    %v1851 = vpop.f32.mrb[0].mxu0
    %v1852 = vadd.f32 %v320, %v1851
    %v1853 = vpop.f32.mrb[0].mxu0
    %v1854 = vadd.f32 %v324, %v1853
    %v1855 = vpop.f32.mrb[0].mxu0
    %v1856 = vadd.f32 %v320, %v1855
    %v1857 = vpop.f32.mrb[0].mxu0
    %v1858 = vadd.f32 %v324, %v1857
    %1859 = vdwg.mxu0
    %1860 = vmatprep.subr.bf16.mxu0 %v1338
    %1861 = vmatpush1.bf16.msra.mxu0 %v1337
    %1862 = vmatprep.subr.bf16.mxu0 %v1344
    %1863 = vmatpush1.bf16.msra.mxu0 %v1343
    %1864 = vmatprep.subr.bf16.mxu0 %v1350
    %1865 = vmatpush1.bf16.msra.mxu0 %v1349
    %1866 = vmatprep.subr.bf16.mxu0 %v1356
    %1867 = vmatpush1.bf16.msra.mxu0 %v1355
    %1868 = vmatprep.subr.bf16.mxu0 %v1362
    %1869 = vmatpush1.bf16.msra.mxu0 %v1361
    %1870 = vmatprep.subr.bf16.mxu0 %v1368
    %1871 = vmatpush1.bf16.msra.mxu0 %v1367
    %1872 = vmatprep.subr.bf16.mxu0 %v1374
    %1873 = vmatpush1.bf16.msra.mxu0 %v1373
    %1874 = vmatprep.subr.bf16.mxu0 %v1380
    %1875 = vmatpush1.bf16.msra.mxu0 %v1379
    %1876 = vmatprep.subr.bf16.mxu0 %v1386
    %1877 = vmatpush1.bf16.msra.mxu0 %v1385
    %1878 = vmatprep.subr.bf16.mxu0 %v1392
    %1879 = vmatpush1.bf16.msra.mxu0 %v1391
    %1880 = vmatprep.subr.bf16.mxu0 %v1398
    %1881 = vmatpush1.bf16.msra.mxu0 %v1397
    %1882 = vmatprep.subr.bf16.mxu0 %v1404
    %1883 = vmatpush1.bf16.msra.mxu0 %v1403
    %1884 = vmatprep.subr.bf16.mxu0 %v1410
    %1885 = vmatpush1.bf16.msra.mxu0 %v1409
    %1886 = vmatprep.subr.bf16.mxu0 %v1416
    %1887 = vmatpush1.bf16.msra.mxu0 %v1415
    %1888 = vmatprep.subr.bf16.mxu0 %v1422
    %1889 = vmatpush1.bf16.msra.mxu0 %v1421
    %1890 = vmatprep.subr.bf16.mxu0 %v1428
    %1891 = vmatpush1.bf16.msra.mxu0 %v1427
    %1892 = vmatprep.mubr.bf16.mxu0 %v368
    %1893 = vmatmul.mubr.bf16.gmra.mrb[0].mxu0 %v367
    %v1894 = vpop.f32.mrb[0].mxu0
    %v1895 = vadd.f32 %v1852, %v1894
    %v1896 = vpop.f32.mrb[0].mxu0
    %v1897 = vadd.f32 %v1854, %v1896
    %v1898 = vpop.f32.mrb[0].mxu0
    %v1899 = vadd.f32 %v1856, %v1898
    %v1900 = vpop.f32.mrb[0].mxu0
    %v1901 = vadd.f32 %v1858, %v1900
    %1902 = vdwg.mxu0
    %1903 = vmatprep.subr.bf16.mxu0 %v1434
    %1904 = vmatpush1.bf16.msra.mxu0 %v1433
    %1905 = vmatprep.subr.bf16.mxu0 %v1440
    %1906 = vmatpush1.bf16.msra.mxu0 %v1439
    %1907 = vmatprep.subr.bf16.mxu0 %v1446
    %1908 = vmatpush1.bf16.msra.mxu0 %v1445
    %1909 = vmatprep.subr.bf16.mxu0 %v1452
    %1910 = vmatpush1.bf16.msra.mxu0 %v1451
    %1911 = vmatprep.subr.bf16.mxu0 %v1458
    %1912 = vmatpush1.bf16.msra.mxu0 %v1457
    %1913 = vmatprep.subr.bf16.mxu0 %v1464
    %1914 = vmatpush1.bf16.msra.mxu0 %v1463
    %1915 = vmatprep.subr.bf16.mxu0 %v1470
    %1916 = vmatpush1.bf16.msra.mxu0 %v1469
    %1917 = vmatprep.subr.bf16.mxu0 %v1476
    %1918 = vmatpush1.bf16.msra.mxu0 %v1475
    %1919 = vmatprep.subr.bf16.mxu0 %v1482
    %1920 = vmatpush1.bf16.msra.mxu0 %v1481
    %1921 = vmatprep.subr.bf16.mxu0 %v1488
    %1922 = vmatpush1.bf16.msra.mxu0 %v1487
    %1923 = vmatprep.subr.bf16.mxu0 %v1494
    %1924 = vmatpush1.bf16.msra.mxu0 %v1493
    %1925 = vmatprep.subr.bf16.mxu0 %v1500
    %1926 = vmatpush1.bf16.msra.mxu0 %v1499
    %1927 = vmatprep.subr.bf16.mxu0 %v1506
    %1928 = vmatpush1.bf16.msra.mxu0 %v1505
    %1929 = vmatprep.subr.bf16.mxu0 %v1512
    %1930 = vmatpush1.bf16.msra.mxu0 %v1511
    %1931 = vmatprep.subr.bf16.mxu0 %v1518
    %1932 = vmatpush1.bf16.msra.mxu0 %v1517
    %1933 = vmatprep.subr.bf16.mxu0 %v1524
    %1934 = vmatpush1.bf16.msra.mxu0 %v1523
    %1935 = vmatprep.mubr.bf16.mxu0 %v370
    %1936 = vmatmul.mubr.bf16.gmra.mrb[0].mxu0 %v369
    %v1937 = vpop.f32.mrb[0].mxu0
    %v1938 = vadd.f32 %v1895, %v1937
    %v1939 = vpop.f32.mrb[0].mxu0
    %v1940 = vadd.f32 %v1897, %v1939
    %v1941 = vpop.f32.mrb[0].mxu0
    %v1942 = vadd.f32 %v1899, %v1941
    %v1943 = vpop.f32.mrb[0].mxu0
    %v1944 = vadd.f32 %v1901, %v1943
    %1945 = vdwg.mxu0
    %1946 = vmatprep.subr.bf16.mxu0 %v1244
    %1947 = vmatpush1.bf16.msra.mxu0 %v1243
    %1948 = vmatprep.subr.bf16.mxu0 %v1250
    %1949 = vmatpush1.bf16.msra.mxu0 %v1249
    %1950 = vmatprep.subr.bf16.mxu0 %v1256
    %1951 = vmatpush1.bf16.msra.mxu0 %v1255
    %1952 = vmatprep.subr.bf16.mxu0 %v1262
    %1953 = vmatpush1.bf16.msra.mxu0 %v1261
    %1954 = vmatprep.subr.bf16.mxu0 %v1268
    %1955 = vmatpush1.bf16.msra.mxu0 %v1267
    %1956 = vmatprep.subr.bf16.mxu0 %v1274
    %1957 = vmatpush1.bf16.msra.mxu0 %v1273
    %1958 = vmatprep.subr.bf16.mxu0 %v1280
    %1959 = vmatpush1.bf16.msra.mxu0 %v1279
    %1960 = vmatprep.subr.bf16.mxu0 %v1286
    %1961 = vmatpush1.bf16.msra.mxu0 %v1285
    %1962 = vmatprep.subr.bf16.mxu0 %v1292
    %1963 = vmatpush1.bf16.msra.mxu0 %v1291
    %1964 = vmatprep.subr.bf16.mxu0 %v1298
    %1965 = vmatpush1.bf16.msra.mxu0 %v1297
    %1966 = vmatprep.subr.bf16.mxu0 %v1304
    %1967 = vmatpush1.bf16.msra.mxu0 %v1303
    %1968 = vmatprep.subr.bf16.mxu0 %v1310
    %1969 = vmatpush1.bf16.msra.mxu0 %v1309
    %1970 = vmatprep.subr.bf16.mxu0 %v1316
    %1971 = vmatpush1.bf16.msra.mxu0 %v1315
    %1972 = vmatprep.subr.bf16.mxu0 %v1322
    %1973 = vmatpush1.bf16.msra.mxu0 %v1321
    %1974 = vmatprep.subr.bf16.mxu0 %v1328
    %1975 = vmatpush1.bf16.msra.mxu0 %v1327
    %1976 = vmatprep.subr.bf16.mxu0 %v1334
    %1977 = vmatpush1.bf16.msra.mxu0 %v1333
    %1978 = vmatprep.mubr.bf16.mxu0 %v366
    %1979 = vmatmul.mubr.bf16.gmra.mrb[0].mxu0 %v365
    %v1980 = vpop.f32.mrb[0].mxu0
    %v1981 = vadd.f32 %v328, %v1980
    %v1982 = vpop.f32.mrb[0].mxu0
    %v1983 = vadd.f32 %v332, %v1982
    %v1984 = vpop.f32.mrb[0].mxu0
    %v1985 = vadd.f32 %v328, %v1984
    %v1986 = vpop.f32.mrb[0].mxu0
    %v1987 = vadd.f32 %v332, %v1986
    %1988 = vdwg.mxu0
    %1989 = vmatprep.subr.bf16.mxu0 %v1340
    %1990 = vmatpush1.bf16.msra.mxu0 %v1339
    %1991 = vmatprep.subr.bf16.mxu0 %v1346
    %1992 = vmatpush1.bf16.msra.mxu0 %v1345
    %1993 = vmatprep.subr.bf16.mxu0 %v1352
    %1994 = vmatpush1.bf16.msra.mxu0 %v1351
    %1995 = vmatprep.subr.bf16.mxu0 %v1358
    %1996 = vmatpush1.bf16.msra.mxu0 %v1357
    %1997 = vmatprep.subr.bf16.mxu0 %v1364
    %1998 = vmatpush1.bf16.msra.mxu0 %v1363
    %1999 = vmatprep.subr.bf16.mxu0 %v1370
    %2000 = vmatpush1.bf16.msra.mxu0 %v1369
    %2001 = vmatprep.subr.bf16.mxu0 %v1376
    %2002 = vmatpush1.bf16.msra.mxu0 %v1375
    %2003 = vmatprep.subr.bf16.mxu0 %v1382
    %2004 = vmatpush1.bf16.msra.mxu0 %v1381
    %2005 = vmatprep.subr.bf16.mxu0 %v1388
    %2006 = vmatpush1.bf16.msra.mxu0 %v1387
    %2007 = vmatprep.subr.bf16.mxu0 %v1394
    %2008 = vmatpush1.bf16.msra.mxu0 %v1393
    %2009 = vmatprep.subr.bf16.mxu0 %v1400
    %2010 = vmatpush1.bf16.msra.mxu0 %v1399
    %2011 = vmatprep.subr.bf16.mxu0 %v1406
    %2012 = vmatpush1.bf16.msra.mxu0 %v1405
    %2013 = vmatprep.subr.bf16.mxu0 %v1412
    %2014 = vmatpush1.bf16.msra.mxu0 %v1411
    %2015 = vmatprep.subr.bf16.mxu0 %v1418
    %2016 = vmatpush1.bf16.msra.mxu0 %v1417
    %2017 = vmatprep.subr.bf16.mxu0 %v1424
    %2018 = vmatpush1.bf16.msra.mxu0 %v1423
    %2019 = vmatprep.subr.bf16.mxu0 %v1430
    %2020 = vmatpush1.bf16.msra.mxu0 %v1429
    %2021 = vmatprep.mubr.bf16.mxu0 %v368
    %2022 = vmatmul.mubr.bf16.gmra.mrb[0].mxu0 %v367
    %v2023 = vpop.f32.mrb[0].mxu0
    %v2024 = vadd.f32 %v1981, %v2023
    %v2025 = vpop.f32.mrb[0].mxu0
    %v2026 = vadd.f32 %v1983, %v2025
    %v2027 = vpop.f32.mrb[0].mxu0
    %v2028 = vadd.f32 %v1985, %v2027
    %v2029 = vpop.f32.mrb[0].mxu0
    %v2030 = vadd.f32 %v1987, %v2029
    %2031 = vdwg.mxu0
    %2032 = vmatprep.subr.bf16.mxu0 %v1436
    %2033 = vmatpush1.bf16.msra.mxu0 %v1435
    %2034 = vmatprep.subr.bf16.mxu0 %v1442
    %2035 = vmatpush1.bf16.msra.mxu0 %v1441
    %2036 = vmatprep.subr.bf16.mxu0 %v1448
    %2037 = vmatpush1.bf16.msra.mxu0 %v1447
    %2038 = vmatprep.subr.bf16.mxu0 %v1454
    %2039 = vmatpush1.bf16.msra.mxu0 %v1453
    %2040 = vmatprep.subr.bf16.mxu0 %v1460
    %2041 = vmatpush1.bf16.msra.mxu0 %v1459
    %2042 = vmatprep.subr.bf16.mxu0 %v1466
    %2043 = vmatpush1.bf16.msra.mxu0 %v1465
    %2044 = vmatprep.subr.bf16.mxu0 %v1472
    %2045 = vmatpush1.bf16.msra.mxu0 %v1471
    %2046 = vmatprep.subr.bf16.mxu0 %v1478
    %2047 = vmatpush1.bf16.msra.mxu0 %v1477
    %2048 = vmatprep.subr.bf16.mxu0 %v1484
    %2049 = vmatpush1.bf16.msra.mxu0 %v1483
    %2050 = vmatprep.subr.bf16.mxu0 %v1490
    %2051 = vmatpush1.bf16.msra.mxu0 %v1489
    %2052 = vmatprep.subr.bf16.mxu0 %v1496
    %2053 = vmatpush1.bf16.msra.mxu0 %v1495
    %2054 = vmatprep.subr.bf16.mxu0 %v1502
    %2055 = vmatpush1.bf16.msra.mxu0 %v1501
    %2056 = vmatprep.subr.bf16.mxu0 %v1508
    %2057 = vmatpush1.bf16.msra.mxu0 %v1507
    %2058 = vmatprep.subr.bf16.mxu0 %v1514
    %2059 = vmatpush1.bf16.msra.mxu0 %v1513
    %2060 = vmatprep.subr.bf16.mxu0 %v1520
    %2061 = vmatpush1.bf16.msra.mxu0 %v1519
    %2062 = vmatprep.subr.bf16.mxu0 %v1526
    %2063 = vmatpush1.bf16.msra.mxu0 %v1525
    %2064 = vmatprep.mubr.bf16.mxu0 %v370
    %2065 = vmatmul.mubr.bf16.gmra.mrb[0].mxu0 %v369
    %v2066 = vpop.f32.mrb[0].mxu0
    %v2067 = vadd.f32 %v2024, %v2066
    %v2068 = vpop.f32.mrb[0].mxu0
    %v2069 = vadd.f32 %v2026, %v2068
    %v2070 = vpop.f32.mrb[0].mxu0
    %v2071 = vadd.f32 %v2028, %v2070
    %v2072 = vpop.f32.mrb[0].mxu0
    %v2073 = vadd.f32 %v2030, %v2072
    %2074 = vdwg.mxu0
    %2075 = vmatprep.subr.bf16.mxu0 %v1246
    %2076 = vmatpush1.bf16.msra.mxu0 %v1245
    %2077 = vmatprep.subr.bf16.mxu0 %v1252
    %2078 = vmatpush1.bf16.msra.mxu0 %v1251
    %2079 = vmatprep.subr.bf16.mxu0 %v1258
    %2080 = vmatpush1.bf16.msra.mxu0 %v1257
    %2081 = vmatprep.subr.bf16.mxu0 %v1264
    %2082 = vmatpush1.bf16.msra.mxu0 %v1263
    %2083 = vmatprep.subr.bf16.mxu0 %v1270
    %2084 = vmatpush1.bf16.msra.mxu0 %v1269
    %2085 = vmatprep.subr.bf16.mxu0 %v1276
    %2086 = vmatpush1.bf16.msra.mxu0 %v1275
    %2087 = vmatprep.subr.bf16.mxu0 %v1282
    %2088 = vmatpush1.bf16.msra.mxu0 %v1281
    %2089 = vmatprep.subr.bf16.mxu0 %v1288
    %2090 = vmatpush1.bf16.msra.mxu0 %v1287
    %2091 = vmatprep.subr.bf16.mxu0 %v1294
    %2092 = vmatpush1.bf16.msra.mxu0 %v1293
    %2093 = vmatprep.subr.bf16.mxu0 %v1300
    %2094 = vmatpush1.bf16.msra.mxu0 %v1299
    %2095 = vmatprep.subr.bf16.mxu0 %v1306
    %2096 = vmatpush1.bf16.msra.mxu0 %v1305
    %2097 = vmatprep.subr.bf16.mxu0 %v1312
    %2098 = vmatpush1.bf16.msra.mxu0 %v1311
    %2099 = vmatprep.subr.bf16.mxu0 %v1318
    %2100 = vmatpush1.bf16.msra.mxu0 %v1317
    %2101 = vmatprep.subr.bf16.mxu0 %v1324
    %2102 = vmatpush1.bf16.msra.mxu0 %v1323
    %2103 = vmatprep.subr.bf16.mxu0 %v1330
    %2104 = vmatpush1.bf16.msra.mxu0 %v1329
    %2105 = vmatprep.subr.bf16.mxu0 %v1336
    %2106 = vmatpush1.bf16.msra.mxu0 %v1335
    %2107 = vmatprep.mubr.bf16.mxu0 %v366
    %2108 = vmatmul.mubr.bf16.gmra.mrb[0].mxu0 %v365
    %v2109 = vpop.f32.mrb[0].mxu0
    %v2110 = vadd.f32 %v336, %v2109
    %v2111 = vpop.f32.mrb[0].mxu0
    %v2112 = vadd.f32 %v340, %v2111
    %v2113 = vpop.f32.mrb[0].mxu0
    %v2114 = vadd.f32 %v336, %v2113
    %v2115 = vpop.f32.mrb[0].mxu0
    %v2116 = vadd.f32 %v340, %v2115
    %2117 = vdwg.mxu0
    %2118 = vmatprep.subr.bf16.mxu0 %v1342
    %2119 = vmatpush1.bf16.msra.mxu0 %v1341
    %2120 = vmatprep.subr.bf16.mxu0 %v1348
    %2121 = vmatpush1.bf16.msra.mxu0 %v1347
    %2122 = vmatprep.subr.bf16.mxu0 %v1354
    %2123 = vmatpush1.bf16.msra.mxu0 %v1353
    %2124 = vmatprep.subr.bf16.mxu0 %v1360
    %2125 = vmatpush1.bf16.msra.mxu0 %v1359
    %2126 = vmatprep.subr.bf16.mxu0 %v1366
    %2127 = vmatpush1.bf16.msra.mxu0 %v1365
    %2128 = vmatprep.subr.bf16.mxu0 %v1372
    %2129 = vmatpush1.bf16.msra.mxu0 %v1371
    %2130 = vmatprep.subr.bf16.mxu0 %v1378
    %2131 = vmatpush1.bf16.msra.mxu0 %v1377
    %2132 = vmatprep.subr.bf16.mxu0 %v1384
    %2133 = vmatpush1.bf16.msra.mxu0 %v1383
    %2134 = vmatprep.subr.bf16.mxu0 %v1390
    %2135 = vmatpush1.bf16.msra.mxu0 %v1389
    %2136 = vmatprep.subr.bf16.mxu0 %v1396
    %2137 = vmatpush1.bf16.msra.mxu0 %v1395
    %2138 = vmatprep.subr.bf16.mxu0 %v1402
    %2139 = vmatpush1.bf16.msra.mxu0 %v1401
    %2140 = vmatprep.subr.bf16.mxu0 %v1408
    %2141 = vmatpush1.bf16.msra.mxu0 %v1407
    %2142 = vmatprep.subr.bf16.mxu0 %v1414
    %2143 = vmatpush1.bf16.msra.mxu0 %v1413
    %2144 = vmatprep.subr.bf16.mxu0 %v1420
    %2145 = vmatpush1.bf16.msra.mxu0 %v1419
    %2146 = vmatprep.subr.bf16.mxu0 %v1426
    %2147 = vmatpush1.bf16.msra.mxu0 %v1425
    %2148 = vmatprep.subr.bf16.mxu0 %v1432
    %2149 = vmatpush1.bf16.msra.mxu0 %v1431
    %2150 = vmatprep.mubr.bf16.mxu0 %v368
    %2151 = vmatmul.mubr.bf16.gmra.mrb[0].mxu0 %v367
    %v2152 = vpop.f32.mrb[0].mxu0
    %v2153 = vadd.f32 %v2110, %v2152
    %v2154 = vpop.f32.mrb[0].mxu0
    %v2155 = vadd.f32 %v2112, %v2154
    %v2156 = vpop.f32.mrb[0].mxu0
    %v2157 = vadd.f32 %v2114, %v2156
    %v2158 = vpop.f32.mrb[0].mxu0
    %v2159 = vadd.f32 %v2116, %v2158
    %2160 = vdwg.mxu0
    %2161 = vmatprep.subr.bf16.mxu0 %v1438
    %2162 = vmatpush1.bf16.msra.mxu0 %v1437
    %2163 = vmatprep.subr.bf16.mxu0 %v1444
    %2164 = vmatpush1.bf16.msra.mxu0 %v1443
    %2165 = vmatprep.subr.bf16.mxu0 %v1450
    %2166 = vmatpush1.bf16.msra.mxu0 %v1449
    %2167 = vmatprep.subr.bf16.mxu0 %v1456
    %2168 = vmatpush1.bf16.msra.mxu0 %v1455
    %2169 = vmatprep.subr.bf16.mxu0 %v1462
    %2170 = vmatpush1.bf16.msra.mxu0 %v1461
    %2171 = vmatprep.subr.bf16.mxu0 %v1468
    %2172 = vmatpush1.bf16.msra.mxu0 %v1467
    %2173 = vmatprep.subr.bf16.mxu0 %v1474
    %2174 = vmatpush1.bf16.msra.mxu0 %v1473
    %2175 = vmatprep.subr.bf16.mxu0 %v1480
    %2176 = vmatpush1.bf16.msra.mxu0 %v1479
    %2177 = vmatprep.subr.bf16.mxu0 %v1486
    %2178 = vmatpush1.bf16.msra.mxu0 %v1485
    %2179 = vmatprep.subr.bf16.mxu0 %v1492
    %2180 = vmatpush1.bf16.msra.mxu0 %v1491
    %2181 = vmatprep.subr.bf16.mxu0 %v1498
    %2182 = vmatpush1.bf16.msra.mxu0 %v1497
    %2183 = vmatprep.subr.bf16.mxu0 %v1504
    %2184 = vmatpush1.bf16.msra.mxu0 %v1503
    %2185 = vmatprep.subr.bf16.mxu0 %v1510
    %2186 = vmatpush1.bf16.msra.mxu0 %v1509
    %2187 = vmatprep.subr.bf16.mxu0 %v1516
    %2188 = vmatpush1.bf16.msra.mxu0 %v1515
    %2189 = vmatprep.subr.bf16.mxu0 %v1522
    %2190 = vmatpush1.bf16.msra.mxu0 %v1521
    %2191 = vmatprep.subr.bf16.mxu0 %v1528
    %2192 = vmatpush1.bf16.msra.mxu0 %v1527
    %2193 = vmatprep.mubr.bf16.mxu0 %v370
    %2194 = vmatmul.mubr.bf16.gmra.mrb[0].mxu0 %v369
    %v2195 = vpop.f32.mrb[0].mxu0
    %v2196 = vadd.f32 %v2153, %v2195
    %v2197 = vpop.f32.mrb[0].mxu0
    %v2198 = vadd.f32 %v2155, %v2197
    %v2199 = vpop.f32.mrb[0].mxu0
    %v2200 = vadd.f32 %v2157, %v2199
    %v2201 = vpop.f32.mrb[0].mxu0
    %v2202 = vadd.f32 %v2159, %v2201
    %2203 = vdwg.mxu0
    %v2204 = vmax.f32 %v1938, 0.0
    %v2205 = vmax.f32 %v1940, 0.0
    %v2206 = vmax.f32 %v2067, 0.0
    %v2207 = vmax.f32 %v2069, 0.0
    %v2208 = vmax.f32 %v2196, 0.0
    %v2209 = vmax.f32 %v2198, 0.0
    %v2210 = vmax.f32 %v1942, 0.0
    %v2211 = vmax.f32 %v1944, 0.0
    %v2212 = vmax.f32 %v2071, 0.0
    %v2213 = vmax.f32 %v2073, 0.0
    %v2214 = vmax.f32 %v2200, 0.0
    %v2215 = vmax.f32 %v2202, 0.0
    %v2216 = vpack.c.bf16 %v2210, %v2204
    %v2217 = vpack.c.bf16 %v2211, %v2205
    %v2218 = vpack.c.bf16 %v2212, %v2206
    %v2219 = vpack.c.bf16 %v2213, %v2207
    %v2220 = vpack.c.bf16 %v2214, %v2208
    %v2221 = vpack.c.bf16 %v2215, %v2209
    %v2222 = vld [vmem:[%s3] sm:$0xff]
    %v2223 = vld [vmem:[%s3 + $0x8] sm:$0xff]
    %v2224 = vld [vmem:[%s3 + $0x10] sm:$0xff]
    %v2225 = vld [vmem:[%s3 + $0x18] sm:$0xff]
    %v2226 = vld [vmem:[%s3 + $0x20] sm:$0xff]
    %v2227 = vld [vmem:[%s3 + $0x28] sm:$0xff]
    %v2228 = vld [vmem:[%s3 + $0x30] sm:$0xff]
    %v2229 = vld [vmem:[%s3 + $0x38] sm:$0xff]
    %v2230 = vld [vmem:[%s3 + $0x40] sm:$0xff]
    %v2231 = vld [vmem:[%s3 + $0x48] sm:$0xff]
    %v2232 = vld [vmem:[%s3 + $0x50] sm:$0xff]
    %v2233 = vld [vmem:[%s3 + $0x58] sm:$0xff]
    %v2234 = vld [vmem:[%s3 + $0x60] sm:$0xff]
    %v2235 = vld [vmem:[%s3 + $0x68] sm:$0xff]
    %v2236 = vld [vmem:[%s3 + $0x70] sm:$0xff]
    %v2237 = vld [vmem:[%s3 + $0x78] sm:$0xff]
    %v2238 = vld [vmem:[%s3 + $0x80] sm:$0xff]
    %v2239 = vld [vmem:[%s3 + $0x88] sm:$0xff]
    %v2240 = vld [vmem:[%s3 + $0x90] sm:$0xff]
    %v2241 = vld [vmem:[%s3 + $0x98] sm:$0xff]
    %v2242 = vld [vmem:[%s3 + $0xa0] sm:$0xff]
    %v2243 = vld [vmem:[%s3 + $0xa8] sm:$0xff]
    %v2244 = vld [vmem:[%s3 + $0xb0] sm:$0xff]
    %v2245 = vld [vmem:[%s3 + $0xb8] sm:$0xff]
    %v2246 = vld [vmem:[%s3 + $0xc0] sm:$0xff]
    %v2247 = vld [vmem:[%s3 + $0xc8] sm:$0xff]
    %v2248 = vld [vmem:[%s3 + $0xd0] sm:$0xff]
    %v2249 = vld [vmem:[%s3 + $0xd8] sm:$0xff]
    %v2250 = vld [vmem:[%s3 + $0xe0] sm:$0xff]
    %v2251 = vld [vmem:[%s3 + $0xe8] sm:$0xff]
    %v2252 = vld [vmem:[%s3 + $0xf0] sm:$0xff]
    %v2253 = vld [vmem:[%s3 + $0xf8] sm:$0xff]
    %v2254 = vld [vmem:[%s3 + $0x100] sm:$0xff]
    %v2255 = vld [vmem:[%s3 + $0x108] sm:$0xff]
    %v2256 = vld [vmem:[%s3 + $0x110] sm:$0xff]
    %v2257 = vld [vmem:[%s3 + $0x118] sm:$0xff]
    %v2258 = vld [vmem:[%s3 + $0x120] sm:$0xff]
    %v2259 = vld [vmem:[%s3 + $0x128] sm:$0xff]
    %v2260 = vld [vmem:[%s3 + $0x130] sm:$0xff]
    %v2261 = vld [vmem:[%s3 + $0x138] sm:$0xff]
    %v2262 = vld [vmem:[%s3 + $0x140] sm:$0xff]
    %v2263 = vld [vmem:[%s3 + $0x148] sm:$0xff]
    %v2264 = vld [vmem:[%s3 + $0x150] sm:$0xff]
    %v2265 = vld [vmem:[%s3 + $0x158] sm:$0xff]
    %v2266 = vld [vmem:[%s3 + $0x160] sm:$0xff]
    %v2267 = vld [vmem:[%s3 + $0x168] sm:$0xff]
    %v2268 = vld [vmem:[%s3 + $0x170] sm:$0xff]
    %v2269 = vld [vmem:[%s3 + $0x178] sm:$0xff]
    %v2270 = vld [vmem:[%s3 + $0x180] sm:$0xff]
    %v2271 = vld [vmem:[%s3 + $0x188] sm:$0xff]
    %v2272 = vld [vmem:[%s3 + $0x190] sm:$0xff]
    %v2273 = vld [vmem:[%s3 + $0x198] sm:$0xff]
    %v2274 = vld [vmem:[%s3 + $0x1a0] sm:$0xff]
    %v2275 = vld [vmem:[%s3 + $0x1a8] sm:$0xff]
    %v2276 = vld [vmem:[%s3 + $0x1b0] sm:$0xff]
    %v2277 = vld [vmem:[%s3 + $0x1b8] sm:$0xff]
    %v2278 = vld [vmem:[%s3 + $0x1c0] sm:$0xff]
    %v2279 = vld [vmem:[%s3 + $0x1c8] sm:$0xff]
    %v2280 = vld [vmem:[%s3 + $0x1d0] sm:$0xff]
    %v2281 = vld [vmem:[%s3 + $0x1d8] sm:$0xff]
    %v2282 = vld [vmem:[%s3 + $0x1e0] sm:$0xff]
    %v2283 = vld [vmem:[%s3 + $0x1e8] sm:$0xff]
    %v2284 = vld [vmem:[%s3 + $0x1f0] sm:$0xff]
    %v2285 = vld [vmem:[%s3 + $0x1f8] sm:$0xff]
    %v2286 = vld [vmem:[%s3 + $0x200] sm:$0xff]
    %v2287 = vld [vmem:[%s3 + $0x208] sm:$0xff]
    %v2288 = vld [vmem:[%s3 + $0x210] sm:$0xff]
    %v2289 = vld [vmem:[%s3 + $0x218] sm:$0xff]
    %v2290 = vld [vmem:[%s3 + $0x220] sm:$0xff]
    %v2291 = vld [vmem:[%s3 + $0x228] sm:$0xff]
    %v2292 = vld [vmem:[%s3 + $0x230] sm:$0xff]
    %v2293 = vld [vmem:[%s3 + $0x238] sm:$0xff]
    %v2294 = vld [vmem:[%s3 + $0x240] sm:$0xff]
    %v2295 = vld [vmem:[%s3 + $0x248] sm:$0xff]
    %v2296 = vld [vmem:[%s3 + $0x250] sm:$0xff]
    %v2297 = vld [vmem:[%s3 + $0x258] sm:$0xff]
    %v2298 = vld [vmem:[%s3 + $0x260] sm:$0xff]
    %v2299 = vld [vmem:[%s3 + $0x268] sm:$0xff]
    %v2300 = vld [vmem:[%s3 + $0x270] sm:$0xff]
    %v2301 = vld [vmem:[%s3 + $0x278] sm:$0xff]
    %v2302 = vld [vmem:[%s3 + $0x280] sm:$0xff]
    %v2303 = vld [vmem:[%s3 + $0x288] sm:$0xff]
    %v2304 = vld [vmem:[%s3 + $0x290] sm:$0xff]
    %v2305 = vld [vmem:[%s3 + $0x298] sm:$0xff]
    %v2306 = vld [vmem:[%s3 + $0x2a0] sm:$0xff]
    %v2307 = vld [vmem:[%s3 + $0x2a8] sm:$0xff]
    %v2308 = vld [vmem:[%s3 + $0x2b0] sm:$0xff]
    %v2309 = vld [vmem:[%s3 + $0x2b8] sm:$0xff]
    %v2310 = vld [vmem:[%s3 + $0x2c0] sm:$0xff]
    %v2311 = vld [vmem:[%s3 + $0x2c8] sm:$0xff]
    %v2312 = vld [vmem:[%s3 + $0x2d0] sm:$0xff]
    %v2313 = vld [vmem:[%s3 + $0x2d8] sm:$0xff]
    %v2314 = vld [vmem:[%s3 + $0x2e0] sm:$0xff]
    %v2315 = vld [vmem:[%s3 + $0x2e8] sm:$0xff]
    %v2316 = vld [vmem:[%s3 + $0x2f0] sm:$0xff]
    %v2317 = vld [vmem:[%s3 + $0x2f8] sm:$0xff]
    %v2318 = vld [vmem:[%s3 + $0x300] sm:$0xff]
    %v2319 = vld [vmem:[%s3 + $0x308] sm:$0xff]
    %v2320 = vld [vmem:[%s3 + $0x310] sm:$0xff]
    %v2321 = vld [vmem:[%s3 + $0x318] sm:$0xff]
    %v2322 = vld [vmem:[%s3 + $0x320] sm:$0xff]
    %v2323 = vld [vmem:[%s3 + $0x328] sm:$0xff]
    %v2324 = vld [vmem:[%s3 + $0x330] sm:$0xff]
    %v2325 = vld [vmem:[%s3 + $0x338] sm:$0xff]
    %v2326 = vld [vmem:[%s3 + $0x340] sm:$0xff]
    %v2327 = vld [vmem:[%s3 + $0x348] sm:$0xff]
    %v2328 = vld [vmem:[%s3 + $0x350] sm:$0xff]
    %v2329 = vld [vmem:[%s3 + $0x358] sm:$0xff]
    %v2330 = vld [vmem:[%s3 + $0x360] sm:$0xff]
    %v2331 = vld [vmem:[%s3 + $0x368] sm:$0xff]
    %v2332 = vld [vmem:[%s3 + $0x370] sm:$0xff]
    %v2333 = vld [vmem:[%s3 + $0x378] sm:$0xff]
    %v2334 = vld [vmem:[%s3 + $0x380] sm:$0xff]
    %v2335 = vld [vmem:[%s3 + $0x388] sm:$0xff]
    %v2336 = vld [vmem:[%s3 + $0x390] sm:$0xff]
    %v2337 = vld [vmem:[%s3 + $0x398] sm:$0xff]
    %v2338 = vld [vmem:[%s3 + $0x3a0] sm:$0xff]
    %v2339 = vld [vmem:[%s3 + $0x3a8] sm:$0xff]
    %v2340 = vld [vmem:[%s3 + $0x3b0] sm:$0xff]
    %v2341 = vld [vmem:[%s3 + $0x3b8] sm:$0xff]
    %v2342 = vld [vmem:[%s3 + $0x3c0] sm:$0xff]
    %v2343 = vld [vmem:[%s3 + $0x3c8] sm:$0xff]
    %v2344 = vld [vmem:[%s3 + $0x3d0] sm:$0xff]
    %v2345 = vld [vmem:[%s3 + $0x3d8] sm:$0xff]
    %v2346 = vld [vmem:[%s3 + $0x3e0] sm:$0xff]
    %v2347 = vld [vmem:[%s3 + $0x3e8] sm:$0xff]
    %v2348 = vld [vmem:[%s3 + $0x3f0] sm:$0xff]
    %v2349 = vld [vmem:[%s3 + $0x3f8] sm:$0xff]
    %v2350 = vld [vmem:[%s3 + $0x400] sm:$0xff]
    %v2351 = vld [vmem:[%s3 + $0x408] sm:$0xff]
    %v2352 = vld [vmem:[%s3 + $0x410] sm:$0xff]
    %v2353 = vld [vmem:[%s3 + $0x418] sm:$0xff]
    %v2354 = vld [vmem:[%s3 + $0x420] sm:$0xff]
    %v2355 = vld [vmem:[%s3 + $0x428] sm:$0xff]
    %v2356 = vld [vmem:[%s3 + $0x430] sm:$0xff]
    %v2357 = vld [vmem:[%s3 + $0x438] sm:$0xff]
    %v2358 = vld [vmem:[%s3 + $0x440] sm:$0xff]
    %v2359 = vld [vmem:[%s3 + $0x448] sm:$0xff]
    %v2360 = vld [vmem:[%s3 + $0x450] sm:$0xff]
    %v2361 = vld [vmem:[%s3 + $0x458] sm:$0xff]
    %v2362 = vld [vmem:[%s3 + $0x460] sm:$0xff]
    %v2363 = vld [vmem:[%s3 + $0x468] sm:$0xff]
    %v2364 = vld [vmem:[%s3 + $0x470] sm:$0xff]
    %v2365 = vld [vmem:[%s3 + $0x478] sm:$0xff]
    %v2366 = vld [vmem:[%s3 + $0x480] sm:$0xff]
    %v2367 = vld [vmem:[%s3 + $0x488] sm:$0xff]
    %v2368 = vld [vmem:[%s3 + $0x490] sm:$0xff]
    %v2369 = vld [vmem:[%s3 + $0x498] sm:$0xff]
    %v2370 = vld [vmem:[%s3 + $0x4a0] sm:$0xff]
    %v2371 = vld [vmem:[%s3 + $0x4a8] sm:$0xff]
    %v2372 = vld [vmem:[%s3 + $0x4b0] sm:$0xff]
    %v2373 = vld [vmem:[%s3 + $0x4b8] sm:$0xff]
    %v2374 = vld [vmem:[%s3 + $0x4c0] sm:$0xff]
    %v2375 = vld [vmem:[%s3 + $0x4c8] sm:$0xff]
    %v2376 = vld [vmem:[%s3 + $0x4d0] sm:$0xff]
    %v2377 = vld [vmem:[%s3 + $0x4d8] sm:$0xff]
    %v2378 = vld [vmem:[%s3 + $0x4e0] sm:$0xff]
    %v2379 = vld [vmem:[%s3 + $0x4e8] sm:$0xff]
    %v2380 = vld [vmem:[%s3 + $0x4f0] sm:$0xff]
    %v2381 = vld [vmem:[%s3 + $0x4f8] sm:$0xff]
    %v2382 = vld [vmem:[%s3 + $0x500] sm:$0xff]
    %v2383 = vld [vmem:[%s3 + $0x508] sm:$0xff]
    %v2384 = vld [vmem:[%s3 + $0x510] sm:$0xff]
    %v2385 = vld [vmem:[%s3 + $0x518] sm:$0xff]
    %v2386 = vld [vmem:[%s3 + $0x520] sm:$0xff]
    %v2387 = vld [vmem:[%s3 + $0x528] sm:$0xff]
    %v2388 = vld [vmem:[%s3 + $0x530] sm:$0xff]
    %v2389 = vld [vmem:[%s3 + $0x538] sm:$0xff]
    %v2390 = vld [vmem:[%s3 + $0x540] sm:$0xff]
    %v2391 = vld [vmem:[%s3 + $0x548] sm:$0xff]
    %v2392 = vld [vmem:[%s3 + $0x550] sm:$0xff]
    %v2393 = vld [vmem:[%s3 + $0x558] sm:$0xff]
    %v2394 = vld [vmem:[%s3 + $0x560] sm:$0xff]
    %v2395 = vld [vmem:[%s3 + $0x568] sm:$0xff]
    %v2396 = vld [vmem:[%s3 + $0x570] sm:$0xff]
    %v2397 = vld [vmem:[%s3 + $0x578] sm:$0xff]
    %v2398 = vld [vmem:[%s3 + $0x580] sm:$0xff]
    %v2399 = vld [vmem:[%s3 + $0x588] sm:$0xff]
    %v2400 = vld [vmem:[%s3 + $0x590] sm:$0xff]
    %v2401 = vld [vmem:[%s3 + $0x598] sm:$0xff]
    %v2402 = vld [vmem:[%s3 + $0x5a0] sm:$0xff]
    %v2403 = vld [vmem:[%s3 + $0x5a8] sm:$0xff]
    %v2404 = vld [vmem:[%s3 + $0x5b0] sm:$0xff]
    %v2405 = vld [vmem:[%s3 + $0x5b8] sm:$0xff]
    %v2406 = vld [vmem:[%s3 + $0x5c0] sm:$0xff]
    %v2407 = vld [vmem:[%s3 + $0x5c8] sm:$0xff]
    %v2408 = vld [vmem:[%s3 + $0x5d0] sm:$0xff]
    %v2409 = vld [vmem:[%s3 + $0x5d8] sm:$0xff]
    %v2410 = vld [vmem:[%s3 + $0x5e0] sm:$0xff]
    %v2411 = vld [vmem:[%s3 + $0x5e8] sm:$0xff]
    %v2412 = vld [vmem:[%s3 + $0x5f0] sm:$0xff]
    %v2413 = vld [vmem:[%s3 + $0x5f8] sm:$0xff]
    %v2414 = vld [vmem:[%s3 + $0x600] sm:$0xff]
    %v2415 = vld [vmem:[%s3 + $0x608] sm:$0xff]
    %v2416 = vld [vmem:[%s3 + $0x610] sm:$0xff]
    %v2417 = vld [vmem:[%s3 + $0x618] sm:$0xff]
    %v2418 = vld [vmem:[%s3 + $0x620] sm:$0xff]
    %v2419 = vld [vmem:[%s3 + $0x628] sm:$0xff]
    %v2420 = vld [vmem:[%s3 + $0x630] sm:$0xff]
    %v2421 = vld [vmem:[%s3 + $0x638] sm:$0xff]
    %v2422 = vld [vmem:[%s3 + $0x640] sm:$0xff]
    %v2423 = vld [vmem:[%s3 + $0x648] sm:$0xff]
    %v2424 = vld [vmem:[%s3 + $0x650] sm:$0xff]
    %v2425 = vld [vmem:[%s3 + $0x658] sm:$0xff]
    %v2426 = vld [vmem:[%s3 + $0x660] sm:$0xff]
    %v2427 = vld [vmem:[%s3 + $0x668] sm:$0xff]
    %v2428 = vld [vmem:[%s3 + $0x670] sm:$0xff]
    %v2429 = vld [vmem:[%s3 + $0x678] sm:$0xff]
    %v2430 = vld [vmem:[%s3 + $0x680] sm:$0xff]
    %v2431 = vld [vmem:[%s3 + $0x688] sm:$0xff]
    %v2432 = vld [vmem:[%s3 + $0x690] sm:$0xff]
    %v2433 = vld [vmem:[%s3 + $0x698] sm:$0xff]
    %v2434 = vld [vmem:[%s3 + $0x6a0] sm:$0xff]
    %v2435 = vld [vmem:[%s3 + $0x6a8] sm:$0xff]
    %v2436 = vld [vmem:[%s3 + $0x6b0] sm:$0xff]
    %v2437 = vld [vmem:[%s3 + $0x6b8] sm:$0xff]
    %v2438 = vld [vmem:[%s3 + $0x6c0] sm:$0xff]
    %v2439 = vld [vmem:[%s3 + $0x6c8] sm:$0xff]
    %v2440 = vld [vmem:[%s3 + $0x6d0] sm:$0xff]
    %v2441 = vld [vmem:[%s3 + $0x6d8] sm:$0xff]
    %v2442 = vld [vmem:[%s3 + $0x6e0] sm:$0xff]
    %v2443 = vld [vmem:[%s3 + $0x6e8] sm:$0xff]
    %v2444 = vld [vmem:[%s3 + $0x6f0] sm:$0xff]
    %v2445 = vld [vmem:[%s3 + $0x6f8] sm:$0xff]
    %v2446 = vld [vmem:[%s3 + $0x700] sm:$0xff]
    %v2447 = vld [vmem:[%s3 + $0x708] sm:$0xff]
    %v2448 = vld [vmem:[%s3 + $0x710] sm:$0xff]
    %v2449 = vld [vmem:[%s3 + $0x718] sm:$0xff]
    %v2450 = vld [vmem:[%s3 + $0x720] sm:$0xff]
    %v2451 = vld [vmem:[%s3 + $0x728] sm:$0xff]
    %v2452 = vld [vmem:[%s3 + $0x730] sm:$0xff]
    %v2453 = vld [vmem:[%s3 + $0x738] sm:$0xff]
    %v2454 = vld [vmem:[%s3 + $0x740] sm:$0xff]
    %v2455 = vld [vmem:[%s3 + $0x748] sm:$0xff]
    %v2456 = vld [vmem:[%s3 + $0x750] sm:$0xff]
    %v2457 = vld [vmem:[%s3 + $0x758] sm:$0xff]
    %v2458 = vld [vmem:[%s3 + $0x760] sm:$0xff]
    %v2459 = vld [vmem:[%s3 + $0x768] sm:$0xff]
    %v2460 = vld [vmem:[%s3 + $0x770] sm:$0xff]
    %v2461 = vld [vmem:[%s3 + $0x778] sm:$0xff]
    %v2462 = vld [vmem:[%s3 + $0x780] sm:$0xff]
    %v2463 = vld [vmem:[%s3 + $0x788] sm:$0xff]
    %v2464 = vld [vmem:[%s3 + $0x790] sm:$0xff]
    %v2465 = vld [vmem:[%s3 + $0x798] sm:$0xff]
    %v2466 = vld [vmem:[%s3 + $0x7a0] sm:$0xff]
    %v2467 = vld [vmem:[%s3 + $0x7a8] sm:$0xff]
    %v2468 = vld [vmem:[%s3 + $0x7b0] sm:$0xff]
    %v2469 = vld [vmem:[%s3 + $0x7b8] sm:$0xff]
    %v2470 = vld [vmem:[%s3 + $0x7c0] sm:$0xff]
    %v2471 = vld [vmem:[%s3 + $0x7c8] sm:$0xff]
    %v2472 = vld [vmem:[%s3 + $0x7d0] sm:$0xff]
    %v2473 = vld [vmem:[%s3 + $0x7d8] sm:$0xff]
    %v2474 = vld [vmem:[%s3 + $0x7e0] sm:$0xff]
    %v2475 = vld [vmem:[%s3 + $0x7e8] sm:$0xff]
    %v2476 = vld [vmem:[%s3 + $0x7f0] sm:$0xff]
    %v2477 = vld [vmem:[%s3 + $0x7f8] sm:$0xff]
    %v2478 = vld [vmem:[%s3 + $0x800] sm:$0xff]
    %v2479 = vld [vmem:[%s3 + $0x808] sm:$0xff]
    %v2480 = vld [vmem:[%s3 + $0x810] sm:$0xff]
    %v2481 = vld [vmem:[%s3 + $0x818] sm:$0xff]
    %v2482 = vld [vmem:[%s3 + $0x820] sm:$0xff]
    %v2483 = vld [vmem:[%s3 + $0x828] sm:$0xff]
    %v2484 = vld [vmem:[%s3 + $0x830] sm:$0xff]
    %v2485 = vld [vmem:[%s3 + $0x838] sm:$0xff]
    %v2486 = vld [vmem:[%s3 + $0x840] sm:$0xff]
    %v2487 = vld [vmem:[%s3 + $0x848] sm:$0xff]
    %v2488 = vld [vmem:[%s3 + $0x850] sm:$0xff]
    %v2489 = vld [vmem:[%s3 + $0x858] sm:$0xff]
    %v2490 = vld [vmem:[%s3 + $0x860] sm:$0xff]
    %v2491 = vld [vmem:[%s3 + $0x868] sm:$0xff]
    %v2492 = vld [vmem:[%s3 + $0x870] sm:$0xff]
    %v2493 = vld [vmem:[%s3 + $0x878] sm:$0xff]
    %v2494 = vld [vmem:[%s3 + $0x880] sm:$0xff]
    %v2495 = vld [vmem:[%s3 + $0x888] sm:$0xff]
    %v2496 = vld [vmem:[%s3 + $0x890] sm:$0xff]
    %v2497 = vld [vmem:[%s3 + $0x898] sm:$0xff]
    %v2498 = vld [vmem:[%s3 + $0x8a0] sm:$0xff]
    %v2499 = vld [vmem:[%s3 + $0x8a8] sm:$0xff]
    %v2500 = vld [vmem:[%s3 + $0x8b0] sm:$0xff]
    %v2501 = vld [vmem:[%s3 + $0x8b8] sm:$0xff]
    %v2502 = vld [vmem:[%s3 + $0x8c0] sm:$0xff]
    %v2503 = vld [vmem:[%s3 + $0x8c8] sm:$0xff]
    %v2504 = vld [vmem:[%s3 + $0x8d0] sm:$0xff]
    %v2505 = vld [vmem:[%s3 + $0x8d8] sm:$0xff]
    %v2506 = vld [vmem:[%s3 + $0x8e0] sm:$0xff]
    %v2507 = vld [vmem:[%s3 + $0x8e8] sm:$0xff]
    %v2508 = vld [vmem:[%s3 + $0x8f0] sm:$0xff]
    %v2509 = vld [vmem:[%s3 + $0x8f8] sm:$0xff]
    %v2510 = vld [vmem:[%s3 + $0x900] sm:$0xff]
    %v2511 = vld [vmem:[%s3 + $0x908] sm:$0xff]
    %v2512 = vld [vmem:[%s3 + $0x910] sm:$0xff]
    %v2513 = vld [vmem:[%s3 + $0x918] sm:$0xff]
    %v2514 = vld [vmem:[%s3 + $0x920] sm:$0xff]
    %v2515 = vld [vmem:[%s3 + $0x928] sm:$0xff]
    %v2516 = vld [vmem:[%s3 + $0x930] sm:$0xff]
    %v2517 = vld [vmem:[%s3 + $0x938] sm:$0xff]
    %v2518 = vld [vmem:[%s3 + $0x940] sm:$0xff]
    %v2519 = vld [vmem:[%s3 + $0x948] sm:$0xff]
    %v2520 = vld [vmem:[%s3 + $0x950] sm:$0xff]
    %v2521 = vld [vmem:[%s3 + $0x958] sm:$0xff]
    %v2522 = vld [vmem:[%s3 + $0x960] sm:$0xff]
    %v2523 = vld [vmem:[%s3 + $0x968] sm:$0xff]
    %v2524 = vld [vmem:[%s3 + $0x970] sm:$0xff]
    %v2525 = vld [vmem:[%s3 + $0x978] sm:$0xff]
    %v2526 = vld [vmem:[%s3 + $0x980] sm:$0xff]
    %v2527 = vld [vmem:[%s3 + $0x988] sm:$0xff]
    %v2528 = vld [vmem:[%s3 + $0x990] sm:$0xff]
    %v2529 = vld [vmem:[%s3 + $0x998] sm:$0xff]
    %v2530 = vld [vmem:[%s3 + $0x9a0] sm:$0xff]
    %v2531 = vld [vmem:[%s3 + $0x9a8] sm:$0xff]
    %v2532 = vld [vmem:[%s3 + $0x9b0] sm:$0xff]
    %v2533 = vld [vmem:[%s3 + $0x9b8] sm:$0xff]
    %v2534 = vld [vmem:[%s3 + $0x9c0] sm:$0xff]
    %v2535 = vld [vmem:[%s3 + $0x9c8] sm:$0xff]
    %v2536 = vld [vmem:[%s3 + $0x9d0] sm:$0xff]
    %v2537 = vld [vmem:[%s3 + $0x9d8] sm:$0xff]
    %v2538 = vld [vmem:[%s3 + $0x9e0] sm:$0xff]
    %v2539 = vld [vmem:[%s3 + $0x9e8] sm:$0xff]
    %v2540 = vld [vmem:[%s3 + $0x9f0] sm:$0xff]
    %v2541 = vld [vmem:[%s3 + $0x9f8] sm:$0xff]
    %v2542 = vld [vmem:[%s3 + $0xa00] sm:$0xff]
    %v2543 = vld [vmem:[%s3 + $0xa08] sm:$0xff]
    %v2544 = vld [vmem:[%s3 + $0xa10] sm:$0xff]
    %v2545 = vld [vmem:[%s3 + $0xa18] sm:$0xff]
    %v2546 = vld [vmem:[%s3 + $0xa20] sm:$0xff]
    %v2547 = vld [vmem:[%s3 + $0xa28] sm:$0xff]
    %v2548 = vld [vmem:[%s3 + $0xa30] sm:$0xff]
    %v2549 = vld [vmem:[%s3 + $0xa38] sm:$0xff]
    %v2550 = vld [vmem:[%s3 + $0xa40] sm:$0xff]
    %v2551 = vld [vmem:[%s3 + $0xa48] sm:$0xff]
    %v2552 = vld [vmem:[%s3 + $0xa50] sm:$0xff]
    %v2553 = vld [vmem:[%s3 + $0xa58] sm:$0xff]
    %v2554 = vld [vmem:[%s3 + $0xa60] sm:$0xff]
    %v2555 = vld [vmem:[%s3 + $0xa68] sm:$0xff]
    %v2556 = vld [vmem:[%s3 + $0xa70] sm:$0xff]
    %v2557 = vld [vmem:[%s3 + $0xa78] sm:$0xff]
    %v2558 = vld [vmem:[%s3 + $0xa80] sm:$0xff]
    %v2559 = vld [vmem:[%s3 + $0xa88] sm:$0xff]
    %v2560 = vld [vmem:[%s3 + $0xa90] sm:$0xff]
    %v2561 = vld [vmem:[%s3 + $0xa98] sm:$0xff]
    %v2562 = vld [vmem:[%s3 + $0xaa0] sm:$0xff]
    %v2563 = vld [vmem:[%s3 + $0xaa8] sm:$0xff]
    %v2564 = vld [vmem:[%s3 + $0xab0] sm:$0xff]
    %v2565 = vld [vmem:[%s3 + $0xab8] sm:$0xff]
    %v2566 = vld [vmem:[%s3 + $0xac0] sm:$0xff]
    %v2567 = vld [vmem:[%s3 + $0xac8] sm:$0xff]
    %v2568 = vld [vmem:[%s3 + $0xad0] sm:$0xff]
    %v2569 = vld [vmem:[%s3 + $0xad8] sm:$0xff]
    %v2570 = vld [vmem:[%s3 + $0xae0] sm:$0xff]
    %v2571 = vld [vmem:[%s3 + $0xae8] sm:$0xff]
    %v2572 = vld [vmem:[%s3 + $0xaf0] sm:$0xff]
    %v2573 = vld [vmem:[%s3 + $0xaf8] sm:$0xff]
    %v2574 = vld [vmem:[%s3 + $0xb00] sm:$0xff]
    %v2575 = vld [vmem:[%s3 + $0xb08] sm:$0xff]
    %v2576 = vld [vmem:[%s3 + $0xb10] sm:$0xff]
    %v2577 = vld [vmem:[%s3 + $0xb18] sm:$0xff]
    %v2578 = vld [vmem:[%s3 + $0xb20] sm:$0xff]
    %v2579 = vld [vmem:[%s3 + $0xb28] sm:$0xff]
    %v2580 = vld [vmem:[%s3 + $0xb30] sm:$0xff]
    %v2581 = vld [vmem:[%s3 + $0xb38] sm:$0xff]
    %v2582 = vld [vmem:[%s3 + $0xb40] sm:$0xff]
    %v2583 = vld [vmem:[%s3 + $0xb48] sm:$0xff]
    %v2584 = vld [vmem:[%s3 + $0xb50] sm:$0xff]
    %v2585 = vld [vmem:[%s3 + $0xb58] sm:$0xff]
    %v2586 = vld [vmem:[%s3 + $0xb60] sm:$0xff]
    %v2587 = vld [vmem:[%s3 + $0xb68] sm:$0xff]
    %v2588 = vld [vmem:[%s3 + $0xb70] sm:$0xff]
    %v2589 = vld [vmem:[%s3 + $0xb78] sm:$0xff]
    %v2590 = vld [vmem:[%s3 + $0xb80] sm:$0xff]
    %v2591 = vld [vmem:[%s3 + $0xb88] sm:$0xff]
    %v2592 = vld [vmem:[%s3 + $0xb90] sm:$0xff]
    %v2593 = vld [vmem:[%s3 + $0xb98] sm:$0xff]
    %v2594 = vld [vmem:[%s3 + $0xba0] sm:$0xff]
    %v2595 = vld [vmem:[%s3 + $0xba8] sm:$0xff]
    %v2596 = vld [vmem:[%s3 + $0xbb0] sm:$0xff]
    %v2597 = vld [vmem:[%s3 + $0xbb8] sm:$0xff]
    %v2598 = vld [vmem:[%s3 + $0xbc0] sm:$0xff]
    %v2599 = vld [vmem:[%s3 + $0xbc8] sm:$0xff]
    %v2600 = vld [vmem:[%s3 + $0xbd0] sm:$0xff]
    %v2601 = vld [vmem:[%s3 + $0xbd8] sm:$0xff]
    %v2602 = vld [vmem:[%s3 + $0xbe0] sm:$0xff]
    %v2603 = vld [vmem:[%s3 + $0xbe8] sm:$0xff]
    %v2604 = vld [vmem:[%s3 + $0xbf0] sm:$0xff]
    %v2605 = vld [vmem:[%s3 + $0xbf8] sm:$0xff]
    %v2606 = vld [vmem:[%s4] sm:$0xff]
    %v2608 = vlaneseq
    %v2609 = vshrl.u32 %v2608, 7
    %v2610 = vsub.s32 0, %v2609
    %v2611 = vrot.slane %v2606, %v2610
    %v2612 = vlaneseq
    %v2613 = vshrl.u32 %v2612, 7
    %v2614 = vsub.s32 1, %v2613
    %v2615 = vrot.slane %v2606, %v2614
    %v2616 = vlaneseq
    %v2617 = vshrl.u32 %v2616, 7
    %v2618 = vsub.s32 2, %v2617
    %v2619 = vrot.slane %v2606, %v2618
    %v2620 = vlaneseq
    %v2621 = vshrl.u32 %v2620, 7
    %v2622 = vsub.s32 3, %v2621
    %v2623 = vrot.slane %v2606, %v2622
    %v2624 = vlaneseq
    %v2625 = vshrl.u32 %v2624, 7
    %v2626 = vsub.s32 4, %v2625
    %v2627 = vrot.slane %v2606, %v2626
    %v2628 = vlaneseq
    %v2629 = vshrl.u32 %v2628, 7
    %v2630 = vsub.s32 5, %v2629
    %v2631 = vrot.slane %v2606, %v2630
    %v2632 = vlaneseq
    %v2633 = vshrl.u32 %v2632, 7
    %v2634 = vsub.s32 6, %v2633
    %v2635 = vrot.slane %v2606, %v2634
    %v2636 = vlaneseq
    %v2637 = vshrl.u32 %v2636, 7
    %v2638 = vsub.s32 7, %v2637
    %v2639 = vrot.slane %v2606, %v2638
    %v3032 = vunpack.c.l.b16 %v2222
    %v3033 = vunpack.c.h.b16 %v2222
    %v3034 = vunpack.c.l.b16 %v2223
    %v3035 = vunpack.c.h.b16 %v2223
    %v3036 = vunpack.c.l.b16 %v2224
    %v3037 = vunpack.c.h.b16 %v2224
    %v3038 = vunpack.c.l.b16 %v2225
    %v3039 = vunpack.c.h.b16 %v2225
    %v3040 = vunpack.c.l.b16 %v2226
    %v3041 = vunpack.c.h.b16 %v2226
    %v3042 = vunpack.c.l.b16 %v2227
    %v3043 = vunpack.c.h.b16 %v2227
    %v3044 = vunpack.c.l.b16 %v2228
    %v3045 = vunpack.c.h.b16 %v2228
    %v3046 = vunpack.c.l.b16 %v2229
    %v3047 = vunpack.c.h.b16 %v2229
    %v3048 = vunpack.c.l.b16 %v2230
    %v3049 = vunpack.c.h.b16 %v2230
    %v3050 = vunpack.c.l.b16 %v2231
    %v3051 = vunpack.c.h.b16 %v2231
    %v3052 = vunpack.c.l.b16 %v2232
    %v3053 = vunpack.c.h.b16 %v2232
    %v3054 = vunpack.c.l.b16 %v2233
    %v3055 = vunpack.c.h.b16 %v2233
    %v3056 = vunpack.c.l.b16 %v2234
    %v3057 = vunpack.c.h.b16 %v2234
    %v3058 = vunpack.c.l.b16 %v2235
    %v3059 = vunpack.c.h.b16 %v2235
    %v3060 = vunpack.c.l.b16 %v2236
    %v3061 = vunpack.c.h.b16 %v2236
    %v3062 = vunpack.c.l.b16 %v2237
    %v3063 = vunpack.c.h.b16 %v2237
    %v3064 = vunpack.c.l.b16 %v2238
    %v3065 = vunpack.c.h.b16 %v2238
    %v3066 = vunpack.c.l.b16 %v2239
    %v3067 = vunpack.c.h.b16 %v2239
    %v3068 = vunpack.c.l.b16 %v2240
    %v3069 = vunpack.c.h.b16 %v2240
    %v3070 = vunpack.c.l.b16 %v2241
    %v3071 = vunpack.c.h.b16 %v2241
    %v3072 = vunpack.c.l.b16 %v2242
    %v3073 = vunpack.c.h.b16 %v2242
    %v3074 = vunpack.c.l.b16 %v2243
    %v3075 = vunpack.c.h.b16 %v2243
    %v3076 = vunpack.c.l.b16 %v2244
    %v3077 = vunpack.c.h.b16 %v2244
    %v3078 = vunpack.c.l.b16 %v2245
    %v3079 = vunpack.c.h.b16 %v2245
    %v3080 = vunpack.c.l.b16 %v2246
    %v3081 = vunpack.c.h.b16 %v2246
    %v3082 = vunpack.c.l.b16 %v2247
    %v3083 = vunpack.c.h.b16 %v2247
    %v3084 = vunpack.c.l.b16 %v2248
    %v3085 = vunpack.c.h.b16 %v2248
    %v3086 = vunpack.c.l.b16 %v2249
    %v3087 = vunpack.c.h.b16 %v2249
    %v3088 = vunpack.c.l.b16 %v2250
    %v3089 = vunpack.c.h.b16 %v2250
    %v3090 = vunpack.c.l.b16 %v2251
    %v3091 = vunpack.c.h.b16 %v2251
    %v3092 = vunpack.c.l.b16 %v2252
    %v3093 = vunpack.c.h.b16 %v2252
    %v3094 = vunpack.c.l.b16 %v2253
    %v3095 = vunpack.c.h.b16 %v2253
    %v3096 = vunpack.c.l.b16 %v2254
    %v3097 = vunpack.c.h.b16 %v2254
    %v3098 = vunpack.c.l.b16 %v2255
    %v3099 = vunpack.c.h.b16 %v2255
    %v3100 = vunpack.c.l.b16 %v2256
    %v3101 = vunpack.c.h.b16 %v2256
    %v3102 = vunpack.c.l.b16 %v2257
    %v3103 = vunpack.c.h.b16 %v2257
    %v3104 = vunpack.c.l.b16 %v2258
    %v3105 = vunpack.c.h.b16 %v2258
    %v3106 = vunpack.c.l.b16 %v2259
    %v3107 = vunpack.c.h.b16 %v2259
    %v3108 = vunpack.c.l.b16 %v2260
    %v3109 = vunpack.c.h.b16 %v2260
    %v3110 = vunpack.c.l.b16 %v2261
    %v3111 = vunpack.c.h.b16 %v2261
    %v3112 = vunpack.c.l.b16 %v2262
    %v3113 = vunpack.c.h.b16 %v2262
    %v3114 = vunpack.c.l.b16 %v2263
    %v3115 = vunpack.c.h.b16 %v2263
    %v3116 = vunpack.c.l.b16 %v2264
    %v3117 = vunpack.c.h.b16 %v2264
    %v3118 = vunpack.c.l.b16 %v2265
    %v3119 = vunpack.c.h.b16 %v2265
    %v3120 = vunpack.c.l.b16 %v2266
    %v3121 = vunpack.c.h.b16 %v2266
    %v3122 = vunpack.c.l.b16 %v2267
    %v3123 = vunpack.c.h.b16 %v2267
    %v3124 = vunpack.c.l.b16 %v2268
    %v3125 = vunpack.c.h.b16 %v2268
    %v3126 = vunpack.c.l.b16 %v2269
    %v3127 = vunpack.c.h.b16 %v2269
    %v3128 = vunpack.c.l.b16 %v2270
    %v3129 = vunpack.c.h.b16 %v2270
    %v3130 = vunpack.c.l.b16 %v2271
    %v3131 = vunpack.c.h.b16 %v2271
    %v3132 = vunpack.c.l.b16 %v2272
    %v3133 = vunpack.c.h.b16 %v2272
    %v3134 = vunpack.c.l.b16 %v2273
    %v3135 = vunpack.c.h.b16 %v2273
    %v3136 = vunpack.c.l.b16 %v2274
    %v3137 = vunpack.c.h.b16 %v2274
    %v3138 = vunpack.c.l.b16 %v2275
    %v3139 = vunpack.c.h.b16 %v2275
    %v3140 = vunpack.c.l.b16 %v2276
    %v3141 = vunpack.c.h.b16 %v2276
    %v3142 = vunpack.c.l.b16 %v2277
    %v3143 = vunpack.c.h.b16 %v2277
    %v3144 = vunpack.c.l.b16 %v2278
    %v3145 = vunpack.c.h.b16 %v2278
    %v3146 = vunpack.c.l.b16 %v2279
    %v3147 = vunpack.c.h.b16 %v2279
    %v3148 = vunpack.c.l.b16 %v2280
    %v3149 = vunpack.c.h.b16 %v2280
    %v3150 = vunpack.c.l.b16 %v2281
    %v3151 = vunpack.c.h.b16 %v2281
    %v3152 = vunpack.c.l.b16 %v2282
    %v3153 = vunpack.c.h.b16 %v2282
    %v3154 = vunpack.c.l.b16 %v2283
    %v3155 = vunpack.c.h.b16 %v2283
    %v3156 = vunpack.c.l.b16 %v2284
    %v3157 = vunpack.c.h.b16 %v2284
    %v3158 = vunpack.c.l.b16 %v2285
    %v3159 = vunpack.c.h.b16 %v2285
    %v3160 = vunpack.c.l.b16 %v2286
    %v3161 = vunpack.c.h.b16 %v2286
    %v3162 = vunpack.c.l.b16 %v2287
    %v3163 = vunpack.c.h.b16 %v2287
    %v3164 = vunpack.c.l.b16 %v2288
    %v3165 = vunpack.c.h.b16 %v2288
    %v3166 = vunpack.c.l.b16 %v2289
    %v3167 = vunpack.c.h.b16 %v2289
    %v3168 = vunpack.c.l.b16 %v2290
    %v3169 = vunpack.c.h.b16 %v2290
    %v3170 = vunpack.c.l.b16 %v2291
    %v3171 = vunpack.c.h.b16 %v2291
    %v3172 = vunpack.c.l.b16 %v2292
    %v3173 = vunpack.c.h.b16 %v2292
    %v3174 = vunpack.c.l.b16 %v2293
    %v3175 = vunpack.c.h.b16 %v2293
    %v3176 = vunpack.c.l.b16 %v2294
    %v3177 = vunpack.c.h.b16 %v2294
    %v3178 = vunpack.c.l.b16 %v2295
    %v3179 = vunpack.c.h.b16 %v2295
    %v3180 = vunpack.c.l.b16 %v2296
    %v3181 = vunpack.c.h.b16 %v2296
    %v3182 = vunpack.c.l.b16 %v2297
    %v3183 = vunpack.c.h.b16 %v2297
    %v3184 = vunpack.c.l.b16 %v2298
    %v3185 = vunpack.c.h.b16 %v2298
    %v3186 = vunpack.c.l.b16 %v2299
    %v3187 = vunpack.c.h.b16 %v2299
    %v3188 = vunpack.c.l.b16 %v2300
    %v3189 = vunpack.c.h.b16 %v2300
    %v3190 = vunpack.c.l.b16 %v2301
    %v3191 = vunpack.c.h.b16 %v2301
    %v3192 = vunpack.c.l.b16 %v2302
    %v3193 = vunpack.c.h.b16 %v2302
    %v3194 = vunpack.c.l.b16 %v2303
    %v3195 = vunpack.c.h.b16 %v2303
    %v3196 = vunpack.c.l.b16 %v2304
    %v3197 = vunpack.c.h.b16 %v2304
    %v3198 = vunpack.c.l.b16 %v2305
    %v3199 = vunpack.c.h.b16 %v2305
    %v3200 = vunpack.c.l.b16 %v2306
    %v3201 = vunpack.c.h.b16 %v2306
    %v3202 = vunpack.c.l.b16 %v2307
    %v3203 = vunpack.c.h.b16 %v2307
    %v3204 = vunpack.c.l.b16 %v2308
    %v3205 = vunpack.c.h.b16 %v2308
    %v3206 = vunpack.c.l.b16 %v2309
    %v3207 = vunpack.c.h.b16 %v2309
    %v3208 = vunpack.c.l.b16 %v2310
    %v3209 = vunpack.c.h.b16 %v2310
    %v3210 = vunpack.c.l.b16 %v2311
    %v3211 = vunpack.c.h.b16 %v2311
    %v3212 = vunpack.c.l.b16 %v2312
    %v3213 = vunpack.c.h.b16 %v2312
    %v3214 = vunpack.c.l.b16 %v2313
    %v3215 = vunpack.c.h.b16 %v2313
    %v3216 = vunpack.c.l.b16 %v2314
    %v3217 = vunpack.c.h.b16 %v2314
    %v3218 = vunpack.c.l.b16 %v2315
    %v3219 = vunpack.c.h.b16 %v2315
    %v3220 = vunpack.c.l.b16 %v2316
    %v3221 = vunpack.c.h.b16 %v2316
    %v3222 = vunpack.c.l.b16 %v2317
    %v3223 = vunpack.c.h.b16 %v2317
    %v3224 = vunpack.c.l.b16 %v2318
    %v3225 = vunpack.c.h.b16 %v2318
    %v3226 = vunpack.c.l.b16 %v2319
    %v3227 = vunpack.c.h.b16 %v2319
    %v3228 = vunpack.c.l.b16 %v2320
    %v3229 = vunpack.c.h.b16 %v2320
    %v3230 = vunpack.c.l.b16 %v2321
    %v3231 = vunpack.c.h.b16 %v2321
    %v3232 = vunpack.c.l.b16 %v2322
    %v3233 = vunpack.c.h.b16 %v2322
    %v3234 = vunpack.c.l.b16 %v2323
    %v3235 = vunpack.c.h.b16 %v2323
    %v3236 = vunpack.c.l.b16 %v2324
    %v3237 = vunpack.c.h.b16 %v2324
    %v3238 = vunpack.c.l.b16 %v2325
    %v3239 = vunpack.c.h.b16 %v2325
    %v3240 = vunpack.c.l.b16 %v2326
    %v3241 = vunpack.c.h.b16 %v2326
    %v3242 = vunpack.c.l.b16 %v2327
    %v3243 = vunpack.c.h.b16 %v2327
    %v3244 = vunpack.c.l.b16 %v2328
    %v3245 = vunpack.c.h.b16 %v2328
    %v3246 = vunpack.c.l.b16 %v2329
    %v3247 = vunpack.c.h.b16 %v2329
    %v3248 = vunpack.c.l.b16 %v2330
    %v3249 = vunpack.c.h.b16 %v2330
    %v3250 = vunpack.c.l.b16 %v2331
    %v3251 = vunpack.c.h.b16 %v2331
    %v3252 = vunpack.c.l.b16 %v2332
    %v3253 = vunpack.c.h.b16 %v2332
    %v3254 = vunpack.c.l.b16 %v2333
    %v3255 = vunpack.c.h.b16 %v2333
    %v3256 = vunpack.c.l.b16 %v2334
    %v3257 = vunpack.c.h.b16 %v2334
    %v3258 = vunpack.c.l.b16 %v2335
    %v3259 = vunpack.c.h.b16 %v2335
    %v3260 = vunpack.c.l.b16 %v2336
    %v3261 = vunpack.c.h.b16 %v2336
    %v3262 = vunpack.c.l.b16 %v2337
    %v3263 = vunpack.c.h.b16 %v2337
    %v3264 = vunpack.c.l.b16 %v2338
    %v3265 = vunpack.c.h.b16 %v2338
    %v3266 = vunpack.c.l.b16 %v2339
    %v3267 = vunpack.c.h.b16 %v2339
    %v3268 = vunpack.c.l.b16 %v2340
    %v3269 = vunpack.c.h.b16 %v2340
    %v3270 = vunpack.c.l.b16 %v2341
    %v3271 = vunpack.c.h.b16 %v2341
    %v3272 = vunpack.c.l.b16 %v2342
    %v3273 = vunpack.c.h.b16 %v2342
    %v3274 = vunpack.c.l.b16 %v2343
    %v3275 = vunpack.c.h.b16 %v2343
    %v3276 = vunpack.c.l.b16 %v2344
    %v3277 = vunpack.c.h.b16 %v2344
    %v3278 = vunpack.c.l.b16 %v2345
    %v3279 = vunpack.c.h.b16 %v2345
    %v3280 = vunpack.c.l.b16 %v2346
    %v3281 = vunpack.c.h.b16 %v2346
    %v3282 = vunpack.c.l.b16 %v2347
    %v3283 = vunpack.c.h.b16 %v2347
    %v3284 = vunpack.c.l.b16 %v2348
    %v3285 = vunpack.c.h.b16 %v2348
    %v3286 = vunpack.c.l.b16 %v2349
    %v3287 = vunpack.c.h.b16 %v2349
    %v3288 = vunpack.c.l.b16 %v2350
    %v3289 = vunpack.c.h.b16 %v2350
    %v3290 = vunpack.c.l.b16 %v2351
    %v3291 = vunpack.c.h.b16 %v2351
    %v3292 = vunpack.c.l.b16 %v2352
    %v3293 = vunpack.c.h.b16 %v2352
    %v3294 = vunpack.c.l.b16 %v2353
    %v3295 = vunpack.c.h.b16 %v2353
    %v3296 = vunpack.c.l.b16 %v2354
    %v3297 = vunpack.c.h.b16 %v2354
    %v3298 = vunpack.c.l.b16 %v2355
    %v3299 = vunpack.c.h.b16 %v2355
    %v3300 = vunpack.c.l.b16 %v2356
    %v3301 = vunpack.c.h.b16 %v2356
    %v3302 = vunpack.c.l.b16 %v2357
    %v3303 = vunpack.c.h.b16 %v2357
    %v3304 = vunpack.c.l.b16 %v2358
    %v3305 = vunpack.c.h.b16 %v2358
    %v3306 = vunpack.c.l.b16 %v2359
    %v3307 = vunpack.c.h.b16 %v2359
    %v3308 = vunpack.c.l.b16 %v2360
    %v3309 = vunpack.c.h.b16 %v2360
    %v3310 = vunpack.c.l.b16 %v2361
    %v3311 = vunpack.c.h.b16 %v2361
    %v3312 = vunpack.c.l.b16 %v2362
    %v3313 = vunpack.c.h.b16 %v2362
    %v3314 = vunpack.c.l.b16 %v2363
    %v3315 = vunpack.c.h.b16 %v2363
    %v3316 = vunpack.c.l.b16 %v2364
    %v3317 = vunpack.c.h.b16 %v2364
    %v3318 = vunpack.c.l.b16 %v2365
    %v3319 = vunpack.c.h.b16 %v2365
    %v3320 = vunpack.c.l.b16 %v2366
    %v3321 = vunpack.c.h.b16 %v2366
    %v3322 = vunpack.c.l.b16 %v2367
    %v3323 = vunpack.c.h.b16 %v2367
    %v3324 = vunpack.c.l.b16 %v2368
    %v3325 = vunpack.c.h.b16 %v2368
    %v3326 = vunpack.c.l.b16 %v2369
    %v3327 = vunpack.c.h.b16 %v2369
    %v3328 = vunpack.c.l.b16 %v2370
    %v3329 = vunpack.c.h.b16 %v2370
    %v3330 = vunpack.c.l.b16 %v2371
    %v3331 = vunpack.c.h.b16 %v2371
    %v3332 = vunpack.c.l.b16 %v2372
    %v3333 = vunpack.c.h.b16 %v2372
    %v3334 = vunpack.c.l.b16 %v2373
    %v3335 = vunpack.c.h.b16 %v2373
    %v3336 = vunpack.c.l.b16 %v2374
    %v3337 = vunpack.c.h.b16 %v2374
    %v3338 = vunpack.c.l.b16 %v2375
    %v3339 = vunpack.c.h.b16 %v2375
    %v3340 = vunpack.c.l.b16 %v2376
    %v3341 = vunpack.c.h.b16 %v2376
    %v3342 = vunpack.c.l.b16 %v2377
    %v3343 = vunpack.c.h.b16 %v2377
    %v3344 = vunpack.c.l.b16 %v2378
    %v3345 = vunpack.c.h.b16 %v2378
    %v3346 = vunpack.c.l.b16 %v2379
    %v3347 = vunpack.c.h.b16 %v2379
    %v3348 = vunpack.c.l.b16 %v2380
    %v3349 = vunpack.c.h.b16 %v2380
    %v3350 = vunpack.c.l.b16 %v2381
    %v3351 = vunpack.c.h.b16 %v2381
    %v3352 = vunpack.c.l.b16 %v2382
    %v3353 = vunpack.c.h.b16 %v2382
    %v3354 = vunpack.c.l.b16 %v2383
    %v3355 = vunpack.c.h.b16 %v2383
    %v3356 = vunpack.c.l.b16 %v2384
    %v3357 = vunpack.c.h.b16 %v2384
    %v3358 = vunpack.c.l.b16 %v2385
    %v3359 = vunpack.c.h.b16 %v2385
    %v3360 = vunpack.c.l.b16 %v2386
    %v3361 = vunpack.c.h.b16 %v2386
    %v3362 = vunpack.c.l.b16 %v2387
    %v3363 = vunpack.c.h.b16 %v2387
    %v3364 = vunpack.c.l.b16 %v2388
    %v3365 = vunpack.c.h.b16 %v2388
    %v3366 = vunpack.c.l.b16 %v2389
    %v3367 = vunpack.c.h.b16 %v2389
    %v3368 = vunpack.c.l.b16 %v2390
    %v3369 = vunpack.c.h.b16 %v2390
    %v3370 = vunpack.c.l.b16 %v2391
    %v3371 = vunpack.c.h.b16 %v2391
    %v3372 = vunpack.c.l.b16 %v2392
    %v3373 = vunpack.c.h.b16 %v2392
    %v3374 = vunpack.c.l.b16 %v2393
    %v3375 = vunpack.c.h.b16 %v2393
    %v3376 = vunpack.c.l.b16 %v2394
    %v3377 = vunpack.c.h.b16 %v2394
    %v3378 = vunpack.c.l.b16 %v2395
    %v3379 = vunpack.c.h.b16 %v2395
    %v3380 = vunpack.c.l.b16 %v2396
    %v3381 = vunpack.c.h.b16 %v2396
    %v3382 = vunpack.c.l.b16 %v2397
    %v3383 = vunpack.c.h.b16 %v2397
    %v3384 = vunpack.c.l.b16 %v2398
    %v3385 = vunpack.c.h.b16 %v2398
    %v3386 = vunpack.c.l.b16 %v2399
    %v3387 = vunpack.c.h.b16 %v2399
    %v3388 = vunpack.c.l.b16 %v2400
    %v3389 = vunpack.c.h.b16 %v2400
    %v3390 = vunpack.c.l.b16 %v2401
    %v3391 = vunpack.c.h.b16 %v2401
    %v3392 = vunpack.c.l.b16 %v2402
    %v3393 = vunpack.c.h.b16 %v2402
    %v3394 = vunpack.c.l.b16 %v2403
    %v3395 = vunpack.c.h.b16 %v2403
    %v3396 = vunpack.c.l.b16 %v2404
    %v3397 = vunpack.c.h.b16 %v2404
    %v3398 = vunpack.c.l.b16 %v2405
    %v3399 = vunpack.c.h.b16 %v2405
    %v3400 = vunpack.c.l.b16 %v2406
    %v3401 = vunpack.c.h.b16 %v2406
    %v3402 = vunpack.c.l.b16 %v2407
    %v3403 = vunpack.c.h.b16 %v2407
    %v3404 = vunpack.c.l.b16 %v2408
    %v3405 = vunpack.c.h.b16 %v2408
    %v3406 = vunpack.c.l.b16 %v2409
    %v3407 = vunpack.c.h.b16 %v2409
    %v3408 = vunpack.c.l.b16 %v2410
    %v3409 = vunpack.c.h.b16 %v2410
    %v3410 = vunpack.c.l.b16 %v2411
    %v3411 = vunpack.c.h.b16 %v2411
    %v3412 = vunpack.c.l.b16 %v2412
    %v3413 = vunpack.c.h.b16 %v2412
    %v3414 = vunpack.c.l.b16 %v2413
    %v3415 = vunpack.c.h.b16 %v2413
    %v3416 = vunpack.c.l.b16 %v2414
    %v3417 = vunpack.c.h.b16 %v2414
    %v3418 = vunpack.c.l.b16 %v2415
    %v3419 = vunpack.c.h.b16 %v2415
    %v3420 = vunpack.c.l.b16 %v2416
    %v3421 = vunpack.c.h.b16 %v2416
    %v3422 = vunpack.c.l.b16 %v2417
    %v3423 = vunpack.c.h.b16 %v2417
    %v3424 = vunpack.c.l.b16 %v2418
    %v3425 = vunpack.c.h.b16 %v2418
    %v3426 = vunpack.c.l.b16 %v2419
    %v3427 = vunpack.c.h.b16 %v2419
    %v3428 = vunpack.c.l.b16 %v2420
    %v3429 = vunpack.c.h.b16 %v2420
    %v3430 = vunpack.c.l.b16 %v2421
    %v3431 = vunpack.c.h.b16 %v2421
    %v3432 = vunpack.c.l.b16 %v2422
    %v3433 = vunpack.c.h.b16 %v2422
    %v3434 = vunpack.c.l.b16 %v2423
    %v3435 = vunpack.c.h.b16 %v2423
    %v3436 = vunpack.c.l.b16 %v2424
    %v3437 = vunpack.c.h.b16 %v2424
    %v3438 = vunpack.c.l.b16 %v2425
    %v3439 = vunpack.c.h.b16 %v2425
    %v3440 = vunpack.c.l.b16 %v2426
    %v3441 = vunpack.c.h.b16 %v2426
    %v3442 = vunpack.c.l.b16 %v2427
    %v3443 = vunpack.c.h.b16 %v2427
    %v3444 = vunpack.c.l.b16 %v2428
    %v3445 = vunpack.c.h.b16 %v2428
    %v3446 = vunpack.c.l.b16 %v2429
    %v3447 = vunpack.c.h.b16 %v2429
    %v3448 = vunpack.c.l.b16 %v2430
    %v3449 = vunpack.c.h.b16 %v2430
    %v3450 = vunpack.c.l.b16 %v2431
    %v3451 = vunpack.c.h.b16 %v2431
    %v3452 = vunpack.c.l.b16 %v2432
    %v3453 = vunpack.c.h.b16 %v2432
    %v3454 = vunpack.c.l.b16 %v2433
    %v3455 = vunpack.c.h.b16 %v2433
    %v3456 = vunpack.c.l.b16 %v2434
    %v3457 = vunpack.c.h.b16 %v2434
    %v3458 = vunpack.c.l.b16 %v2435
    %v3459 = vunpack.c.h.b16 %v2435
    %v3460 = vunpack.c.l.b16 %v2436
    %v3461 = vunpack.c.h.b16 %v2436
    %v3462 = vunpack.c.l.b16 %v2437
    %v3463 = vunpack.c.h.b16 %v2437
    %v3464 = vunpack.c.l.b16 %v2438
    %v3465 = vunpack.c.h.b16 %v2438
    %v3466 = vunpack.c.l.b16 %v2439
    %v3467 = vunpack.c.h.b16 %v2439
    %v3468 = vunpack.c.l.b16 %v2440
    %v3469 = vunpack.c.h.b16 %v2440
    %v3470 = vunpack.c.l.b16 %v2441
    %v3471 = vunpack.c.h.b16 %v2441
    %v3472 = vunpack.c.l.b16 %v2442
    %v3473 = vunpack.c.h.b16 %v2442
    %v3474 = vunpack.c.l.b16 %v2443
    %v3475 = vunpack.c.h.b16 %v2443
    %v3476 = vunpack.c.l.b16 %v2444
    %v3477 = vunpack.c.h.b16 %v2444
    %v3478 = vunpack.c.l.b16 %v2445
    %v3479 = vunpack.c.h.b16 %v2445
    %v3480 = vunpack.c.l.b16 %v2446
    %v3481 = vunpack.c.h.b16 %v2446
    %v3482 = vunpack.c.l.b16 %v2447
    %v3483 = vunpack.c.h.b16 %v2447
    %v3484 = vunpack.c.l.b16 %v2448
    %v3485 = vunpack.c.h.b16 %v2448
    %v3486 = vunpack.c.l.b16 %v2449
    %v3487 = vunpack.c.h.b16 %v2449
    %v3488 = vunpack.c.l.b16 %v2450
    %v3489 = vunpack.c.h.b16 %v2450
    %v3490 = vunpack.c.l.b16 %v2451
    %v3491 = vunpack.c.h.b16 %v2451
    %v3492 = vunpack.c.l.b16 %v2452
    %v3493 = vunpack.c.h.b16 %v2452
    %v3494 = vunpack.c.l.b16 %v2453
    %v3495 = vunpack.c.h.b16 %v2453
    %v3496 = vunpack.c.l.b16 %v2454
    %v3497 = vunpack.c.h.b16 %v2454
    %v3498 = vunpack.c.l.b16 %v2455
    %v3499 = vunpack.c.h.b16 %v2455
    %v3500 = vunpack.c.l.b16 %v2456
    %v3501 = vunpack.c.h.b16 %v2456
    %v3502 = vunpack.c.l.b16 %v2457
    %v3503 = vunpack.c.h.b16 %v2457
    %v3504 = vunpack.c.l.b16 %v2458
    %v3505 = vunpack.c.h.b16 %v2458
    %v3506 = vunpack.c.l.b16 %v2459
    %v3507 = vunpack.c.h.b16 %v2459
    %v3508 = vunpack.c.l.b16 %v2460
    %v3509 = vunpack.c.h.b16 %v2460
    %v3510 = vunpack.c.l.b16 %v2461
    %v3511 = vunpack.c.h.b16 %v2461
    %v3512 = vunpack.c.l.b16 %v2462
    %v3513 = vunpack.c.h.b16 %v2462
    %v3514 = vunpack.c.l.b16 %v2463
    %v3515 = vunpack.c.h.b16 %v2463
    %v3516 = vunpack.c.l.b16 %v2464
    %v3517 = vunpack.c.h.b16 %v2464
    %v3518 = vunpack.c.l.b16 %v2465
    %v3519 = vunpack.c.h.b16 %v2465
    %v3520 = vunpack.c.l.b16 %v2466
    %v3521 = vunpack.c.h.b16 %v2466
    %v3522 = vunpack.c.l.b16 %v2467
    %v3523 = vunpack.c.h.b16 %v2467
    %v3524 = vunpack.c.l.b16 %v2468
    %v3525 = vunpack.c.h.b16 %v2468
    %v3526 = vunpack.c.l.b16 %v2469
    %v3527 = vunpack.c.h.b16 %v2469
    %v3528 = vunpack.c.l.b16 %v2470
    %v3529 = vunpack.c.h.b16 %v2470
    %v3530 = vunpack.c.l.b16 %v2471
    %v3531 = vunpack.c.h.b16 %v2471
    %v3532 = vunpack.c.l.b16 %v2472
    %v3533 = vunpack.c.h.b16 %v2472
    %v3534 = vunpack.c.l.b16 %v2473
    %v3535 = vunpack.c.h.b16 %v2473
    %v3536 = vunpack.c.l.b16 %v2474
    %v3537 = vunpack.c.h.b16 %v2474
    %v3538 = vunpack.c.l.b16 %v2475
    %v3539 = vunpack.c.h.b16 %v2475
    %v3540 = vunpack.c.l.b16 %v2476
    %v3541 = vunpack.c.h.b16 %v2476
    %v3542 = vunpack.c.l.b16 %v2477
    %v3543 = vunpack.c.h.b16 %v2477
    %v3544 = vunpack.c.l.b16 %v2478
    %v3545 = vunpack.c.h.b16 %v2478
    %v3546 = vunpack.c.l.b16 %v2479
    %v3547 = vunpack.c.h.b16 %v2479
    %v3548 = vunpack.c.l.b16 %v2480
    %v3549 = vunpack.c.h.b16 %v2480
    %v3550 = vunpack.c.l.b16 %v2481
    %v3551 = vunpack.c.h.b16 %v2481
    %v3552 = vunpack.c.l.b16 %v2482
    %v3553 = vunpack.c.h.b16 %v2482
    %v3554 = vunpack.c.l.b16 %v2483
    %v3555 = vunpack.c.h.b16 %v2483
    %v3556 = vunpack.c.l.b16 %v2484
    %v3557 = vunpack.c.h.b16 %v2484
    %v3558 = vunpack.c.l.b16 %v2485
    %v3559 = vunpack.c.h.b16 %v2485
    %v3560 = vunpack.c.l.b16 %v2486
    %v3561 = vunpack.c.h.b16 %v2486
    %v3562 = vunpack.c.l.b16 %v2487
    %v3563 = vunpack.c.h.b16 %v2487
    %v3564 = vunpack.c.l.b16 %v2488
    %v3565 = vunpack.c.h.b16 %v2488
    %v3566 = vunpack.c.l.b16 %v2489
    %v3567 = vunpack.c.h.b16 %v2489
    %v3568 = vunpack.c.l.b16 %v2490
    %v3569 = vunpack.c.h.b16 %v2490
    %v3570 = vunpack.c.l.b16 %v2491
    %v3571 = vunpack.c.h.b16 %v2491
    %v3572 = vunpack.c.l.b16 %v2492
    %v3573 = vunpack.c.h.b16 %v2492
    %v3574 = vunpack.c.l.b16 %v2493
    %v3575 = vunpack.c.h.b16 %v2493
    %v3576 = vunpack.c.l.b16 %v2494
    %v3577 = vunpack.c.h.b16 %v2494
    %v3578 = vunpack.c.l.b16 %v2495
    %v3579 = vunpack.c.h.b16 %v2495
    %v3580 = vunpack.c.l.b16 %v2496
    %v3581 = vunpack.c.h.b16 %v2496
    %v3582 = vunpack.c.l.b16 %v2497
    %v3583 = vunpack.c.h.b16 %v2497
    %v3584 = vunpack.c.l.b16 %v2498
    %v3585 = vunpack.c.h.b16 %v2498
    %v3586 = vunpack.c.l.b16 %v2499
    %v3587 = vunpack.c.h.b16 %v2499
    %v3588 = vunpack.c.l.b16 %v2500
    %v3589 = vunpack.c.h.b16 %v2500
    %v3590 = vunpack.c.l.b16 %v2501
    %v3591 = vunpack.c.h.b16 %v2501
    %v3592 = vunpack.c.l.b16 %v2502
    %v3593 = vunpack.c.h.b16 %v2502
    %v3594 = vunpack.c.l.b16 %v2503
    %v3595 = vunpack.c.h.b16 %v2503
    %v3596 = vunpack.c.l.b16 %v2504
    %v3597 = vunpack.c.h.b16 %v2504
    %v3598 = vunpack.c.l.b16 %v2505
    %v3599 = vunpack.c.h.b16 %v2505
    %v3600 = vunpack.c.l.b16 %v2506
    %v3601 = vunpack.c.h.b16 %v2506
    %v3602 = vunpack.c.l.b16 %v2507
    %v3603 = vunpack.c.h.b16 %v2507
    %v3604 = vunpack.c.l.b16 %v2508
    %v3605 = vunpack.c.h.b16 %v2508
    %v3606 = vunpack.c.l.b16 %v2509
    %v3607 = vunpack.c.h.b16 %v2509
    %v3608 = vunpack.c.l.b16 %v2510
    %v3609 = vunpack.c.h.b16 %v2510
    %v3610 = vunpack.c.l.b16 %v2511
    %v3611 = vunpack.c.h.b16 %v2511
    %v3612 = vunpack.c.l.b16 %v2512
    %v3613 = vunpack.c.h.b16 %v2512
    %v3614 = vunpack.c.l.b16 %v2513
    %v3615 = vunpack.c.h.b16 %v2513
    %v3616 = vunpack.c.l.b16 %v2514
    %v3617 = vunpack.c.h.b16 %v2514
    %v3618 = vunpack.c.l.b16 %v2515
    %v3619 = vunpack.c.h.b16 %v2515
    %v3620 = vunpack.c.l.b16 %v2516
    %v3621 = vunpack.c.h.b16 %v2516
    %v3622 = vunpack.c.l.b16 %v2517
    %v3623 = vunpack.c.h.b16 %v2517
    %v3624 = vunpack.c.l.b16 %v2518
    %v3625 = vunpack.c.h.b16 %v2518
    %v3626 = vunpack.c.l.b16 %v2519
    %v3627 = vunpack.c.h.b16 %v2519
    %v3628 = vunpack.c.l.b16 %v2520
    %v3629 = vunpack.c.h.b16 %v2520
    %v3630 = vunpack.c.l.b16 %v2521
    %v3631 = vunpack.c.h.b16 %v2521
    %v3632 = vunpack.c.l.b16 %v2522
    %v3633 = vunpack.c.h.b16 %v2522
    %v3634 = vunpack.c.l.b16 %v2523
    %v3635 = vunpack.c.h.b16 %v2523
    %v3636 = vunpack.c.l.b16 %v2524
    %v3637 = vunpack.c.h.b16 %v2524
    %v3638 = vunpack.c.l.b16 %v2525
    %v3639 = vunpack.c.h.b16 %v2525
    %v3640 = vunpack.c.l.b16 %v2526
    %v3641 = vunpack.c.h.b16 %v2526
    %v3642 = vunpack.c.l.b16 %v2527
    %v3643 = vunpack.c.h.b16 %v2527
    %v3644 = vunpack.c.l.b16 %v2528
    %v3645 = vunpack.c.h.b16 %v2528
    %v3646 = vunpack.c.l.b16 %v2529
    %v3647 = vunpack.c.h.b16 %v2529
    %v3648 = vunpack.c.l.b16 %v2530
    %v3649 = vunpack.c.h.b16 %v2530
    %v3650 = vunpack.c.l.b16 %v2531
    %v3651 = vunpack.c.h.b16 %v2531
    %v3652 = vunpack.c.l.b16 %v2532
    %v3653 = vunpack.c.h.b16 %v2532
    %v3654 = vunpack.c.l.b16 %v2533
    %v3655 = vunpack.c.h.b16 %v2533
    %v3656 = vunpack.c.l.b16 %v2534
    %v3657 = vunpack.c.h.b16 %v2534
    %v3658 = vunpack.c.l.b16 %v2535
    %v3659 = vunpack.c.h.b16 %v2535
    %v3660 = vunpack.c.l.b16 %v2536
    %v3661 = vunpack.c.h.b16 %v2536
    %v3662 = vunpack.c.l.b16 %v2537
    %v3663 = vunpack.c.h.b16 %v2537
    %v3664 = vunpack.c.l.b16 %v2538
    %v3665 = vunpack.c.h.b16 %v2538
    %v3666 = vunpack.c.l.b16 %v2539
    %v3667 = vunpack.c.h.b16 %v2539
    %v3668 = vunpack.c.l.b16 %v2540
    %v3669 = vunpack.c.h.b16 %v2540
    %v3670 = vunpack.c.l.b16 %v2541
    %v3671 = vunpack.c.h.b16 %v2541
    %v3672 = vunpack.c.l.b16 %v2542
    %v3673 = vunpack.c.h.b16 %v2542
    %v3674 = vunpack.c.l.b16 %v2543
    %v3675 = vunpack.c.h.b16 %v2543
    %v3676 = vunpack.c.l.b16 %v2544
    %v3677 = vunpack.c.h.b16 %v2544
    %v3678 = vunpack.c.l.b16 %v2545
    %v3679 = vunpack.c.h.b16 %v2545
    %v3680 = vunpack.c.l.b16 %v2546
    %v3681 = vunpack.c.h.b16 %v2546
    %v3682 = vunpack.c.l.b16 %v2547
    %v3683 = vunpack.c.h.b16 %v2547
    %v3684 = vunpack.c.l.b16 %v2548
    %v3685 = vunpack.c.h.b16 %v2548
    %v3686 = vunpack.c.l.b16 %v2549
    %v3687 = vunpack.c.h.b16 %v2549
    %v3688 = vunpack.c.l.b16 %v2550
    %v3689 = vunpack.c.h.b16 %v2550
    %v3690 = vunpack.c.l.b16 %v2551
    %v3691 = vunpack.c.h.b16 %v2551
    %v3692 = vunpack.c.l.b16 %v2552
    %v3693 = vunpack.c.h.b16 %v2552
    %v3694 = vunpack.c.l.b16 %v2553
    %v3695 = vunpack.c.h.b16 %v2553
    %v3696 = vunpack.c.l.b16 %v2554
    %v3697 = vunpack.c.h.b16 %v2554
    %v3698 = vunpack.c.l.b16 %v2555
    %v3699 = vunpack.c.h.b16 %v2555
    %v3700 = vunpack.c.l.b16 %v2556
    %v3701 = vunpack.c.h.b16 %v2556
    %v3702 = vunpack.c.l.b16 %v2557
    %v3703 = vunpack.c.h.b16 %v2557
    %v3704 = vunpack.c.l.b16 %v2558
    %v3705 = vunpack.c.h.b16 %v2558
    %v3706 = vunpack.c.l.b16 %v2559
    %v3707 = vunpack.c.h.b16 %v2559
    %v3708 = vunpack.c.l.b16 %v2560
    %v3709 = vunpack.c.h.b16 %v2560
    %v3710 = vunpack.c.l.b16 %v2561
    %v3711 = vunpack.c.h.b16 %v2561
    %v3712 = vunpack.c.l.b16 %v2562
    %v3713 = vunpack.c.h.b16 %v2562
    %v3714 = vunpack.c.l.b16 %v2563
    %v3715 = vunpack.c.h.b16 %v2563
    %v3716 = vunpack.c.l.b16 %v2564
    %v3717 = vunpack.c.h.b16 %v2564
    %v3718 = vunpack.c.l.b16 %v2565
    %v3719 = vunpack.c.h.b16 %v2565
    %v3720 = vunpack.c.l.b16 %v2566
    %v3721 = vunpack.c.h.b16 %v2566
    %v3722 = vunpack.c.l.b16 %v2567
    %v3723 = vunpack.c.h.b16 %v2567
    %v3724 = vunpack.c.l.b16 %v2568
    %v3725 = vunpack.c.h.b16 %v2568
    %v3726 = vunpack.c.l.b16 %v2569
    %v3727 = vunpack.c.h.b16 %v2569
    %v3728 = vunpack.c.l.b16 %v2570
    %v3729 = vunpack.c.h.b16 %v2570
    %v3730 = vunpack.c.l.b16 %v2571
    %v3731 = vunpack.c.h.b16 %v2571
    %v3732 = vunpack.c.l.b16 %v2572
    %v3733 = vunpack.c.h.b16 %v2572
    %v3734 = vunpack.c.l.b16 %v2573
    %v3735 = vunpack.c.h.b16 %v2573
    %v3736 = vunpack.c.l.b16 %v2574
    %v3737 = vunpack.c.h.b16 %v2574
    %v3738 = vunpack.c.l.b16 %v2575
    %v3739 = vunpack.c.h.b16 %v2575
    %v3740 = vunpack.c.l.b16 %v2576
    %v3741 = vunpack.c.h.b16 %v2576
    %v3742 = vunpack.c.l.b16 %v2577
    %v3743 = vunpack.c.h.b16 %v2577
    %v3744 = vunpack.c.l.b16 %v2578
    %v3745 = vunpack.c.h.b16 %v2578
    %v3746 = vunpack.c.l.b16 %v2579
    %v3747 = vunpack.c.h.b16 %v2579
    %v3748 = vunpack.c.l.b16 %v2580
    %v3749 = vunpack.c.h.b16 %v2580
    %v3750 = vunpack.c.l.b16 %v2581
    %v3751 = vunpack.c.h.b16 %v2581
    %v3752 = vunpack.c.l.b16 %v2582
    %v3753 = vunpack.c.h.b16 %v2582
    %v3754 = vunpack.c.l.b16 %v2583
    %v3755 = vunpack.c.h.b16 %v2583
    %v3756 = vunpack.c.l.b16 %v2584
    %v3757 = vunpack.c.h.b16 %v2584
    %v3758 = vunpack.c.l.b16 %v2585
    %v3759 = vunpack.c.h.b16 %v2585
    %v3760 = vunpack.c.l.b16 %v2586
    %v3761 = vunpack.c.h.b16 %v2586
    %v3762 = vunpack.c.l.b16 %v2587
    %v3763 = vunpack.c.h.b16 %v2587
    %v3764 = vunpack.c.l.b16 %v2588
    %v3765 = vunpack.c.h.b16 %v2588
    %v3766 = vunpack.c.l.b16 %v2589
    %v3767 = vunpack.c.h.b16 %v2589
    %v3768 = vunpack.c.l.b16 %v2590
    %v3769 = vunpack.c.h.b16 %v2590
    %v3770 = vunpack.c.l.b16 %v2591
    %v3771 = vunpack.c.h.b16 %v2591
    %v3772 = vunpack.c.l.b16 %v2592
    %v3773 = vunpack.c.h.b16 %v2592
    %v3774 = vunpack.c.l.b16 %v2593
    %v3775 = vunpack.c.h.b16 %v2593
    %v3776 = vunpack.c.l.b16 %v2594
    %v3777 = vunpack.c.h.b16 %v2594
    %v3778 = vunpack.c.l.b16 %v2595
    %v3779 = vunpack.c.h.b16 %v2595
    %v3780 = vunpack.c.l.b16 %v2596
    %v3781 = vunpack.c.h.b16 %v2596
    %v3782 = vunpack.c.l.b16 %v2597
    %v3783 = vunpack.c.h.b16 %v2597
    %v3784 = vunpack.c.l.b16 %v2598
    %v3785 = vunpack.c.h.b16 %v2598
    %v3786 = vunpack.c.l.b16 %v2599
    %v3787 = vunpack.c.h.b16 %v2599
    %v3788 = vunpack.c.l.b16 %v2600
    %v3789 = vunpack.c.h.b16 %v2600
    %v3790 = vunpack.c.l.b16 %v2601
    %v3791 = vunpack.c.h.b16 %v2601
    %v3792 = vunpack.c.l.b16 %v2602
    %v3793 = vunpack.c.h.b16 %v2602
    %v3794 = vunpack.c.l.b16 %v2603
    %v3795 = vunpack.c.h.b16 %v2603
    %v3796 = vunpack.c.l.b16 %v2604
    %v3797 = vunpack.c.h.b16 %v2604
    %v3798 = vunpack.c.l.b16 %v2605
    %v3799 = vunpack.c.h.b16 %v2605
    %v3800 = vpack.c.b16 %v3040, %v3032
    %v3801 = vpack.c.b16 %v3041, %v3033
    %v3802 = vpack.c.b16 %v3042, %v3034
    %v3803 = vpack.c.b16 %v3043, %v3035
    %v3804 = vpack.c.b16 %v3044, %v3036
    %v3805 = vpack.c.b16 %v3045, %v3037
    %v3806 = vpack.c.b16 %v3046, %v3038
    %v3807 = vpack.c.b16 %v3047, %v3039
    %v3808 = vpack.c.b16 %v3056, %v3048
    %v3809 = vpack.c.b16 %v3057, %v3049
    %v3810 = vpack.c.b16 %v3058, %v3050
    %v3811 = vpack.c.b16 %v3059, %v3051
    %v3812 = vpack.c.b16 %v3060, %v3052
    %v3813 = vpack.c.b16 %v3061, %v3053
    %v3814 = vpack.c.b16 %v3062, %v3054
    %v3815 = vpack.c.b16 %v3063, %v3055
    %v3816 = vpack.c.b16 %v3072, %v3064
    %v3817 = vpack.c.b16 %v3073, %v3065
    %v3818 = vpack.c.b16 %v3074, %v3066
    %v3819 = vpack.c.b16 %v3075, %v3067
    %v3820 = vpack.c.b16 %v3076, %v3068
    %v3821 = vpack.c.b16 %v3077, %v3069
    %v3822 = vpack.c.b16 %v3078, %v3070
    %v3823 = vpack.c.b16 %v3079, %v3071
    %v3824 = vpack.c.b16 %v3088, %v3080
    %v3825 = vpack.c.b16 %v3089, %v3081
    %v3826 = vpack.c.b16 %v3090, %v3082
    %v3827 = vpack.c.b16 %v3091, %v3083
    %v3828 = vpack.c.b16 %v3092, %v3084
    %v3829 = vpack.c.b16 %v3093, %v3085
    %v3830 = vpack.c.b16 %v3094, %v3086
    %v3831 = vpack.c.b16 %v3095, %v3087
    %v3832 = vpack.c.b16 %v3104, %v3096
    %v3833 = vpack.c.b16 %v3105, %v3097
    %v3834 = vpack.c.b16 %v3106, %v3098
    %v3835 = vpack.c.b16 %v3107, %v3099
    %v3836 = vpack.c.b16 %v3108, %v3100
    %v3837 = vpack.c.b16 %v3109, %v3101
    %v3838 = vpack.c.b16 %v3110, %v3102
    %v3839 = vpack.c.b16 %v3111, %v3103
    %v3840 = vpack.c.b16 %v3120, %v3112
    %v3841 = vpack.c.b16 %v3121, %v3113
    %v3842 = vpack.c.b16 %v3122, %v3114
    %v3843 = vpack.c.b16 %v3123, %v3115
    %v3844 = vpack.c.b16 %v3124, %v3116
    %v3845 = vpack.c.b16 %v3125, %v3117
    %v3846 = vpack.c.b16 %v3126, %v3118
    %v3847 = vpack.c.b16 %v3127, %v3119
    %v3848 = vpack.c.b16 %v3136, %v3128
    %v3849 = vpack.c.b16 %v3137, %v3129
    %v3850 = vpack.c.b16 %v3138, %v3130
    %v3851 = vpack.c.b16 %v3139, %v3131
    %v3852 = vpack.c.b16 %v3140, %v3132
    %v3853 = vpack.c.b16 %v3141, %v3133
    %v3854 = vpack.c.b16 %v3142, %v3134
    %v3855 = vpack.c.b16 %v3143, %v3135
    %v3856 = vpack.c.b16 %v3152, %v3144
    %v3857 = vpack.c.b16 %v3153, %v3145
    %v3858 = vpack.c.b16 %v3154, %v3146
    %v3859 = vpack.c.b16 %v3155, %v3147
    %v3860 = vpack.c.b16 %v3156, %v3148
    %v3861 = vpack.c.b16 %v3157, %v3149
    %v3862 = vpack.c.b16 %v3158, %v3150
    %v3863 = vpack.c.b16 %v3159, %v3151
    %v3864 = vpack.c.b16 %v3168, %v3160
    %v3865 = vpack.c.b16 %v3169, %v3161
    %v3866 = vpack.c.b16 %v3170, %v3162
    %v3867 = vpack.c.b16 %v3171, %v3163
    %v3868 = vpack.c.b16 %v3172, %v3164
    %v3869 = vpack.c.b16 %v3173, %v3165
    %v3870 = vpack.c.b16 %v3174, %v3166
    %v3871 = vpack.c.b16 %v3175, %v3167
    %v3872 = vpack.c.b16 %v3184, %v3176
    %v3873 = vpack.c.b16 %v3185, %v3177
    %v3874 = vpack.c.b16 %v3186, %v3178
    %v3875 = vpack.c.b16 %v3187, %v3179
    %v3876 = vpack.c.b16 %v3188, %v3180
    %v3877 = vpack.c.b16 %v3189, %v3181
    %v3878 = vpack.c.b16 %v3190, %v3182
    %v3879 = vpack.c.b16 %v3191, %v3183
    %v3880 = vpack.c.b16 %v3200, %v3192
    %v3881 = vpack.c.b16 %v3201, %v3193
    %v3882 = vpack.c.b16 %v3202, %v3194
    %v3883 = vpack.c.b16 %v3203, %v3195
    %v3884 = vpack.c.b16 %v3204, %v3196
    %v3885 = vpack.c.b16 %v3205, %v3197
    %v3886 = vpack.c.b16 %v3206, %v3198
    %v3887 = vpack.c.b16 %v3207, %v3199
    %v3888 = vpack.c.b16 %v3216, %v3208
    %v3889 = vpack.c.b16 %v3217, %v3209
    %v3890 = vpack.c.b16 %v3218, %v3210
    %v3891 = vpack.c.b16 %v3219, %v3211
    %v3892 = vpack.c.b16 %v3220, %v3212
    %v3893 = vpack.c.b16 %v3221, %v3213
    %v3894 = vpack.c.b16 %v3222, %v3214
    %v3895 = vpack.c.b16 %v3223, %v3215
    %v3896 = vpack.c.b16 %v3232, %v3224
    %v3897 = vpack.c.b16 %v3233, %v3225
    %v3898 = vpack.c.b16 %v3234, %v3226
    %v3899 = vpack.c.b16 %v3235, %v3227
    %v3900 = vpack.c.b16 %v3236, %v3228
    %v3901 = vpack.c.b16 %v3237, %v3229
    %v3902 = vpack.c.b16 %v3238, %v3230
    %v3903 = vpack.c.b16 %v3239, %v3231
    %v3904 = vpack.c.b16 %v3248, %v3240
    %v3905 = vpack.c.b16 %v3249, %v3241
    %v3906 = vpack.c.b16 %v3250, %v3242
    %v3907 = vpack.c.b16 %v3251, %v3243
    %v3908 = vpack.c.b16 %v3252, %v3244
    %v3909 = vpack.c.b16 %v3253, %v3245
    %v3910 = vpack.c.b16 %v3254, %v3246
    %v3911 = vpack.c.b16 %v3255, %v3247
    %v3912 = vpack.c.b16 %v3264, %v3256
    %v3913 = vpack.c.b16 %v3265, %v3257
    %v3914 = vpack.c.b16 %v3266, %v3258
    %v3915 = vpack.c.b16 %v3267, %v3259
    %v3916 = vpack.c.b16 %v3268, %v3260
    %v3917 = vpack.c.b16 %v3269, %v3261
    %v3918 = vpack.c.b16 %v3270, %v3262
    %v3919 = vpack.c.b16 %v3271, %v3263
    %v3920 = vpack.c.b16 %v3280, %v3272
    %v3921 = vpack.c.b16 %v3281, %v3273
    %v3922 = vpack.c.b16 %v3282, %v3274
    %v3923 = vpack.c.b16 %v3283, %v3275
    %v3924 = vpack.c.b16 %v3284, %v3276
    %v3925 = vpack.c.b16 %v3285, %v3277
    %v3926 = vpack.c.b16 %v3286, %v3278
    %v3927 = vpack.c.b16 %v3287, %v3279
    %v3928 = vpack.c.b16 %v3296, %v3288
    %v3929 = vpack.c.b16 %v3297, %v3289
    %v3930 = vpack.c.b16 %v3298, %v3290
    %v3931 = vpack.c.b16 %v3299, %v3291
    %v3932 = vpack.c.b16 %v3300, %v3292
    %v3933 = vpack.c.b16 %v3301, %v3293
    %v3934 = vpack.c.b16 %v3302, %v3294
    %v3935 = vpack.c.b16 %v3303, %v3295
    %v3936 = vpack.c.b16 %v3312, %v3304
    %v3937 = vpack.c.b16 %v3313, %v3305
    %v3938 = vpack.c.b16 %v3314, %v3306
    %v3939 = vpack.c.b16 %v3315, %v3307
    %v3940 = vpack.c.b16 %v3316, %v3308
    %v3941 = vpack.c.b16 %v3317, %v3309
    %v3942 = vpack.c.b16 %v3318, %v3310
    %v3943 = vpack.c.b16 %v3319, %v3311
    %v3944 = vpack.c.b16 %v3328, %v3320
    %v3945 = vpack.c.b16 %v3329, %v3321
    %v3946 = vpack.c.b16 %v3330, %v3322
    %v3947 = vpack.c.b16 %v3331, %v3323
    %v3948 = vpack.c.b16 %v3332, %v3324
    %v3949 = vpack.c.b16 %v3333, %v3325
    %v3950 = vpack.c.b16 %v3334, %v3326
    %v3951 = vpack.c.b16 %v3335, %v3327
    %v3952 = vpack.c.b16 %v3344, %v3336
    %v3953 = vpack.c.b16 %v3345, %v3337
    %v3954 = vpack.c.b16 %v3346, %v3338
    %v3955 = vpack.c.b16 %v3347, %v3339
    %v3956 = vpack.c.b16 %v3348, %v3340
    %v3957 = vpack.c.b16 %v3349, %v3341
    %v3958 = vpack.c.b16 %v3350, %v3342
    %v3959 = vpack.c.b16 %v3351, %v3343
    %v3960 = vpack.c.b16 %v3360, %v3352
    %v3961 = vpack.c.b16 %v3361, %v3353
    %v3962 = vpack.c.b16 %v3362, %v3354
    %v3963 = vpack.c.b16 %v3363, %v3355
    %v3964 = vpack.c.b16 %v3364, %v3356
    %v3965 = vpack.c.b16 %v3365, %v3357
    %v3966 = vpack.c.b16 %v3366, %v3358
    %v3967 = vpack.c.b16 %v3367, %v3359
    %v3968 = vpack.c.b16 %v3376, %v3368
    %v3969 = vpack.c.b16 %v3377, %v3369
    %v3970 = vpack.c.b16 %v3378, %v3370
    %v3971 = vpack.c.b16 %v3379, %v3371
    %v3972 = vpack.c.b16 %v3380, %v3372
    %v3973 = vpack.c.b16 %v3381, %v3373
    %v3974 = vpack.c.b16 %v3382, %v3374
    %v3975 = vpack.c.b16 %v3383, %v3375
    %v3976 = vpack.c.b16 %v3392, %v3384
    %v3977 = vpack.c.b16 %v3393, %v3385
    %v3978 = vpack.c.b16 %v3394, %v3386
    %v3979 = vpack.c.b16 %v3395, %v3387
    %v3980 = vpack.c.b16 %v3396, %v3388
    %v3981 = vpack.c.b16 %v3397, %v3389
    %v3982 = vpack.c.b16 %v3398, %v3390
    %v3983 = vpack.c.b16 %v3399, %v3391
    %v3984 = vpack.c.b16 %v3408, %v3400
    %v3985 = vpack.c.b16 %v3409, %v3401
    %v3986 = vpack.c.b16 %v3410, %v3402
    %v3987 = vpack.c.b16 %v3411, %v3403
    %v3988 = vpack.c.b16 %v3412, %v3404
    %v3989 = vpack.c.b16 %v3413, %v3405
    %v3990 = vpack.c.b16 %v3414, %v3406
    %v3991 = vpack.c.b16 %v3415, %v3407
    %v3992 = vpack.c.b16 %v3424, %v3416
    %v3993 = vpack.c.b16 %v3425, %v3417
    %v3994 = vpack.c.b16 %v3426, %v3418
    %v3995 = vpack.c.b16 %v3427, %v3419
    %v3996 = vpack.c.b16 %v3428, %v3420
    %v3997 = vpack.c.b16 %v3429, %v3421
    %v3998 = vpack.c.b16 %v3430, %v3422
    %v3999 = vpack.c.b16 %v3431, %v3423
    %v4000 = vpack.c.b16 %v3440, %v3432
    %v4001 = vpack.c.b16 %v3441, %v3433
    %v4002 = vpack.c.b16 %v3442, %v3434
    %v4003 = vpack.c.b16 %v3443, %v3435
    %v4004 = vpack.c.b16 %v3444, %v3436
    %v4005 = vpack.c.b16 %v3445, %v3437
    %v4006 = vpack.c.b16 %v3446, %v3438
    %v4007 = vpack.c.b16 %v3447, %v3439
    %v4008 = vpack.c.b16 %v3456, %v3448
    %v4009 = vpack.c.b16 %v3457, %v3449
    %v4010 = vpack.c.b16 %v3458, %v3450
    %v4011 = vpack.c.b16 %v3459, %v3451
    %v4012 = vpack.c.b16 %v3460, %v3452
    %v4013 = vpack.c.b16 %v3461, %v3453
    %v4014 = vpack.c.b16 %v3462, %v3454
    %v4015 = vpack.c.b16 %v3463, %v3455
    %v4016 = vpack.c.b16 %v3472, %v3464
    %v4017 = vpack.c.b16 %v3473, %v3465
    %v4018 = vpack.c.b16 %v3474, %v3466
    %v4019 = vpack.c.b16 %v3475, %v3467
    %v4020 = vpack.c.b16 %v3476, %v3468
    %v4021 = vpack.c.b16 %v3477, %v3469
    %v4022 = vpack.c.b16 %v3478, %v3470
    %v4023 = vpack.c.b16 %v3479, %v3471
    %v4024 = vpack.c.b16 %v3488, %v3480
    %v4025 = vpack.c.b16 %v3489, %v3481
    %v4026 = vpack.c.b16 %v3490, %v3482
    %v4027 = vpack.c.b16 %v3491, %v3483
    %v4028 = vpack.c.b16 %v3492, %v3484
    %v4029 = vpack.c.b16 %v3493, %v3485
    %v4030 = vpack.c.b16 %v3494, %v3486
    %v4031 = vpack.c.b16 %v3495, %v3487
    %v4032 = vpack.c.b16 %v3504, %v3496
    %v4033 = vpack.c.b16 %v3505, %v3497
    %v4034 = vpack.c.b16 %v3506, %v3498
    %v4035 = vpack.c.b16 %v3507, %v3499
    %v4036 = vpack.c.b16 %v3508, %v3500
    %v4037 = vpack.c.b16 %v3509, %v3501
    %v4038 = vpack.c.b16 %v3510, %v3502
    %v4039 = vpack.c.b16 %v3511, %v3503
    %v4040 = vpack.c.b16 %v3520, %v3512
    %v4041 = vpack.c.b16 %v3521, %v3513
    %v4042 = vpack.c.b16 %v3522, %v3514
    %v4043 = vpack.c.b16 %v3523, %v3515
    %v4044 = vpack.c.b16 %v3524, %v3516
    %v4045 = vpack.c.b16 %v3525, %v3517
    %v4046 = vpack.c.b16 %v3526, %v3518
    %v4047 = vpack.c.b16 %v3527, %v3519
    %v4048 = vpack.c.b16 %v3536, %v3528
    %v4049 = vpack.c.b16 %v3537, %v3529
    %v4050 = vpack.c.b16 %v3538, %v3530
    %v4051 = vpack.c.b16 %v3539, %v3531
    %v4052 = vpack.c.b16 %v3540, %v3532
    %v4053 = vpack.c.b16 %v3541, %v3533
    %v4054 = vpack.c.b16 %v3542, %v3534
    %v4055 = vpack.c.b16 %v3543, %v3535
    %v4056 = vpack.c.b16 %v3552, %v3544
    %v4057 = vpack.c.b16 %v3553, %v3545
    %v4058 = vpack.c.b16 %v3554, %v3546
    %v4059 = vpack.c.b16 %v3555, %v3547
    %v4060 = vpack.c.b16 %v3556, %v3548
    %v4061 = vpack.c.b16 %v3557, %v3549
    %v4062 = vpack.c.b16 %v3558, %v3550
    %v4063 = vpack.c.b16 %v3559, %v3551
    %v4064 = vpack.c.b16 %v3568, %v3560
    %v4065 = vpack.c.b16 %v3569, %v3561
    %v4066 = vpack.c.b16 %v3570, %v3562
    %v4067 = vpack.c.b16 %v3571, %v3563
    %v4068 = vpack.c.b16 %v3572, %v3564
    %v4069 = vpack.c.b16 %v3573, %v3565
    %v4070 = vpack.c.b16 %v3574, %v3566
    %v4071 = vpack.c.b16 %v3575, %v3567
    %v4072 = vpack.c.b16 %v3584, %v3576
    %v4073 = vpack.c.b16 %v3585, %v3577
    %v4074 = vpack.c.b16 %v3586, %v3578
    %v4075 = vpack.c.b16 %v3587, %v3579
    %v4076 = vpack.c.b16 %v3588, %v3580
    %v4077 = vpack.c.b16 %v3589, %v3581
    %v4078 = vpack.c.b16 %v3590, %v3582
    %v4079 = vpack.c.b16 %v3591, %v3583
    %v4080 = vpack.c.b16 %v3600, %v3592
    %v4081 = vpack.c.b16 %v3601, %v3593
    %v4082 = vpack.c.b16 %v3602, %v3594
    %v4083 = vpack.c.b16 %v3603, %v3595
    %v4084 = vpack.c.b16 %v3604, %v3596
    %v4085 = vpack.c.b16 %v3605, %v3597
    %v4086 = vpack.c.b16 %v3606, %v3598
    %v4087 = vpack.c.b16 %v3607, %v3599
    %v4088 = vpack.c.b16 %v3616, %v3608
    %v4089 = vpack.c.b16 %v3617, %v3609
    %v4090 = vpack.c.b16 %v3618, %v3610
    %v4091 = vpack.c.b16 %v3619, %v3611
    %v4092 = vpack.c.b16 %v3620, %v3612
    %v4093 = vpack.c.b16 %v3621, %v3613
    %v4094 = vpack.c.b16 %v3622, %v3614
    %v4095 = vpack.c.b16 %v3623, %v3615
    %v4096 = vpack.c.b16 %v3632, %v3624
    %v4097 = vpack.c.b16 %v3633, %v3625
    %v4098 = vpack.c.b16 %v3634, %v3626
    %v4099 = vpack.c.b16 %v3635, %v3627
    %v4100 = vpack.c.b16 %v3636, %v3628
    %v4101 = vpack.c.b16 %v3637, %v3629
    %v4102 = vpack.c.b16 %v3638, %v3630
    %v4103 = vpack.c.b16 %v3639, %v3631
    %v4104 = vpack.c.b16 %v3648, %v3640
    %v4105 = vpack.c.b16 %v3649, %v3641
    %v4106 = vpack.c.b16 %v3650, %v3642
    %v4107 = vpack.c.b16 %v3651, %v3643
    %v4108 = vpack.c.b16 %v3652, %v3644
    %v4109 = vpack.c.b16 %v3653, %v3645
    %v4110 = vpack.c.b16 %v3654, %v3646
    %v4111 = vpack.c.b16 %v3655, %v3647
    %v4112 = vpack.c.b16 %v3664, %v3656
    %v4113 = vpack.c.b16 %v3665, %v3657
    %v4114 = vpack.c.b16 %v3666, %v3658
    %v4115 = vpack.c.b16 %v3667, %v3659
    %v4116 = vpack.c.b16 %v3668, %v3660
    %v4117 = vpack.c.b16 %v3669, %v3661
    %v4118 = vpack.c.b16 %v3670, %v3662
    %v4119 = vpack.c.b16 %v3671, %v3663
    %v4120 = vpack.c.b16 %v3680, %v3672
    %v4121 = vpack.c.b16 %v3681, %v3673
    %v4122 = vpack.c.b16 %v3682, %v3674
    %v4123 = vpack.c.b16 %v3683, %v3675
    %v4124 = vpack.c.b16 %v3684, %v3676
    %v4125 = vpack.c.b16 %v3685, %v3677
    %v4126 = vpack.c.b16 %v3686, %v3678
    %v4127 = vpack.c.b16 %v3687, %v3679
    %v4128 = vpack.c.b16 %v3696, %v3688
    %v4129 = vpack.c.b16 %v3697, %v3689
    %v4130 = vpack.c.b16 %v3698, %v3690
    %v4131 = vpack.c.b16 %v3699, %v3691
    %v4132 = vpack.c.b16 %v3700, %v3692
    %v4133 = vpack.c.b16 %v3701, %v3693
    %v4134 = vpack.c.b16 %v3702, %v3694
    %v4135 = vpack.c.b16 %v3703, %v3695
    %v4136 = vpack.c.b16 %v3712, %v3704
    %v4137 = vpack.c.b16 %v3713, %v3705
    %v4138 = vpack.c.b16 %v3714, %v3706
    %v4139 = vpack.c.b16 %v3715, %v3707
    %v4140 = vpack.c.b16 %v3716, %v3708
    %v4141 = vpack.c.b16 %v3717, %v3709
    %v4142 = vpack.c.b16 %v3718, %v3710
    %v4143 = vpack.c.b16 %v3719, %v3711
    %v4144 = vpack.c.b16 %v3728, %v3720
    %v4145 = vpack.c.b16 %v3729, %v3721
    %v4146 = vpack.c.b16 %v3730, %v3722
    %v4147 = vpack.c.b16 %v3731, %v3723
    %v4148 = vpack.c.b16 %v3732, %v3724
    %v4149 = vpack.c.b16 %v3733, %v3725
    %v4150 = vpack.c.b16 %v3734, %v3726
    %v4151 = vpack.c.b16 %v3735, %v3727
    %v4152 = vpack.c.b16 %v3744, %v3736
    %v4153 = vpack.c.b16 %v3745, %v3737
    %v4154 = vpack.c.b16 %v3746, %v3738
    %v4155 = vpack.c.b16 %v3747, %v3739
    %v4156 = vpack.c.b16 %v3748, %v3740
    %v4157 = vpack.c.b16 %v3749, %v3741
    %v4158 = vpack.c.b16 %v3750, %v3742
    %v4159 = vpack.c.b16 %v3751, %v3743
    %v4160 = vpack.c.b16 %v3760, %v3752
    %v4161 = vpack.c.b16 %v3761, %v3753
    %v4162 = vpack.c.b16 %v3762, %v3754
    %v4163 = vpack.c.b16 %v3763, %v3755
    %v4164 = vpack.c.b16 %v3764, %v3756
    %v4165 = vpack.c.b16 %v3765, %v3757
    %v4166 = vpack.c.b16 %v3766, %v3758
    %v4167 = vpack.c.b16 %v3767, %v3759
    %v4168 = vpack.c.b16 %v3776, %v3768
    %v4169 = vpack.c.b16 %v3777, %v3769
    %v4170 = vpack.c.b16 %v3778, %v3770
    %v4171 = vpack.c.b16 %v3779, %v3771
    %v4172 = vpack.c.b16 %v3780, %v3772
    %v4173 = vpack.c.b16 %v3781, %v3773
    %v4174 = vpack.c.b16 %v3782, %v3774
    %v4175 = vpack.c.b16 %v3783, %v3775
    %v4176 = vpack.c.b16 %v3792, %v3784
    %v4177 = vpack.c.b16 %v3793, %v3785
    %v4178 = vpack.c.b16 %v3794, %v3786
    %v4179 = vpack.c.b16 %v3795, %v3787
    %v4180 = vpack.c.b16 %v3796, %v3788
    %v4181 = vpack.c.b16 %v3797, %v3789
    %v4182 = vpack.c.b16 %v3798, %v3790
    %v4183 = vpack.c.b16 %v3799, %v3791
    %4568 = vmatprep.subr.bf16.mxu0 %v3801
    %4569 = vmatpush1.bf16.msra.mxu0 %v3800
    %4570 = vmatprep.subr.bf16.mxu0 %v3809
    %4571 = vmatpush1.bf16.msra.mxu0 %v3808
    %4572 = vmatprep.subr.bf16.mxu0 %v3817
    %4573 = vmatpush1.bf16.msra.mxu0 %v3816
    %4574 = vmatprep.subr.bf16.mxu0 %v3825
    %4575 = vmatpush1.bf16.msra.mxu0 %v3824
    %4576 = vmatprep.subr.bf16.mxu0 %v3833
    %4577 = vmatpush1.bf16.msra.mxu0 %v3832
    %4578 = vmatprep.subr.bf16.mxu0 %v3841
    %4579 = vmatpush1.bf16.msra.mxu0 %v3840
    %4580 = vmatprep.subr.bf16.mxu0 %v3849
    %4581 = vmatpush1.bf16.msra.mxu0 %v3848
    %4582 = vmatprep.subr.bf16.mxu0 %v3857
    %4583 = vmatpush1.bf16.msra.mxu0 %v3856
    %4584 = vmatprep.subr.bf16.mxu0 %v3865
    %4585 = vmatpush1.bf16.msra.mxu0 %v3864
    %4586 = vmatprep.subr.bf16.mxu0 %v3873
    %4587 = vmatpush1.bf16.msra.mxu0 %v3872
    %4588 = vmatprep.subr.bf16.mxu0 %v3881
    %4589 = vmatpush1.bf16.msra.mxu0 %v3880
    %4590 = vmatprep.subr.bf16.mxu0 %v3889
    %4591 = vmatpush1.bf16.msra.mxu0 %v3888
    %4592 = vmatprep.subr.bf16.mxu0 %v3897
    %4593 = vmatpush1.bf16.msra.mxu0 %v3896
    %4594 = vmatprep.subr.bf16.mxu0 %v3905
    %4595 = vmatpush1.bf16.msra.mxu0 %v3904
    %4596 = vmatprep.subr.bf16.mxu0 %v3913
    %4597 = vmatpush1.bf16.msra.mxu0 %v3912
    %4598 = vmatprep.subr.bf16.mxu0 %v3921
    %4599 = vmatpush1.bf16.msra.mxu0 %v3920
    %4600 = vmatprep.mubr.bf16.mxu0 %v2217
    %4601 = vmatmul.mubr.bf16.gmra.mrb[0].mxu0 %v2216
    %v4602 = vpop.f32.mrb[0].mxu0
    %v4603 = vadd.f32 %v2611, %v4602
    %v4604 = vpop.f32.mrb[0].mxu0
    %v4605 = vadd.f32 %v2615, %v4604
    %v4606 = vpop.f32.mrb[0].mxu0
    %v4607 = vadd.f32 %v2611, %v4606
    %v4608 = vpop.f32.mrb[0].mxu0
    %v4609 = vadd.f32 %v2615, %v4608
    %4610 = vdwg.mxu0
    %4611 = vmatprep.subr.bf16.mxu0 %v3929
    %4612 = vmatpush1.bf16.msra.mxu0 %v3928
    %4613 = vmatprep.subr.bf16.mxu0 %v3937
    %4614 = vmatpush1.bf16.msra.mxu0 %v3936
    %4615 = vmatprep.subr.bf16.mxu0 %v3945
    %4616 = vmatpush1.bf16.msra.mxu0 %v3944
    %4617 = vmatprep.subr.bf16.mxu0 %v3953
    %4618 = vmatpush1.bf16.msra.mxu0 %v3952
    %4619 = vmatprep.subr.bf16.mxu0 %v3961
    %4620 = vmatpush1.bf16.msra.mxu0 %v3960
    %4621 = vmatprep.subr.bf16.mxu0 %v3969
    %4622 = vmatpush1.bf16.msra.mxu0 %v3968
    %4623 = vmatprep.subr.bf16.mxu0 %v3977
    %4624 = vmatpush1.bf16.msra.mxu0 %v3976
    %4625 = vmatprep.subr.bf16.mxu0 %v3985
    %4626 = vmatpush1.bf16.msra.mxu0 %v3984
    %4627 = vmatprep.subr.bf16.mxu0 %v3993
    %4628 = vmatpush1.bf16.msra.mxu0 %v3992
    %4629 = vmatprep.subr.bf16.mxu0 %v4001
    %4630 = vmatpush1.bf16.msra.mxu0 %v4000
    %4631 = vmatprep.subr.bf16.mxu0 %v4009
    %4632 = vmatpush1.bf16.msra.mxu0 %v4008
    %4633 = vmatprep.subr.bf16.mxu0 %v4017
    %4634 = vmatpush1.bf16.msra.mxu0 %v4016
    %4635 = vmatprep.subr.bf16.mxu0 %v4025
    %4636 = vmatpush1.bf16.msra.mxu0 %v4024
    %4637 = vmatprep.subr.bf16.mxu0 %v4033
    %4638 = vmatpush1.bf16.msra.mxu0 %v4032
    %4639 = vmatprep.subr.bf16.mxu0 %v4041
    %4640 = vmatpush1.bf16.msra.mxu0 %v4040
    %4641 = vmatprep.subr.bf16.mxu0 %v4049
    %4642 = vmatpush1.bf16.msra.mxu0 %v4048
    %4643 = vmatprep.mubr.bf16.mxu0 %v2219
    %4644 = vmatmul.mubr.bf16.gmra.mrb[0].mxu0 %v2218
    %v4645 = vpop.f32.mrb[0].mxu0
    %v4646 = vadd.f32 %v4603, %v4645
    %v4647 = vpop.f32.mrb[0].mxu0
    %v4648 = vadd.f32 %v4605, %v4647
    %v4649 = vpop.f32.mrb[0].mxu0
    %v4650 = vadd.f32 %v4607, %v4649
    %v4651 = vpop.f32.mrb[0].mxu0
    %v4652 = vadd.f32 %v4609, %v4651
    %4653 = vdwg.mxu0
    %4654 = vmatprep.subr.bf16.mxu0 %v4057
    %4655 = vmatpush1.bf16.msra.mxu0 %v4056
    %4656 = vmatprep.subr.bf16.mxu0 %v4065
    %4657 = vmatpush1.bf16.msra.mxu0 %v4064
    %4658 = vmatprep.subr.bf16.mxu0 %v4073
    %4659 = vmatpush1.bf16.msra.mxu0 %v4072
    %4660 = vmatprep.subr.bf16.mxu0 %v4081
    %4661 = vmatpush1.bf16.msra.mxu0 %v4080
    %4662 = vmatprep.subr.bf16.mxu0 %v4089
    %4663 = vmatpush1.bf16.msra.mxu0 %v4088
    %4664 = vmatprep.subr.bf16.mxu0 %v4097
    %4665 = vmatpush1.bf16.msra.mxu0 %v4096
    %4666 = vmatprep.subr.bf16.mxu0 %v4105
    %4667 = vmatpush1.bf16.msra.mxu0 %v4104
    %4668 = vmatprep.subr.bf16.mxu0 %v4113
    %4669 = vmatpush1.bf16.msra.mxu0 %v4112
    %4670 = vmatprep.subr.bf16.mxu0 %v4121
    %4671 = vmatpush1.bf16.msra.mxu0 %v4120
    %4672 = vmatprep.subr.bf16.mxu0 %v4129
    %4673 = vmatpush1.bf16.msra.mxu0 %v4128
    %4674 = vmatprep.subr.bf16.mxu0 %v4137
    %4675 = vmatpush1.bf16.msra.mxu0 %v4136
    %4676 = vmatprep.subr.bf16.mxu0 %v4145
    %4677 = vmatpush1.bf16.msra.mxu0 %v4144
    %4678 = vmatprep.subr.bf16.mxu0 %v4153
    %4679 = vmatpush1.bf16.msra.mxu0 %v4152
    %4680 = vmatprep.subr.bf16.mxu0 %v4161
    %4681 = vmatpush1.bf16.msra.mxu0 %v4160
    %4682 = vmatprep.subr.bf16.mxu0 %v4169
    %4683 = vmatpush1.bf16.msra.mxu0 %v4168
    %4684 = vmatprep.subr.bf16.mxu0 %v4177
    %4685 = vmatpush1.bf16.msra.mxu0 %v4176
    %4686 = vmatprep.mubr.bf16.mxu0 %v2221
    %4687 = vmatmul.mubr.bf16.gmra.mrb[0].mxu0 %v2220
    %v4688 = vpop.f32.mrb[0].mxu0
    %v4689 = vadd.f32 %v4646, %v4688
    %v4690 = vpop.f32.mrb[0].mxu0
    %v4691 = vadd.f32 %v4648, %v4690
    %v4692 = vpop.f32.mrb[0].mxu0
    %v4693 = vadd.f32 %v4650, %v4692
    %v4694 = vpop.f32.mrb[0].mxu0
    %v4695 = vadd.f32 %v4652, %v4694
    %4696 = vdwg.mxu0
    %4697 = vmatprep.subr.bf16.mxu0 %v3803
    %4698 = vmatpush1.bf16.msra.mxu0 %v3802
    %4699 = vmatprep.subr.bf16.mxu0 %v3811
    %4700 = vmatpush1.bf16.msra.mxu0 %v3810
    %4701 = vmatprep.subr.bf16.mxu0 %v3819
    %4702 = vmatpush1.bf16.msra.mxu0 %v3818
    %4703 = vmatprep.subr.bf16.mxu0 %v3827
    %4704 = vmatpush1.bf16.msra.mxu0 %v3826
    %4705 = vmatprep.subr.bf16.mxu0 %v3835
    %4706 = vmatpush1.bf16.msra.mxu0 %v3834
    %4707 = vmatprep.subr.bf16.mxu0 %v3843
    %4708 = vmatpush1.bf16.msra.mxu0 %v3842
    %4709 = vmatprep.subr.bf16.mxu0 %v3851
    %4710 = vmatpush1.bf16.msra.mxu0 %v3850
    %4711 = vmatprep.subr.bf16.mxu0 %v3859
    %4712 = vmatpush1.bf16.msra.mxu0 %v3858
    %4713 = vmatprep.subr.bf16.mxu0 %v3867
    %4714 = vmatpush1.bf16.msra.mxu0 %v3866
    %4715 = vmatprep.subr.bf16.mxu0 %v3875
    %4716 = vmatpush1.bf16.msra.mxu0 %v3874
    %4717 = vmatprep.subr.bf16.mxu0 %v3883
    %4718 = vmatpush1.bf16.msra.mxu0 %v3882
    %4719 = vmatprep.subr.bf16.mxu0 %v3891
    %4720 = vmatpush1.bf16.msra.mxu0 %v3890
    %4721 = vmatprep.subr.bf16.mxu0 %v3899
    %4722 = vmatpush1.bf16.msra.mxu0 %v3898
    %4723 = vmatprep.subr.bf16.mxu0 %v3907
    %4724 = vmatpush1.bf16.msra.mxu0 %v3906
    %4725 = vmatprep.subr.bf16.mxu0 %v3915
    %4726 = vmatpush1.bf16.msra.mxu0 %v3914
    %4727 = vmatprep.subr.bf16.mxu0 %v3923
    %4728 = vmatpush1.bf16.msra.mxu0 %v3922
    %4729 = vmatprep.mubr.bf16.mxu0 %v2217
    %4730 = vmatmul.mubr.bf16.gmra.mrb[0].mxu0 %v2216
    %v4731 = vpop.f32.mrb[0].mxu0
    %v4732 = vadd.f32 %v2619, %v4731
    %v4733 = vpop.f32.mrb[0].mxu0
    %v4734 = vadd.f32 %v2623, %v4733
    %v4735 = vpop.f32.mrb[0].mxu0
    %v4736 = vadd.f32 %v2619, %v4735
    %v4737 = vpop.f32.mrb[0].mxu0
    %v4738 = vadd.f32 %v2623, %v4737
    %4739 = vdwg.mxu0
    %4740 = vmatprep.subr.bf16.mxu0 %v3931
    %4741 = vmatpush1.bf16.msra.mxu0 %v3930
    %4742 = vmatprep.subr.bf16.mxu0 %v3939
    %4743 = vmatpush1.bf16.msra.mxu0 %v3938
    %4744 = vmatprep.subr.bf16.mxu0 %v3947
    %4745 = vmatpush1.bf16.msra.mxu0 %v3946
    %4746 = vmatprep.subr.bf16.mxu0 %v3955
    %4747 = vmatpush1.bf16.msra.mxu0 %v3954
    %4748 = vmatprep.subr.bf16.mxu0 %v3963
    %4749 = vmatpush1.bf16.msra.mxu0 %v3962
    %4750 = vmatprep.subr.bf16.mxu0 %v3971
    %4751 = vmatpush1.bf16.msra.mxu0 %v3970
    %4752 = vmatprep.subr.bf16.mxu0 %v3979
    %4753 = vmatpush1.bf16.msra.mxu0 %v3978
    %4754 = vmatprep.subr.bf16.mxu0 %v3987
    %4755 = vmatpush1.bf16.msra.mxu0 %v3986
    %4756 = vmatprep.subr.bf16.mxu0 %v3995
    %4757 = vmatpush1.bf16.msra.mxu0 %v3994
    %4758 = vmatprep.subr.bf16.mxu0 %v4003
    %4759 = vmatpush1.bf16.msra.mxu0 %v4002
    %4760 = vmatprep.subr.bf16.mxu0 %v4011
    %4761 = vmatpush1.bf16.msra.mxu0 %v4010
    %4762 = vmatprep.subr.bf16.mxu0 %v4019
    %4763 = vmatpush1.bf16.msra.mxu0 %v4018
    %4764 = vmatprep.subr.bf16.mxu0 %v4027
    %4765 = vmatpush1.bf16.msra.mxu0 %v4026
    %4766 = vmatprep.subr.bf16.mxu0 %v4035
    %4767 = vmatpush1.bf16.msra.mxu0 %v4034
    %4768 = vmatprep.subr.bf16.mxu0 %v4043
    %4769 = vmatpush1.bf16.msra.mxu0 %v4042
    %4770 = vmatprep.subr.bf16.mxu0 %v4051
    %4771 = vmatpush1.bf16.msra.mxu0 %v4050
    %4772 = vmatprep.mubr.bf16.mxu0 %v2219
    %4773 = vmatmul.mubr.bf16.gmra.mrb[0].mxu0 %v2218
    %v4774 = vpop.f32.mrb[0].mxu0
    %v4775 = vadd.f32 %v4732, %v4774
    %v4776 = vpop.f32.mrb[0].mxu0
    %v4777 = vadd.f32 %v4734, %v4776
    %v4778 = vpop.f32.mrb[0].mxu0
    %v4779 = vadd.f32 %v4736, %v4778
    %v4780 = vpop.f32.mrb[0].mxu0
    %v4781 = vadd.f32 %v4738, %v4780
    %4782 = vdwg.mxu0
    %4783 = vmatprep.subr.bf16.mxu0 %v4059
    %4784 = vmatpush1.bf16.msra.mxu0 %v4058
    %4785 = vmatprep.subr.bf16.mxu0 %v4067
    %4786 = vmatpush1.bf16.msra.mxu0 %v4066
    %4787 = vmatprep.subr.bf16.mxu0 %v4075
    %4788 = vmatpush1.bf16.msra.mxu0 %v4074
    %4789 = vmatprep.subr.bf16.mxu0 %v4083
    %4790 = vmatpush1.bf16.msra.mxu0 %v4082
    %4791 = vmatprep.subr.bf16.mxu0 %v4091
    %4792 = vmatpush1.bf16.msra.mxu0 %v4090
    %4793 = vmatprep.subr.bf16.mxu0 %v4099
    %4794 = vmatpush1.bf16.msra.mxu0 %v4098
    %4795 = vmatprep.subr.bf16.mxu0 %v4107
    %4796 = vmatpush1.bf16.msra.mxu0 %v4106
    %4797 = vmatprep.subr.bf16.mxu0 %v4115
    %4798 = vmatpush1.bf16.msra.mxu0 %v4114
    %4799 = vmatprep.subr.bf16.mxu0 %v4123
    %4800 = vmatpush1.bf16.msra.mxu0 %v4122
    %4801 = vmatprep.subr.bf16.mxu0 %v4131
    %4802 = vmatpush1.bf16.msra.mxu0 %v4130
    %4803 = vmatprep.subr.bf16.mxu0 %v4139
    %4804 = vmatpush1.bf16.msra.mxu0 %v4138
    %4805 = vmatprep.subr.bf16.mxu0 %v4147
    %4806 = vmatpush1.bf16.msra.mxu0 %v4146
    %4807 = vmatprep.subr.bf16.mxu0 %v4155
    %4808 = vmatpush1.bf16.msra.mxu0 %v4154
    %4809 = vmatprep.subr.bf16.mxu0 %v4163
    %4810 = vmatpush1.bf16.msra.mxu0 %v4162
    %4811 = vmatprep.subr.bf16.mxu0 %v4171
    %4812 = vmatpush1.bf16.msra.mxu0 %v4170
    %4813 = vmatprep.subr.bf16.mxu0 %v4179
    %4814 = vmatpush1.bf16.msra.mxu0 %v4178
    %4815 = vmatprep.mubr.bf16.mxu0 %v2221
    %4816 = vmatmul.mubr.bf16.gmra.mrb[0].mxu0 %v2220
    %v4817 = vpop.f32.mrb[0].mxu0
    %v4818 = vadd.f32 %v4775, %v4817
    %v4819 = vpop.f32.mrb[0].mxu0
    %v4820 = vadd.f32 %v4777, %v4819
    %v4821 = vpop.f32.mrb[0].mxu0
    %v4822 = vadd.f32 %v4779, %v4821
    %v4823 = vpop.f32.mrb[0].mxu0
    %v4824 = vadd.f32 %v4781, %v4823
    %4825 = vdwg.mxu0
    %4826 = vmatprep.subr.bf16.mxu0 %v3805
    %4827 = vmatpush1.bf16.msra.mxu0 %v3804
    %4828 = vmatprep.subr.bf16.mxu0 %v3813
    %4829 = vmatpush1.bf16.msra.mxu0 %v3812
    %4830 = vmatprep.subr.bf16.mxu0 %v3821
    %4831 = vmatpush1.bf16.msra.mxu0 %v3820
    %4832 = vmatprep.subr.bf16.mxu0 %v3829
    %4833 = vmatpush1.bf16.msra.mxu0 %v3828
    %4834 = vmatprep.subr.bf16.mxu0 %v3837
    %4835 = vmatpush1.bf16.msra.mxu0 %v3836
    %4836 = vmatprep.subr.bf16.mxu0 %v3845
    %4837 = vmatpush1.bf16.msra.mxu0 %v3844
    %4838 = vmatprep.subr.bf16.mxu0 %v3853
    %4839 = vmatpush1.bf16.msra.mxu0 %v3852
    %4840 = vmatprep.subr.bf16.mxu0 %v3861
    %4841 = vmatpush1.bf16.msra.mxu0 %v3860
    %4842 = vmatprep.subr.bf16.mxu0 %v3869
    %4843 = vmatpush1.bf16.msra.mxu0 %v3868
    %4844 = vmatprep.subr.bf16.mxu0 %v3877
    %4845 = vmatpush1.bf16.msra.mxu0 %v3876
    %4846 = vmatprep.subr.bf16.mxu0 %v3885
    %4847 = vmatpush1.bf16.msra.mxu0 %v3884
    %4848 = vmatprep.subr.bf16.mxu0 %v3893
    %4849 = vmatpush1.bf16.msra.mxu0 %v3892
    %4850 = vmatprep.subr.bf16.mxu0 %v3901
    %4851 = vmatpush1.bf16.msra.mxu0 %v3900
    %4852 = vmatprep.subr.bf16.mxu0 %v3909
    %4853 = vmatpush1.bf16.msra.mxu0 %v3908
    %4854 = vmatprep.subr.bf16.mxu0 %v3917
    %4855 = vmatpush1.bf16.msra.mxu0 %v3916
    %4856 = vmatprep.subr.bf16.mxu0 %v3925
    %4857 = vmatpush1.bf16.msra.mxu0 %v3924
    %4858 = vmatprep.mubr.bf16.mxu0 %v2217
    %4859 = vmatmul.mubr.bf16.gmra.mrb[0].mxu0 %v2216
    %v4860 = vpop.f32.mrb[0].mxu0
    %v4861 = vadd.f32 %v2627, %v4860
    %v4862 = vpop.f32.mrb[0].mxu0
    %v4863 = vadd.f32 %v2631, %v4862
    %v4864 = vpop.f32.mrb[0].mxu0
    %v4865 = vadd.f32 %v2627, %v4864
    %v4866 = vpop.f32.mrb[0].mxu0
    %v4867 = vadd.f32 %v2631, %v4866
    %4868 = vdwg.mxu0
    %4869 = vmatprep.subr.bf16.mxu0 %v3933
    %4870 = vmatpush1.bf16.msra.mxu0 %v3932
    %4871 = vmatprep.subr.bf16.mxu0 %v3941
    %4872 = vmatpush1.bf16.msra.mxu0 %v3940
    %4873 = vmatprep.subr.bf16.mxu0 %v3949
    %4874 = vmatpush1.bf16.msra.mxu0 %v3948
    %4875 = vmatprep.subr.bf16.mxu0 %v3957
    %4876 = vmatpush1.bf16.msra.mxu0 %v3956
    %4877 = vmatprep.subr.bf16.mxu0 %v3965
    %4878 = vmatpush1.bf16.msra.mxu0 %v3964
    %4879 = vmatprep.subr.bf16.mxu0 %v3973
    %4880 = vmatpush1.bf16.msra.mxu0 %v3972
    %4881 = vmatprep.subr.bf16.mxu0 %v3981
    %4882 = vmatpush1.bf16.msra.mxu0 %v3980
    %4883 = vmatprep.subr.bf16.mxu0 %v3989
    %4884 = vmatpush1.bf16.msra.mxu0 %v3988
    %4885 = vmatprep.subr.bf16.mxu0 %v3997
    %4886 = vmatpush1.bf16.msra.mxu0 %v3996
    %4887 = vmatprep.subr.bf16.mxu0 %v4005
    %4888 = vmatpush1.bf16.msra.mxu0 %v4004
    %4889 = vmatprep.subr.bf16.mxu0 %v4013
    %4890 = vmatpush1.bf16.msra.mxu0 %v4012
    %4891 = vmatprep.subr.bf16.mxu0 %v4021
    %4892 = vmatpush1.bf16.msra.mxu0 %v4020
    %4893 = vmatprep.subr.bf16.mxu0 %v4029
    %4894 = vmatpush1.bf16.msra.mxu0 %v4028
    %4895 = vmatprep.subr.bf16.mxu0 %v4037
    %4896 = vmatpush1.bf16.msra.mxu0 %v4036
    %4897 = vmatprep.subr.bf16.mxu0 %v4045
    %4898 = vmatpush1.bf16.msra.mxu0 %v4044
    %4899 = vmatprep.subr.bf16.mxu0 %v4053
    %4900 = vmatpush1.bf16.msra.mxu0 %v4052
    %4901 = vmatprep.mubr.bf16.mxu0 %v2219
    %4902 = vmatmul.mubr.bf16.gmra.mrb[0].mxu0 %v2218
    %v4903 = vpop.f32.mrb[0].mxu0
    %v4904 = vadd.f32 %v4861, %v4903
    %v4905 = vpop.f32.mrb[0].mxu0
    %v4906 = vadd.f32 %v4863, %v4905
    %v4907 = vpop.f32.mrb[0].mxu0
    %v4908 = vadd.f32 %v4865, %v4907
    %v4909 = vpop.f32.mrb[0].mxu0
    %v4910 = vadd.f32 %v4867, %v4909
    %4911 = vdwg.mxu0
    %4912 = vmatprep.subr.bf16.mxu0 %v4061
    %4913 = vmatpush1.bf16.msra.mxu0 %v4060
    %4914 = vmatprep.subr.bf16.mxu0 %v4069
    %4915 = vmatpush1.bf16.msra.mxu0 %v4068
    %4916 = vmatprep.subr.bf16.mxu0 %v4077
    %4917 = vmatpush1.bf16.msra.mxu0 %v4076
    %4918 = vmatprep.subr.bf16.mxu0 %v4085
    %4919 = vmatpush1.bf16.msra.mxu0 %v4084
    %4920 = vmatprep.subr.bf16.mxu0 %v4093
    %4921 = vmatpush1.bf16.msra.mxu0 %v4092
    %4922 = vmatprep.subr.bf16.mxu0 %v4101
    %4923 = vmatpush1.bf16.msra.mxu0 %v4100
    %4924 = vmatprep.subr.bf16.mxu0 %v4109
    %4925 = vmatpush1.bf16.msra.mxu0 %v4108
    %4926 = vmatprep.subr.bf16.mxu0 %v4117
    %4927 = vmatpush1.bf16.msra.mxu0 %v4116
    %4928 = vmatprep.subr.bf16.mxu0 %v4125
    %4929 = vmatpush1.bf16.msra.mxu0 %v4124
    %4930 = vmatprep.subr.bf16.mxu0 %v4133
    %4931 = vmatpush1.bf16.msra.mxu0 %v4132
    %4932 = vmatprep.subr.bf16.mxu0 %v4141
    %4933 = vmatpush1.bf16.msra.mxu0 %v4140
    %4934 = vmatprep.subr.bf16.mxu0 %v4149
    %4935 = vmatpush1.bf16.msra.mxu0 %v4148
    %4936 = vmatprep.subr.bf16.mxu0 %v4157
    %4937 = vmatpush1.bf16.msra.mxu0 %v4156
    %4938 = vmatprep.subr.bf16.mxu0 %v4165
    %4939 = vmatpush1.bf16.msra.mxu0 %v4164
    %4940 = vmatprep.subr.bf16.mxu0 %v4173
    %4941 = vmatpush1.bf16.msra.mxu0 %v4172
    %4942 = vmatprep.subr.bf16.mxu0 %v4181
    %4943 = vmatpush1.bf16.msra.mxu0 %v4180
    %4944 = vmatprep.mubr.bf16.mxu0 %v2221
    %4945 = vmatmul.mubr.bf16.gmra.mrb[0].mxu0 %v2220
    %v4946 = vpop.f32.mrb[0].mxu0
    %v4947 = vadd.f32 %v4904, %v4946
    %v4948 = vpop.f32.mrb[0].mxu0
    %v4949 = vadd.f32 %v4906, %v4948
    %v4950 = vpop.f32.mrb[0].mxu0
    %v4951 = vadd.f32 %v4908, %v4950
    %v4952 = vpop.f32.mrb[0].mxu0
    %v4953 = vadd.f32 %v4910, %v4952
    %4954 = vdwg.mxu0
    %4955 = vmatprep.subr.bf16.mxu0 %v3807
    %4956 = vmatpush1.bf16.msra.mxu0 %v3806
    %4957 = vmatprep.subr.bf16.mxu0 %v3815
    %4958 = vmatpush1.bf16.msra.mxu0 %v3814
    %4959 = vmatprep.subr.bf16.mxu0 %v3823
    %4960 = vmatpush1.bf16.msra.mxu0 %v3822
    %4961 = vmatprep.subr.bf16.mxu0 %v3831
    %4962 = vmatpush1.bf16.msra.mxu0 %v3830
    %4963 = vmatprep.subr.bf16.mxu0 %v3839
    %4964 = vmatpush1.bf16.msra.mxu0 %v3838
    %4965 = vmatprep.subr.bf16.mxu0 %v3847
    %4966 = vmatpush1.bf16.msra.mxu0 %v3846
    %4967 = vmatprep.subr.bf16.mxu0 %v3855
    %4968 = vmatpush1.bf16.msra.mxu0 %v3854
    %4969 = vmatprep.subr.bf16.mxu0 %v3863
    %4970 = vmatpush1.bf16.msra.mxu0 %v3862
    %4971 = vmatprep.subr.bf16.mxu0 %v3871
    %4972 = vmatpush1.bf16.msra.mxu0 %v3870
    %4973 = vmatprep.subr.bf16.mxu0 %v3879
    %4974 = vmatpush1.bf16.msra.mxu0 %v3878
    %4975 = vmatprep.subr.bf16.mxu0 %v3887
    %4976 = vmatpush1.bf16.msra.mxu0 %v3886
    %4977 = vmatprep.subr.bf16.mxu0 %v3895
    %4978 = vmatpush1.bf16.msra.mxu0 %v3894
    %4979 = vmatprep.subr.bf16.mxu0 %v3903
    %4980 = vmatpush1.bf16.msra.mxu0 %v3902
    %4981 = vmatprep.subr.bf16.mxu0 %v3911
    %4982 = vmatpush1.bf16.msra.mxu0 %v3910
    %4983 = vmatprep.subr.bf16.mxu0 %v3919
    %4984 = vmatpush1.bf16.msra.mxu0 %v3918
    %4985 = vmatprep.subr.bf16.mxu0 %v3927
    %4986 = vmatpush1.bf16.msra.mxu0 %v3926
    %4987 = vmatprep.mubr.bf16.mxu0 %v2217
    %4988 = vmatmul.mubr.bf16.gmra.mrb[0].mxu0 %v2216
    %v4989 = vpop.f32.mrb[0].mxu0
    %v4990 = vadd.f32 %v2635, %v4989
    %v4991 = vpop.f32.mrb[0].mxu0
    %v4992 = vadd.f32 %v2639, %v4991
    %v4993 = vpop.f32.mrb[0].mxu0
    %v4994 = vadd.f32 %v2635, %v4993
    %v4995 = vpop.f32.mrb[0].mxu0
    %v4996 = vadd.f32 %v2639, %v4995
    %4997 = vdwg.mxu0
    %4998 = vmatprep.subr.bf16.mxu0 %v3935
    %4999 = vmatpush1.bf16.msra.mxu0 %v3934
    %5000 = vmatprep.subr.bf16.mxu0 %v3943
    %5001 = vmatpush1.bf16.msra.mxu0 %v3942
    %5002 = vmatprep.subr.bf16.mxu0 %v3951
    %5003 = vmatpush1.bf16.msra.mxu0 %v3950
    %5004 = vmatprep.subr.bf16.mxu0 %v3959
    %5005 = vmatpush1.bf16.msra.mxu0 %v3958
    %5006 = vmatprep.subr.bf16.mxu0 %v3967
    %5007 = vmatpush1.bf16.msra.mxu0 %v3966
    %5008 = vmatprep.subr.bf16.mxu0 %v3975
    %5009 = vmatpush1.bf16.msra.mxu0 %v3974
    %5010 = vmatprep.subr.bf16.mxu0 %v3983
    %5011 = vmatpush1.bf16.msra.mxu0 %v3982
    %5012 = vmatprep.subr.bf16.mxu0 %v3991
    %5013 = vmatpush1.bf16.msra.mxu0 %v3990
    %5014 = vmatprep.subr.bf16.mxu0 %v3999
    %5015 = vmatpush1.bf16.msra.mxu0 %v3998
    %5016 = vmatprep.subr.bf16.mxu0 %v4007
    %5017 = vmatpush1.bf16.msra.mxu0 %v4006
    %5018 = vmatprep.subr.bf16.mxu0 %v4015
    %5019 = vmatpush1.bf16.msra.mxu0 %v4014
    %5020 = vmatprep.subr.bf16.mxu0 %v4023
    %5021 = vmatpush1.bf16.msra.mxu0 %v4022
    %5022 = vmatprep.subr.bf16.mxu0 %v4031
    %5023 = vmatpush1.bf16.msra.mxu0 %v4030
    %5024 = vmatprep.subr.bf16.mxu0 %v4039
    %5025 = vmatpush1.bf16.msra.mxu0 %v4038
    %5026 = vmatprep.subr.bf16.mxu0 %v4047
    %5027 = vmatpush1.bf16.msra.mxu0 %v4046
    %5028 = vmatprep.subr.bf16.mxu0 %v4055
    %5029 = vmatpush1.bf16.msra.mxu0 %v4054
    %5030 = vmatprep.mubr.bf16.mxu0 %v2219
    %5031 = vmatmul.mubr.bf16.gmra.mrb[0].mxu0 %v2218
    %v5032 = vpop.f32.mrb[0].mxu0
    %v5033 = vadd.f32 %v4990, %v5032
    %v5034 = vpop.f32.mrb[0].mxu0
    %v5035 = vadd.f32 %v4992, %v5034
    %v5036 = vpop.f32.mrb[0].mxu0
    %v5037 = vadd.f32 %v4994, %v5036
    %v5038 = vpop.f32.mrb[0].mxu0
    %v5039 = vadd.f32 %v4996, %v5038
    %5040 = vdwg.mxu0
    %5041 = vmatprep.subr.bf16.mxu0 %v4063
    %5042 = vmatpush1.bf16.msra.mxu0 %v4062
    %5043 = vmatprep.subr.bf16.mxu0 %v4071
    %5044 = vmatpush1.bf16.msra.mxu0 %v4070
    %5045 = vmatprep.subr.bf16.mxu0 %v4079
    %5046 = vmatpush1.bf16.msra.mxu0 %v4078
    %5047 = vmatprep.subr.bf16.mxu0 %v4087
    %5048 = vmatpush1.bf16.msra.mxu0 %v4086
    %5049 = vmatprep.subr.bf16.mxu0 %v4095
    %5050 = vmatpush1.bf16.msra.mxu0 %v4094
    %5051 = vmatprep.subr.bf16.mxu0 %v4103
    %5052 = vmatpush1.bf16.msra.mxu0 %v4102
    %5053 = vmatprep.subr.bf16.mxu0 %v4111
    %5054 = vmatpush1.bf16.msra.mxu0 %v4110
    %5055 = vmatprep.subr.bf16.mxu0 %v4119
    %5056 = vmatpush1.bf16.msra.mxu0 %v4118
    %5057 = vmatprep.subr.bf16.mxu0 %v4127
    %5058 = vmatpush1.bf16.msra.mxu0 %v4126
    %5059 = vmatprep.subr.bf16.mxu0 %v4135
    %5060 = vmatpush1.bf16.msra.mxu0 %v4134
    %5061 = vmatprep.subr.bf16.mxu0 %v4143
    %5062 = vmatpush1.bf16.msra.mxu0 %v4142
    %5063 = vmatprep.subr.bf16.mxu0 %v4151
    %5064 = vmatpush1.bf16.msra.mxu0 %v4150
    %5065 = vmatprep.subr.bf16.mxu0 %v4159
    %5066 = vmatpush1.bf16.msra.mxu0 %v4158
    %5067 = vmatprep.subr.bf16.mxu0 %v4167
    %5068 = vmatpush1.bf16.msra.mxu0 %v4166
    %5069 = vmatprep.subr.bf16.mxu0 %v4175
    %5070 = vmatpush1.bf16.msra.mxu0 %v4174
    %5071 = vmatprep.subr.bf16.mxu0 %v4183
    %5072 = vmatpush1.bf16.msra.mxu0 %v4182
    %5073 = vmatprep.mubr.bf16.mxu0 %v2221
    %5074 = vmatmul.mubr.bf16.gmra.mrb[0].mxu0 %v2220
    %v5075 = vpop.f32.mrb[0].mxu0
    %v5076 = vadd.f32 %v5033, %v5075
    %v5077 = vpop.f32.mrb[0].mxu0
    %v5078 = vadd.f32 %v5035, %v5077
    %v5079 = vpop.f32.mrb[0].mxu0
    %v5080 = vadd.f32 %v5037, %v5079
    %v5081 = vpop.f32.mrb[0].mxu0
    %v5082 = vadd.f32 %v5039, %v5081
    %5083 = vdwg.mxu0
    %5084 = vst [vmem:[#allocation2] sm:$0xff] %v4689
    %5085 = vst [vmem:[#allocation2 + $0x8] sm:$0xff] %v4691
    %5086 = vst [vmem:[#allocation2 + $0x10] sm:$0xff] %v4818
    %5087 = vst [vmem:[#allocation2 + $0x18] sm:$0xff] %v4820
    %5088 = vst [vmem:[#allocation2 + $0x20] sm:$0xff] %v4947
    %5089 = vst [vmem:[#allocation2 + $0x28] sm:$0xff] %v4949
    %5090 = vst [vmem:[#allocation2 + $0x30] sm:$0xff] %v5076
    %5091 = vst [vmem:[#allocation2 + $0x38] sm:$0xff] %v5078
    %5092 = vst [vmem:[#allocation2 + $0x40] sm:$0xff] %v4693
    %5093 = vst [vmem:[#allocation2 + $0x48] sm:$0xff] %v4695
    %5094 = vst [vmem:[#allocation2 + $0x50] sm:$0xff] %v4822
    %5095 = vst [vmem:[#allocation2 + $0x58] sm:$0xff] %v4824
    %5096 = vst [vmem:[#allocation2 + $0x60] sm:$0xff] %v4951
    %5097 = vst [vmem:[#allocation2 + $0x68] sm:$0xff] %v4953
    %5098 = vst [vmem:[#allocation2 + $0x70] sm:$0xff] %v5080
    %5099 = vst [vmem:[#allocation2 + $0x78] sm:$0xff] %v5082
    // Predicated region
    $region22: #{masker_net_mkr_forward.5} parent=1 // pred_check
      _
    $region23: #{masker_net_mkr_forward.5} parent=1 // pred_check_branch
      %5101 = sbr.rel (0) target = $region25
    $region24: #{masker_net_mkr_forward.5} parent=1 // pred_region
      %s5103 = ssub.s32 2048, 2048
      %5104 = vsyncadd [#allocation3], %s5103
      %s5105 = sshll.u32 [#allocation2], 4
      %s5106 = int_to_ptr.vmem [resolvable:$true] %s5105
      %5111 = dma.vmem_to_hbm [thread:$0]  %s5106, 2048, %s5, [#allocation3], 1024, 1024, 64
    $region25: #{masker_net_mkr_forward.5} parent=1 // pred_fallthru
      _
    // Predicated region
    $region26: #{masker_net_mkr_forward.5} parent=1 // pred_check
      _
    $region27: #{masker_net_mkr_forward.5} parent=1 // pred_check_branch
      %5113 = sbr.rel (0) target = $region29
    $region28: #{masker_net_mkr_forward.5} parent=1 // pred_region
      %5114 = dma.done [#allocation3], 2048
    $region29: #{masker_net_mkr_forward.5} parent=1 // pred_fallthru
      _
    %5115 = vsyncpa [#allocation3], 1

</llo_original>
